<compile_context>
chip_gen: v7x
topology: tpu7x:2x2x1
jax: 0.10.0
libtpu: 0.0.40
codegen_flags: <defaults>
</compile_context>

<pallas_src>
import functools

import jax
import jax.numpy as jnp
from jax import lax
from jax.experimental import pallas as pl
from jax.experimental.pallas import tpu as pltpu

K = 5            # conv kernel size
PAD = 2          # "same" padding for stride 1
N_LAYERS = 5
LEAKY_SLOPE = 0.01
BN_EPS = 1e-5
CH_PACK = 16     # channel padding granularity = bf16 sublane tile (aligned stores)


def _round_up(x, m):
    return (x + m - 1) // m * m


# ------------------------------ Pallas kernel ------------------------------ #

def _hazynet_kernel(x_ref, w_ref, bias_ref, mask_ref, o_ref, patch_ref, *,
                    H, W, c_pad):
    """Fused 5-layer conv5x5 (+folded BN) + activation for one image.

    x_ref:     (1, c_pad, H*W)        f32 input, channel-major, channels zero-padded
    w_ref:     (5, c_pad, K*K*c_pad)  bf16 transposed weights (BN scale folded in)
    bias_ref:  (5, c_pad, 1)          f32 folded bias (conv bias + BN)
    mask_ref:  (K*K, H*W)             f32 0/1 "same"-padding boundary masks per tap
    o_ref:     (1, c_pad, H*W)        f32 sigmoid output
    patch_ref: (K*K*c_pad, H*W)       bf16 transposed im2col scratch
    """
    HW = H * W
    masks = mask_ref[...]                              # (25, HW), loop-invariant

    def build_patch(src):
        # src: (c_pad, HW) f32. Each tap = lane roll (XLU) + boundary mask (VPU),
        # stored as an aligned, unmasked 16-sublane x HW-lane bf16 block.
        for dy in range(K):
            for dx in range(K):
                t = dy * K + dx
                sh = (dy - PAD) * W + (dx - PAD)       # flat source offset
                tap = src if sh == 0 else pltpu.roll(src, shift=(-sh) % HW, axis=1)
                if not (dy == PAD and dx == PAD):      # center tap needs no mask
                    tap = tap * masks[t]
                patch_ref[t * c_pad:(t + 1) * c_pad, :] = tap.astype(jnp.bfloat16)

    src = x_ref[0]                                     # layer-0 input, no copy
    for layer in range(N_LAYERS):
        build_patch(src)
        # One lane-dense MXU matmul per layer: (c_pad, K*K*c_pad) @ (K*K*c_pad, HW),
        # bf16 operands, f32 accumulation. Result is (c_pad, HW): 256-lane wide,
        # only c_pad (=16) rows, so the epilogue below is 8x cheaper than before.
        acc = jnp.dot(w_ref[layer], patch_ref[...],
                      preferred_element_type=jnp.float32)
        y = acc + bias_ref[layer]                      # BN scale folded into weights
        if layer < N_LAYERS - 1:
            src = jnp.where(y > 0, y, LEAKY_SLOPE * y)
        else:
            o_ref[0] = 1.0 / (1.0 + jnp.exp(-y))       # exact sigmoid


def _build_pallas_call(N, H, W, c_pad):
    HW = H * W
    kkc = K * K * c_pad
    kern = functools.partial(_hazynet_kernel, H=H, W=W, c_pad=c_pad)
    return pl.pallas_call(
        kern,
        out_shape=jax.ShapeDtypeStruct((N, c_pad, HW), jnp.float32),
        grid=(N,),
        in_specs=[
            pl.BlockSpec((1, c_pad, HW), lambda n: (n, 0, 0)),          # x
            pl.BlockSpec((N_LAYERS, c_pad, kkc), lambda n: (0, 0, 0)),  # weights
            pl.BlockSpec((N_LAYERS, c_pad, 1), lambda n: (0, 0, 0)),    # bias
            pl.BlockSpec((K * K, HW), lambda n: (0, 0)),                # tap masks
        ],
        out_specs=pl.BlockSpec((1, c_pad, HW), lambda n: (n, 0, 0)),
        scratch_shapes=[
            pltpu.VMEM((kkc, HW), jnp.bfloat16),       # transposed im2col patch
        ],
        compiler_params=pltpu.CompilerParams(
            dimension_semantics=("parallel",),         # shards batch on v7x 2-TC
            vmem_limit_bytes=32 * 1024 * 1024,         # explicit; safe on v5e/v6e/v7x
        ),
    )


# ----------------------------- parameter handling --------------------------- #

def init_params(key, out_channel):
    """Deterministic synthetic parameters matching HazyNet(out_channel).

    BN scale is folded into the conv weights (then rounded to bf16 once); both
    the Pallas kernel packing and the pure-JAX reference use those identical
    folded bf16 weights so the tolerance check stays valid.
    """
    c_pad = _round_up(max(3, out_channel), CH_PACK)

    w_packed, bias_packed, ref_layers = [], [], []
    in_ch = 3
    for layer in range(N_LAYERS):
        k = jax.random.fold_in(key, layer)
        kw, kb, kg, kbe, km, kv = jax.random.split(k, 6)
        # Conv2d(in_ch, out_channel, 5, 1, 2): PyTorch OIHW weights.
        w_oihw = 0.1 * jax.random.normal(kw, (out_channel, in_ch, K, K), jnp.float32)
        b_conv = 0.1 * jax.random.normal(kb, (out_channel,), jnp.float32)

        if layer < N_LAYERS - 1:
            # BatchNorm2d(out_channel), eval mode -> per-channel affine.
            gamma = 0.5 + jax.random.uniform(kg, (out_channel,), jnp.float32)
            beta = 0.1 * jax.random.normal(kbe, (out_channel,), jnp.float32)
            r_mean = 0.1 * jax.random.normal(km, (out_channel,), jnp.float32)
            r_var = 0.5 + jax.random.uniform(kv, (out_channel,), jnp.float32)
            scale = gamma / jnp.sqrt(r_var + BN_EPS)
            bias = scale * (b_conv - r_mean) + beta
            act = "leaky_relu"
        else:
            scale = jnp.ones((out_channel,), jnp.float32)
            bias = b_conv
            act = "sigmoid"

        # Fold BN scale into the conv weight, round to bf16 once.
        w_folded = w_oihw * scale[:, None, None, None]
        w_bf16 = w_folded.astype(jnp.bfloat16)                   # (co, ci, ky, kx)

        # Kernel packing: (c_pad, K*K*c_pad); rows = out channel (zero-padded),
        # columns ordered (ky, kx, ci) with ci zero-padded to c_pad.
        wt = jnp.transpose(w_bf16, (0, 2, 3, 1))                 # (co, ky, kx, ci)
        wt = jnp.pad(wt, ((0, c_pad - out_channel), (0, 0), (0, 0),
                          (0, c_pad - in_ch)))
        w_packed.append(wt.reshape(c_pad, K * K * c_pad))
        bias_packed.append(jnp.pad(bias, (0, c_pad - out_channel)))

        # Reference (lax.conv, HWIO) uses the same folded bf16 weights as f32.
        w_hwio = jnp.transpose(w_bf16.astype(jnp.float32), (2, 3, 1, 0))
        ref_layers.append(dict(w=w_hwio, bias=bias, act=act))
        in_ch = out_channel

    return dict(out_channel=out_channel, c_pad=c_pad,
                w=jnp.stack(w_packed),                           # (5, c_pad, KKC) bf16
                bias=jnp.stack(bias_packed)[..., None],          # (5, c_pad, 1) f32
                ref_layers=ref_layers)


def _tap_masks(H, W):
    """(K*K, H*W) 0/1 masks: tap (dy, dx) contributes only where the shifted
    source pixel lies inside the image ("same" padding realized as a mask)."""
    h = jnp.arange(H)[:, None]
    w = jnp.arange(W)[None, :]
    rows = []
    for dy in range(K):
        for dx in range(K):
            m = ((h + dy - PAD >= 0) & (h + dy - PAD < H) &
                 (w + dx - PAD >= 0) & (w + dx - PAD < W))
            rows.append(m.reshape(H * W))
    return jnp.stack(rows).astype(jnp.float32)


# ------------------------------- forward passes ----------------------------- #

@functools.partial(jax.jit, static_argnames=("out_channel", "c_pad"))
def _forward_impl(x_nchw, w, bias, *, out_channel, c_pad):
    N, Cin, H, W = x_nchw.shape
    # Channel-major flattened layout (NCHW is already channel-major: reshape only).
    x = x_nchw.reshape(N, Cin, H * W)
    x = jnp.pad(x, ((0, 0), (0, c_pad - Cin), (0, 0)))
    masks = _tap_masks(H, W)
    out = _build_pallas_call(N, H, W, c_pad)(x, w, bias, masks)   # (N, c_pad, H*W)
    return out[:, :out_channel, :].reshape(N, out_channel, H, W)  # NCHW, no transpose


def hazynet_forward(params, x_nchw):
    """Pallas forward. Accepts NCHW (PyTorch layout) f32, returns NCHW f32."""
    return _forward_impl(x_nchw, params["w"], params["bias"],
                         out_channel=params["out_channel"], c_pad=params["c_pad"])


def hazynet_reference(params, x_nchw):
    """Pure-JAX reference (lax.conv) with identical folded bf16 weights and the
    same bf16 rounding of per-layer activations."""
    x = jnp.transpose(x_nchw, (0, 2, 3, 1))
    for p in params["ref_layers"]:
        xq = x.astype(jnp.bfloat16).astype(jnp.float32)
        z = lax.conv_general_dilated(
            xq, p["w"], window_strides=(1, 1),
            padding=[(PAD, PAD), (PAD, PAD)],
            dimension_numbers=("NHWC", "HWIO", "NHWC"))
        y = z + p["bias"]
        if p["act"] == "leaky_relu":
            y = jnp.where(y > 0, y, LEAKY_SLOPE * y)
        else:
            y = 1.0 / (1.0 + jnp.exp(-y))
        x = y
    return jnp.transpose(x, (0, 3, 1, 2))


# ------------------------------------ main ---------------------------------- #

if __name__ == "__main__":
    out_channel = 8
    x = jax.random.normal(jax.random.PRNGKey(0), (2, 3, 16, 16), jnp.float32)
    params = init_params(jax.random.PRNGKey(42), out_channel)

    out = jax.block_until_ready(hazynet_forward(params, x))
    assert out.shape == (2, out_channel, 16, 16)

    ref = jax.block_until_ready(hazynet_reference(params, x))
    err = float(jnp.max(jnp.abs(out - ref)))
    assert err < 2e-2, f"Pallas output mismatch vs reference: {err}"

    print("KERNEL_OK")
</pallas_src>

<mosaic_0001>
module attributes {stable_mosaic.version = 11 : i64} {
  func.func @_hazynet_kernel(%arg0: i32, %arg1: memref<1x16x256xf32, #tpu.memory_space<vmem>>, %arg2: memref<5x16x400xbf16, #tpu.memory_space<vmem>>, %arg3: memref<5x16x1xf32, #tpu.memory_space<vmem>>, %arg4: memref<25x256xf32, #tpu.memory_space<vmem>>, %arg5: memref<1x16x256xf32, #tpu.memory_space<vmem>>, %arg6: memref<400x256xbf16, #tpu.memory_space<vmem>>) attributes {dimension_semantics = [#tpu.dimension_semantics<parallel>], iteration_bounds = array<i64: 2>, scalar_prefetch = 0 : i64, scratch_operands = 1 : i64, tpu.core_type = #tpu.core_type<tc>, window_params = [{transform_indices = @transform_0, window_bounds = array<i64: 1, 16, 256>}, {pipeline_mode = #tpu.pipeline_mode<synchronous>, transform_indices = @transform_1, window_bounds = array<i64: 5, 16, 400>}, {pipeline_mode = #tpu.pipeline_mode<synchronous>, transform_indices = @transform_2, window_bounds = array<i64: 5, 16, 1>}, {pipeline_mode = #tpu.pipeline_mode<synchronous>, transform_indices = @transform_3, window_bounds = array<i64: 25, 256>}, {transform_indices = @transform_4, window_bounds = array<i64: 1, 16, 256>}]} {
    %c0 = arith.constant 0 : index
    %c0_0 = arith.constant 0 : index
    %0 = vector.load %arg4[%c0, %c0_0] : memref<25x256xf32, #tpu.memory_space<vmem>>, vector<25x256xf32>
    %c0_1 = arith.constant 0 : index
    %c0_2 = arith.constant 0 : index
    %c0_3 = arith.constant 0 : index
    %1 = vector.load %arg1[%c0_1, %c0_2, %c0_3] : memref<1x16x256xf32, #tpu.memory_space<vmem>>, vector<1x16x256xf32>
    %2 = vector.shape_cast %1 : vector<1x16x256xf32> to vector<16x256xf32>
    %c34_i32 = arith.constant 34 : i32
    %3 = tpu.dynamic_rotate %2 by %c34_i32 dim 1 : vector<16x256xf32>, i32 -> vector<16x256xf32>
    %4 = vector.extract_strided_slice %0 {offsets = [0, 0], sizes = [1, 256], strides = [1, 1]} : vector<25x256xf32> to vector<1x256xf32>
    %5 = vector.shape_cast %4 : vector<1x256xf32> to vector<256xf32>
    %6 = vector.shape_cast %5 : vector<256xf32> to vector<1x256xf32>
    %7 = vector.broadcast %6 : vector<1x256xf32> to vector<16x256xf32>
    %8 = arith.mulf %3, %7 : vector<16x256xf32>
    %9 = arith.truncf %8 : vector<16x256xf32> to vector<16x256xbf16>
    %c0_4 = arith.constant 0 : index
    %c0_5 = arith.constant 0 : index
    %10 = vector.load %arg6[%c0_4, %c0_5] : memref<400x256xbf16, #tpu.memory_space<vmem>>, vector<16x256xbf16>
    tpu.vector_store %arg6[%c0_4, %c0_5], %9 {strides = array<i32>} : memref<400x256xbf16, #tpu.memory_space<vmem>>, vector<16x256xbf16>,
    %c33_i32 = arith.constant 33 : i32
    %11 = tpu.dynamic_rotate %2 by %c33_i32 dim 1 : vector<16x256xf32>, i32 -> vector<16x256xf32>
    %12 = vector.extract_strided_slice %0 {offsets = [1, 0], sizes = [1, 256], strides = [1, 1]} : vector<25x256xf32> to vector<1x256xf32>
    %13 = vector.shape_cast %12 : vector<1x256xf32> to vector<256xf32>
    %14 = vector.shape_cast %13 : vector<256xf32> to vector<1x256xf32>
    %15 = vector.broadcast %14 : vector<1x256xf32> to vector<16x256xf32>
    %16 = arith.mulf %11, %15 : vector<16x256xf32>
    %17 = arith.truncf %16 : vector<16x256xf32> to vector<16x256xbf16>
    %c16 = arith.constant 16 : index
    %c0_6 = arith.constant 0 : index
    %18 = vector.load %arg6[%c16, %c0_6] : memref<400x256xbf16, #tpu.memory_space<vmem>>, vector<16x256xbf16>
    tpu.vector_store %arg6[%c16, %c0_6], %17 {strides = array<i32>} : memref<400x256xbf16, #tpu.memory_space<vmem>>, vector<16x256xbf16>,
    %c32_i32 = arith.constant 32 : i32
    %19 = tpu.dynamic_rotate %2 by %c32_i32 dim 1 : vector<16x256xf32>, i32 -> vector<16x256xf32>
    %20 = vector.extract_strided_slice %0 {offsets = [2, 0], sizes = [1, 256], strides = [1, 1]} : vector<25x256xf32> to vector<1x256xf32>
    %21 = vector.shape_cast %20 : vector<1x256xf32> to vector<256xf32>
    %22 = vector.shape_cast %21 : vector<256xf32> to vector<1x256xf32>
    %23 = vector.broadcast %22 : vector<1x256xf32> to vector<16x256xf32>
    %24 = arith.mulf %19, %23 : vector<16x256xf32>
    %25 = arith.truncf %24 : vector<16x256xf32> to vector<16x256xbf16>
    %c32 = arith.constant 32 : index
    %c0_7 = arith.constant 0 : index
    %26 = vector.load %arg6[%c32, %c0_7] : memref<400x256xbf16, #tpu.memory_space<vmem>>, vector<16x256xbf16>
    tpu.vector_store %arg6[%c32, %c0_7], %25 {strides = array<i32>} : memref<400x256xbf16, #tpu.memory_space<vmem>>, vector<16x256xbf16>,
    %c31_i32 = arith.constant 31 : i32
    %27 = tpu.dynamic_rotate %2 by %c31_i32 dim 1 : vector<16x256xf32>, i32 -> vector<16x256xf32>
    %28 = vector.extract_strided_slice %0 {offsets = [3, 0], sizes = [1, 256], strides = [1, 1]} : vector<25x256xf32> to vector<1x256xf32>
    %29 = vector.shape_cast %28 : vector<1x256xf32> to vector<256xf32>
    %30 = vector.shape_cast %29 : vector<256xf32> to vector<1x256xf32>
    %31 = vector.broadcast %30 : vector<1x256xf32> to vector<16x256xf32>
    %32 = arith.mulf %27, %31 : vector<16x256xf32>
    %33 = arith.truncf %32 : vector<16x256xf32> to vector<16x256xbf16>
    %c48 = arith.constant 48 : index
    %c0_8 = arith.constant 0 : index
    %34 = vector.load %arg6[%c48, %c0_8] : memref<400x256xbf16, #tpu.memory_space<vmem>>, vector<16x256xbf16>
    tpu.vector_store %arg6[%c48, %c0_8], %33 {strides = array<i32>} : memref<400x256xbf16, #tpu.memory_space<vmem>>, vector<16x256xbf16>,
    %c30_i32 = arith.constant 30 : i32
    %35 = tpu.dynamic_rotate %2 by %c30_i32 dim 1 : vector<16x256xf32>, i32 -> vector<16x256xf32>
    %36 = vector.extract_strided_slice %0 {offsets = [4, 0], sizes = [1, 256], strides = [1, 1]} : vector<25x256xf32> to vector<1x256xf32>
    %37 = vector.shape_cast %36 : vector<1x256xf32> to vector<256xf32>
    %38 = vector.shape_cast %37 : vector<256xf32> to vector<1x256xf32>
    %39 = vector.broadcast %38 : vector<1x256xf32> to vector<16x256xf32>
    %40 = arith.mulf %35, %39 : vector<16x256xf32>
    %41 = arith.truncf %40 : vector<16x256xf32> to vector<16x256xbf16>
    %c64 = arith.constant 64 : index
    %c0_9 = arith.constant 0 : index
    %42 = vector.load %arg6[%c64, %c0_9] : memref<400x256xbf16, #tpu.memory_space<vmem>>, vector<16x256xbf16>
    tpu.vector_store %arg6[%c64, %c0_9], %41 {strides = array<i32>} : memref<400x256xbf16, #tpu.memory_space<vmem>>, vector<16x256xbf16>,
    %c18_i32 = arith.constant 18 : i32
    %43 = tpu.dynamic_rotate %2 by %c18_i32 dim 1 : vector<16x256xf32>, i32 -> vector<16x256xf32>
    %44 = vector.extract_strided_slice %0 {offsets = [5, 0], sizes = [1, 256], strides = [1, 1]} : vector<25x256xf32> to vector<1x256xf32>
    %45 = vector.shape_cast %44 : vector<1x256xf32> to vector<256xf32>
    %46 = vector.shape_cast %45 : vector<256xf32> to vector<1x256xf32>
    %47 = vector.broadcast %46 : vector<1x256xf32> to vector<16x256xf32>
    %48 = arith.mulf %43, %47 : vector<16x256xf32>
    %49 = arith.truncf %48 : vector<16x256xf32> to vector<16x256xbf16>
    %c80 = arith.constant 80 : index
    %c0_10 = arith.constant 0 : index
    %50 = vector.load %arg6[%c80, %c0_10] : memref<400x256xbf16, #tpu.memory_space<vmem>>, vector<16x256xbf16>
    tpu.vector_store %arg6[%c80, %c0_10], %49 {strides = array<i32>} : memref<400x256xbf16, #tpu.memory_space<vmem>>, vector<16x256xbf16>,
    %c17_i32 = arith.constant 17 : i32
    %51 = tpu.dynamic_rotate %2 by %c17_i32 dim 1 : vector<16x256xf32>, i32 -> vector<16x256xf32>
    %52 = vector.extract_strided_slice %0 {offsets = [6, 0], sizes = [1, 256], strides = [1, 1]} : vector<25x256xf32> to vector<1x256xf32>
    %53 = vector.shape_cast %52 : vector<1x256xf32> to vector<256xf32>
    %54 = vector.shape_cast %53 : vector<256xf32> to vector<1x256xf32>
    %55 = vector.broadcast %54 : vector<1x256xf32> to vector<16x256xf32>
    %56 = arith.mulf %51, %55 : vector<16x256xf32>
    %57 = arith.truncf %56 : vector<16x256xf32> to vector<16x256xbf16>
    %c96 = arith.constant 96 : index
    %c0_11 = arith.constant 0 : index
    %58 = vector.load %arg6[%c96, %c0_11] : memref<400x256xbf16, #tpu.memory_space<vmem>>, vector<16x256xbf16>
    tpu.vector_store %arg6[%c96, %c0_11], %57 {strides = array<i32>} : memref<400x256xbf16, #tpu.memory_space<vmem>>, vector<16x256xbf16>,
    %c16_i32 = arith.constant 16 : i32
    %59 = tpu.dynamic_rotate %2 by %c16_i32 dim 1 : vector<16x256xf32>, i32 -> vector<16x256xf32>
    %60 = vector.extract_strided_slice %0 {offsets = [7, 0], sizes = [1, 256], strides = [1, 1]} : vector<25x256xf32> to vector<1x256xf32>
    %61 = vector.shape_cast %60 : vector<1x256xf32> to vector<256xf32>
    %62 = vector.shape_cast %61 : vector<256xf32> to vector<1x256xf32>
    %63 = vector.broadcast %62 : vector<1x256xf32> to vector<16x256xf32>
    %64 = arith.mulf %59, %63 : vector<16x256xf32>
    %65 = arith.truncf %64 : vector<16x256xf32> to vector<16x256xbf16>
    %c112 = arith.constant 112 : index
    %c0_12 = arith.constant 0 : index
    %66 = vector.load %arg6[%c112, %c0_12] : memref<400x256xbf16, #tpu.memory_space<vmem>>, vector<16x256xbf16>
    tpu.vector_store %arg6[%c112, %c0_12], %65 {strides = array<i32>} : memref<400x256xbf16, #tpu.memory_space<vmem>>, vector<16x256xbf16>,
    %c15_i32 = arith.constant 15 : i32
    %67 = tpu.dynamic_rotate %2 by %c15_i32 dim 1 : vector<16x256xf32>, i32 -> vector<16x256xf32>
    %68 = vector.extract_strided_slice %0 {offsets = [8, 0], sizes = [1, 256], strides = [1, 1]} : vector<25x256xf32> to vector<1x256xf32>
    %69 = vector.shape_cast %68 : vector<1x256xf32> to vector<256xf32>
    %70 = vector.shape_cast %69 : vector<256xf32> to vector<1x256xf32>
    %71 = vector.broadcast %70 : vector<1x256xf32> to vector<16x256xf32>
    %72 = arith.mulf %67, %71 : vector<16x256xf32>
    %73 = arith.truncf %72 : vector<16x256xf32> to vector<16x256xbf16>
    %c128 = arith.constant 128 : index
    %c0_13 = arith.constant 0 : index
    %74 = vector.load %arg6[%c128, %c0_13] : memref<400x256xbf16, #tpu.memory_space<vmem>>, vector<16x256xbf16>
    tpu.vector_store %arg6[%c128, %c0_13], %73 {strides = array<i32>} : memref<400x256xbf16, #tpu.memory_space<vmem>>, vector<16x256xbf16>,
    %c14_i32 = arith.constant 14 : i32
    %75 = tpu.dynamic_rotate %2 by %c14_i32 dim 1 : vector<16x256xf32>, i32 -> vector<16x256xf32>
    %76 = vector.extract_strided_slice %0 {offsets = [9, 0], sizes = [1, 256], strides = [1, 1]} : vector<25x256xf32> to vector<1x256xf32>
    %77 = vector.shape_cast %76 : vector<1x256xf32> to vector<256xf32>
    %78 = vector.shape_cast %77 : vector<256xf32> to vector<1x256xf32>
    %79 = vector.broadcast %78 : vector<1x256xf32> to vector<16x256xf32>
    %80 = arith.mulf %75, %79 : vector<16x256xf32>
    %81 = arith.truncf %80 : vector<16x256xf32> to vector<16x256xbf16>
    %c144 = arith.constant 144 : index
    %c0_14 = arith.constant 0 : index
    %82 = vector.load %arg6[%c144, %c0_14] : memref<400x256xbf16, #tpu.memory_space<vmem>>, vector<16x256xbf16>
    tpu.vector_store %arg6[%c144, %c0_14], %81 {strides = array<i32>} : memref<400x256xbf16, #tpu.memory_space<vmem>>, vector<16x256xbf16>,
    %c2_i32 = arith.constant 2 : i32
    %83 = tpu.dynamic_rotate %2 by %c2_i32 dim 1 : vector<16x256xf32>, i32 -> vector<16x256xf32>
    %84 = vector.extract_strided_slice %0 {offsets = [10, 0], sizes = [1, 256], strides = [1, 1]} : vector<25x256xf32> to vector<1x256xf32>
    %85 = vector.shape_cast %84 : vector<1x256xf32> to vector<256xf32>
    %86 = vector.shape_cast %85 : vector<256xf32> to vector<1x256xf32>
    %87 = vector.broadcast %86 : vector<1x256xf32> to vector<16x256xf32>
    %88 = arith.mulf %83, %87 : vector<16x256xf32>
    %89 = arith.truncf %88 : vector<16x256xf32> to vector<16x256xbf16>
    %c160 = arith.constant 160 : index
    %c0_15 = arith.constant 0 : index
    %90 = vector.load %arg6[%c160, %c0_15] : memref<400x256xbf16, #tpu.memory_space<vmem>>, vector<16x256xbf16>
    tpu.vector_store %arg6[%c160, %c0_15], %89 {strides = array<i32>} : memref<400x256xbf16, #tpu.memory_space<vmem>>, vector<16x256xbf16>,
    %c1_i32 = arith.constant 1 : i32
    %91 = tpu.dynamic_rotate %2 by %c1_i32 dim 1 : vector<16x256xf32>, i32 -> vector<16x256xf32>
    %92 = vector.extract_strided_slice %0 {offsets = [11, 0], sizes = [1, 256], strides = [1, 1]} : vector<25x256xf32> to vector<1x256xf32>
    %93 = vector.shape_cast %92 : vector<1x256xf32> to vector<256xf32>
    %94 = vector.shape_cast %93 : vector<256xf32> to vector<1x256xf32>
    %95 = vector.broadcast %94 : vector<1x256xf32> to vector<16x256xf32>
    %96 = arith.mulf %91, %95 : vector<16x256xf32>
    %97 = arith.truncf %96 : vector<16x256xf32> to vector<16x256xbf16>
    %c176 = arith.constant 176 : index
    %c0_16 = arith.constant 0 : index
    %98 = vector.load %arg6[%c176, %c0_16] : memref<400x256xbf16, #tpu.memory_space<vmem>>, vector<16x256xbf16>
    tpu.vector_store %arg6[%c176, %c0_16], %97 {strides = array<i32>} : memref<400x256xbf16, #tpu.memory_space<vmem>>, vector<16x256xbf16>,
    %99 = arith.truncf %2 : vector<16x256xf32> to vector<16x256xbf16>
    %c192 = arith.constant 192 : index
    %c0_17 = arith.constant 0 : index
    %100 = vector.load %arg6[%c192, %c0_17] : memref<400x256xbf16, #tpu.memory_space<vmem>>, vector<16x256xbf16>
    tpu.vector_store %arg6[%c192, %c0_17], %99 {strides = array<i32>} : memref<400x256xbf16, #tpu.memory_space<vmem>>, vector<16x256xbf16>,
    %c255_i32 = arith.constant 255 : i32
    %101 = tpu.dynamic_rotate %2 by %c255_i32 dim 1 : vector<16x256xf32>, i32 -> vector<16x256xf32>
    %102 = vector.extract_strided_slice %0 {offsets = [13, 0], sizes = [1, 256], strides = [1, 1]} : vector<25x256xf32> to vector<1x256xf32>
    %103 = vector.shape_cast %102 : vector<1x256xf32> to vector<256xf32>
    %104 = vector.shape_cast %103 : vector<256xf32> to vector<1x256xf32>
    %105 = vector.broadcast %104 : vector<1x256xf32> to vector<16x256xf32>
    %106 = arith.mulf %101, %105 : vector<16x256xf32>
    %107 = arith.truncf %106 : vector<16x256xf32> to vector<16x256xbf16>
    %c208 = arith.constant 208 : index
    %c0_18 = arith.constant 0 : index
    %108 = vector.load %arg6[%c208, %c0_18] : memref<400x256xbf16, #tpu.memory_space<vmem>>, vector<16x256xbf16>
    tpu.vector_store %arg6[%c208, %c0_18], %107 {strides = array<i32>} : memref<400x256xbf16, #tpu.memory_space<vmem>>, vector<16x256xbf16>,
    %c254_i32 = arith.constant 254 : i32
    %109 = tpu.dynamic_rotate %2 by %c254_i32 dim 1 : vector<16x256xf32>, i32 -> vector<16x256xf32>
    %110 = vector.extract_strided_slice %0 {offsets = [14, 0], sizes = [1, 256], strides = [1, 1]} : vector<25x256xf32> to vector<1x256xf32>
    %111 = vector.shape_cast %110 : vector<1x256xf32> to vector<256xf32>
    %112 = vector.shape_cast %111 : vector<256xf32> to vector<1x256xf32>
    %113 = vector.broadcast %112 : vector<1x256xf32> to vector<16x256xf32>
    %114 = arith.mulf %109, %113 : vector<16x256xf32>
    %115 = arith.truncf %114 : vector<16x256xf32> to vector<16x256xbf16>
    %c224 = arith.constant 224 : index
    %c0_19 = arith.constant 0 : index
    %116 = vector.load %arg6[%c224, %c0_19] : memref<400x256xbf16, #tpu.memory_space<vmem>>, vector<16x256xbf16>
    tpu.vector_store %arg6[%c224, %c0_19], %115 {strides = array<i32>} : memref<400x256xbf16, #tpu.memory_space<vmem>>, vector<16x256xbf16>,
    %c242_i32 = arith.constant 242 : i32
    %117 = tpu.dynamic_rotate %2 by %c242_i32 dim 1 : vector<16x256xf32>, i32 -> vector<16x256xf32>
    %118 = vector.extract_strided_slice %0 {offsets = [15, 0], sizes = [1, 256], strides = [1, 1]} : vector<25x256xf32> to vector<1x256xf32>
    %119 = vector.shape_cast %118 : vector<1x256xf32> to vector<256xf32>
    %120 = vector.shape_cast %119 : vector<256xf32> to vector<1x256xf32>
    %121 = vector.broadcast %120 : vector<1x256xf32> to vector<16x256xf32>
    %122 = arith.mulf %117, %121 : vector<16x256xf32>
    %123 = arith.truncf %122 : vector<16x256xf32> to vector<16x256xbf16>
    %c240 = arith.constant 240 : index
    %c0_20 = arith.constant 0 : index
    %124 = vector.load %arg6[%c240, %c0_20] : memref<400x256xbf16, #tpu.memory_space<vmem>>, vector<16x256xbf16>
    tpu.vector_store %arg6[%c240, %c0_20], %123 {strides = array<i32>} : memref<400x256xbf16, #tpu.memory_space<vmem>>, vector<16x256xbf16>,
    %c241_i32 = arith.constant 241 : i32
    %125 = tpu.dynamic_rotate %2 by %c241_i32 dim 1 : vector<16x256xf32>, i32 -> vector<16x256xf32>
    %126 = vector.extract_strided_slice %0 {offsets = [16, 0], sizes = [1, 256], strides = [1, 1]} : vector<25x256xf32> to vector<1x256xf32>
    %127 = vector.shape_cast %126 : vector<1x256xf32> to vector<256xf32>
    %128 = vector.shape_cast %127 : vector<256xf32> to vector<1x256xf32>
    %129 = vector.broadcast %128 : vector<1x256xf32> to vector<16x256xf32>
    %130 = arith.mulf %125, %129 : vector<16x256xf32>
    %131 = arith.truncf %130 : vector<16x256xf32> to vector<16x256xbf16>
    %c256 = arith.constant 256 : index
    %c0_21 = arith.constant 0 : index
    %132 = vector.load %arg6[%c256, %c0_21] : memref<400x256xbf16, #tpu.memory_space<vmem>>, vector<16x256xbf16>
    tpu.vector_store %arg6[%c256, %c0_21], %131 {strides = array<i32>} : memref<400x256xbf16, #tpu.memory_space<vmem>>, vector<16x256xbf16>,
    %c240_i32 = arith.constant 240 : i32
    %133 = tpu.dynamic_rotate %2 by %c240_i32 dim 1 : vector<16x256xf32>, i32 -> vector<16x256xf32>
    %134 = vector.extract_strided_slice %0 {offsets = [17, 0], sizes = [1, 256], strides = [1, 1]} : vector<25x256xf32> to vector<1x256xf32>
    %135 = vector.shape_cast %134 : vector<1x256xf32> to vector<256xf32>
    %136 = vector.shape_cast %135 : vector<256xf32> to vector<1x256xf32>
    %137 = vector.broadcast %136 : vector<1x256xf32> to vector<16x256xf32>
    %138 = arith.mulf %133, %137 : vector<16x256xf32>
    %139 = arith.truncf %138 : vector<16x256xf32> to vector<16x256xbf16>
    %c272 = arith.constant 272 : index
    %c0_22 = arith.constant 0 : index
    %140 = vector.load %arg6[%c272, %c0_22] : memref<400x256xbf16, #tpu.memory_space<vmem>>, vector<16x256xbf16>
    tpu.vector_store %arg6[%c272, %c0_22], %139 {strides = array<i32>} : memref<400x256xbf16, #tpu.memory_space<vmem>>, vector<16x256xbf16>,
    %c239_i32 = arith.constant 239 : i32
    %141 = tpu.dynamic_rotate %2 by %c239_i32 dim 1 : vector<16x256xf32>, i32 -> vector<16x256xf32>
    %142 = vector.extract_strided_slice %0 {offsets = [18, 0], sizes = [1, 256], strides = [1, 1]} : vector<25x256xf32> to vector<1x256xf32>
    %143 = vector.shape_cast %142 : vector<1x256xf32> to vector<256xf32>
    %144 = vector.shape_cast %143 : vector<256xf32> to vector<1x256xf32>
    %145 = vector.broadcast %144 : vector<1x256xf32> to vector<16x256xf32>
    %146 = arith.mulf %141, %145 : vector<16x256xf32>
    %147 = arith.truncf %146 : vector<16x256xf32> to vector<16x256xbf16>
    %c288 = arith.constant 288 : index
    %c0_23 = arith.constant 0 : index
    %148 = vector.load %arg6[%c288, %c0_23] : memref<400x256xbf16, #tpu.memory_space<vmem>>, vector<16x256xbf16>
    tpu.vector_store %arg6[%c288, %c0_23], %147 {strides = array<i32>} : memref<400x256xbf16, #tpu.memory_space<vmem>>, vector<16x256xbf16>,
    %c238_i32 = arith.constant 238 : i32
    %149 = tpu.dynamic_rotate %2 by %c238_i32 dim 1 : vector<16x256xf32>, i32 -> vector<16x256xf32>
    %150 = vector.extract_strided_slice %0 {offsets = [19, 0], sizes = [1, 256], strides = [1, 1]} : vector<25x256xf32> to vector<1x256xf32>
    %151 = vector.shape_cast %150 : vector<1x256xf32> to vector<256xf32>
    %152 = vector.shape_cast %151 : vector<256xf32> to vector<1x256xf32>
    %153 = vector.broadcast %152 : vector<1x256xf32> to vector<16x256xf32>
    %154 = arith.mulf %149, %153 : vector<16x256xf32>
    %155 = arith.truncf %154 : vector<16x256xf32> to vector<16x256xbf16>
    %c304 = arith.constant 304 : index
    %c0_24 = arith.constant 0 : index
    %156 = vector.load %arg6[%c304, %c0_24] : memref<400x256xbf16, #tpu.memory_space<vmem>>, vector<16x256xbf16>
    tpu.vector_store %arg6[%c304, %c0_24], %155 {strides = array<i32>} : memref<400x256xbf16, #tpu.memory_space<vmem>>, vector<16x256xbf16>,
    %c226_i32 = arith.constant 226 : i32
    %157 = tpu.dynamic_rotate %2 by %c226_i32 dim 1 : vector<16x256xf32>, i32 -> vector<16x256xf32>
    %158 = vector.extract_strided_slice %0 {offsets = [20, 0], sizes = [1, 256], strides = [1, 1]} : vector<25x256xf32> to vector<1x256xf32>
    %159 = vector.shape_cast %158 : vector<1x256xf32> to vector<256xf32>
    %160 = vector.shape_cast %159 : vector<256xf32> to vector<1x256xf32>
    %161 = vector.broadcast %160 : vector<1x256xf32> to vector<16x256xf32>
    %162 = arith.mulf %157, %161 : vector<16x256xf32>
    %163 = arith.truncf %162 : vector<16x256xf32> to vector<16x256xbf16>
    %c320 = arith.constant 320 : index
    %c0_25 = arith.constant 0 : index
    %164 = vector.load %arg6[%c320, %c0_25] : memref<400x256xbf16, #tpu.memory_space<vmem>>, vector<16x256xbf16>
    tpu.vector_store %arg6[%c320, %c0_25], %163 {strides = array<i32>} : memref<400x256xbf16, #tpu.memory_space<vmem>>, vector<16x256xbf16>,
    %c225_i32 = arith.constant 225 : i32
    %165 = tpu.dynamic_rotate %2 by %c225_i32 dim 1 : vector<16x256xf32>, i32 -> vector<16x256xf32>
    %166 = vector.extract_strided_slice %0 {offsets = [21, 0], sizes = [1, 256], strides = [1, 1]} : vector<25x256xf32> to vector<1x256xf32>
    %167 = vector.shape_cast %166 : vector<1x256xf32> to vector<256xf32>
    %168 = vector.shape_cast %167 : vector<256xf32> to vector<1x256xf32>
    %169 = vector.broadcast %168 : vector<1x256xf32> to vector<16x256xf32>
    %170 = arith.mulf %165, %169 : vector<16x256xf32>
    %171 = arith.truncf %170 : vector<16x256xf32> to vector<16x256xbf16>
    %c336 = arith.constant 336 : index
    %c0_26 = arith.constant 0 : index
    %172 = vector.load %arg6[%c336, %c0_26] : memref<400x256xbf16, #tpu.memory_space<vmem>>, vector<16x256xbf16>
    tpu.vector_store %arg6[%c336, %c0_26], %171 {strides = array<i32>} : memref<400x256xbf16, #tpu.memory_space<vmem>>, vector<16x256xbf16>,
    %c224_i32 = arith.constant 224 : i32
    %173 = tpu.dynamic_rotate %2 by %c224_i32 dim 1 : vector<16x256xf32>, i32 -> vector<16x256xf32>
    %174 = vector.extract_strided_slice %0 {offsets = [22, 0], sizes = [1, 256], strides = [1, 1]} : vector<25x256xf32> to vector<1x256xf32>
    %175 = vector.shape_cast %174 : vector<1x256xf32> to vector<256xf32>
    %176 = vector.shape_cast %175 : vector<256xf32> to vector<1x256xf32>
    %177 = vector.broadcast %176 : vector<1x256xf32> to vector<16x256xf32>
    %178 = arith.mulf %173, %177 : vector<16x256xf32>
    %179 = arith.truncf %178 : vector<16x256xf32> to vector<16x256xbf16>
    %c352 = arith.constant 352 : index
    %c0_27 = arith.constant 0 : index
    %180 = vector.load %arg6[%c352, %c0_27] : memref<400x256xbf16, #tpu.memory_space<vmem>>, vector<16x256xbf16>
    tpu.vector_store %arg6[%c352, %c0_27], %179 {strides = array<i32>} : memref<400x256xbf16, #tpu.memory_space<vmem>>, vector<16x256xbf16>,
    %c223_i32 = arith.constant 223 : i32
    %181 = tpu.dynamic_rotate %2 by %c223_i32 dim 1 : vector<16x256xf32>, i32 -> vector<16x256xf32>
    %182 = vector.extract_strided_slice %0 {offsets = [23, 0], sizes = [1, 256], strides = [1, 1]} : vector<25x256xf32> to vector<1x256xf32>
    %183 = vector.shape_cast %182 : vector<1x256xf32> to vector<256xf32>
    %184 = vector.shape_cast %183 : vector<256xf32> to vector<1x256xf32>
    %185 = vector.broadcast %184 : vector<1x256xf32> to vector<16x256xf32>
    %186 = arith.mulf %181, %185 : vector<16x256xf32>
    %187 = arith.truncf %186 : vector<16x256xf32> to vector<16x256xbf16>
    %c368 = arith.constant 368 : index
    %c0_28 = arith.constant 0 : index
    %188 = vector.load %arg6[%c368, %c0_28] : memref<400x256xbf16, #tpu.memory_space<vmem>>, vector<16x256xbf16>
    tpu.vector_store %arg6[%c368, %c0_28], %187 {strides = array<i32>} : memref<400x256xbf16, #tpu.memory_space<vmem>>, vector<16x256xbf16>,
    %c222_i32 = arith.constant 222 : i32
    %189 = tpu.dynamic_rotate %2 by %c222_i32 dim 1 : vector<16x256xf32>, i32 -> vector<16x256xf32>
    %190 = vector.extract_strided_slice %0 {offsets = [24, 0], sizes = [1, 256], strides = [1, 1]} : vector<25x256xf32> to vector<1x256xf32>
    %191 = vector.shape_cast %190 : vector<1x256xf32> to vector<256xf32>
    %192 = vector.shape_cast %191 : vector<256xf32> to vector<1x256xf32>
    %193 = vector.broadcast %192 : vector<1x256xf32> to vector<16x256xf32>
    %194 = arith.mulf %189, %193 : vector<16x256xf32>
    %195 = arith.truncf %194 : vector<16x256xf32> to vector<16x256xbf16>
    %c384 = arith.constant 384 : index
    %c0_29 = arith.constant 0 : index
    %196 = vector.load %arg6[%c384, %c0_29] : memref<400x256xbf16, #tpu.memory_space<vmem>>, vector<16x256xbf16>
    tpu.vector_store %arg6[%c384, %c0_29], %195 {strides = array<i32>} : memref<400x256xbf16, #tpu.memory_space<vmem>>, vector<16x256xbf16>,
    %c0_30 = arith.constant 0 : index
    %c0_31 = arith.constant 0 : index
    %c0_32 = arith.constant 0 : index
    %197 = vector.load %arg2[%c0_30, %c0_31, %c0_32] : memref<5x16x400xbf16, #tpu.memory_space<vmem>>, vector<1x16x400xbf16>
    %198 = vector.shape_cast %197 : vector<1x16x400xbf16> to vector<16x400xbf16>
    %c0_33 = arith.constant 0 : index
    %c0_34 = arith.constant 0 : index
    %199 = vector.load %arg6[%c0_33, %c0_34] : memref<400x256xbf16, #tpu.memory_space<vmem>>, vector<400x256xbf16>
    %cst = arith.constant dense<0.000000e+00> : vector<16x256xf32>
    %200 = tpu.matmul %198, %199, %cst {dimension_numbers = #tpu.dot_dimension_numbers<[1], [0], [0], [1], [0, 0, 1, 1], [], []>} : vector<16x400xbf16>, vector<400x256xbf16>, vector<16x256xf32> -> vector<16x256xf32>
    %c0_35 = arith.constant 0 : index
    %c0_36 = arith.constant 0 : index
    %c0_37 = arith.constant 0 : index
    %201 = vector.load %arg3[%c0_35, %c0_36, %c0_37] : memref<5x16x1xf32, #tpu.memory_space<vmem>>, vector<1x16x1xf32>
    %202 = vector.shape_cast %201 : vector<1x16x1xf32> to vector<16x1xf32>
    %203 = vector.broadcast %202 : vector<16x1xf32> to vector<16x256xf32>
    %204 = arith.addf %200, %203 : vector<16x256xf32>
    %cst_38 = arith.constant 0.000000e+00 : f32
    %205 = vector.broadcast %cst_38 : f32 to vector<16x256xf32>
    %206 = arith.cmpf ogt, %204, %205 : vector<16x256xf32>
    %cst_39 = arith.constant 0.00999999977 : f32
    %207 = vector.broadcast %cst_39 : f32 to vector<16x256xf32>
    %208 = arith.mulf %207, %204 : vector<16x256xf32>
    %209 = arith.select %206, %204, %208 : vector<16x256xi1>, vector<16x256xf32>
    %c34_i32_40 = arith.constant 34 : i32
    %210 = tpu.dynamic_rotate %209 by %c34_i32_40 dim 1 : vector<16x256xf32>, i32 -> vector<16x256xf32>
    %211 = vector.extract_strided_slice %0 {offsets = [0, 0], sizes = [1, 256], strides = [1, 1]} : vector<25x256xf32> to vector<1x256xf32>
    %212 = vector.shape_cast %211 : vector<1x256xf32> to vector<256xf32>
    %213 = vector.shape_cast %212 : vector<256xf32> to vector<1x256xf32>
    %214 = vector.broadcast %213 : vector<1x256xf32> to vector<16x256xf32>
    %215 = arith.mulf %210, %214 : vector<16x256xf32>
    %216 = arith.truncf %215 : vector<16x256xf32> to vector<16x256xbf16>
    %c0_41 = arith.constant 0 : index
    %c0_42 = arith.constant 0 : index
    %217 = vector.load %arg6[%c0_41, %c0_42] : memref<400x256xbf16, #tpu.memory_space<vmem>>, vector<16x256xbf16>
    tpu.vector_store %arg6[%c0_41, %c0_42], %216 {strides = array<i32>} : memref<400x256xbf16, #tpu.memory_space<vmem>>, vector<16x256xbf16>,
    %c33_i32_43 = arith.constant 33 : i32
    %218 = tpu.dynamic_rotate %209 by %c33_i32_43 dim 1 : vector<16x256xf32>, i32 -> vector<16x256xf32>
    %219 = vector.extract_strided_slice %0 {offsets = [1, 0], sizes = [1, 256], strides = [1, 1]} : vector<25x256xf32> to vector<1x256xf32>
    %220 = vector.shape_cast %219 : vector<1x256xf32> to vector<256xf32>
    %221 = vector.shape_cast %220 : vector<256xf32> to vector<1x256xf32>
    %222 = vector.broadcast %221 : vector<1x256xf32> to vector<16x256xf32>
    %223 = arith.mulf %218, %222 : vector<16x256xf32>
    %224 = arith.truncf %223 : vector<16x256xf32> to vector<16x256xbf16>
    %c16_44 = arith.constant 16 : index
    %c0_45 = arith.constant 0 : index
    %225 = vector.load %arg6[%c16_44, %c0_45] : memref<400x256xbf16, #tpu.memory_space<vmem>>, vector<16x256xbf16>
    tpu.vector_store %arg6[%c16_44, %c0_45], %224 {strides = array<i32>} : memref<400x256xbf16, #tpu.memory_space<vmem>>, vector<16x256xbf16>,
    %c32_i32_46 = arith.constant 32 : i32
    %226 = tpu.dynamic_rotate %209 by %c32_i32_46 dim 1 : vector<16x256xf32>, i32 -> vector<16x256xf32>
    %227 = vector.extract_strided_slice %0 {offsets = [2, 0], sizes = [1, 256], strides = [1, 1]} : vector<25x256xf32> to vector<1x256xf32>
    %228 = vector.shape_cast %227 : vector<1x256xf32> to vector<256xf32>
    %229 = vector.shape_cast %228 : vector<256xf32> to vector<1x256xf32>
    %230 = vector.broadcast %229 : vector<1x256xf32> to vector<16x256xf32>
    %231 = arith.mulf %226, %230 : vector<16x256xf32>
    %232 = arith.truncf %231 : vector<16x256xf32> to vector<16x256xbf16>
    %c32_47 = arith.constant 32 : index
    %c0_48 = arith.constant 0 : index
    %233 = vector.load %arg6[%c32_47, %c0_48] : memref<400x256xbf16, #tpu.memory_space<vmem>>, vector<16x256xbf16>
    tpu.vector_store %arg6[%c32_47, %c0_48], %232 {strides = array<i32>} : memref<400x256xbf16, #tpu.memory_space<vmem>>, vector<16x256xbf16>,
    %c31_i32_49 = arith.constant 31 : i32
    %234 = tpu.dynamic_rotate %209 by %c31_i32_49 dim 1 : vector<16x256xf32>, i32 -> vector<16x256xf32>
    %235 = vector.extract_strided_slice %0 {offsets = [3, 0], sizes = [1, 256], strides = [1, 1]} : vector<25x256xf32> to vector<1x256xf32>
    %236 = vector.shape_cast %235 : vector<1x256xf32> to vector<256xf32>
    %237 = vector.shape_cast %236 : vector<256xf32> to vector<1x256xf32>
    %238 = vector.broadcast %237 : vector<1x256xf32> to vector<16x256xf32>
    %239 = arith.mulf %234, %238 : vector<16x256xf32>
    %240 = arith.truncf %239 : vector<16x256xf32> to vector<16x256xbf16>
    %c48_50 = arith.constant 48 : index
    %c0_51 = arith.constant 0 : index
    %241 = vector.load %arg6[%c48_50, %c0_51] : memref<400x256xbf16, #tpu.memory_space<vmem>>, vector<16x256xbf16>
    tpu.vector_store %arg6[%c48_50, %c0_51], %240 {strides = array<i32>} : memref<400x256xbf16, #tpu.memory_space<vmem>>, vector<16x256xbf16>,
    %c30_i32_52 = arith.constant 30 : i32
    %242 = tpu.dynamic_rotate %209 by %c30_i32_52 dim 1 : vector<16x256xf32>, i32 -> vector<16x256xf32>
    %243 = vector.extract_strided_slice %0 {offsets = [4, 0], sizes = [1, 256], strides = [1, 1]} : vector<25x256xf32> to vector<1x256xf32>
    %244 = vector.shape_cast %243 : vector<1x256xf32> to vector<256xf32>
    %245 = vector.shape_cast %244 : vector<256xf32> to vector<1x256xf32>
    %246 = vector.broadcast %245 : vector<1x256xf32> to vector<16x256xf32>
    %247 = arith.mulf %242, %246 : vector<16x256xf32>
    %248 = arith.truncf %247 : vector<16x256xf32> to vector<16x256xbf16>
    %c64_53 = arith.constant 64 : index
    %c0_54 = arith.constant 0 : index
    %249 = vector.load %arg6[%c64_53, %c0_54] : memref<400x256xbf16, #tpu.memory_space<vmem>>, vector<16x256xbf16>
    tpu.vector_store %arg6[%c64_53, %c0_54], %248 {strides = array<i32>} : memref<400x256xbf16, #tpu.memory_space<vmem>>, vector<16x256xbf16>,
    %c18_i32_55 = arith.constant 18 : i32
    %250 = tpu.dynamic_rotate %209 by %c18_i32_55 dim 1 : vector<16x256xf32>, i32 -> vector<16x256xf32>
    %251 = vector.extract_strided_slice %0 {offsets = [5, 0], sizes = [1, 256], strides = [1, 1]} : vector<25x256xf32> to vector<1x256xf32>
    %252 = vector.shape_cast %251 : vector<1x256xf32> to vector<256xf32>
    %253 = vector.shape_cast %252 : vector<256xf32> to vector<1x256xf32>
    %254 = vector.broadcast %253 : vector<1x256xf32> to vector<16x256xf32>
    %255 = arith.mulf %250, %254 : vector<16x256xf32>
    %256 = arith.truncf %255 : vector<16x256xf32> to vector<16x256xbf16>
    %c80_56 = arith.constant 80 : index
    %c0_57 = arith.constant 0 : index
    %257 = vector.load %arg6[%c80_56, %c0_57] : memref<400x256xbf16, #tpu.memory_space<vmem>>, vector<16x256xbf16>
    tpu.vector_store %arg6[%c80_56, %c0_57], %256 {strides = array<i32>} : memref<400x256xbf16, #tpu.memory_space<vmem>>, vector<16x256xbf16>,
    %c17_i32_58 = arith.constant 17 : i32
    %258 = tpu.dynamic_rotate %209 by %c17_i32_58 dim 1 : vector<16x256xf32>, i32 -> vector<16x256xf32>
    %259 = vector.extract_strided_slice %0 {offsets = [6, 0], sizes = [1, 256], strides = [1, 1]} : vector<25x256xf32> to vector<1x256xf32>
    %260 = vector.shape_cast %259 : vector<1x256xf32> to vector<256xf32>
    %261 = vector.shape_cast %260 : vector<256xf32> to vector<1x256xf32>
    %262 = vector.broadcast %261 : vector<1x256xf32> to vector<16x256xf32>
    %263 = arith.mulf %258, %262 : vector<16x256xf32>
    %264 = arith.truncf %263 : vector<16x256xf32> to vector<16x256xbf16>
    %c96_59 = arith.constant 96 : index
    %c0_60 = arith.constant 0 : index
    %265 = vector.load %arg6[%c96_59, %c0_60] : memref<400x256xbf16, #tpu.memory_space<vmem>>, vector<16x256xbf16>
    tpu.vector_store %arg6[%c96_59, %c0_60], %264 {strides = array<i32>} : memref<400x256xbf16, #tpu.memory_space<vmem>>, vector<16x256xbf16>,
    %c16_i32_61 = arith.constant 16 : i32
    %266 = tpu.dynamic_rotate %209 by %c16_i32_61 dim 1 : vector<16x256xf32>, i32 -> vector<16x256xf32>
    %267 = vector.extract_strided_slice %0 {offsets = [7, 0], sizes = [1, 256], strides = [1, 1]} : vector<25x256xf32> to vector<1x256xf32>
    %268 = vector.shape_cast %267 : vector<1x256xf32> to vector<256xf32>
    %269 = vector.shape_cast %268 : vector<256xf32> to vector<1x256xf32>
    %270 = vector.broadcast %269 : vector<1x256xf32> to vector<16x256xf32>
    %271 = arith.mulf %266, %270 : vector<16x256xf32>
    %272 = arith.truncf %271 : vector<16x256xf32> to vector<16x256xbf16>
    %c112_62 = arith.constant 112 : index
    %c0_63 = arith.constant 0 : index
    %273 = vector.load %arg6[%c112_62, %c0_63] : memref<400x256xbf16, #tpu.memory_space<vmem>>, vector<16x256xbf16>
    tpu.vector_store %arg6[%c112_62, %c0_63], %272 {strides = array<i32>} : memref<400x256xbf16, #tpu.memory_space<vmem>>, vector<16x256xbf16>,
    %c15_i32_64 = arith.constant 15 : i32
    %274 = tpu.dynamic_rotate %209 by %c15_i32_64 dim 1 : vector<16x256xf32>, i32 -> vector<16x256xf32>
    %275 = vector.extract_strided_slice %0 {offsets = [8, 0], sizes = [1, 256], strides = [1, 1]} : vector<25x256xf32> to vector<1x256xf32>
    %276 = vector.shape_cast %275 : vector<1x256xf32> to vector<256xf32>
    %277 = vector.shape_cast %276 : vector<256xf32> to vector<1x256xf32>
    %278 = vector.broadcast %277 : vector<1x256xf32> to vector<16x256xf32>
    %279 = arith.mulf %274, %278 : vector<16x256xf32>
    %280 = arith.truncf %279 : vector<16x256xf32> to vector<16x256xbf16>
    %c128_65 = arith.constant 128 : index
    %c0_66 = arith.constant 0 : index
    %281 = vector.load %arg6[%c128_65, %c0_66] : memref<400x256xbf16, #tpu.memory_space<vmem>>, vector<16x256xbf16>
    tpu.vector_store %arg6[%c128_65, %c0_66], %280 {strides = array<i32>} : memref<400x256xbf16, #tpu.memory_space<vmem>>, vector<16x256xbf16>,
    %c14_i32_67 = arith.constant 14 : i32
    %282 = tpu.dynamic_rotate %209 by %c14_i32_67 dim 1 : vector<16x256xf32>, i32 -> vector<16x256xf32>
    %283 = vector.extract_strided_slice %0 {offsets = [9, 0], sizes = [1, 256], strides = [1, 1]} : vector<25x256xf32> to vector<1x256xf32>
    %284 = vector.shape_cast %283 : vector<1x256xf32> to vector<256xf32>
    %285 = vector.shape_cast %284 : vector<256xf32> to vector<1x256xf32>
    %286 = vector.broadcast %285 : vector<1x256xf32> to vector<16x256xf32>
    %287 = arith.mulf %282, %286 : vector<16x256xf32>
    %288 = arith.truncf %287 : vector<16x256xf32> to vector<16x256xbf16>
    %c144_68 = arith.constant 144 : index
    %c0_69 = arith.constant 0 : index
    %289 = vector.load %arg6[%c144_68, %c0_69] : memref<400x256xbf16, #tpu.memory_space<vmem>>, vector<16x256xbf16>
    tpu.vector_store %arg6[%c144_68, %c0_69], %288 {strides = array<i32>} : memref<400x256xbf16, #tpu.memory_space<vmem>>, vector<16x256xbf16>,
    %c2_i32_70 = arith.constant 2 : i32
    %290 = tpu.dynamic_rotate %209 by %c2_i32_70 dim 1 : vector<16x256xf32>, i32 -> vector<16x256xf32>
    %291 = vector.extract_strided_slice %0 {offsets = [10, 0], sizes = [1, 256], strides = [1, 1]} : vector<25x256xf32> to vector<1x256xf32>
    %292 = vector.shape_cast %291 : vector<1x256xf32> to vector<256xf32>
    %293 = vector.shape_cast %292 : vector<256xf32> to vector<1x256xf32>
    %294 = vector.broadcast %293 : vector<1x256xf32> to vector<16x256xf32>
    %295 = arith.mulf %290, %294 : vector<16x256xf32>
    %296 = arith.truncf %295 : vector<16x256xf32> to vector<16x256xbf16>
    %c160_71 = arith.constant 160 : index
    %c0_72 = arith.constant 0 : index
    %297 = vector.load %arg6[%c160_71, %c0_72] : memref<400x256xbf16, #tpu.memory_space<vmem>>, vector<16x256xbf16>
    tpu.vector_store %arg6[%c160_71, %c0_72], %296 {strides = array<i32>} : memref<400x256xbf16, #tpu.memory_space<vmem>>, vector<16x256xbf16>,
    %c1_i32_73 = arith.constant 1 : i32
    %298 = tpu.dynamic_rotate %209 by %c1_i32_73 dim 1 : vector<16x256xf32>, i32 -> vector<16x256xf32>
    %299 = vector.extract_strided_slice %0 {offsets = [11, 0], sizes = [1, 256], strides = [1, 1]} : vector<25x256xf32> to vector<1x256xf32>
    %300 = vector.shape_cast %299 : vector<1x256xf32> to vector<256xf32>
    %301 = vector.shape_cast %300 : vector<256xf32> to vector<1x256xf32>
    %302 = vector.broadcast %301 : vector<1x256xf32> to vector<16x256xf32>
    %303 = arith.mulf %298, %302 : vector<16x256xf32>
    %304 = arith.truncf %303 : vector<16x256xf32> to vector<16x256xbf16>
    %c176_74 = arith.constant 176 : index
    %c0_75 = arith.constant 0 : index
    %305 = vector.load %arg6[%c176_74, %c0_75] : memref<400x256xbf16, #tpu.memory_space<vmem>>, vector<16x256xbf16>
    tpu.vector_store %arg6[%c176_74, %c0_75], %304 {strides = array<i32>} : memref<400x256xbf16, #tpu.memory_space<vmem>>, vector<16x256xbf16>,
    %306 = arith.truncf %209 : vector<16x256xf32> to vector<16x256xbf16>
    %c192_76 = arith.constant 192 : index
    %c0_77 = arith.constant 0 : index
    %307 = vector.load %arg6[%c192_76, %c0_77] : memref<400x256xbf16, #tpu.memory_space<vmem>>, vector<16x256xbf16>
    tpu.vector_store %arg6[%c192_76, %c0_77], %306 {strides = array<i32>} : memref<400x256xbf16, #tpu.memory_space<vmem>>, vector<16x256xbf16>,
    %c255_i32_78 = arith.constant 255 : i32
    %308 = tpu.dynamic_rotate %209 by %c255_i32_78 dim 1 : vector<16x256xf32>, i32 -> vector<16x256xf32>
    %309 = vector.extract_strided_slice %0 {offsets = [13, 0], sizes = [1, 256], strides = [1, 1]} : vector<25x256xf32> to vector<1x256xf32>
    %310 = vector.shape_cast %309 : vector<1x256xf32> to vector<256xf32>
    %311 = vector.shape_cast %310 : vector<256xf32> to vector<1x256xf32>
    %312 = vector.broadcast %311 : vector<1x256xf32> to vector<16x256xf32>
    %313 = arith.mulf %308, %312 : vector<16x256xf32>
    %314 = arith.truncf %313 : vector<16x256xf32> to vector<16x256xbf16>
    %c208_79 = arith.constant 208 : index
    %c0_80 = arith.constant 0 : index
    %315 = vector.load %arg6[%c208_79, %c0_80] : memref<400x256xbf16, #tpu.memory_space<vmem>>, vector<16x256xbf16>
    tpu.vector_store %arg6[%c208_79, %c0_80], %314 {strides = array<i32>} : memref<400x256xbf16, #tpu.memory_space<vmem>>, vector<16x256xbf16>,
    %c254_i32_81 = arith.constant 254 : i32
    %316 = tpu.dynamic_rotate %209 by %c254_i32_81 dim 1 : vector<16x256xf32>, i32 -> vector<16x256xf32>
    %317 = vector.extract_strided_slice %0 {offsets = [14, 0], sizes = [1, 256], strides = [1, 1]} : vector<25x256xf32> to vector<1x256xf32>
    %318 = vector.shape_cast %317 : vector<1x256xf32> to vector<256xf32>
    %319 = vector.shape_cast %318 : vector<256xf32> to vector<1x256xf32>
    %320 = vector.broadcast %319 : vector<1x256xf32> to vector<16x256xf32>
    %321 = arith.mulf %316, %320 : vector<16x256xf32>
    %322 = arith.truncf %321 : vector<16x256xf32> to vector<16x256xbf16>
    %c224_82 = arith.constant 224 : index
    %c0_83 = arith.constant 0 : index
    %323 = vector.load %arg6[%c224_82, %c0_83] : memref<400x256xbf16, #tpu.memory_space<vmem>>, vector<16x256xbf16>
    tpu.vector_store %arg6[%c224_82, %c0_83], %322 {strides = array<i32>} : memref<400x256xbf16, #tpu.memory_space<vmem>>, vector<16x256xbf16>,
    %c242_i32_84 = arith.constant 242 : i32
    %324 = tpu.dynamic_rotate %209 by %c242_i32_84 dim 1 : vector<16x256xf32>, i32 -> vector<16x256xf32>
    %325 = vector.extract_strided_slice %0 {offsets = [15, 0], sizes = [1, 256], strides = [1, 1]} : vector<25x256xf32> to vector<1x256xf32>
    %326 = vector.shape_cast %325 : vector<1x256xf32> to vector<256xf32>
    %327 = vector.shape_cast %326 : vector<256xf32> to vector<1x256xf32>
    %328 = vector.broadcast %327 : vector<1x256xf32> to vector<16x256xf32>
    %329 = arith.mulf %324, %328 : vector<16x256xf32>
    %330 = arith.truncf %329 : vector<16x256xf32> to vector<16x256xbf16>
    %c240_85 = arith.constant 240 : index
    %c0_86 = arith.constant 0 : index
    %331 = vector.load %arg6[%c240_85, %c0_86] : memref<400x256xbf16, #tpu.memory_space<vmem>>, vector<16x256xbf16>
    tpu.vector_store %arg6[%c240_85, %c0_86], %330 {strides = array<i32>} : memref<400x256xbf16, #tpu.memory_space<vmem>>, vector<16x256xbf16>,
    %c241_i32_87 = arith.constant 241 : i32
    %332 = tpu.dynamic_rotate %209 by %c241_i32_87 dim 1 : vector<16x256xf32>, i32 -> vector<16x256xf32>
    %333 = vector.extract_strided_slice %0 {offsets = [16, 0], sizes = [1, 256], strides = [1, 1]} : vector<25x256xf32> to vector<1x256xf32>
    %334 = vector.shape_cast %333 : vector<1x256xf32> to vector<256xf32>
    %335 = vector.shape_cast %334 : vector<256xf32> to vector<1x256xf32>
    %336 = vector.broadcast %335 : vector<1x256xf32> to vector<16x256xf32>
    %337 = arith.mulf %332, %336 : vector<16x256xf32>
    %338 = arith.truncf %337 : vector<16x256xf32> to vector<16x256xbf16>
    %c256_88 = arith.constant 256 : index
    %c0_89 = arith.constant 0 : index
    %339 = vector.load %arg6[%c256_88, %c0_89] : memref<400x256xbf16, #tpu.memory_space<vmem>>, vector<16x256xbf16>
    tpu.vector_store %arg6[%c256_88, %c0_89], %338 {strides = array<i32>} : memref<400x256xbf16, #tpu.memory_space<vmem>>, vector<16x256xbf16>,
    %c240_i32_90 = arith.constant 240 : i32
    %340 = tpu.dynamic_rotate %209 by %c240_i32_90 dim 1 : vector<16x256xf32>, i32 -> vector<16x256xf32>
    %341 = vector.extract_strided_slice %0 {offsets = [17, 0], sizes = [1, 256], strides = [1, 1]} : vector<25x256xf32> to vector<1x256xf32>
    %342 = vector.shape_cast %341 : vector<1x256xf32> to vector<256xf32>
    %343 = vector.shape_cast %342 : vector<256xf32> to vector<1x256xf32>
    %344 = vector.broadcast %343 : vector<1x256xf32> to vector<16x256xf32>
    %345 = arith.mulf %340, %344 : vector<16x256xf32>
    %346 = arith.truncf %345 : vector<16x256xf32> to vector<16x256xbf16>
    %c272_91 = arith.constant 272 : index
    %c0_92 = arith.constant 0 : index
    %347 = vector.load %arg6[%c272_91, %c0_92] : memref<400x256xbf16, #tpu.memory_space<vmem>>, vector<16x256xbf16>
    tpu.vector_store %arg6[%c272_91, %c0_92], %346 {strides = array<i32>} : memref<400x256xbf16, #tpu.memory_space<vmem>>, vector<16x256xbf16>,
    %c239_i32_93 = arith.constant 239 : i32
    %348 = tpu.dynamic_rotate %209 by %c239_i32_93 dim 1 : vector<16x256xf32>, i32 -> vector<16x256xf32>
    %349 = vector.extract_strided_slice %0 {offsets = [18, 0], sizes = [1, 256], strides = [1, 1]} : vector<25x256xf32> to vector<1x256xf32>
    %350 = vector.shape_cast %349 : vector<1x256xf32> to vector<256xf32>
    %351 = vector.shape_cast %350 : vector<256xf32> to vector<1x256xf32>
    %352 = vector.broadcast %351 : vector<1x256xf32> to vector<16x256xf32>
    %353 = arith.mulf %348, %352 : vector<16x256xf32>
    %354 = arith.truncf %353 : vector<16x256xf32> to vector<16x256xbf16>
    %c288_94 = arith.constant 288 : index
    %c0_95 = arith.constant 0 : index
    %355 = vector.load %arg6[%c288_94, %c0_95] : memref<400x256xbf16, #tpu.memory_space<vmem>>, vector<16x256xbf16>
    tpu.vector_store %arg6[%c288_94, %c0_95], %354 {strides = array<i32>} : memref<400x256xbf16, #tpu.memory_space<vmem>>, vector<16x256xbf16>,
    %c238_i32_96 = arith.constant 238 : i32
    %356 = tpu.dynamic_rotate %209 by %c238_i32_96 dim 1 : vector<16x256xf32>, i32 -> vector<16x256xf32>
    %357 = vector.extract_strided_slice %0 {offsets = [19, 0], sizes = [1, 256], strides = [1, 1]} : vector<25x256xf32> to vector<1x256xf32>
    %358 = vector.shape_cast %357 : vector<1x256xf32> to vector<256xf32>
    %359 = vector.shape_cast %358 : vector<256xf32> to vector<1x256xf32>
    %360 = vector.broadcast %359 : vector<1x256xf32> to vector<16x256xf32>
    %361 = arith.mulf %356, %360 : vector<16x256xf32>
    %362 = arith.truncf %361 : vector<16x256xf32> to vector<16x256xbf16>
    %c304_97 = arith.constant 304 : index
    %c0_98 = arith.constant 0 : index
    %363 = vector.load %arg6[%c304_97, %c0_98] : memref<400x256xbf16, #tpu.memory_space<vmem>>, vector<16x256xbf16>
    tpu.vector_store %arg6[%c304_97, %c0_98], %362 {strides = array<i32>} : memref<400x256xbf16, #tpu.memory_space<vmem>>, vector<16x256xbf16>,
    %c226_i32_99 = arith.constant 226 : i32
    %364 = tpu.dynamic_rotate %209 by %c226_i32_99 dim 1 : vector<16x256xf32>, i32 -> vector<16x256xf32>
    %365 = vector.extract_strided_slice %0 {offsets = [20, 0], sizes = [1, 256], strides = [1, 1]} : vector<25x256xf32> to vector<1x256xf32>
    %366 = vector.shape_cast %365 : vector<1x256xf32> to vector<256xf32>
    %367 = vector.shape_cast %366 : vector<256xf32> to vector<1x256xf32>
    %368 = vector.broadcast %367 : vector<1x256xf32> to vector<16x256xf32>
    %369 = arith.mulf %364, %368 : vector<16x256xf32>
    %370 = arith.truncf %369 : vector<16x256xf32> to vector<16x256xbf16>
    %c320_100 = arith.constant 320 : index
    %c0_101 = arith.constant 0 : index
    %371 = vector.load %arg6[%c320_100, %c0_101] : memref<400x256xbf16, #tpu.memory_space<vmem>>, vector<16x256xbf16>
    tpu.vector_store %arg6[%c320_100, %c0_101], %370 {strides = array<i32>} : memref<400x256xbf16, #tpu.memory_space<vmem>>, vector<16x256xbf16>,
    %c225_i32_102 = arith.constant 225 : i32
    %372 = tpu.dynamic_rotate %209 by %c225_i32_102 dim 1 : vector<16x256xf32>, i32 -> vector<16x256xf32>
    %373 = vector.extract_strided_slice %0 {offsets = [21, 0], sizes = [1, 256], strides = [1, 1]} : vector<25x256xf32> to vector<1x256xf32>
    %374 = vector.shape_cast %373 : vector<1x256xf32> to vector<256xf32>
    %375 = vector.shape_cast %374 : vector<256xf32> to vector<1x256xf32>
    %376 = vector.broadcast %375 : vector<1x256xf32> to vector<16x256xf32>
    %377 = arith.mulf %372, %376 : vector<16x256xf32>
    %378 = arith.truncf %377 : vector<16x256xf32> to vector<16x256xbf16>
    %c336_103 = arith.constant 336 : index
    %c0_104 = arith.constant 0 : index
    %379 = vector.load %arg6[%c336_103, %c0_104] : memref<400x256xbf16, #tpu.memory_space<vmem>>, vector<16x256xbf16>
    tpu.vector_store %arg6[%c336_103, %c0_104], %378 {strides = array<i32>} : memref<400x256xbf16, #tpu.memory_space<vmem>>, vector<16x256xbf16>,
    %c224_i32_105 = arith.constant 224 : i32
    %380 = tpu.dynamic_rotate %209 by %c224_i32_105 dim 1 : vector<16x256xf32>, i32 -> vector<16x256xf32>
    %381 = vector.extract_strided_slice %0 {offsets = [22, 0], sizes = [1, 256], strides = [1, 1]} : vector<25x256xf32> to vector<1x256xf32>
    %382 = vector.shape_cast %381 : vector<1x256xf32> to vector<256xf32>
    %383 = vector.shape_cast %382 : vector<256xf32> to vector<1x256xf32>
    %384 = vector.broadcast %383 : vector<1x256xf32> to vector<16x256xf32>
    %385 = arith.mulf %380, %384 : vector<16x256xf32>
    %386 = arith.truncf %385 : vector<16x256xf32> to vector<16x256xbf16>
    %c352_106 = arith.constant 352 : index
    %c0_107 = arith.constant 0 : index
    %387 = vector.load %arg6[%c352_106, %c0_107] : memref<400x256xbf16, #tpu.memory_space<vmem>>, vector<16x256xbf16>
    tpu.vector_store %arg6[%c352_106, %c0_107], %386 {strides = array<i32>} : memref<400x256xbf16, #tpu.memory_space<vmem>>, vector<16x256xbf16>,
    %c223_i32_108 = arith.constant 223 : i32
    %388 = tpu.dynamic_rotate %209 by %c223_i32_108 dim 1 : vector<16x256xf32>, i32 -> vector<16x256xf32>
    %389 = vector.extract_strided_slice %0 {offsets = [23, 0], sizes = [1, 256], strides = [1, 1]} : vector<25x256xf32> to vector<1x256xf32>
    %390 = vector.shape_cast %389 : vector<1x256xf32> to vector<256xf32>
    %391 = vector.shape_cast %390 : vector<256xf32> to vector<1x256xf32>
    %392 = vector.broadcast %391 : vector<1x256xf32> to vector<16x256xf32>
    %393 = arith.mulf %388, %392 : vector<16x256xf32>
    %394 = arith.truncf %393 : vector<16x256xf32> to vector<16x256xbf16>
    %c368_109 = arith.constant 368 : index
    %c0_110 = arith.constant 0 : index
    %395 = vector.load %arg6[%c368_109, %c0_110] : memref<400x256xbf16, #tpu.memory_space<vmem>>, vector<16x256xbf16>
    tpu.vector_store %arg6[%c368_109, %c0_110], %394 {strides = array<i32>} : memref<400x256xbf16, #tpu.memory_space<vmem>>, vector<16x256xbf16>,
    %c222_i32_111 = arith.constant 222 : i32
    %396 = tpu.dynamic_rotate %209 by %c222_i32_111 dim 1 : vector<16x256xf32>, i32 -> vector<16x256xf32>
    %397 = vector.extract_strided_slice %0 {offsets = [24, 0], sizes = [1, 256], strides = [1, 1]} : vector<25x256xf32> to vector<1x256xf32>
    %398 = vector.shape_cast %397 : vector<1x256xf32> to vector<256xf32>
    %399 = vector.shape_cast %398 : vector<256xf32> to vector<1x256xf32>
    %400 = vector.broadcast %399 : vector<1x256xf32> to vector<16x256xf32>
    %401 = arith.mulf %396, %400 : vector<16x256xf32>
    %402 = arith.truncf %401 : vector<16x256xf32> to vector<16x256xbf16>
    %c384_112 = arith.constant 384 : index
    %c0_113 = arith.constant 0 : index
    %403 = vector.load %arg6[%c384_112, %c0_113] : memref<400x256xbf16, #tpu.memory_space<vmem>>, vector<16x256xbf16>
    tpu.vector_store %arg6[%c384_112, %c0_113], %402 {strides = array<i32>} : memref<400x256xbf16, #tpu.memory_space<vmem>>, vector<16x256xbf16>,
    %c1 = arith.constant 1 : index
    %c0_114 = arith.constant 0 : index
    %c0_115 = arith.constant 0 : index
    %404 = vector.load %arg2[%c1, %c0_114, %c0_115] : memref<5x16x400xbf16, #tpu.memory_space<vmem>>, vector<1x16x400xbf16>
    %405 = vector.shape_cast %404 : vector<1x16x400xbf16> to vector<16x400xbf16>
    %c0_116 = arith.constant 0 : index
    %c0_117 = arith.constant 0 : index
    %406 = vector.load %arg6[%c0_116, %c0_117] : memref<400x256xbf16, #tpu.memory_space<vmem>>, vector<400x256xbf16>
    %cst_118 = arith.constant dense<0.000000e+00> : vector<16x256xf32>
    %407 = tpu.matmul %405, %406, %cst_118 {dimension_numbers = #tpu.dot_dimension_numbers<[1], [0], [0], [1], [0, 0, 1, 1], [], []>} : vector<16x400xbf16>, vector<400x256xbf16>, vector<16x256xf32> -> vector<16x256xf32>
    %c1_119 = arith.constant 1 : index
    %c0_120 = arith.constant 0 : index
    %c0_121 = arith.constant 0 : index
    %408 = vector.load %arg3[%c1_119, %c0_120, %c0_121] : memref<5x16x1xf32, #tpu.memory_space<vmem>>, vector<1x16x1xf32>
    %409 = vector.shape_cast %408 : vector<1x16x1xf32> to vector<16x1xf32>
    %410 = vector.broadcast %409 : vector<16x1xf32> to vector<16x256xf32>
    %411 = arith.addf %407, %410 : vector<16x256xf32>
    %cst_122 = arith.constant 0.000000e+00 : f32
    %412 = vector.broadcast %cst_122 : f32 to vector<16x256xf32>
    %413 = arith.cmpf ogt, %411, %412 : vector<16x256xf32>
    %cst_123 = arith.constant 0.00999999977 : f32
    %414 = vector.broadcast %cst_123 : f32 to vector<16x256xf32>
    %415 = arith.mulf %414, %411 : vector<16x256xf32>
    %416 = arith.select %413, %411, %415 : vector<16x256xi1>, vector<16x256xf32>
    %c34_i32_124 = arith.constant 34 : i32
    %417 = tpu.dynamic_rotate %416 by %c34_i32_124 dim 1 : vector<16x256xf32>, i32 -> vector<16x256xf32>
    %418 = vector.extract_strided_slice %0 {offsets = [0, 0], sizes = [1, 256], strides = [1, 1]} : vector<25x256xf32> to vector<1x256xf32>
    %419 = vector.shape_cast %418 : vector<1x256xf32> to vector<256xf32>
    %420 = vector.shape_cast %419 : vector<256xf32> to vector<1x256xf32>
    %421 = vector.broadcast %420 : vector<1x256xf32> to vector<16x256xf32>
    %422 = arith.mulf %417, %421 : vector<16x256xf32>
    %423 = arith.truncf %422 : vector<16x256xf32> to vector<16x256xbf16>
    %c0_125 = arith.constant 0 : index
    %c0_126 = arith.constant 0 : index
    %424 = vector.load %arg6[%c0_125, %c0_126] : memref<400x256xbf16, #tpu.memory_space<vmem>>, vector<16x256xbf16>
    tpu.vector_store %arg6[%c0_125, %c0_126], %423 {strides = array<i32>} : memref<400x256xbf16, #tpu.memory_space<vmem>>, vector<16x256xbf16>,
    %c33_i32_127 = arith.constant 33 : i32
    %425 = tpu.dynamic_rotate %416 by %c33_i32_127 dim 1 : vector<16x256xf32>, i32 -> vector<16x256xf32>
    %426 = vector.extract_strided_slice %0 {offsets = [1, 0], sizes = [1, 256], strides = [1, 1]} : vector<25x256xf32> to vector<1x256xf32>
    %427 = vector.shape_cast %426 : vector<1x256xf32> to vector<256xf32>
    %428 = vector.shape_cast %427 : vector<256xf32> to vector<1x256xf32>
    %429 = vector.broadcast %428 : vector<1x256xf32> to vector<16x256xf32>
    %430 = arith.mulf %425, %429 : vector<16x256xf32>
    %431 = arith.truncf %430 : vector<16x256xf32> to vector<16x256xbf16>
    %c16_128 = arith.constant 16 : index
    %c0_129 = arith.constant 0 : index
    %432 = vector.load %arg6[%c16_128, %c0_129] : memref<400x256xbf16, #tpu.memory_space<vmem>>, vector<16x256xbf16>
    tpu.vector_store %arg6[%c16_128, %c0_129], %431 {strides = array<i32>} : memref<400x256xbf16, #tpu.memory_space<vmem>>, vector<16x256xbf16>,
    %c32_i32_130 = arith.constant 32 : i32
    %433 = tpu.dynamic_rotate %416 by %c32_i32_130 dim 1 : vector<16x256xf32>, i32 -> vector<16x256xf32>
    %434 = vector.extract_strided_slice %0 {offsets = [2, 0], sizes = [1, 256], strides = [1, 1]} : vector<25x256xf32> to vector<1x256xf32>
    %435 = vector.shape_cast %434 : vector<1x256xf32> to vector<256xf32>
    %436 = vector.shape_cast %435 : vector<256xf32> to vector<1x256xf32>
    %437 = vector.broadcast %436 : vector<1x256xf32> to vector<16x256xf32>
    %438 = arith.mulf %433, %437 : vector<16x256xf32>
    %439 = arith.truncf %438 : vector<16x256xf32> to vector<16x256xbf16>
    %c32_131 = arith.constant 32 : index
    %c0_132 = arith.constant 0 : index
    %440 = vector.load %arg6[%c32_131, %c0_132] : memref<400x256xbf16, #tpu.memory_space<vmem>>, vector<16x256xbf16>
    tpu.vector_store %arg6[%c32_131, %c0_132], %439 {strides = array<i32>} : memref<400x256xbf16, #tpu.memory_space<vmem>>, vector<16x256xbf16>,
    %c31_i32_133 = arith.constant 31 : i32
    %441 = tpu.dynamic_rotate %416 by %c31_i32_133 dim 1 : vector<16x256xf32>, i32 -> vector<16x256xf32>
    %442 = vector.extract_strided_slice %0 {offsets = [3, 0], sizes = [1, 256], strides = [1, 1]} : vector<25x256xf32> to vector<1x256xf32>
    %443 = vector.shape_cast %442 : vector<1x256xf32> to vector<256xf32>
    %444 = vector.shape_cast %443 : vector<256xf32> to vector<1x256xf32>
    %445 = vector.broadcast %444 : vector<1x256xf32> to vector<16x256xf32>
    %446 = arith.mulf %441, %445 : vector<16x256xf32>
    %447 = arith.truncf %446 : vector<16x256xf32> to vector<16x256xbf16>
    %c48_134 = arith.constant 48 : index
    %c0_135 = arith.constant 0 : index
    %448 = vector.load %arg6[%c48_134, %c0_135] : memref<400x256xbf16, #tpu.memory_space<vmem>>, vector<16x256xbf16>
    tpu.vector_store %arg6[%c48_134, %c0_135], %447 {strides = array<i32>} : memref<400x256xbf16, #tpu.memory_space<vmem>>, vector<16x256xbf16>,
    %c30_i32_136 = arith.constant 30 : i32
    %449 = tpu.dynamic_rotate %416 by %c30_i32_136 dim 1 : vector<16x256xf32>, i32 -> vector<16x256xf32>
    %450 = vector.extract_strided_slice %0 {offsets = [4, 0], sizes = [1, 256], strides = [1, 1]} : vector<25x256xf32> to vector<1x256xf32>
    %451 = vector.shape_cast %450 : vector<1x256xf32> to vector<256xf32>
    %452 = vector.shape_cast %451 : vector<256xf32> to vector<1x256xf32>
    %453 = vector.broadcast %452 : vector<1x256xf32> to vector<16x256xf32>
    %454 = arith.mulf %449, %453 : vector<16x256xf32>
    %455 = arith.truncf %454 : vector<16x256xf32> to vector<16x256xbf16>
    %c64_137 = arith.constant 64 : index
    %c0_138 = arith.constant 0 : index
    %456 = vector.load %arg6[%c64_137, %c0_138] : memref<400x256xbf16, #tpu.memory_space<vmem>>, vector<16x256xbf16>
    tpu.vector_store %arg6[%c64_137, %c0_138], %455 {strides = array<i32>} : memref<400x256xbf16, #tpu.memory_space<vmem>>, vector<16x256xbf16>,
    %c18_i32_139 = arith.constant 18 : i32
    %457 = tpu.dynamic_rotate %416 by %c18_i32_139 dim 1 : vector<16x256xf32>, i32 -> vector<16x256xf32>
    %458 = vector.extract_strided_slice %0 {offsets = [5, 0], sizes = [1, 256], strides = [1, 1]} : vector<25x256xf32> to vector<1x256xf32>
    %459 = vector.shape_cast %458 : vector<1x256xf32> to vector<256xf32>
    %460 = vector.shape_cast %459 : vector<256xf32> to vector<1x256xf32>
    %461 = vector.broadcast %460 : vector<1x256xf32> to vector<16x256xf32>
    %462 = arith.mulf %457, %461 : vector<16x256xf32>
    %463 = arith.truncf %462 : vector<16x256xf32> to vector<16x256xbf16>
    %c80_140 = arith.constant 80 : index
    %c0_141 = arith.constant 0 : index
    %464 = vector.load %arg6[%c80_140, %c0_141] : memref<400x256xbf16, #tpu.memory_space<vmem>>, vector<16x256xbf16>
    tpu.vector_store %arg6[%c80_140, %c0_141], %463 {strides = array<i32>} : memref<400x256xbf16, #tpu.memory_space<vmem>>, vector<16x256xbf16>,
    %c17_i32_142 = arith.constant 17 : i32
    %465 = tpu.dynamic_rotate %416 by %c17_i32_142 dim 1 : vector<16x256xf32>, i32 -> vector<16x256xf32>
    %466 = vector.extract_strided_slice %0 {offsets = [6, 0], sizes = [1, 256], strides = [1, 1]} : vector<25x256xf32> to vector<1x256xf32>
    %467 = vector.shape_cast %466 : vector<1x256xf32> to vector<256xf32>
    %468 = vector.shape_cast %467 : vector<256xf32> to vector<1x256xf32>
    %469 = vector.broadcast %468 : vector<1x256xf32> to vector<16x256xf32>
    %470 = arith.mulf %465, %469 : vector<16x256xf32>
    %471 = arith.truncf %470 : vector<16x256xf32> to vector<16x256xbf16>
    %c96_143 = arith.constant 96 : index
    %c0_144 = arith.constant 0 : index
    %472 = vector.load %arg6[%c96_143, %c0_144] : memref<400x256xbf16, #tpu.memory_space<vmem>>, vector<16x256xbf16>
    tpu.vector_store %arg6[%c96_143, %c0_144], %471 {strides = array<i32>} : memref<400x256xbf16, #tpu.memory_space<vmem>>, vector<16x256xbf16>,
    %c16_i32_145 = arith.constant 16 : i32
    %473 = tpu.dynamic_rotate %416 by %c16_i32_145 dim 1 : vector<16x256xf32>, i32 -> vector<16x256xf32>
    %474 = vector.extract_strided_slice %0 {offsets = [7, 0], sizes = [1, 256], strides = [1, 1]} : vector<25x256xf32> to vector<1x256xf32>
    %475 = vector.shape_cast %474 : vector<1x256xf32> to vector<256xf32>
    %476 = vector.shape_cast %475 : vector<256xf32> to vector<1x256xf32>
    %477 = vector.broadcast %476 : vector<1x256xf32> to vector<16x256xf32>
    %478 = arith.mulf %473, %477 : vector<16x256xf32>
    %479 = arith.truncf %478 : vector<16x256xf32> to vector<16x256xbf16>
    %c112_146 = arith.constant 112 : index
    %c0_147 = arith.constant 0 : index
    %480 = vector.load %arg6[%c112_146, %c0_147] : memref<400x256xbf16, #tpu.memory_space<vmem>>, vector<16x256xbf16>
    tpu.vector_store %arg6[%c112_146, %c0_147], %479 {strides = array<i32>} : memref<400x256xbf16, #tpu.memory_space<vmem>>, vector<16x256xbf16>,
    %c15_i32_148 = arith.constant 15 : i32
    %481 = tpu.dynamic_rotate %416 by %c15_i32_148 dim 1 : vector<16x256xf32>, i32 -> vector<16x256xf32>
    %482 = vector.extract_strided_slice %0 {offsets = [8, 0], sizes = [1, 256], strides = [1, 1]} : vector<25x256xf32> to vector<1x256xf32>
    %483 = vector.shape_cast %482 : vector<1x256xf32> to vector<256xf32>
    %484 = vector.shape_cast %483 : vector<256xf32> to vector<1x256xf32>
    %485 = vector.broadcast %484 : vector<1x256xf32> to vector<16x256xf32>
    %486 = arith.mulf %481, %485 : vector<16x256xf32>
    %487 = arith.truncf %486 : vector<16x256xf32> to vector<16x256xbf16>
    %c128_149 = arith.constant 128 : index
    %c0_150 = arith.constant 0 : index
    %488 = vector.load %arg6[%c128_149, %c0_150] : memref<400x256xbf16, #tpu.memory_space<vmem>>, vector<16x256xbf16>
    tpu.vector_store %arg6[%c128_149, %c0_150], %487 {strides = array<i32>} : memref<400x256xbf16, #tpu.memory_space<vmem>>, vector<16x256xbf16>,
    %c14_i32_151 = arith.constant 14 : i32
    %489 = tpu.dynamic_rotate %416 by %c14_i32_151 dim 1 : vector<16x256xf32>, i32 -> vector<16x256xf32>
    %490 = vector.extract_strided_slice %0 {offsets = [9, 0], sizes = [1, 256], strides = [1, 1]} : vector<25x256xf32> to vector<1x256xf32>
    %491 = vector.shape_cast %490 : vector<1x256xf32> to vector<256xf32>
    %492 = vector.shape_cast %491 : vector<256xf32> to vector<1x256xf32>
    %493 = vector.broadcast %492 : vector<1x256xf32> to vector<16x256xf32>
    %494 = arith.mulf %489, %493 : vector<16x256xf32>
    %495 = arith.truncf %494 : vector<16x256xf32> to vector<16x256xbf16>
    %c144_152 = arith.constant 144 : index
    %c0_153 = arith.constant 0 : index
    %496 = vector.load %arg6[%c144_152, %c0_153] : memref<400x256xbf16, #tpu.memory_space<vmem>>, vector<16x256xbf16>
    tpu.vector_store %arg6[%c144_152, %c0_153], %495 {strides = array<i32>} : memref<400x256xbf16, #tpu.memory_space<vmem>>, vector<16x256xbf16>,
    %c2_i32_154 = arith.constant 2 : i32
    %497 = tpu.dynamic_rotate %416 by %c2_i32_154 dim 1 : vector<16x256xf32>, i32 -> vector<16x256xf32>
    %498 = vector.extract_strided_slice %0 {offsets = [10, 0], sizes = [1, 256], strides = [1, 1]} : vector<25x256xf32> to vector<1x256xf32>
    %499 = vector.shape_cast %498 : vector<1x256xf32> to vector<256xf32>
    %500 = vector.shape_cast %499 : vector<256xf32> to vector<1x256xf32>
    %501 = vector.broadcast %500 : vector<1x256xf32> to vector<16x256xf32>
    %502 = arith.mulf %497, %501 : vector<16x256xf32>
    %503 = arith.truncf %502 : vector<16x256xf32> to vector<16x256xbf16>
    %c160_155 = arith.constant 160 : index
    %c0_156 = arith.constant 0 : index
    %504 = vector.load %arg6[%c160_155, %c0_156] : memref<400x256xbf16, #tpu.memory_space<vmem>>, vector<16x256xbf16>
    tpu.vector_store %arg6[%c160_155, %c0_156], %503 {strides = array<i32>} : memref<400x256xbf16, #tpu.memory_space<vmem>>, vector<16x256xbf16>,
    %c1_i32_157 = arith.constant 1 : i32
    %505 = tpu.dynamic_rotate %416 by %c1_i32_157 dim 1 : vector<16x256xf32>, i32 -> vector<16x256xf32>
    %506 = vector.extract_strided_slice %0 {offsets = [11, 0], sizes = [1, 256], strides = [1, 1]} : vector<25x256xf32> to vector<1x256xf32>
    %507 = vector.shape_cast %506 : vector<1x256xf32> to vector<256xf32>
    %508 = vector.shape_cast %507 : vector<256xf32> to vector<1x256xf32>
    %509 = vector.broadcast %508 : vector<1x256xf32> to vector<16x256xf32>
    %510 = arith.mulf %505, %509 : vector<16x256xf32>
    %511 = arith.truncf %510 : vector<16x256xf32> to vector<16x256xbf16>
    %c176_158 = arith.constant 176 : index
    %c0_159 = arith.constant 0 : index
    %512 = vector.load %arg6[%c176_158, %c0_159] : memref<400x256xbf16, #tpu.memory_space<vmem>>, vector<16x256xbf16>
    tpu.vector_store %arg6[%c176_158, %c0_159], %511 {strides = array<i32>} : memref<400x256xbf16, #tpu.memory_space<vmem>>, vector<16x256xbf16>,
    %513 = arith.truncf %416 : vector<16x256xf32> to vector<16x256xbf16>
    %c192_160 = arith.constant 192 : index
    %c0_161 = arith.constant 0 : index
    %514 = vector.load %arg6[%c192_160, %c0_161] : memref<400x256xbf16, #tpu.memory_space<vmem>>, vector<16x256xbf16>
    tpu.vector_store %arg6[%c192_160, %c0_161], %513 {strides = array<i32>} : memref<400x256xbf16, #tpu.memory_space<vmem>>, vector<16x256xbf16>,
    %c255_i32_162 = arith.constant 255 : i32
    %515 = tpu.dynamic_rotate %416 by %c255_i32_162 dim 1 : vector<16x256xf32>, i32 -> vector<16x256xf32>
    %516 = vector.extract_strided_slice %0 {offsets = [13, 0], sizes = [1, 256], strides = [1, 1]} : vector<25x256xf32> to vector<1x256xf32>
    %517 = vector.shape_cast %516 : vector<1x256xf32> to vector<256xf32>
    %518 = vector.shape_cast %517 : vector<256xf32> to vector<1x256xf32>
    %519 = vector.broadcast %518 : vector<1x256xf32> to vector<16x256xf32>
    %520 = arith.mulf %515, %519 : vector<16x256xf32>
    %521 = arith.truncf %520 : vector<16x256xf32> to vector<16x256xbf16>
    %c208_163 = arith.constant 208 : index
    %c0_164 = arith.constant 0 : index
    %522 = vector.load %arg6[%c208_163, %c0_164] : memref<400x256xbf16, #tpu.memory_space<vmem>>, vector<16x256xbf16>
    tpu.vector_store %arg6[%c208_163, %c0_164], %521 {strides = array<i32>} : memref<400x256xbf16, #tpu.memory_space<vmem>>, vector<16x256xbf16>,
    %c254_i32_165 = arith.constant 254 : i32
    %523 = tpu.dynamic_rotate %416 by %c254_i32_165 dim 1 : vector<16x256xf32>, i32 -> vector<16x256xf32>
    %524 = vector.extract_strided_slice %0 {offsets = [14, 0], sizes = [1, 256], strides = [1, 1]} : vector<25x256xf32> to vector<1x256xf32>
    %525 = vector.shape_cast %524 : vector<1x256xf32> to vector<256xf32>
    %526 = vector.shape_cast %525 : vector<256xf32> to vector<1x256xf32>
    %527 = vector.broadcast %526 : vector<1x256xf32> to vector<16x256xf32>
    %528 = arith.mulf %523, %527 : vector<16x256xf32>
    %529 = arith.truncf %528 : vector<16x256xf32> to vector<16x256xbf16>
    %c224_166 = arith.constant 224 : index
    %c0_167 = arith.constant 0 : index
    %530 = vector.load %arg6[%c224_166, %c0_167] : memref<400x256xbf16, #tpu.memory_space<vmem>>, vector<16x256xbf16>
    tpu.vector_store %arg6[%c224_166, %c0_167], %529 {strides = array<i32>} : memref<400x256xbf16, #tpu.memory_space<vmem>>, vector<16x256xbf16>,
    %c242_i32_168 = arith.constant 242 : i32
    %531 = tpu.dynamic_rotate %416 by %c242_i32_168 dim 1 : vector<16x256xf32>, i32 -> vector<16x256xf32>
    %532 = vector.extract_strided_slice %0 {offsets = [15, 0], sizes = [1, 256], strides = [1, 1]} : vector<25x256xf32> to vector<1x256xf32>
    %533 = vector.shape_cast %532 : vector<1x256xf32> to vector<256xf32>
    %534 = vector.shape_cast %533 : vector<256xf32> to vector<1x256xf32>
    %535 = vector.broadcast %534 : vector<1x256xf32> to vector<16x256xf32>
    %536 = arith.mulf %531, %535 : vector<16x256xf32>
    %537 = arith.truncf %536 : vector<16x256xf32> to vector<16x256xbf16>
    %c240_169 = arith.constant 240 : index
    %c0_170 = arith.constant 0 : index
    %538 = vector.load %arg6[%c240_169, %c0_170] : memref<400x256xbf16, #tpu.memory_space<vmem>>, vector<16x256xbf16>
    tpu.vector_store %arg6[%c240_169, %c0_170], %537 {strides = array<i32>} : memref<400x256xbf16, #tpu.memory_space<vmem>>, vector<16x256xbf16>,
    %c241_i32_171 = arith.constant 241 : i32
    %539 = tpu.dynamic_rotate %416 by %c241_i32_171 dim 1 : vector<16x256xf32>, i32 -> vector<16x256xf32>
    %540 = vector.extract_strided_slice %0 {offsets = [16, 0], sizes = [1, 256], strides = [1, 1]} : vector<25x256xf32> to vector<1x256xf32>
    %541 = vector.shape_cast %540 : vector<1x256xf32> to vector<256xf32>
    %542 = vector.shape_cast %541 : vector<256xf32> to vector<1x256xf32>
    %543 = vector.broadcast %542 : vector<1x256xf32> to vector<16x256xf32>
    %544 = arith.mulf %539, %543 : vector<16x256xf32>
    %545 = arith.truncf %544 : vector<16x256xf32> to vector<16x256xbf16>
    %c256_172 = arith.constant 256 : index
    %c0_173 = arith.constant 0 : index
    %546 = vector.load %arg6[%c256_172, %c0_173] : memref<400x256xbf16, #tpu.memory_space<vmem>>, vector<16x256xbf16>
    tpu.vector_store %arg6[%c256_172, %c0_173], %545 {strides = array<i32>} : memref<400x256xbf16, #tpu.memory_space<vmem>>, vector<16x256xbf16>,
    %c240_i32_174 = arith.constant 240 : i32
    %547 = tpu.dynamic_rotate %416 by %c240_i32_174 dim 1 : vector<16x256xf32>, i32 -> vector<16x256xf32>
    %548 = vector.extract_strided_slice %0 {offsets = [17, 0], sizes = [1, 256], strides = [1, 1]} : vector<25x256xf32> to vector<1x256xf32>
    %549 = vector.shape_cast %548 : vector<1x256xf32> to vector<256xf32>
    %550 = vector.shape_cast %549 : vector<256xf32> to vector<1x256xf32>
    %551 = vector.broadcast %550 : vector<1x256xf32> to vector<16x256xf32>
    %552 = arith.mulf %547, %551 : vector<16x256xf32>
    %553 = arith.truncf %552 : vector<16x256xf32> to vector<16x256xbf16>
    %c272_175 = arith.constant 272 : index
    %c0_176 = arith.constant 0 : index
    %554 = vector.load %arg6[%c272_175, %c0_176] : memref<400x256xbf16, #tpu.memory_space<vmem>>, vector<16x256xbf16>
    tpu.vector_store %arg6[%c272_175, %c0_176], %553 {strides = array<i32>} : memref<400x256xbf16, #tpu.memory_space<vmem>>, vector<16x256xbf16>,
    %c239_i32_177 = arith.constant 239 : i32
    %555 = tpu.dynamic_rotate %416 by %c239_i32_177 dim 1 : vector<16x256xf32>, i32 -> vector<16x256xf32>
    %556 = vector.extract_strided_slice %0 {offsets = [18, 0], sizes = [1, 256], strides = [1, 1]} : vector<25x256xf32> to vector<1x256xf32>
    %557 = vector.shape_cast %556 : vector<1x256xf32> to vector<256xf32>
    %558 = vector.shape_cast %557 : vector<256xf32> to vector<1x256xf32>
    %559 = vector.broadcast %558 : vector<1x256xf32> to vector<16x256xf32>
    %560 = arith.mulf %555, %559 : vector<16x256xf32>
    %561 = arith.truncf %560 : vector<16x256xf32> to vector<16x256xbf16>
    %c288_178 = arith.constant 288 : index
    %c0_179 = arith.constant 0 : index
    %562 = vector.load %arg6[%c288_178, %c0_179] : memref<400x256xbf16, #tpu.memory_space<vmem>>, vector<16x256xbf16>
    tpu.vector_store %arg6[%c288_178, %c0_179], %561 {strides = array<i32>} : memref<400x256xbf16, #tpu.memory_space<vmem>>, vector<16x256xbf16>,
    %c238_i32_180 = arith.constant 238 : i32
    %563 = tpu.dynamic_rotate %416 by %c238_i32_180 dim 1 : vector<16x256xf32>, i32 -> vector<16x256xf32>
    %564 = vector.extract_strided_slice %0 {offsets = [19, 0], sizes = [1, 256], strides = [1, 1]} : vector<25x256xf32> to vector<1x256xf32>
    %565 = vector.shape_cast %564 : vector<1x256xf32> to vector<256xf32>
    %566 = vector.shape_cast %565 : vector<256xf32> to vector<1x256xf32>
    %567 = vector.broadcast %566 : vector<1x256xf32> to vector<16x256xf32>
    %568 = arith.mulf %563, %567 : vector<16x256xf32>
    %569 = arith.truncf %568 : vector<16x256xf32> to vector<16x256xbf16>
    %c304_181 = arith.constant 304 : index
    %c0_182 = arith.constant 0 : index
    %570 = vector.load %arg6[%c304_181, %c0_182] : memref<400x256xbf16, #tpu.memory_space<vmem>>, vector<16x256xbf16>
    tpu.vector_store %arg6[%c304_181, %c0_182], %569 {strides = array<i32>} : memref<400x256xbf16, #tpu.memory_space<vmem>>, vector<16x256xbf16>,
    %c226_i32_183 = arith.constant 226 : i32
    %571 = tpu.dynamic_rotate %416 by %c226_i32_183 dim 1 : vector<16x256xf32>, i32 -> vector<16x256xf32>
    %572 = vector.extract_strided_slice %0 {offsets = [20, 0], sizes = [1, 256], strides = [1, 1]} : vector<25x256xf32> to vector<1x256xf32>
    %573 = vector.shape_cast %572 : vector<1x256xf32> to vector<256xf32>
    %574 = vector.shape_cast %573 : vector<256xf32> to vector<1x256xf32>
    %575 = vector.broadcast %574 : vector<1x256xf32> to vector<16x256xf32>
    %576 = arith.mulf %571, %575 : vector<16x256xf32>
    %577 = arith.truncf %576 : vector<16x256xf32> to vector<16x256xbf16>
    %c320_184 = arith.constant 320 : index
    %c0_185 = arith.constant 0 : index
    %578 = vector.load %arg6[%c320_184, %c0_185] : memref<400x256xbf16, #tpu.memory_space<vmem>>, vector<16x256xbf16>
    tpu.vector_store %arg6[%c320_184, %c0_185], %577 {strides = array<i32>} : memref<400x256xbf16, #tpu.memory_space<vmem>>, vector<16x256xbf16>,
    %c225_i32_186 = arith.constant 225 : i32
    %579 = tpu.dynamic_rotate %416 by %c225_i32_186 dim 1 : vector<16x256xf32>, i32 -> vector<16x256xf32>
    %580 = vector.extract_strided_slice %0 {offsets = [21, 0], sizes = [1, 256], strides = [1, 1]} : vector<25x256xf32> to vector<1x256xf32>
    %581 = vector.shape_cast %580 : vector<1x256xf32> to vector<256xf32>
    %582 = vector.shape_cast %581 : vector<256xf32> to vector<1x256xf32>
    %583 = vector.broadcast %582 : vector<1x256xf32> to vector<16x256xf32>
    %584 = arith.mulf %579, %583 : vector<16x256xf32>
    %585 = arith.truncf %584 : vector<16x256xf32> to vector<16x256xbf16>
    %c336_187 = arith.constant 336 : index
    %c0_188 = arith.constant 0 : index
    %586 = vector.load %arg6[%c336_187, %c0_188] : memref<400x256xbf16, #tpu.memory_space<vmem>>, vector<16x256xbf16>
    tpu.vector_store %arg6[%c336_187, %c0_188], %585 {strides = array<i32>} : memref<400x256xbf16, #tpu.memory_space<vmem>>, vector<16x256xbf16>,
    %c224_i32_189 = arith.constant 224 : i32
    %587 = tpu.dynamic_rotate %416 by %c224_i32_189 dim 1 : vector<16x256xf32>, i32 -> vector<16x256xf32>
    %588 = vector.extract_strided_slice %0 {offsets = [22, 0], sizes = [1, 256], strides = [1, 1]} : vector<25x256xf32> to vector<1x256xf32>
    %589 = vector.shape_cast %588 : vector<1x256xf32> to vector<256xf32>
    %590 = vector.shape_cast %589 : vector<256xf32> to vector<1x256xf32>
    %591 = vector.broadcast %590 : vector<1x256xf32> to vector<16x256xf32>
    %592 = arith.mulf %587, %591 : vector<16x256xf32>
    %593 = arith.truncf %592 : vector<16x256xf32> to vector<16x256xbf16>
    %c352_190 = arith.constant 352 : index
    %c0_191 = arith.constant 0 : index
    %594 = vector.load %arg6[%c352_190, %c0_191] : memref<400x256xbf16, #tpu.memory_space<vmem>>, vector<16x256xbf16>
    tpu.vector_store %arg6[%c352_190, %c0_191], %593 {strides = array<i32>} : memref<400x256xbf16, #tpu.memory_space<vmem>>, vector<16x256xbf16>,
    %c223_i32_192 = arith.constant 223 : i32
    %595 = tpu.dynamic_rotate %416 by %c223_i32_192 dim 1 : vector<16x256xf32>, i32 -> vector<16x256xf32>
    %596 = vector.extract_strided_slice %0 {offsets = [23, 0], sizes = [1, 256], strides = [1, 1]} : vector<25x256xf32> to vector<1x256xf32>
    %597 = vector.shape_cast %596 : vector<1x256xf32> to vector<256xf32>
    %598 = vector.shape_cast %597 : vector<256xf32> to vector<1x256xf32>
    %599 = vector.broadcast %598 : vector<1x256xf32> to vector<16x256xf32>
    %600 = arith.mulf %595, %599 : vector<16x256xf32>
    %601 = arith.truncf %600 : vector<16x256xf32> to vector<16x256xbf16>
    %c368_193 = arith.constant 368 : index
    %c0_194 = arith.constant 0 : index
    %602 = vector.load %arg6[%c368_193, %c0_194] : memref<400x256xbf16, #tpu.memory_space<vmem>>, vector<16x256xbf16>
    tpu.vector_store %arg6[%c368_193, %c0_194], %601 {strides = array<i32>} : memref<400x256xbf16, #tpu.memory_space<vmem>>, vector<16x256xbf16>,
    %c222_i32_195 = arith.constant 222 : i32
    %603 = tpu.dynamic_rotate %416 by %c222_i32_195 dim 1 : vector<16x256xf32>, i32 -> vector<16x256xf32>
    %604 = vector.extract_strided_slice %0 {offsets = [24, 0], sizes = [1, 256], strides = [1, 1]} : vector<25x256xf32> to vector<1x256xf32>
    %605 = vector.shape_cast %604 : vector<1x256xf32> to vector<256xf32>
    %606 = vector.shape_cast %605 : vector<256xf32> to vector<1x256xf32>
    %607 = vector.broadcast %606 : vector<1x256xf32> to vector<16x256xf32>
    %608 = arith.mulf %603, %607 : vector<16x256xf32>
    %609 = arith.truncf %608 : vector<16x256xf32> to vector<16x256xbf16>
    %c384_196 = arith.constant 384 : index
    %c0_197 = arith.constant 0 : index
    %610 = vector.load %arg6[%c384_196, %c0_197] : memref<400x256xbf16, #tpu.memory_space<vmem>>, vector<16x256xbf16>
    tpu.vector_store %arg6[%c384_196, %c0_197], %609 {strides = array<i32>} : memref<400x256xbf16, #tpu.memory_space<vmem>>, vector<16x256xbf16>,
    %c2 = arith.constant 2 : index
    %c0_198 = arith.constant 0 : index
    %c0_199 = arith.constant 0 : index
    %611 = vector.load %arg2[%c2, %c0_198, %c0_199] : memref<5x16x400xbf16, #tpu.memory_space<vmem>>, vector<1x16x400xbf16>
    %612 = vector.shape_cast %611 : vector<1x16x400xbf16> to vector<16x400xbf16>
    %c0_200 = arith.constant 0 : index
    %c0_201 = arith.constant 0 : index
    %613 = vector.load %arg6[%c0_200, %c0_201] : memref<400x256xbf16, #tpu.memory_space<vmem>>, vector<400x256xbf16>
    %cst_202 = arith.constant dense<0.000000e+00> : vector<16x256xf32>
    %614 = tpu.matmul %612, %613, %cst_202 {dimension_numbers = #tpu.dot_dimension_numbers<[1], [0], [0], [1], [0, 0, 1, 1], [], []>} : vector<16x400xbf16>, vector<400x256xbf16>, vector<16x256xf32> -> vector<16x256xf32>
    %c2_203 = arith.constant 2 : index
    %c0_204 = arith.constant 0 : index
    %c0_205 = arith.constant 0 : index
    %615 = vector.load %arg3[%c2_203, %c0_204, %c0_205] : memref<5x16x1xf32, #tpu.memory_space<vmem>>, vector<1x16x1xf32>
    %616 = vector.shape_cast %615 : vector<1x16x1xf32> to vector<16x1xf32>
    %617 = vector.broadcast %616 : vector<16x1xf32> to vector<16x256xf32>
    %618 = arith.addf %614, %617 : vector<16x256xf32>
    %cst_206 = arith.constant 0.000000e+00 : f32
    %619 = vector.broadcast %cst_206 : f32 to vector<16x256xf32>
    %620 = arith.cmpf ogt, %618, %619 : vector<16x256xf32>
    %cst_207 = arith.constant 0.00999999977 : f32
    %621 = vector.broadcast %cst_207 : f32 to vector<16x256xf32>
    %622 = arith.mulf %621, %618 : vector<16x256xf32>
    %623 = arith.select %620, %618, %622 : vector<16x256xi1>, vector<16x256xf32>
    %c34_i32_208 = arith.constant 34 : i32
    %624 = tpu.dynamic_rotate %623 by %c34_i32_208 dim 1 : vector<16x256xf32>, i32 -> vector<16x256xf32>
    %625 = vector.extract_strided_slice %0 {offsets = [0, 0], sizes = [1, 256], strides = [1, 1]} : vector<25x256xf32> to vector<1x256xf32>
    %626 = vector.shape_cast %625 : vector<1x256xf32> to vector<256xf32>
    %627 = vector.shape_cast %626 : vector<256xf32> to vector<1x256xf32>
    %628 = vector.broadcast %627 : vector<1x256xf32> to vector<16x256xf32>
    %629 = arith.mulf %624, %628 : vector<16x256xf32>
    %630 = arith.truncf %629 : vector<16x256xf32> to vector<16x256xbf16>
    %c0_209 = arith.constant 0 : index
    %c0_210 = arith.constant 0 : index
    %631 = vector.load %arg6[%c0_209, %c0_210] : memref<400x256xbf16, #tpu.memory_space<vmem>>, vector<16x256xbf16>
    tpu.vector_store %arg6[%c0_209, %c0_210], %630 {strides = array<i32>} : memref<400x256xbf16, #tpu.memory_space<vmem>>, vector<16x256xbf16>,
    %c33_i32_211 = arith.constant 33 : i32
    %632 = tpu.dynamic_rotate %623 by %c33_i32_211 dim 1 : vector<16x256xf32>, i32 -> vector<16x256xf32>
    %633 = vector.extract_strided_slice %0 {offsets = [1, 0], sizes = [1, 256], strides = [1, 1]} : vector<25x256xf32> to vector<1x256xf32>
    %634 = vector.shape_cast %633 : vector<1x256xf32> to vector<256xf32>
    %635 = vector.shape_cast %634 : vector<256xf32> to vector<1x256xf32>
    %636 = vector.broadcast %635 : vector<1x256xf32> to vector<16x256xf32>
    %637 = arith.mulf %632, %636 : vector<16x256xf32>
    %638 = arith.truncf %637 : vector<16x256xf32> to vector<16x256xbf16>
    %c16_212 = arith.constant 16 : index
    %c0_213 = arith.constant 0 : index
    %639 = vector.load %arg6[%c16_212, %c0_213] : memref<400x256xbf16, #tpu.memory_space<vmem>>, vector<16x256xbf16>
    tpu.vector_store %arg6[%c16_212, %c0_213], %638 {strides = array<i32>} : memref<400x256xbf16, #tpu.memory_space<vmem>>, vector<16x256xbf16>,
    %c32_i32_214 = arith.constant 32 : i32
    %640 = tpu.dynamic_rotate %623 by %c32_i32_214 dim 1 : vector<16x256xf32>, i32 -> vector<16x256xf32>
    %641 = vector.extract_strided_slice %0 {offsets = [2, 0], sizes = [1, 256], strides = [1, 1]} : vector<25x256xf32> to vector<1x256xf32>
    %642 = vector.shape_cast %641 : vector<1x256xf32> to vector<256xf32>
    %643 = vector.shape_cast %642 : vector<256xf32> to vector<1x256xf32>
    %644 = vector.broadcast %643 : vector<1x256xf32> to vector<16x256xf32>
    %645 = arith.mulf %640, %644 : vector<16x256xf32>
    %646 = arith.truncf %645 : vector<16x256xf32> to vector<16x256xbf16>
    %c32_215 = arith.constant 32 : index
    %c0_216 = arith.constant 0 : index
    %647 = vector.load %arg6[%c32_215, %c0_216] : memref<400x256xbf16, #tpu.memory_space<vmem>>, vector<16x256xbf16>
    tpu.vector_store %arg6[%c32_215, %c0_216], %646 {strides = array<i32>} : memref<400x256xbf16, #tpu.memory_space<vmem>>, vector<16x256xbf16>,
    %c31_i32_217 = arith.constant 31 : i32
    %648 = tpu.dynamic_rotate %623 by %c31_i32_217 dim 1 : vector<16x256xf32>, i32 -> vector<16x256xf32>
    %649 = vector.extract_strided_slice %0 {offsets = [3, 0], sizes = [1, 256], strides = [1, 1]} : vector<25x256xf32> to vector<1x256xf32>
    %650 = vector.shape_cast %649 : vector<1x256xf32> to vector<256xf32>
    %651 = vector.shape_cast %650 : vector<256xf32> to vector<1x256xf32>
    %652 = vector.broadcast %651 : vector<1x256xf32> to vector<16x256xf32>
    %653 = arith.mulf %648, %652 : vector<16x256xf32>
    %654 = arith.truncf %653 : vector<16x256xf32> to vector<16x256xbf16>
    %c48_218 = arith.constant 48 : index
    %c0_219 = arith.constant 0 : index
    %655 = vector.load %arg6[%c48_218, %c0_219] : memref<400x256xbf16, #tpu.memory_space<vmem>>, vector<16x256xbf16>
    tpu.vector_store %arg6[%c48_218, %c0_219], %654 {strides = array<i32>} : memref<400x256xbf16, #tpu.memory_space<vmem>>, vector<16x256xbf16>,
    %c30_i32_220 = arith.constant 30 : i32
    %656 = tpu.dynamic_rotate %623 by %c30_i32_220 dim 1 : vector<16x256xf32>, i32 -> vector<16x256xf32>
    %657 = vector.extract_strided_slice %0 {offsets = [4, 0], sizes = [1, 256], strides = [1, 1]} : vector<25x256xf32> to vector<1x256xf32>
    %658 = vector.shape_cast %657 : vector<1x256xf32> to vector<256xf32>
    %659 = vector.shape_cast %658 : vector<256xf32> to vector<1x256xf32>
    %660 = vector.broadcast %659 : vector<1x256xf32> to vector<16x256xf32>
    %661 = arith.mulf %656, %660 : vector<16x256xf32>
    %662 = arith.truncf %661 : vector<16x256xf32> to vector<16x256xbf16>
    %c64_221 = arith.constant 64 : index
    %c0_222 = arith.constant 0 : index
    %663 = vector.load %arg6[%c64_221, %c0_222] : memref<400x256xbf16, #tpu.memory_space<vmem>>, vector<16x256xbf16>
    tpu.vector_store %arg6[%c64_221, %c0_222], %662 {strides = array<i32>} : memref<400x256xbf16, #tpu.memory_space<vmem>>, vector<16x256xbf16>,
    %c18_i32_223 = arith.constant 18 : i32
    %664 = tpu.dynamic_rotate %623 by %c18_i32_223 dim 1 : vector<16x256xf32>, i32 -> vector<16x256xf32>
    %665 = vector.extract_strided_slice %0 {offsets = [5, 0], sizes = [1, 256], strides = [1, 1]} : vector<25x256xf32> to vector<1x256xf32>
    %666 = vector.shape_cast %665 : vector<1x256xf32> to vector<256xf32>
    %667 = vector.shape_cast %666 : vector<256xf32> to vector<1x256xf32>
    %668 = vector.broadcast %667 : vector<1x256xf32> to vector<16x256xf32>
    %669 = arith.mulf %664, %668 : vector<16x256xf32>
    %670 = arith.truncf %669 : vector<16x256xf32> to vector<16x256xbf16>
    %c80_224 = arith.constant 80 : index
    %c0_225 = arith.constant 0 : index
    %671 = vector.load %arg6[%c80_224, %c0_225] : memref<400x256xbf16, #tpu.memory_space<vmem>>, vector<16x256xbf16>
    tpu.vector_store %arg6[%c80_224, %c0_225], %670 {strides = array<i32>} : memref<400x256xbf16, #tpu.memory_space<vmem>>, vector<16x256xbf16>,
    %c17_i32_226 = arith.constant 17 : i32
    %672 = tpu.dynamic_rotate %623 by %c17_i32_226 dim 1 : vector<16x256xf32>, i32 -> vector<16x256xf32>
    %673 = vector.extract_strided_slice %0 {offsets = [6, 0], sizes = [1, 256], strides = [1, 1]} : vector<25x256xf32> to vector<1x256xf32>
    %674 = vector.shape_cast %673 : vector<1x256xf32> to vector<256xf32>
    %675 = vector.shape_cast %674 : vector<256xf32> to vector<1x256xf32>
    %676 = vector.broadcast %675 : vector<1x256xf32> to vector<16x256xf32>
    %677 = arith.mulf %672, %676 : vector<16x256xf32>
    %678 = arith.truncf %677 : vector<16x256xf32> to vector<16x256xbf16>
    %c96_227 = arith.constant 96 : index
    %c0_228 = arith.constant 0 : index
    %679 = vector.load %arg6[%c96_227, %c0_228] : memref<400x256xbf16, #tpu.memory_space<vmem>>, vector<16x256xbf16>
    tpu.vector_store %arg6[%c96_227, %c0_228], %678 {strides = array<i32>} : memref<400x256xbf16, #tpu.memory_space<vmem>>, vector<16x256xbf16>,
    %c16_i32_229 = arith.constant 16 : i32
    %680 = tpu.dynamic_rotate %623 by %c16_i32_229 dim 1 : vector<16x256xf32>, i32 -> vector<16x256xf32>
    %681 = vector.extract_strided_slice %0 {offsets = [7, 0], sizes = [1, 256], strides = [1, 1]} : vector<25x256xf32> to vector<1x256xf32>
    %682 = vector.shape_cast %681 : vector<1x256xf32> to vector<256xf32>
    %683 = vector.shape_cast %682 : vector<256xf32> to vector<1x256xf32>
    %684 = vector.broadcast %683 : vector<1x256xf32> to vector<16x256xf32>
    %685 = arith.mulf %680, %684 : vector<16x256xf32>
    %686 = arith.truncf %685 : vector<16x256xf32> to vector<16x256xbf16>
    %c112_230 = arith.constant 112 : index
    %c0_231 = arith.constant 0 : index
    %687 = vector.load %arg6[%c112_230, %c0_231] : memref<400x256xbf16, #tpu.memory_space<vmem>>, vector<16x256xbf16>
    tpu.vector_store %arg6[%c112_230, %c0_231], %686 {strides = array<i32>} : memref<400x256xbf16, #tpu.memory_space<vmem>>, vector<16x256xbf16>,
    %c15_i32_232 = arith.constant 15 : i32
    %688 = tpu.dynamic_rotate %623 by %c15_i32_232 dim 1 : vector<16x256xf32>, i32 -> vector<16x256xf32>
    %689 = vector.extract_strided_slice %0 {offsets = [8, 0], sizes = [1, 256], strides = [1, 1]} : vector<25x256xf32> to vector<1x256xf32>
    %690 = vector.shape_cast %689 : vector<1x256xf32> to vector<256xf32>
    %691 = vector.shape_cast %690 : vector<256xf32> to vector<1x256xf32>
    %692 = vector.broadcast %691 : vector<1x256xf32> to vector<16x256xf32>
    %693 = arith.mulf %688, %692 : vector<16x256xf32>
    %694 = arith.truncf %693 : vector<16x256xf32> to vector<16x256xbf16>
    %c128_233 = arith.constant 128 : index
    %c0_234 = arith.constant 0 : index
    %695 = vector.load %arg6[%c128_233, %c0_234] : memref<400x256xbf16, #tpu.memory_space<vmem>>, vector<16x256xbf16>
    tpu.vector_store %arg6[%c128_233, %c0_234], %694 {strides = array<i32>} : memref<400x256xbf16, #tpu.memory_space<vmem>>, vector<16x256xbf16>,
    %c14_i32_235 = arith.constant 14 : i32
    %696 = tpu.dynamic_rotate %623 by %c14_i32_235 dim 1 : vector<16x256xf32>, i32 -> vector<16x256xf32>
    %697 = vector.extract_strided_slice %0 {offsets = [9, 0], sizes = [1, 256], strides = [1, 1]} : vector<25x256xf32> to vector<1x256xf32>
    %698 = vector.shape_cast %697 : vector<1x256xf32> to vector<256xf32>
    %699 = vector.shape_cast %698 : vector<256xf32> to vector<1x256xf32>
    %700 = vector.broadcast %699 : vector<1x256xf32> to vector<16x256xf32>
    %701 = arith.mulf %696, %700 : vector<16x256xf32>
    %702 = arith.truncf %701 : vector<16x256xf32> to vector<16x256xbf16>
    %c144_236 = arith.constant 144 : index
    %c0_237 = arith.constant 0 : index
    %703 = vector.load %arg6[%c144_236, %c0_237] : memref<400x256xbf16, #tpu.memory_space<vmem>>, vector<16x256xbf16>
    tpu.vector_store %arg6[%c144_236, %c0_237], %702 {strides = array<i32>} : memref<400x256xbf16, #tpu.memory_space<vmem>>, vector<16x256xbf16>,
    %c2_i32_238 = arith.constant 2 : i32
    %704 = tpu.dynamic_rotate %623 by %c2_i32_238 dim 1 : vector<16x256xf32>, i32 -> vector<16x256xf32>
    %705 = vector.extract_strided_slice %0 {offsets = [10, 0], sizes = [1, 256], strides = [1, 1]} : vector<25x256xf32> to vector<1x256xf32>
    %706 = vector.shape_cast %705 : vector<1x256xf32> to vector<256xf32>
    %707 = vector.shape_cast %706 : vector<256xf32> to vector<1x256xf32>
    %708 = vector.broadcast %707 : vector<1x256xf32> to vector<16x256xf32>
    %709 = arith.mulf %704, %708 : vector<16x256xf32>
    %710 = arith.truncf %709 : vector<16x256xf32> to vector<16x256xbf16>
    %c160_239 = arith.constant 160 : index
    %c0_240 = arith.constant 0 : index
    %711 = vector.load %arg6[%c160_239, %c0_240] : memref<400x256xbf16, #tpu.memory_space<vmem>>, vector<16x256xbf16>
    tpu.vector_store %arg6[%c160_239, %c0_240], %710 {strides = array<i32>} : memref<400x256xbf16, #tpu.memory_space<vmem>>, vector<16x256xbf16>,
    %c1_i32_241 = arith.constant 1 : i32
    %712 = tpu.dynamic_rotate %623 by %c1_i32_241 dim 1 : vector<16x256xf32>, i32 -> vector<16x256xf32>
    %713 = vector.extract_strided_slice %0 {offsets = [11, 0], sizes = [1, 256], strides = [1, 1]} : vector<25x256xf32> to vector<1x256xf32>
    %714 = vector.shape_cast %713 : vector<1x256xf32> to vector<256xf32>
    %715 = vector.shape_cast %714 : vector<256xf32> to vector<1x256xf32>
    %716 = vector.broadcast %715 : vector<1x256xf32> to vector<16x256xf32>
    %717 = arith.mulf %712, %716 : vector<16x256xf32>
    %718 = arith.truncf %717 : vector<16x256xf32> to vector<16x256xbf16>
    %c176_242 = arith.constant 176 : index
    %c0_243 = arith.constant 0 : index
    %719 = vector.load %arg6[%c176_242, %c0_243] : memref<400x256xbf16, #tpu.memory_space<vmem>>, vector<16x256xbf16>
    tpu.vector_store %arg6[%c176_242, %c0_243], %718 {strides = array<i32>} : memref<400x256xbf16, #tpu.memory_space<vmem>>, vector<16x256xbf16>,
    %720 = arith.truncf %623 : vector<16x256xf32> to vector<16x256xbf16>
    %c192_244 = arith.constant 192 : index
    %c0_245 = arith.constant 0 : index
    %721 = vector.load %arg6[%c192_244, %c0_245] : memref<400x256xbf16, #tpu.memory_space<vmem>>, vector<16x256xbf16>
    tpu.vector_store %arg6[%c192_244, %c0_245], %720 {strides = array<i32>} : memref<400x256xbf16, #tpu.memory_space<vmem>>, vector<16x256xbf16>,
    %c255_i32_246 = arith.constant 255 : i32
    %722 = tpu.dynamic_rotate %623 by %c255_i32_246 dim 1 : vector<16x256xf32>, i32 -> vector<16x256xf32>
    %723 = vector.extract_strided_slice %0 {offsets = [13, 0], sizes = [1, 256], strides = [1, 1]} : vector<25x256xf32> to vector<1x256xf32>
    %724 = vector.shape_cast %723 : vector<1x256xf32> to vector<256xf32>
    %725 = vector.shape_cast %724 : vector<256xf32> to vector<1x256xf32>
    %726 = vector.broadcast %725 : vector<1x256xf32> to vector<16x256xf32>
    %727 = arith.mulf %722, %726 : vector<16x256xf32>
    %728 = arith.truncf %727 : vector<16x256xf32> to vector<16x256xbf16>
    %c208_247 = arith.constant 208 : index
    %c0_248 = arith.constant 0 : index
    %729 = vector.load %arg6[%c208_247, %c0_248] : memref<400x256xbf16, #tpu.memory_space<vmem>>, vector<16x256xbf16>
    tpu.vector_store %arg6[%c208_247, %c0_248], %728 {strides = array<i32>} : memref<400x256xbf16, #tpu.memory_space<vmem>>, vector<16x256xbf16>,
    %c254_i32_249 = arith.constant 254 : i32
    %730 = tpu.dynamic_rotate %623 by %c254_i32_249 dim 1 : vector<16x256xf32>, i32 -> vector<16x256xf32>
    %731 = vector.extract_strided_slice %0 {offsets = [14, 0], sizes = [1, 256], strides = [1, 1]} : vector<25x256xf32> to vector<1x256xf32>
    %732 = vector.shape_cast %731 : vector<1x256xf32> to vector<256xf32>
    %733 = vector.shape_cast %732 : vector<256xf32> to vector<1x256xf32>
    %734 = vector.broadcast %733 : vector<1x256xf32> to vector<16x256xf32>
    %735 = arith.mulf %730, %734 : vector<16x256xf32>
    %736 = arith.truncf %735 : vector<16x256xf32> to vector<16x256xbf16>
    %c224_250 = arith.constant 224 : index
    %c0_251 = arith.constant 0 : index
    %737 = vector.load %arg6[%c224_250, %c0_251] : memref<400x256xbf16, #tpu.memory_space<vmem>>, vector<16x256xbf16>
    tpu.vector_store %arg6[%c224_250, %c0_251], %736 {strides = array<i32>} : memref<400x256xbf16, #tpu.memory_space<vmem>>, vector<16x256xbf16>,
    %c242_i32_252 = arith.constant 242 : i32
    %738 = tpu.dynamic_rotate %623 by %c242_i32_252 dim 1 : vector<16x256xf32>, i32 -> vector<16x256xf32>
    %739 = vector.extract_strided_slice %0 {offsets = [15, 0], sizes = [1, 256], strides = [1, 1]} : vector<25x256xf32> to vector<1x256xf32>
    %740 = vector.shape_cast %739 : vector<1x256xf32> to vector<256xf32>
    %741 = vector.shape_cast %740 : vector<256xf32> to vector<1x256xf32>
    %742 = vector.broadcast %741 : vector<1x256xf32> to vector<16x256xf32>
    %743 = arith.mulf %738, %742 : vector<16x256xf32>
    %744 = arith.truncf %743 : vector<16x256xf32> to vector<16x256xbf16>
    %c240_253 = arith.constant 240 : index
    %c0_254 = arith.constant 0 : index
    %745 = vector.load %arg6[%c240_253, %c0_254] : memref<400x256xbf16, #tpu.memory_space<vmem>>, vector<16x256xbf16>
    tpu.vector_store %arg6[%c240_253, %c0_254], %744 {strides = array<i32>} : memref<400x256xbf16, #tpu.memory_space<vmem>>, vector<16x256xbf16>,
    %c241_i32_255 = arith.constant 241 : i32
    %746 = tpu.dynamic_rotate %623 by %c241_i32_255 dim 1 : vector<16x256xf32>, i32 -> vector<16x256xf32>
    %747 = vector.extract_strided_slice %0 {offsets = [16, 0], sizes = [1, 256], strides = [1, 1]} : vector<25x256xf32> to vector<1x256xf32>
    %748 = vector.shape_cast %747 : vector<1x256xf32> to vector<256xf32>
    %749 = vector.shape_cast %748 : vector<256xf32> to vector<1x256xf32>
    %750 = vector.broadcast %749 : vector<1x256xf32> to vector<16x256xf32>
    %751 = arith.mulf %746, %750 : vector<16x256xf32>
    %752 = arith.truncf %751 : vector<16x256xf32> to vector<16x256xbf16>
    %c256_256 = arith.constant 256 : index
    %c0_257 = arith.constant 0 : index
    %753 = vector.load %arg6[%c256_256, %c0_257] : memref<400x256xbf16, #tpu.memory_space<vmem>>, vector<16x256xbf16>
    tpu.vector_store %arg6[%c256_256, %c0_257], %752 {strides = array<i32>} : memref<400x256xbf16, #tpu.memory_space<vmem>>, vector<16x256xbf16>,
    %c240_i32_258 = arith.constant 240 : i32
    %754 = tpu.dynamic_rotate %623 by %c240_i32_258 dim 1 : vector<16x256xf32>, i32 -> vector<16x256xf32>
    %755 = vector.extract_strided_slice %0 {offsets = [17, 0], sizes = [1, 256], strides = [1, 1]} : vector<25x256xf32> to vector<1x256xf32>
    %756 = vector.shape_cast %755 : vector<1x256xf32> to vector<256xf32>
    %757 = vector.shape_cast %756 : vector<256xf32> to vector<1x256xf32>
    %758 = vector.broadcast %757 : vector<1x256xf32> to vector<16x256xf32>
    %759 = arith.mulf %754, %758 : vector<16x256xf32>
    %760 = arith.truncf %759 : vector<16x256xf32> to vector<16x256xbf16>
    %c272_259 = arith.constant 272 : index
    %c0_260 = arith.constant 0 : index
    %761 = vector.load %arg6[%c272_259, %c0_260] : memref<400x256xbf16, #tpu.memory_space<vmem>>, vector<16x256xbf16>
    tpu.vector_store %arg6[%c272_259, %c0_260], %760 {strides = array<i32>} : memref<400x256xbf16, #tpu.memory_space<vmem>>, vector<16x256xbf16>,
    %c239_i32_261 = arith.constant 239 : i32
    %762 = tpu.dynamic_rotate %623 by %c239_i32_261 dim 1 : vector<16x256xf32>, i32 -> vector<16x256xf32>
    %763 = vector.extract_strided_slice %0 {offsets = [18, 0], sizes = [1, 256], strides = [1, 1]} : vector<25x256xf32> to vector<1x256xf32>
    %764 = vector.shape_cast %763 : vector<1x256xf32> to vector<256xf32>
    %765 = vector.shape_cast %764 : vector<256xf32> to vector<1x256xf32>
    %766 = vector.broadcast %765 : vector<1x256xf32> to vector<16x256xf32>
    %767 = arith.mulf %762, %766 : vector<16x256xf32>
    %768 = arith.truncf %767 : vector<16x256xf32> to vector<16x256xbf16>
    %c288_262 = arith.constant 288 : index
    %c0_263 = arith.constant 0 : index
    %769 = vector.load %arg6[%c288_262, %c0_263] : memref<400x256xbf16, #tpu.memory_space<vmem>>, vector<16x256xbf16>
    tpu.vector_store %arg6[%c288_262, %c0_263], %768 {strides = array<i32>} : memref<400x256xbf16, #tpu.memory_space<vmem>>, vector<16x256xbf16>,
    %c238_i32_264 = arith.constant 238 : i32
    %770 = tpu.dynamic_rotate %623 by %c238_i32_264 dim 1 : vector<16x256xf32>, i32 -> vector<16x256xf32>
    %771 = vector.extract_strided_slice %0 {offsets = [19, 0], sizes = [1, 256], strides = [1, 1]} : vector<25x256xf32> to vector<1x256xf32>
    %772 = vector.shape_cast %771 : vector<1x256xf32> to vector<256xf32>
    %773 = vector.shape_cast %772 : vector<256xf32> to vector<1x256xf32>
    %774 = vector.broadcast %773 : vector<1x256xf32> to vector<16x256xf32>
    %775 = arith.mulf %770, %774 : vector<16x256xf32>
    %776 = arith.truncf %775 : vector<16x256xf32> to vector<16x256xbf16>
    %c304_265 = arith.constant 304 : index
    %c0_266 = arith.constant 0 : index
    %777 = vector.load %arg6[%c304_265, %c0_266] : memref<400x256xbf16, #tpu.memory_space<vmem>>, vector<16x256xbf16>
    tpu.vector_store %arg6[%c304_265, %c0_266], %776 {strides = array<i32>} : memref<400x256xbf16, #tpu.memory_space<vmem>>, vector<16x256xbf16>,
    %c226_i32_267 = arith.constant 226 : i32
    %778 = tpu.dynamic_rotate %623 by %c226_i32_267 dim 1 : vector<16x256xf32>, i32 -> vector<16x256xf32>
    %779 = vector.extract_strided_slice %0 {offsets = [20, 0], sizes = [1, 256], strides = [1, 1]} : vector<25x256xf32> to vector<1x256xf32>
    %780 = vector.shape_cast %779 : vector<1x256xf32> to vector<256xf32>
    %781 = vector.shape_cast %780 : vector<256xf32> to vector<1x256xf32>
    %782 = vector.broadcast %781 : vector<1x256xf32> to vector<16x256xf32>
    %783 = arith.mulf %778, %782 : vector<16x256xf32>
    %784 = arith.truncf %783 : vector<16x256xf32> to vector<16x256xbf16>
    %c320_268 = arith.constant 320 : index
    %c0_269 = arith.constant 0 : index
    %785 = vector.load %arg6[%c320_268, %c0_269] : memref<400x256xbf16, #tpu.memory_space<vmem>>, vector<16x256xbf16>
    tpu.vector_store %arg6[%c320_268, %c0_269], %784 {strides = array<i32>} : memref<400x256xbf16, #tpu.memory_space<vmem>>, vector<16x256xbf16>,
    %c225_i32_270 = arith.constant 225 : i32
    %786 = tpu.dynamic_rotate %623 by %c225_i32_270 dim 1 : vector<16x256xf32>, i32 -> vector<16x256xf32>
    %787 = vector.extract_strided_slice %0 {offsets = [21, 0], sizes = [1, 256], strides = [1, 1]} : vector<25x256xf32> to vector<1x256xf32>
    %788 = vector.shape_cast %787 : vector<1x256xf32> to vector<256xf32>
    %789 = vector.shape_cast %788 : vector<256xf32> to vector<1x256xf32>
    %790 = vector.broadcast %789 : vector<1x256xf32> to vector<16x256xf32>
    %791 = arith.mulf %786, %790 : vector<16x256xf32>
    %792 = arith.truncf %791 : vector<16x256xf32> to vector<16x256xbf16>
    %c336_271 = arith.constant 336 : index
    %c0_272 = arith.constant 0 : index
    %793 = vector.load %arg6[%c336_271, %c0_272] : memref<400x256xbf16, #tpu.memory_space<vmem>>, vector<16x256xbf16>
    tpu.vector_store %arg6[%c336_271, %c0_272], %792 {strides = array<i32>} : memref<400x256xbf16, #tpu.memory_space<vmem>>, vector<16x256xbf16>,
    %c224_i32_273 = arith.constant 224 : i32
    %794 = tpu.dynamic_rotate %623 by %c224_i32_273 dim 1 : vector<16x256xf32>, i32 -> vector<16x256xf32>
    %795 = vector.extract_strided_slice %0 {offsets = [22, 0], sizes = [1, 256], strides = [1, 1]} : vector<25x256xf32> to vector<1x256xf32>
    %796 = vector.shape_cast %795 : vector<1x256xf32> to vector<256xf32>
    %797 = vector.shape_cast %796 : vector<256xf32> to vector<1x256xf32>
    %798 = vector.broadcast %797 : vector<1x256xf32> to vector<16x256xf32>
    %799 = arith.mulf %794, %798 : vector<16x256xf32>
    %800 = arith.truncf %799 : vector<16x256xf32> to vector<16x256xbf16>
    %c352_274 = arith.constant 352 : index
    %c0_275 = arith.constant 0 : index
    %801 = vector.load %arg6[%c352_274, %c0_275] : memref<400x256xbf16, #tpu.memory_space<vmem>>, vector<16x256xbf16>
    tpu.vector_store %arg6[%c352_274, %c0_275], %800 {strides = array<i32>} : memref<400x256xbf16, #tpu.memory_space<vmem>>, vector<16x256xbf16>,
    %c223_i32_276 = arith.constant 223 : i32
    %802 = tpu.dynamic_rotate %623 by %c223_i32_276 dim 1 : vector<16x256xf32>, i32 -> vector<16x256xf32>
    %803 = vector.extract_strided_slice %0 {offsets = [23, 0], sizes = [1, 256], strides = [1, 1]} : vector<25x256xf32> to vector<1x256xf32>
    %804 = vector.shape_cast %803 : vector<1x256xf32> to vector<256xf32>
    %805 = vector.shape_cast %804 : vector<256xf32> to vector<1x256xf32>
    %806 = vector.broadcast %805 : vector<1x256xf32> to vector<16x256xf32>
    %807 = arith.mulf %802, %806 : vector<16x256xf32>
    %808 = arith.truncf %807 : vector<16x256xf32> to vector<16x256xbf16>
    %c368_277 = arith.constant 368 : index
    %c0_278 = arith.constant 0 : index
    %809 = vector.load %arg6[%c368_277, %c0_278] : memref<400x256xbf16, #tpu.memory_space<vmem>>, vector<16x256xbf16>
    tpu.vector_store %arg6[%c368_277, %c0_278], %808 {strides = array<i32>} : memref<400x256xbf16, #tpu.memory_space<vmem>>, vector<16x256xbf16>,
    %c222_i32_279 = arith.constant 222 : i32
    %810 = tpu.dynamic_rotate %623 by %c222_i32_279 dim 1 : vector<16x256xf32>, i32 -> vector<16x256xf32>
    %811 = vector.extract_strided_slice %0 {offsets = [24, 0], sizes = [1, 256], strides = [1, 1]} : vector<25x256xf32> to vector<1x256xf32>
    %812 = vector.shape_cast %811 : vector<1x256xf32> to vector<256xf32>
    %813 = vector.shape_cast %812 : vector<256xf32> to vector<1x256xf32>
    %814 = vector.broadcast %813 : vector<1x256xf32> to vector<16x256xf32>
    %815 = arith.mulf %810, %814 : vector<16x256xf32>
    %816 = arith.truncf %815 : vector<16x256xf32> to vector<16x256xbf16>
    %c384_280 = arith.constant 384 : index
    %c0_281 = arith.constant 0 : index
    %817 = vector.load %arg6[%c384_280, %c0_281] : memref<400x256xbf16, #tpu.memory_space<vmem>>, vector<16x256xbf16>
    tpu.vector_store %arg6[%c384_280, %c0_281], %816 {strides = array<i32>} : memref<400x256xbf16, #tpu.memory_space<vmem>>, vector<16x256xbf16>,
    %c3 = arith.constant 3 : index
    %c0_282 = arith.constant 0 : index
    %c0_283 = arith.constant 0 : index
    %818 = vector.load %arg2[%c3, %c0_282, %c0_283] : memref<5x16x400xbf16, #tpu.memory_space<vmem>>, vector<1x16x400xbf16>
    %819 = vector.shape_cast %818 : vector<1x16x400xbf16> to vector<16x400xbf16>
    %c0_284 = arith.constant 0 : index
    %c0_285 = arith.constant 0 : index
    %820 = vector.load %arg6[%c0_284, %c0_285] : memref<400x256xbf16, #tpu.memory_space<vmem>>, vector<400x256xbf16>
    %cst_286 = arith.constant dense<0.000000e+00> : vector<16x256xf32>
    %821 = tpu.matmul %819, %820, %cst_286 {dimension_numbers = #tpu.dot_dimension_numbers<[1], [0], [0], [1], [0, 0, 1, 1], [], []>} : vector<16x400xbf16>, vector<400x256xbf16>, vector<16x256xf32> -> vector<16x256xf32>
    %c3_287 = arith.constant 3 : index
    %c0_288 = arith.constant 0 : index
    %c0_289 = arith.constant 0 : index
    %822 = vector.load %arg3[%c3_287, %c0_288, %c0_289] : memref<5x16x1xf32, #tpu.memory_space<vmem>>, vector<1x16x1xf32>
    %823 = vector.shape_cast %822 : vector<1x16x1xf32> to vector<16x1xf32>
    %824 = vector.broadcast %823 : vector<16x1xf32> to vector<16x256xf32>
    %825 = arith.addf %821, %824 : vector<16x256xf32>
    %cst_290 = arith.constant 0.000000e+00 : f32
    %826 = vector.broadcast %cst_290 : f32 to vector<16x256xf32>
    %827 = arith.cmpf ogt, %825, %826 : vector<16x256xf32>
    %cst_291 = arith.constant 0.00999999977 : f32
    %828 = vector.broadcast %cst_291 : f32 to vector<16x256xf32>
    %829 = arith.mulf %828, %825 : vector<16x256xf32>
    %830 = arith.select %827, %825, %829 : vector<16x256xi1>, vector<16x256xf32>
    %c34_i32_292 = arith.constant 34 : i32
    %831 = tpu.dynamic_rotate %830 by %c34_i32_292 dim 1 : vector<16x256xf32>, i32 -> vector<16x256xf32>
    %832 = vector.extract_strided_slice %0 {offsets = [0, 0], sizes = [1, 256], strides = [1, 1]} : vector<25x256xf32> to vector<1x256xf32>
    %833 = vector.shape_cast %832 : vector<1x256xf32> to vector<256xf32>
    %834 = vector.shape_cast %833 : vector<256xf32> to vector<1x256xf32>
    %835 = vector.broadcast %834 : vector<1x256xf32> to vector<16x256xf32>
    %836 = arith.mulf %831, %835 : vector<16x256xf32>
    %837 = arith.truncf %836 : vector<16x256xf32> to vector<16x256xbf16>
    %c0_293 = arith.constant 0 : index
    %c0_294 = arith.constant 0 : index
    %838 = vector.load %arg6[%c0_293, %c0_294] : memref<400x256xbf16, #tpu.memory_space<vmem>>, vector<16x256xbf16>
    tpu.vector_store %arg6[%c0_293, %c0_294], %837 {strides = array<i32>} : memref<400x256xbf16, #tpu.memory_space<vmem>>, vector<16x256xbf16>,
    %c33_i32_295 = arith.constant 33 : i32
    %839 = tpu.dynamic_rotate %830 by %c33_i32_295 dim 1 : vector<16x256xf32>, i32 -> vector<16x256xf32>
    %840 = vector.extract_strided_slice %0 {offsets = [1, 0], sizes = [1, 256], strides = [1, 1]} : vector<25x256xf32> to vector<1x256xf32>
    %841 = vector.shape_cast %840 : vector<1x256xf32> to vector<256xf32>
    %842 = vector.shape_cast %841 : vector<256xf32> to vector<1x256xf32>
    %843 = vector.broadcast %842 : vector<1x256xf32> to vector<16x256xf32>
    %844 = arith.mulf %839, %843 : vector<16x256xf32>
    %845 = arith.truncf %844 : vector<16x256xf32> to vector<16x256xbf16>
    %c16_296 = arith.constant 16 : index
    %c0_297 = arith.constant 0 : index
    %846 = vector.load %arg6[%c16_296, %c0_297] : memref<400x256xbf16, #tpu.memory_space<vmem>>, vector<16x256xbf16>
    tpu.vector_store %arg6[%c16_296, %c0_297], %845 {strides = array<i32>} : memref<400x256xbf16, #tpu.memory_space<vmem>>, vector<16x256xbf16>,
    %c32_i32_298 = arith.constant 32 : i32
    %847 = tpu.dynamic_rotate %830 by %c32_i32_298 dim 1 : vector<16x256xf32>, i32 -> vector<16x256xf32>
    %848 = vector.extract_strided_slice %0 {offsets = [2, 0], sizes = [1, 256], strides = [1, 1]} : vector<25x256xf32> to vector<1x256xf32>
    %849 = vector.shape_cast %848 : vector<1x256xf32> to vector<256xf32>
    %850 = vector.shape_cast %849 : vector<256xf32> to vector<1x256xf32>
    %851 = vector.broadcast %850 : vector<1x256xf32> to vector<16x256xf32>
    %852 = arith.mulf %847, %851 : vector<16x256xf32>
    %853 = arith.truncf %852 : vector<16x256xf32> to vector<16x256xbf16>
    %c32_299 = arith.constant 32 : index
    %c0_300 = arith.constant 0 : index
    %854 = vector.load %arg6[%c32_299, %c0_300] : memref<400x256xbf16, #tpu.memory_space<vmem>>, vector<16x256xbf16>
    tpu.vector_store %arg6[%c32_299, %c0_300], %853 {strides = array<i32>} : memref<400x256xbf16, #tpu.memory_space<vmem>>, vector<16x256xbf16>,
    %c31_i32_301 = arith.constant 31 : i32
    %855 = tpu.dynamic_rotate %830 by %c31_i32_301 dim 1 : vector<16x256xf32>, i32 -> vector<16x256xf32>
    %856 = vector.extract_strided_slice %0 {offsets = [3, 0], sizes = [1, 256], strides = [1, 1]} : vector<25x256xf32> to vector<1x256xf32>
    %857 = vector.shape_cast %856 : vector<1x256xf32> to vector<256xf32>
    %858 = vector.shape_cast %857 : vector<256xf32> to vector<1x256xf32>
    %859 = vector.broadcast %858 : vector<1x256xf32> to vector<16x256xf32>
    %860 = arith.mulf %855, %859 : vector<16x256xf32>
    %861 = arith.truncf %860 : vector<16x256xf32> to vector<16x256xbf16>
    %c48_302 = arith.constant 48 : index
    %c0_303 = arith.constant 0 : index
    %862 = vector.load %arg6[%c48_302, %c0_303] : memref<400x256xbf16, #tpu.memory_space<vmem>>, vector<16x256xbf16>
    tpu.vector_store %arg6[%c48_302, %c0_303], %861 {strides = array<i32>} : memref<400x256xbf16, #tpu.memory_space<vmem>>, vector<16x256xbf16>,
    %c30_i32_304 = arith.constant 30 : i32
    %863 = tpu.dynamic_rotate %830 by %c30_i32_304 dim 1 : vector<16x256xf32>, i32 -> vector<16x256xf32>
    %864 = vector.extract_strided_slice %0 {offsets = [4, 0], sizes = [1, 256], strides = [1, 1]} : vector<25x256xf32> to vector<1x256xf32>
    %865 = vector.shape_cast %864 : vector<1x256xf32> to vector<256xf32>
    %866 = vector.shape_cast %865 : vector<256xf32> to vector<1x256xf32>
    %867 = vector.broadcast %866 : vector<1x256xf32> to vector<16x256xf32>
    %868 = arith.mulf %863, %867 : vector<16x256xf32>
    %869 = arith.truncf %868 : vector<16x256xf32> to vector<16x256xbf16>
    %c64_305 = arith.constant 64 : index
    %c0_306 = arith.constant 0 : index
    %870 = vector.load %arg6[%c64_305, %c0_306] : memref<400x256xbf16, #tpu.memory_space<vmem>>, vector<16x256xbf16>
    tpu.vector_store %arg6[%c64_305, %c0_306], %869 {strides = array<i32>} : memref<400x256xbf16, #tpu.memory_space<vmem>>, vector<16x256xbf16>,
    %c18_i32_307 = arith.constant 18 : i32
    %871 = tpu.dynamic_rotate %830 by %c18_i32_307 dim 1 : vector<16x256xf32>, i32 -> vector<16x256xf32>
    %872 = vector.extract_strided_slice %0 {offsets = [5, 0], sizes = [1, 256], strides = [1, 1]} : vector<25x256xf32> to vector<1x256xf32>
    %873 = vector.shape_cast %872 : vector<1x256xf32> to vector<256xf32>
    %874 = vector.shape_cast %873 : vector<256xf32> to vector<1x256xf32>
    %875 = vector.broadcast %874 : vector<1x256xf32> to vector<16x256xf32>
    %876 = arith.mulf %871, %875 : vector<16x256xf32>
    %877 = arith.truncf %876 : vector<16x256xf32> to vector<16x256xbf16>
    %c80_308 = arith.constant 80 : index
    %c0_309 = arith.constant 0 : index
    %878 = vector.load %arg6[%c80_308, %c0_309] : memref<400x256xbf16, #tpu.memory_space<vmem>>, vector<16x256xbf16>
    tpu.vector_store %arg6[%c80_308, %c0_309], %877 {strides = array<i32>} : memref<400x256xbf16, #tpu.memory_space<vmem>>, vector<16x256xbf16>,
    %c17_i32_310 = arith.constant 17 : i32
    %879 = tpu.dynamic_rotate %830 by %c17_i32_310 dim 1 : vector<16x256xf32>, i32 -> vector<16x256xf32>
    %880 = vector.extract_strided_slice %0 {offsets = [6, 0], sizes = [1, 256], strides = [1, 1]} : vector<25x256xf32> to vector<1x256xf32>
    %881 = vector.shape_cast %880 : vector<1x256xf32> to vector<256xf32>
    %882 = vector.shape_cast %881 : vector<256xf32> to vector<1x256xf32>
    %883 = vector.broadcast %882 : vector<1x256xf32> to vector<16x256xf32>
    %884 = arith.mulf %879, %883 : vector<16x256xf32>
    %885 = arith.truncf %884 : vector<16x256xf32> to vector<16x256xbf16>
    %c96_311 = arith.constant 96 : index
    %c0_312 = arith.constant 0 : index
    %886 = vector.load %arg6[%c96_311, %c0_312] : memref<400x256xbf16, #tpu.memory_space<vmem>>, vector<16x256xbf16>
    tpu.vector_store %arg6[%c96_311, %c0_312], %885 {strides = array<i32>} : memref<400x256xbf16, #tpu.memory_space<vmem>>, vector<16x256xbf16>,
    %c16_i32_313 = arith.constant 16 : i32
    %887 = tpu.dynamic_rotate %830 by %c16_i32_313 dim 1 : vector<16x256xf32>, i32 -> vector<16x256xf32>
    %888 = vector.extract_strided_slice %0 {offsets = [7, 0], sizes = [1, 256], strides = [1, 1]} : vector<25x256xf32> to vector<1x256xf32>
    %889 = vector.shape_cast %888 : vector<1x256xf32> to vector<256xf32>
    %890 = vector.shape_cast %889 : vector<256xf32> to vector<1x256xf32>
    %891 = vector.broadcast %890 : vector<1x256xf32> to vector<16x256xf32>
    %892 = arith.mulf %887, %891 : vector<16x256xf32>
    %893 = arith.truncf %892 : vector<16x256xf32> to vector<16x256xbf16>
    %c112_314 = arith.constant 112 : index
    %c0_315 = arith.constant 0 : index
    %894 = vector.load %arg6[%c112_314, %c0_315] : memref<400x256xbf16, #tpu.memory_space<vmem>>, vector<16x256xbf16>
    tpu.vector_store %arg6[%c112_314, %c0_315], %893 {strides = array<i32>} : memref<400x256xbf16, #tpu.memory_space<vmem>>, vector<16x256xbf16>,
    %c15_i32_316 = arith.constant 15 : i32
    %895 = tpu.dynamic_rotate %830 by %c15_i32_316 dim 1 : vector<16x256xf32>, i32 -> vector<16x256xf32>
    %896 = vector.extract_strided_slice %0 {offsets = [8, 0], sizes = [1, 256], strides = [1, 1]} : vector<25x256xf32> to vector<1x256xf32>
    %897 = vector.shape_cast %896 : vector<1x256xf32> to vector<256xf32>
    %898 = vector.shape_cast %897 : vector<256xf32> to vector<1x256xf32>
    %899 = vector.broadcast %898 : vector<1x256xf32> to vector<16x256xf32>
    %900 = arith.mulf %895, %899 : vector<16x256xf32>
    %901 = arith.truncf %900 : vector<16x256xf32> to vector<16x256xbf16>
    %c128_317 = arith.constant 128 : index
    %c0_318 = arith.constant 0 : index
    %902 = vector.load %arg6[%c128_317, %c0_318] : memref<400x256xbf16, #tpu.memory_space<vmem>>, vector<16x256xbf16>
    tpu.vector_store %arg6[%c128_317, %c0_318], %901 {strides = array<i32>} : memref<400x256xbf16, #tpu.memory_space<vmem>>, vector<16x256xbf16>,
    %c14_i32_319 = arith.constant 14 : i32
    %903 = tpu.dynamic_rotate %830 by %c14_i32_319 dim 1 : vector<16x256xf32>, i32 -> vector<16x256xf32>
    %904 = vector.extract_strided_slice %0 {offsets = [9, 0], sizes = [1, 256], strides = [1, 1]} : vector<25x256xf32> to vector<1x256xf32>
    %905 = vector.shape_cast %904 : vector<1x256xf32> to vector<256xf32>
    %906 = vector.shape_cast %905 : vector<256xf32> to vector<1x256xf32>
    %907 = vector.broadcast %906 : vector<1x256xf32> to vector<16x256xf32>
    %908 = arith.mulf %903, %907 : vector<16x256xf32>
    %909 = arith.truncf %908 : vector<16x256xf32> to vector<16x256xbf16>
    %c144_320 = arith.constant 144 : index
    %c0_321 = arith.constant 0 : index
    %910 = vector.load %arg6[%c144_320, %c0_321] : memref<400x256xbf16, #tpu.memory_space<vmem>>, vector<16x256xbf16>
    tpu.vector_store %arg6[%c144_320, %c0_321], %909 {strides = array<i32>} : memref<400x256xbf16, #tpu.memory_space<vmem>>, vector<16x256xbf16>,
    %c2_i32_322 = arith.constant 2 : i32
    %911 = tpu.dynamic_rotate %830 by %c2_i32_322 dim 1 : vector<16x256xf32>, i32 -> vector<16x256xf32>
    %912 = vector.extract_strided_slice %0 {offsets = [10, 0], sizes = [1, 256], strides = [1, 1]} : vector<25x256xf32> to vector<1x256xf32>
    %913 = vector.shape_cast %912 : vector<1x256xf32> to vector<256xf32>
    %914 = vector.shape_cast %913 : vector<256xf32> to vector<1x256xf32>
    %915 = vector.broadcast %914 : vector<1x256xf32> to vector<16x256xf32>
    %916 = arith.mulf %911, %915 : vector<16x256xf32>
    %917 = arith.truncf %916 : vector<16x256xf32> to vector<16x256xbf16>
    %c160_323 = arith.constant 160 : index
    %c0_324 = arith.constant 0 : index
    %918 = vector.load %arg6[%c160_323, %c0_324] : memref<400x256xbf16, #tpu.memory_space<vmem>>, vector<16x256xbf16>
    tpu.vector_store %arg6[%c160_323, %c0_324], %917 {strides = array<i32>} : memref<400x256xbf16, #tpu.memory_space<vmem>>, vector<16x256xbf16>,
    %c1_i32_325 = arith.constant 1 : i32
    %919 = tpu.dynamic_rotate %830 by %c1_i32_325 dim 1 : vector<16x256xf32>, i32 -> vector<16x256xf32>
    %920 = vector.extract_strided_slice %0 {offsets = [11, 0], sizes = [1, 256], strides = [1, 1]} : vector<25x256xf32> to vector<1x256xf32>
    %921 = vector.shape_cast %920 : vector<1x256xf32> to vector<256xf32>
    %922 = vector.shape_cast %921 : vector<256xf32> to vector<1x256xf32>
    %923 = vector.broadcast %922 : vector<1x256xf32> to vector<16x256xf32>
    %924 = arith.mulf %919, %923 : vector<16x256xf32>
    %925 = arith.truncf %924 : vector<16x256xf32> to vector<16x256xbf16>
    %c176_326 = arith.constant 176 : index
    %c0_327 = arith.constant 0 : index
    %926 = vector.load %arg6[%c176_326, %c0_327] : memref<400x256xbf16, #tpu.memory_space<vmem>>, vector<16x256xbf16>
    tpu.vector_store %arg6[%c176_326, %c0_327], %925 {strides = array<i32>} : memref<400x256xbf16, #tpu.memory_space<vmem>>, vector<16x256xbf16>,
    %927 = arith.truncf %830 : vector<16x256xf32> to vector<16x256xbf16>
    %c192_328 = arith.constant 192 : index
    %c0_329 = arith.constant 0 : index
    %928 = vector.load %arg6[%c192_328, %c0_329] : memref<400x256xbf16, #tpu.memory_space<vmem>>, vector<16x256xbf16>
    tpu.vector_store %arg6[%c192_328, %c0_329], %927 {strides = array<i32>} : memref<400x256xbf16, #tpu.memory_space<vmem>>, vector<16x256xbf16>,
    %c255_i32_330 = arith.constant 255 : i32
    %929 = tpu.dynamic_rotate %830 by %c255_i32_330 dim 1 : vector<16x256xf32>, i32 -> vector<16x256xf32>
    %930 = vector.extract_strided_slice %0 {offsets = [13, 0], sizes = [1, 256], strides = [1, 1]} : vector<25x256xf32> to vector<1x256xf32>
    %931 = vector.shape_cast %930 : vector<1x256xf32> to vector<256xf32>
    %932 = vector.shape_cast %931 : vector<256xf32> to vector<1x256xf32>
    %933 = vector.broadcast %932 : vector<1x256xf32> to vector<16x256xf32>
    %934 = arith.mulf %929, %933 : vector<16x256xf32>
    %935 = arith.truncf %934 : vector<16x256xf32> to vector<16x256xbf16>
    %c208_331 = arith.constant 208 : index
    %c0_332 = arith.constant 0 : index
    %936 = vector.load %arg6[%c208_331, %c0_332] : memref<400x256xbf16, #tpu.memory_space<vmem>>, vector<16x256xbf16>
    tpu.vector_store %arg6[%c208_331, %c0_332], %935 {strides = array<i32>} : memref<400x256xbf16, #tpu.memory_space<vmem>>, vector<16x256xbf16>,
    %c254_i32_333 = arith.constant 254 : i32
    %937 = tpu.dynamic_rotate %830 by %c254_i32_333 dim 1 : vector<16x256xf32>, i32 -> vector<16x256xf32>
    %938 = vector.extract_strided_slice %0 {offsets = [14, 0], sizes = [1, 256], strides = [1, 1]} : vector<25x256xf32> to vector<1x256xf32>
    %939 = vector.shape_cast %938 : vector<1x256xf32> to vector<256xf32>
    %940 = vector.shape_cast %939 : vector<256xf32> to vector<1x256xf32>
    %941 = vector.broadcast %940 : vector<1x256xf32> to vector<16x256xf32>
    %942 = arith.mulf %937, %941 : vector<16x256xf32>
    %943 = arith.truncf %942 : vector<16x256xf32> to vector<16x256xbf16>
    %c224_334 = arith.constant 224 : index
    %c0_335 = arith.constant 0 : index
    %944 = vector.load %arg6[%c224_334, %c0_335] : memref<400x256xbf16, #tpu.memory_space<vmem>>, vector<16x256xbf16>
    tpu.vector_store %arg6[%c224_334, %c0_335], %943 {strides = array<i32>} : memref<400x256xbf16, #tpu.memory_space<vmem>>, vector<16x256xbf16>,
    %c242_i32_336 = arith.constant 242 : i32
    %945 = tpu.dynamic_rotate %830 by %c242_i32_336 dim 1 : vector<16x256xf32>, i32 -> vector<16x256xf32>
    %946 = vector.extract_strided_slice %0 {offsets = [15, 0], sizes = [1, 256], strides = [1, 1]} : vector<25x256xf32> to vector<1x256xf32>
    %947 = vector.shape_cast %946 : vector<1x256xf32> to vector<256xf32>
    %948 = vector.shape_cast %947 : vector<256xf32> to vector<1x256xf32>
    %949 = vector.broadcast %948 : vector<1x256xf32> to vector<16x256xf32>
    %950 = arith.mulf %945, %949 : vector<16x256xf32>
    %951 = arith.truncf %950 : vector<16x256xf32> to vector<16x256xbf16>
    %c240_337 = arith.constant 240 : index
    %c0_338 = arith.constant 0 : index
    %952 = vector.load %arg6[%c240_337, %c0_338] : memref<400x256xbf16, #tpu.memory_space<vmem>>, vector<16x256xbf16>
    tpu.vector_store %arg6[%c240_337, %c0_338], %951 {strides = array<i32>} : memref<400x256xbf16, #tpu.memory_space<vmem>>, vector<16x256xbf16>,
    %c241_i32_339 = arith.constant 241 : i32
    %953 = tpu.dynamic_rotate %830 by %c241_i32_339 dim 1 : vector<16x256xf32>, i32 -> vector<16x256xf32>
    %954 = vector.extract_strided_slice %0 {offsets = [16, 0], sizes = [1, 256], strides = [1, 1]} : vector<25x256xf32> to vector<1x256xf32>
    %955 = vector.shape_cast %954 : vector<1x256xf32> to vector<256xf32>
    %956 = vector.shape_cast %955 : vector<256xf32> to vector<1x256xf32>
    %957 = vector.broadcast %956 : vector<1x256xf32> to vector<16x256xf32>
    %958 = arith.mulf %953, %957 : vector<16x256xf32>
    %959 = arith.truncf %958 : vector<16x256xf32> to vector<16x256xbf16>
    %c256_340 = arith.constant 256 : index
    %c0_341 = arith.constant 0 : index
    %960 = vector.load %arg6[%c256_340, %c0_341] : memref<400x256xbf16, #tpu.memory_space<vmem>>, vector<16x256xbf16>
    tpu.vector_store %arg6[%c256_340, %c0_341], %959 {strides = array<i32>} : memref<400x256xbf16, #tpu.memory_space<vmem>>, vector<16x256xbf16>,
    %c240_i32_342 = arith.constant 240 : i32
    %961 = tpu.dynamic_rotate %830 by %c240_i32_342 dim 1 : vector<16x256xf32>, i32 -> vector<16x256xf32>
    %962 = vector.extract_strided_slice %0 {offsets = [17, 0], sizes = [1, 256], strides = [1, 1]} : vector<25x256xf32> to vector<1x256xf32>
    %963 = vector.shape_cast %962 : vector<1x256xf32> to vector<256xf32>
    %964 = vector.shape_cast %963 : vector<256xf32> to vector<1x256xf32>
    %965 = vector.broadcast %964 : vector<1x256xf32> to vector<16x256xf32>
    %966 = arith.mulf %961, %965 : vector<16x256xf32>
    %967 = arith.truncf %966 : vector<16x256xf32> to vector<16x256xbf16>
    %c272_343 = arith.constant 272 : index
    %c0_344 = arith.constant 0 : index
    %968 = vector.load %arg6[%c272_343, %c0_344] : memref<400x256xbf16, #tpu.memory_space<vmem>>, vector<16x256xbf16>
    tpu.vector_store %arg6[%c272_343, %c0_344], %967 {strides = array<i32>} : memref<400x256xbf16, #tpu.memory_space<vmem>>, vector<16x256xbf16>,
    %c239_i32_345 = arith.constant 239 : i32
    %969 = tpu.dynamic_rotate %830 by %c239_i32_345 dim 1 : vector<16x256xf32>, i32 -> vector<16x256xf32>
    %970 = vector.extract_strided_slice %0 {offsets = [18, 0], sizes = [1, 256], strides = [1, 1]} : vector<25x256xf32> to vector<1x256xf32>
    %971 = vector.shape_cast %970 : vector<1x256xf32> to vector<256xf32>
    %972 = vector.shape_cast %971 : vector<256xf32> to vector<1x256xf32>
    %973 = vector.broadcast %972 : vector<1x256xf32> to vector<16x256xf32>
    %974 = arith.mulf %969, %973 : vector<16x256xf32>
    %975 = arith.truncf %974 : vector<16x256xf32> to vector<16x256xbf16>
    %c288_346 = arith.constant 288 : index
    %c0_347 = arith.constant 0 : index
    %976 = vector.load %arg6[%c288_346, %c0_347] : memref<400x256xbf16, #tpu.memory_space<vmem>>, vector<16x256xbf16>
    tpu.vector_store %arg6[%c288_346, %c0_347], %975 {strides = array<i32>} : memref<400x256xbf16, #tpu.memory_space<vmem>>, vector<16x256xbf16>,
    %c238_i32_348 = arith.constant 238 : i32
    %977 = tpu.dynamic_rotate %830 by %c238_i32_348 dim 1 : vector<16x256xf32>, i32 -> vector<16x256xf32>
    %978 = vector.extract_strided_slice %0 {offsets = [19, 0], sizes = [1, 256], strides = [1, 1]} : vector<25x256xf32> to vector<1x256xf32>
    %979 = vector.shape_cast %978 : vector<1x256xf32> to vector<256xf32>
    %980 = vector.shape_cast %979 : vector<256xf32> to vector<1x256xf32>
    %981 = vector.broadcast %980 : vector<1x256xf32> to vector<16x256xf32>
    %982 = arith.mulf %977, %981 : vector<16x256xf32>
    %983 = arith.truncf %982 : vector<16x256xf32> to vector<16x256xbf16>
    %c304_349 = arith.constant 304 : index
    %c0_350 = arith.constant 0 : index
    %984 = vector.load %arg6[%c304_349, %c0_350] : memref<400x256xbf16, #tpu.memory_space<vmem>>, vector<16x256xbf16>
    tpu.vector_store %arg6[%c304_349, %c0_350], %983 {strides = array<i32>} : memref<400x256xbf16, #tpu.memory_space<vmem>>, vector<16x256xbf16>,
    %c226_i32_351 = arith.constant 226 : i32
    %985 = tpu.dynamic_rotate %830 by %c226_i32_351 dim 1 : vector<16x256xf32>, i32 -> vector<16x256xf32>
    %986 = vector.extract_strided_slice %0 {offsets = [20, 0], sizes = [1, 256], strides = [1, 1]} : vector<25x256xf32> to vector<1x256xf32>
    %987 = vector.shape_cast %986 : vector<1x256xf32> to vector<256xf32>
    %988 = vector.shape_cast %987 : vector<256xf32> to vector<1x256xf32>
    %989 = vector.broadcast %988 : vector<1x256xf32> to vector<16x256xf32>
    %990 = arith.mulf %985, %989 : vector<16x256xf32>
    %991 = arith.truncf %990 : vector<16x256xf32> to vector<16x256xbf16>
    %c320_352 = arith.constant 320 : index
    %c0_353 = arith.constant 0 : index
    %992 = vector.load %arg6[%c320_352, %c0_353] : memref<400x256xbf16, #tpu.memory_space<vmem>>, vector<16x256xbf16>
    tpu.vector_store %arg6[%c320_352, %c0_353], %991 {strides = array<i32>} : memref<400x256xbf16, #tpu.memory_space<vmem>>, vector<16x256xbf16>,
    %c225_i32_354 = arith.constant 225 : i32
    %993 = tpu.dynamic_rotate %830 by %c225_i32_354 dim 1 : vector<16x256xf32>, i32 -> vector<16x256xf32>
    %994 = vector.extract_strided_slice %0 {offsets = [21, 0], sizes = [1, 256], strides = [1, 1]} : vector<25x256xf32> to vector<1x256xf32>
    %995 = vector.shape_cast %994 : vector<1x256xf32> to vector<256xf32>
    %996 = vector.shape_cast %995 : vector<256xf32> to vector<1x256xf32>
    %997 = vector.broadcast %996 : vector<1x256xf32> to vector<16x256xf32>
    %998 = arith.mulf %993, %997 : vector<16x256xf32>
    %999 = arith.truncf %998 : vector<16x256xf32> to vector<16x256xbf16>
    %c336_355 = arith.constant 336 : index
    %c0_356 = arith.constant 0 : index
    %1000 = vector.load %arg6[%c336_355, %c0_356] : memref<400x256xbf16, #tpu.memory_space<vmem>>, vector<16x256xbf16>
    tpu.vector_store %arg6[%c336_355, %c0_356], %999 {strides = array<i32>} : memref<400x256xbf16, #tpu.memory_space<vmem>>, vector<16x256xbf16>,
    %c224_i32_357 = arith.constant 224 : i32
    %1001 = tpu.dynamic_rotate %830 by %c224_i32_357 dim 1 : vector<16x256xf32>, i32 -> vector<16x256xf32>
    %1002 = vector.extract_strided_slice %0 {offsets = [22, 0], sizes = [1, 256], strides = [1, 1]} : vector<25x256xf32> to vector<1x256xf32>
    %1003 = vector.shape_cast %1002 : vector<1x256xf32> to vector<256xf32>
    %1004 = vector.shape_cast %1003 : vector<256xf32> to vector<1x256xf32>
    %1005 = vector.broadcast %1004 : vector<1x256xf32> to vector<16x256xf32>
    %1006 = arith.mulf %1001, %1005 : vector<16x256xf32>
    %1007 = arith.truncf %1006 : vector<16x256xf32> to vector<16x256xbf16>
    %c352_358 = arith.constant 352 : index
    %c0_359 = arith.constant 0 : index
    %1008 = vector.load %arg6[%c352_358, %c0_359] : memref<400x256xbf16, #tpu.memory_space<vmem>>, vector<16x256xbf16>
    tpu.vector_store %arg6[%c352_358, %c0_359], %1007 {strides = array<i32>} : memref<400x256xbf16, #tpu.memory_space<vmem>>, vector<16x256xbf16>,
    %c223_i32_360 = arith.constant 223 : i32
    %1009 = tpu.dynamic_rotate %830 by %c223_i32_360 dim 1 : vector<16x256xf32>, i32 -> vector<16x256xf32>
    %1010 = vector.extract_strided_slice %0 {offsets = [23, 0], sizes = [1, 256], strides = [1, 1]} : vector<25x256xf32> to vector<1x256xf32>
    %1011 = vector.shape_cast %1010 : vector<1x256xf32> to vector<256xf32>
    %1012 = vector.shape_cast %1011 : vector<256xf32> to vector<1x256xf32>
    %1013 = vector.broadcast %1012 : vector<1x256xf32> to vector<16x256xf32>
    %1014 = arith.mulf %1009, %1013 : vector<16x256xf32>
    %1015 = arith.truncf %1014 : vector<16x256xf32> to vector<16x256xbf16>
    %c368_361 = arith.constant 368 : index
    %c0_362 = arith.constant 0 : index
    %1016 = vector.load %arg6[%c368_361, %c0_362] : memref<400x256xbf16, #tpu.memory_space<vmem>>, vector<16x256xbf16>
    tpu.vector_store %arg6[%c368_361, %c0_362], %1015 {strides = array<i32>} : memref<400x256xbf16, #tpu.memory_space<vmem>>, vector<16x256xbf16>,
    %c222_i32_363 = arith.constant 222 : i32
    %1017 = tpu.dynamic_rotate %830 by %c222_i32_363 dim 1 : vector<16x256xf32>, i32 -> vector<16x256xf32>
    %1018 = vector.extract_strided_slice %0 {offsets = [24, 0], sizes = [1, 256], strides = [1, 1]} : vector<25x256xf32> to vector<1x256xf32>
    %1019 = vector.shape_cast %1018 : vector<1x256xf32> to vector<256xf32>
    %1020 = vector.shape_cast %1019 : vector<256xf32> to vector<1x256xf32>
    %1021 = vector.broadcast %1020 : vector<1x256xf32> to vector<16x256xf32>
    %1022 = arith.mulf %1017, %1021 : vector<16x256xf32>
    %1023 = arith.truncf %1022 : vector<16x256xf32> to vector<16x256xbf16>
    %c384_364 = arith.constant 384 : index
    %c0_365 = arith.constant 0 : index
    %1024 = vector.load %arg6[%c384_364, %c0_365] : memref<400x256xbf16, #tpu.memory_space<vmem>>, vector<16x256xbf16>
    tpu.vector_store %arg6[%c384_364, %c0_365], %1023 {strides = array<i32>} : memref<400x256xbf16, #tpu.memory_space<vmem>>, vector<16x256xbf16>,
    %c4 = arith.constant 4 : index
    %c0_366 = arith.constant 0 : index
    %c0_367 = arith.constant 0 : index
    %1025 = vector.load %arg2[%c4, %c0_366, %c0_367] : memref<5x16x400xbf16, #tpu.memory_space<vmem>>, vector<1x16x400xbf16>
    %1026 = vector.shape_cast %1025 : vector<1x16x400xbf16> to vector<16x400xbf16>
    %c0_368 = arith.constant 0 : index
    %c0_369 = arith.constant 0 : index
    %1027 = vector.load %arg6[%c0_368, %c0_369] : memref<400x256xbf16, #tpu.memory_space<vmem>>, vector<400x256xbf16>
    %cst_370 = arith.constant dense<0.000000e+00> : vector<16x256xf32>
    %1028 = tpu.matmul %1026, %1027, %cst_370 {dimension_numbers = #tpu.dot_dimension_numbers<[1], [0], [0], [1], [0, 0, 1, 1], [], []>} : vector<16x400xbf16>, vector<400x256xbf16>, vector<16x256xf32> -> vector<16x256xf32>
    %c4_371 = arith.constant 4 : index
    %c0_372 = arith.constant 0 : index
    %c0_373 = arith.constant 0 : index
    %1029 = vector.load %arg3[%c4_371, %c0_372, %c0_373] : memref<5x16x1xf32, #tpu.memory_space<vmem>>, vector<1x16x1xf32>
    %1030 = vector.shape_cast %1029 : vector<1x16x1xf32> to vector<16x1xf32>
    %1031 = vector.broadcast %1030 : vector<16x1xf32> to vector<16x256xf32>
    %1032 = arith.addf %1028, %1031 : vector<16x256xf32>
    %cst_374 = arith.constant 0.000000e+00 : f32
    %1033 = vector.broadcast %cst_374 : f32 to vector<16x256xf32>
    %1034 = arith.subf %1033, %1032 : vector<16x256xf32>
    %1035 = math.exp %1034 : vector<16x256xf32>
    %cst_375 = arith.constant 1.000000e+00 : f32
    %1036 = vector.broadcast %cst_375 : f32 to vector<16x256xf32>
    %1037 = arith.addf %1036, %1035 : vector<16x256xf32>
    %cst_376 = arith.constant 1.000000e+00 : f32
    %1038 = vector.broadcast %cst_376 : f32 to vector<16x256xf32>
    %1039 = arith.divf %1038, %1037 : vector<16x256xf32>
    %c0_377 = arith.constant 0 : index
    %c0_378 = arith.constant 0 : index
    %c0_379 = arith.constant 0 : index
    %1040 = vector.load %arg5[%c0_377, %c0_378, %c0_379] : memref<1x16x256xf32, #tpu.memory_space<vmem>>, vector<1x16x256xf32>
    %1041 = vector.shape_cast %1040 : vector<1x16x256xf32> to vector<16x256xf32>
    %1042 = vector.shape_cast %1039 : vector<16x256xf32> to vector<1x16x256xf32>
    tpu.vector_store %arg5[%c0_377, %c0_378, %c0_379], %1042 {strides = array<i32>} : memref<1x16x256xf32, #tpu.memory_space<vmem>>, vector<1x16x256xf32>,
    return
  }
  func.func @transform_0(%arg0: i32) -> (i32, i32, i32) {
    %c0_i32 = arith.constant 0 : i32
    %c0_i32_0 = arith.constant 0 : i32
    %c0_i32_1 = arith.constant 0 : i32
    return %arg0, %c0_i32, %c0_i32_0 : i32, i32, i32
  }
  func.func @transform_1(%arg0: i32) -> (i32, i32, i32) {
    %c0_i32 = arith.constant 0 : i32
    %c0_i32_0 = arith.constant 0 : i32
    %c0_i32_1 = arith.constant 0 : i32
    %c0_i32_2 = arith.constant 0 : i32
    return %c0_i32, %c0_i32_0, %c0_i32_1 : i32, i32, i32
  }
  func.func @transform_2(%arg0: i32) -> (i32, i32, i32) {
    %c0_i32 = arith.constant 0 : i32
    %c0_i32_0 = arith.constant 0 : i32
    %c0_i32_1 = arith.constant 0 : i32
    %c0_i32_2 = arith.constant 0 : i32
    return %c0_i32, %c0_i32_0, %c0_i32_1 : i32, i32, i32
  }
  func.func @transform_3(%arg0: i32) -> (i32, i32) {
    %c0_i32 = arith.constant 0 : i32
    %c0_i32_0 = arith.constant 0 : i32
    %c0_i32_1 = arith.constant 0 : i32
    return %c0_i32, %c0_i32_0 : i32, i32
  }
  func.func @transform_4(%arg0: i32) -> (i32, i32, i32) {
    %c0_i32 = arith.constant 0 : i32
    %c0_i32_0 = arith.constant 0 : i32
    %c0_i32_1 = arith.constant 0 : i32
    return %arg0, %c0_i32, %c0_i32_0 : i32, i32, i32
  }
}

</mosaic_0001>

<llo_original>
// kernel: _forward_impl.1
$region0: #{_forward_impl.1}
  #allocation0 [shape = 'u32[]', space=smem, size = 0x4, offset = 0x4, fixed_abs, tag = 'smem constant byte address 0x4 - core index']
  #allocation1 [shape = 'u32[144,128]{1,0:T(1,128)}', space=vmem, size = 0x12000, scoped, tag = 'internal scratch']
  #allocation2 [shape = 'bf16[400,256]{1,0:T(16,128)(2,1)}', space=vmem, size = 0x32000, scoped, tag = 'scratch operand']
  %s0 = inlined_call_operand.vmem [shape: f32[2,16,256], index: 0, kind: input, shape index: {}]
  %s1 = inlined_call_operand.vmem [shape: bf16[5,16,400], index: 1, kind: input, shape index: {}]
  %s2 = inlined_call_operand.vmem [shape: f32[5,16,1], index: 2, kind: input, shape index: {}]
  %s3 = inlined_call_operand.vmem [shape: f32[25,256], index: 3, kind: input, shape index: {}]
  %s4 = inlined_call_operand.vmem [shape: f32[2,16,256], index: 4, kind: output, shape index: {}]
  %s5 = sld [smem:[#allocation0]]
  $region49: #{_forward_impl.1} parent=0
    _
  %s7 = ssub.s32 1, %s5
  %s8 = scalar_select 0, %s7, %s5
  loop: start=0, step=1, limit=4
  $region2: #{_forward_impl.1} parent=0 // loop_pre_header
    _
  $region3: #{_forward_impl.1} parent=0 // loop_header
    %s10 = sphi 0, %s14
    %p11 = scmp.ge.s32.totalorder %s10, 4
    %s20 = sphi 0, %s22
    %s23 = sphi 0, %s20
    %s24 = sphi 0, %s23
    %s40 = sphi 0, %s24
    %s44 = sphi 0, %s44
    %s46 = sphi 0, %s44
    %s47 = sphi 0, %s46
    %s61 = sphi 0, %s47
    %s65 = sphi 0, %s65
    %s67 = sphi 0, %s65
    %s68 = sphi 0, %s67
    %s82 = sphi 0, %s68
    %s86 = sphi 0, %s86
    %s88 = sphi 0, %s86
    %s89 = sphi 0, %s88
    %s103 = sphi 0, %s89
    %s109 = sphi 0, %s111
    %s112 = sphi 0, %s109
    %s113 = sphi 0, %s112
    %s129 = sphi 0, %s113
  $region4: #{_forward_impl.1} parent=0 // loop_header_branch
    %13 = sbr.rel (%p11) target = $region8
  $region5: #{_forward_impl.1} parent=0 // loop_body
    %s15 = ssub.s32 %s10, 1
    %s16 = ssub.s32 %s10, 2
    %s17 = sadd.s32 %s10, 1
    %s18 = ssub.s32 %s10, %s17
    %p19 = scmp.eq.s32.totalorder %s18, 0
    %s21 = sadd.s32 %s20, 1
    %s22 = scalar_select %p19, %s20, %s21
    %p25 = pneg %p19
    %p26 = scmp.eq.s32.totalorder %s10, 1
    %p27 = por %p25, %p26
    %p28 = scmp.ne.s32.totalorder %s20, %s23
    %p29 = scmp.eq.s32.totalorder %s10, 0
    %p30 = por %p28, %p29
    %p31 = scmp.ne.s32.totalorder %s20, %s23
    %p32 = scmp.eq.s32.totalorder %s15, 1
    %p33 = por %p31, %p32
    %p34 = scmp.ne.s32.totalorder %s23, %s24
    %p35 = scmp.eq.s32.totalorder %s15, 0
    %p36 = por %p34, %p35
    %p37 = scmp.ne.s32.totalorder %s23, %s24
    %p38 = scmp.eq.s32.totalorder %s16, 1
    %p39 = por %p37, %p38
    %p41 = scmp.ne.s32.totalorder %s24, %s40
    %p42 = scmp.eq.s32.totalorder %s16, 0
    %p43 = por %p41, %p42
    %s45 = sadd.s32 %s44, 1
    %p48 = scmp.eq.s32.totalorder %s10, 1
    %p49 = scmp.ne.s32.totalorder %s44, %s46
    %p50 = scmp.eq.s32.totalorder %s10, 0
    %p51 = por %p49, %p50
    %p52 = scmp.ne.s32.totalorder %s44, %s46
    %p53 = scmp.eq.s32.totalorder %s15, 1
    %p54 = por %p52, %p53
    %p55 = scmp.ne.s32.totalorder %s46, %s47
    %p56 = scmp.eq.s32.totalorder %s15, 0
    %p57 = por %p55, %p56
    %p58 = scmp.ne.s32.totalorder %s46, %s47
    %p59 = scmp.eq.s32.totalorder %s16, 1
    %p60 = por %p58, %p59
    %p62 = scmp.ne.s32.totalorder %s47, %s61
    %p63 = scmp.eq.s32.totalorder %s16, 0
    %p64 = por %p62, %p63
    %s66 = sadd.s32 %s65, 1
    %p69 = scmp.eq.s32.totalorder %s10, 1
    %p70 = scmp.ne.s32.totalorder %s65, %s67
    %p71 = scmp.eq.s32.totalorder %s10, 0
    %p72 = por %p70, %p71
    %p73 = scmp.ne.s32.totalorder %s65, %s67
    %p74 = scmp.eq.s32.totalorder %s15, 1
    %p75 = por %p73, %p74
    %p76 = scmp.ne.s32.totalorder %s67, %s68
    %p77 = scmp.eq.s32.totalorder %s15, 0
    %p78 = por %p76, %p77
    %p79 = scmp.ne.s32.totalorder %s67, %s68
    %p80 = scmp.eq.s32.totalorder %s16, 1
    %p81 = por %p79, %p80
    %p83 = scmp.ne.s32.totalorder %s68, %s82
    %p84 = scmp.eq.s32.totalorder %s16, 0
    %p85 = por %p83, %p84
    %s87 = sadd.s32 %s86, 1
    %p90 = scmp.eq.s32.totalorder %s10, 1
    %p91 = scmp.ne.s32.totalorder %s86, %s88
    %p92 = scmp.eq.s32.totalorder %s10, 0
    %p93 = por %p91, %p92
    %p94 = scmp.ne.s32.totalorder %s86, %s88
    %p95 = scmp.eq.s32.totalorder %s15, 1
    %p96 = por %p94, %p95
    %p97 = scmp.ne.s32.totalorder %s88, %s89
    %p98 = scmp.eq.s32.totalorder %s15, 0
    %p99 = por %p97, %p98
    %p100 = scmp.ne.s32.totalorder %s88, %s89
    %p101 = scmp.eq.s32.totalorder %s16, 1
    %p102 = por %p100, %p101
    %p104 = scmp.ne.s32.totalorder %s89, %s103
    %p105 = scmp.eq.s32.totalorder %s16, 0
    %p106 = por %p104, %p105
    %s107 = ssub.s32 %s10, %s17
    %p108 = scmp.eq.s32.totalorder %s107, 0
    %s110 = sadd.s32 %s109, 1
    %s111 = scalar_select %p108, %s109, %s110
    %p114 = pneg %p108
    %p115 = scmp.eq.s32.totalorder %s10, 1
    %p116 = por %p114, %p115
    %p117 = scmp.ne.s32.totalorder %s109, %s112
    %p118 = scmp.eq.s32.totalorder %s10, 0
    %p119 = por %p117, %p118
    %p120 = scmp.ne.s32.totalorder %s109, %s112
    %p121 = scmp.eq.s32.totalorder %s15, 1
    %p122 = por %p120, %p121
    %p123 = scmp.ne.s32.totalorder %s112, %s113
    %p124 = scmp.eq.s32.totalorder %s15, 0
    %p125 = por %p123, %p124
    %p126 = scmp.ne.s32.totalorder %s112, %s113
    %p127 = scmp.eq.s32.totalorder %s16, 1
    %p128 = por %p126, %p127
    %p130 = scmp.ne.s32.totalorder %s113, %s129
    %p131 = scmp.eq.s32.totalorder %s16, 0
    %p132 = por %p130, %p131
    %p133 = scmp.le.s32.totalorder 1, %s10
    %p134 = scmp.lt.s32.totalorder %s10, 3
    %p135 = pnand %p133, %p134
    %p136 = pneg %p135
    // Predicated region
    $region9: #{_forward_impl.1} parent=5 // pred_check
      _
    $region10: #{_forward_impl.1} parent=5 // pred_check_branch
      %138 = sbr.rel (%p135) target = $region12
    $region11: #{_forward_impl.1} parent=5 // pred_region
      %s139 = ssub.s32 %s10, 1
      // Predicated region
      $region13: #{_forward_impl.1} parent=11 // pred_check
        %p140 = pneg %p57
      $region14: #{_forward_impl.1} parent=11 // pred_check_branch
        %142 = sbr.rel (%p140) target = $region16
      $region15: #{_forward_impl.1} parent=11 // pred_region
        _
      $region16: #{_forward_impl.1} parent=11 // pred_fallthru
        _
      // Predicated region
      $region17: #{_forward_impl.1} parent=11 // pred_check
        %p143 = pneg %p78
      $region18: #{_forward_impl.1} parent=11 // pred_check_branch
        %145 = sbr.rel (%p143) target = $region20
      $region19: #{_forward_impl.1} parent=11 // pred_region
        _
      $region20: #{_forward_impl.1} parent=11 // pred_fallthru
        _
      // Predicated region
      $region21: #{_forward_impl.1} parent=11 // pred_check
        %p146 = pneg %p99
      $region22: #{_forward_impl.1} parent=11 // pred_check_branch
        %148 = sbr.rel (%p146) target = $region24
      $region23: #{_forward_impl.1} parent=11 // pred_region
        _
      $region24: #{_forward_impl.1} parent=11 // pred_fallthru
        _
    $region12: #{_forward_impl.1} parent=5 // pred_fallthru
      _
    %p149 = scmp.lt.s32.totalorder %s10, 2
    // Predicated region
    $region25: #{_forward_impl.1} parent=5 // pred_check
      %p150 = pneg %p149
    $region26: #{_forward_impl.1} parent=5 // pred_check_branch
      %152 = sbr.rel (%p150) target = $region28
    $region27: #{_forward_impl.1} parent=5 // pred_region
      // Predicated region
      $region29: #{_forward_impl.1} parent=27 // pred_check
        %p153 = pneg %p30
      $region30: #{_forward_impl.1} parent=27 // pred_check_branch
        %155 = sbr.rel (%p153) target = $region32
      $region31: #{_forward_impl.1} parent=27 // pred_region
        %p156 = scmp.lt.s32.totalorder %s10, 1
        %s157 = scalar_select %p156, %s10, 1
        %s158 = smul.addr %s157, 4
        %s159 = smul.addr %s158, 8
        %s160 = scalar_lea.vmem %s0, %s159
      $region32: #{_forward_impl.1} parent=27 // pred_fallthru
        _
    $region28: #{_forward_impl.1} parent=5 // pred_fallthru
      _
    %p161 = scmp.le.s32.totalorder 1, %s10
    %p162 = scmp.lt.s32.totalorder %s10, 3
    %p163 = pnand %p161, %p162
    %p164 = pneg %p163
    // Predicated region
    $region33: #{_forward_impl.1} parent=5 // pred_check
      _
    $region34: #{_forward_impl.1} parent=5 // pred_check_branch
      %166 = sbr.rel (%p163) target = $region36
    $region35: #{_forward_impl.1} parent=5 // pred_region
      %s167 = ssub.s32 %s10, 1
      %p168 = scmp.lt.s32.totalorder %s15, 1
      %s169 = scalar_select %p168, %s15, 1
      %s170 = smul.addr %s169, 4
      %s171 = smul.addr %s170, 8
      %s172 = scalar_lea.vmem %s0, %s171
      %p173 = pneg %p36
      %p174 = pneg %p33
      %p175 = pneg %p57
      %p176 = pneg %p54
      %p177 = pneg %p78
      %p178 = pneg %p75
      %p179 = pneg %p99
      %p180 = pneg %p96
      %p181 = pneg %p125
      %p182 = pneg %p122
      %p183 = scmp.lt.s32.totalorder %s15, 1
      %s184 = scalar_select %p183, %s15, 1
      %s185 = smul.addr %s184, 4
      %s186 = smul.addr %s185, 8
      %s187 = scalar_lea.vmem %s4, %s186
      %p188 = scmp.lt.s32.totalorder %s15, 1
      %s189 = scalar_select %p188, %s15, 1
      %s190 = smul.addr %s189, 4
      %s191 = smul.addr %s190, 8
      %s192 = scalar_lea.vmem %s0, %s191
      %p193 = scmp.lt.s32.totalorder %s15, 1
      %s194 = scalar_select %p193, %s15, 1
      %s195 = smul.addr %s194, 4
      %s196 = smul.addr %s195, 8
      %s197 = scalar_lea.vmem %s4, %s196
      %v199 = vld [vmem:[%s3] sm:$0xff]
      %v200 = vld [vmem:[%s3 + $0x8] sm:$0xff]
      %v201 = vld [vmem:[%s3 + $0x10] sm:$0xff]
      %v202 = vld [vmem:[%s3 + $0x18] sm:$0xff]
      %v203 = vld [vmem:[%s3 + $0x20] sm:$0xff]
      %v204 = vld [vmem:[%s3 + $0x28] sm:$0xff]
      %v205 = vld [vmem:[%s3 + $0x30] sm:$0x1]
      %v206 = vld [vmem:[%s3 + $0x38] sm:$0x1]
      %v207 = vld [vmem:[%s192] sm:$0xff]
      %v208 = vld [vmem:[%s192 + $0x8] sm:$0xff]
      %v209 = vld [vmem:[%s192 + $0x10] sm:$0xff]
      %v210 = vld [vmem:[%s192 + $0x18] sm:$0xff]
      %211 = vrot.lane.b32.xlu0 %v207, 34
      %v212 = vpop.permute.xlu0 %211
      %213 = vrot.lane.b32.xlu0 %v209, 34
      %v214 = vpop.permute.xlu0 %213
      %215 = vrot.lane.b32.xlu0 %v208, 34
      %v216 = vpop.permute.xlu0 %215
      %217 = vrot.lane.b32.xlu0 %v210, 34
      %v218 = vpop.permute.xlu0 %217
      %v219 = vlaneseq
      %v220 = vand.u32 %v219, 127
      %vm221 = vcmp.lt.s32.totalorder %v220, 34
      %v222 = vsel %vm221, %v212, %v216
      %v223 = vsel %vm221, %v214, %v218
      %v224 = vsel %vm221, %v216, %v212
      %v225 = vsel %vm221, %v218, %v214
      %v226 = vlaneseq
      %v227 = vshrl.u32 %v226, 7
      %v228 = vsub.s32 0, %v227
      %v229 = vrot.slane %v199, %v228
      %v230 = vlaneseq
      %v231 = vshrl.u32 %v230, 7
      %v232 = vsub.s32 0, %v231
      %v233 = vrot.slane %v200, %v232
      %v234 = vmul.f32 %v224, %v229
      %v235 = vmul.f32 %v222, %v233
      %v236 = vmul.f32 %v225, %v229
      %v237 = vmul.f32 %v223, %v233
      %v238 = vpack.c.bf16 %v236, %v234
      %v239 = vpack.c.bf16 %v237, %v235
      %240 = vst [vmem:[#allocation2] sm:$0xff] %v238
      %241 = vst [vmem:[#allocation2 + $0x8] sm:$0xff] %v239
      %242 = vrot.lane.b32.xlu0 %v207, 33
      %v243 = vpop.permute.xlu0 %242
      %244 = vrot.lane.b32.xlu0 %v209, 33
      %v245 = vpop.permute.xlu0 %244
      %246 = vrot.lane.b32.xlu0 %v208, 33
      %v247 = vpop.permute.xlu0 %246
      %248 = vrot.lane.b32.xlu0 %v210, 33
      %v249 = vpop.permute.xlu0 %248
      %vm250 = vcmp.lt.s32.totalorder %v220, 33
      %v251 = vsel %vm250, %v243, %v247
      %v252 = vsel %vm250, %v245, %v249
      %v253 = vsel %vm250, %v247, %v243
      %v254 = vsel %vm250, %v249, %v245
      %v255 = vlaneseq
      %v256 = vshrl.u32 %v255, 7
      %v257 = vsub.s32 1, %v256
      %v258 = vrot.slane %v199, %v257
      %v259 = vlaneseq
      %v260 = vshrl.u32 %v259, 7
      %v261 = vsub.s32 1, %v260
      %v262 = vrot.slane %v200, %v261
      %v263 = vmul.f32 %v253, %v258
      %v264 = vmul.f32 %v251, %v262
      %v265 = vmul.f32 %v254, %v258
      %v266 = vmul.f32 %v252, %v262
      %v267 = vpack.c.bf16 %v265, %v263
      %v268 = vpack.c.bf16 %v266, %v264
      %269 = vst [vmem:[#allocation2 + $0x10] sm:$0xff] %v267
      %270 = vst [vmem:[#allocation2 + $0x18] sm:$0xff] %v268
      %271 = vrot.lane.b32.xlu0 %v207, 32
      %v272 = vpop.permute.xlu0 %271
      %273 = vrot.lane.b32.xlu0 %v209, 32
      %v274 = vpop.permute.xlu0 %273
      %275 = vrot.lane.b32.xlu0 %v208, 32
      %v276 = vpop.permute.xlu0 %275
      %277 = vrot.lane.b32.xlu0 %v210, 32
      %v278 = vpop.permute.xlu0 %277
      %vm279 = vcmp.lt.s32.totalorder %v220, 32
      %v280 = vsel %vm279, %v272, %v276
      %v281 = vsel %vm279, %v274, %v278
      %v282 = vsel %vm279, %v276, %v272
      %v283 = vsel %vm279, %v278, %v274
      %v284 = vlaneseq
      %v285 = vshrl.u32 %v284, 7
      %v286 = vsub.s32 2, %v285
      %v287 = vrot.slane %v199, %v286
      %v288 = vlaneseq
      %v289 = vshrl.u32 %v288, 7
      %v290 = vsub.s32 2, %v289
      %v291 = vrot.slane %v200, %v290
      %v292 = vmul.f32 %v282, %v287
      %v293 = vmul.f32 %v280, %v291
      %v294 = vmul.f32 %v283, %v287
      %v295 = vmul.f32 %v281, %v291
      %v296 = vpack.c.bf16 %v294, %v292
      %v297 = vpack.c.bf16 %v295, %v293
      %298 = vst [vmem:[#allocation2 + $0x20] sm:$0xff] %v296
      %299 = vst [vmem:[#allocation2 + $0x28] sm:$0xff] %v297
      %300 = vrot.lane.b32.xlu0 %v207, 31
      %v301 = vpop.permute.xlu0 %300
      %302 = vrot.lane.b32.xlu0 %v209, 31
      %v303 = vpop.permute.xlu0 %302
      %304 = vrot.lane.b32.xlu0 %v208, 31
      %v305 = vpop.permute.xlu0 %304
      %306 = vrot.lane.b32.xlu0 %v210, 31
      %v307 = vpop.permute.xlu0 %306
      %vm308 = vcmp.lt.s32.totalorder %v220, 31
      %v309 = vsel %vm308, %v301, %v305
      %v310 = vsel %vm308, %v303, %v307
      %v311 = vsel %vm308, %v305, %v301
      %v312 = vsel %vm308, %v307, %v303
      %v313 = vlaneseq
      %v314 = vshrl.u32 %v313, 7
      %v315 = vsub.s32 3, %v314
      %v316 = vrot.slane %v199, %v315
      %v317 = vlaneseq
      %v318 = vshrl.u32 %v317, 7
      %v319 = vsub.s32 3, %v318
      %v320 = vrot.slane %v200, %v319
      %v321 = vmul.f32 %v311, %v316
      %v322 = vmul.f32 %v309, %v320
      %v323 = vmul.f32 %v312, %v316
      %v324 = vmul.f32 %v310, %v320
      %v325 = vpack.c.bf16 %v323, %v321
      %v326 = vpack.c.bf16 %v324, %v322
      %327 = vst [vmem:[#allocation2 + $0x30] sm:$0xff] %v325
      %328 = vst [vmem:[#allocation2 + $0x38] sm:$0xff] %v326
      %329 = vrot.lane.b32.xlu0 %v207, 30
      %v330 = vpop.permute.xlu0 %329
      %331 = vrot.lane.b32.xlu0 %v209, 30
      %v332 = vpop.permute.xlu0 %331
      %333 = vrot.lane.b32.xlu0 %v208, 30
      %v334 = vpop.permute.xlu0 %333
      %335 = vrot.lane.b32.xlu0 %v210, 30
      %v336 = vpop.permute.xlu0 %335
      %vm337 = vcmp.lt.s32.totalorder %v220, 30
      %v338 = vsel %vm337, %v330, %v334
      %v339 = vsel %vm337, %v332, %v336
      %v340 = vsel %vm337, %v334, %v330
      %v341 = vsel %vm337, %v336, %v332
      %v342 = vlaneseq
      %v343 = vshrl.u32 %v342, 7
      %v344 = vsub.s32 4, %v343
      %v345 = vrot.slane %v199, %v344
      %v346 = vlaneseq
      %v347 = vshrl.u32 %v346, 7
      %v348 = vsub.s32 4, %v347
      %v349 = vrot.slane %v200, %v348
      %v350 = vmul.f32 %v340, %v345
      %v351 = vmul.f32 %v338, %v349
      %v352 = vmul.f32 %v341, %v345
      %v353 = vmul.f32 %v339, %v349
      %v354 = vpack.c.bf16 %v352, %v350
      %v355 = vpack.c.bf16 %v353, %v351
      %356 = vst [vmem:[#allocation2 + $0x40] sm:$0xff] %v354
      %357 = vst [vmem:[#allocation2 + $0x48] sm:$0xff] %v355
      %358 = vrot.lane.b32.xlu0 %v207, 18
      %v359 = vpop.permute.xlu0 %358
      %360 = vrot.lane.b32.xlu0 %v209, 18
      %v361 = vpop.permute.xlu0 %360
      %362 = vrot.lane.b32.xlu0 %v208, 18
      %v363 = vpop.permute.xlu0 %362
      %364 = vrot.lane.b32.xlu0 %v210, 18
      %v365 = vpop.permute.xlu0 %364
      %vm366 = vcmp.lt.s32.totalorder %v220, 18
      %v367 = vsel %vm366, %v359, %v363
      %v368 = vsel %vm366, %v361, %v365
      %v369 = vsel %vm366, %v363, %v359
      %v370 = vsel %vm366, %v365, %v361
      %v371 = vlaneseq
      %v372 = vshrl.u32 %v371, 7
      %v373 = vsub.s32 5, %v372
      %v374 = vrot.slane %v199, %v373
      %v375 = vlaneseq
      %v376 = vshrl.u32 %v375, 7
      %v377 = vsub.s32 5, %v376
      %v378 = vrot.slane %v200, %v377
      %v379 = vmul.f32 %v369, %v374
      %v380 = vmul.f32 %v367, %v378
      %v381 = vmul.f32 %v370, %v374
      %v382 = vmul.f32 %v368, %v378
      %v383 = vpack.c.bf16 %v381, %v379
      %v384 = vpack.c.bf16 %v382, %v380
      %385 = vst [vmem:[#allocation2 + $0x50] sm:$0xff] %v383
      %386 = vst [vmem:[#allocation2 + $0x58] sm:$0xff] %v384
      %387 = vrot.lane.b32.xlu0 %v207, 17
      %v388 = vpop.permute.xlu0 %387
      %389 = vrot.lane.b32.xlu0 %v209, 17
      %v390 = vpop.permute.xlu0 %389
      %391 = vrot.lane.b32.xlu0 %v208, 17
      %v392 = vpop.permute.xlu0 %391
      %393 = vrot.lane.b32.xlu0 %v210, 17
      %v394 = vpop.permute.xlu0 %393
      %vm395 = vcmp.lt.s32.totalorder %v220, 17
      %v396 = vsel %vm395, %v388, %v392
      %v397 = vsel %vm395, %v390, %v394
      %v398 = vsel %vm395, %v392, %v388
      %v399 = vsel %vm395, %v394, %v390
      %v400 = vlaneseq
      %v401 = vshrl.u32 %v400, 7
      %v402 = vsub.s32 6, %v401
      %v403 = vrot.slane %v199, %v402
      %v404 = vlaneseq
      %v405 = vshrl.u32 %v404, 7
      %v406 = vsub.s32 6, %v405
      %v407 = vrot.slane %v200, %v406
      %v408 = vmul.f32 %v398, %v403
      %v409 = vmul.f32 %v396, %v407
      %v410 = vmul.f32 %v399, %v403
      %v411 = vmul.f32 %v397, %v407
      %v412 = vpack.c.bf16 %v410, %v408
      %v413 = vpack.c.bf16 %v411, %v409
      %414 = vst [vmem:[#allocation2 + $0x60] sm:$0xff] %v412
      %415 = vst [vmem:[#allocation2 + $0x68] sm:$0xff] %v413
      %416 = vrot.lane.b32.xlu0 %v207, 16
      %v417 = vpop.permute.xlu0 %416
      %418 = vrot.lane.b32.xlu0 %v209, 16
      %v419 = vpop.permute.xlu0 %418
      %420 = vrot.lane.b32.xlu0 %v208, 16
      %v421 = vpop.permute.xlu0 %420
      %422 = vrot.lane.b32.xlu0 %v210, 16
      %v423 = vpop.permute.xlu0 %422
      %vm424 = vcmp.lt.s32.totalorder %v220, 16
      %v425 = vsel %vm424, %v417, %v421
      %v426 = vsel %vm424, %v419, %v423
      %v427 = vsel %vm424, %v421, %v417
      %v428 = vsel %vm424, %v423, %v419
      %v429 = vlaneseq
      %v430 = vshrl.u32 %v429, 7
      %v431 = vsub.s32 7, %v430
      %v432 = vrot.slane %v199, %v431
      %v433 = vlaneseq
      %v434 = vshrl.u32 %v433, 7
      %v435 = vsub.s32 7, %v434
      %v436 = vrot.slane %v200, %v435
      %v437 = vmul.f32 %v427, %v432
      %v438 = vmul.f32 %v425, %v436
      %v439 = vmul.f32 %v428, %v432
      %v440 = vmul.f32 %v426, %v436
      %v441 = vpack.c.bf16 %v439, %v437
      %v442 = vpack.c.bf16 %v440, %v438
      %443 = vst [vmem:[#allocation2 + $0x70] sm:$0xff] %v441
      %444 = vst [vmem:[#allocation2 + $0x78] sm:$0xff] %v442
      %445 = vrot.lane.b32.xlu0 %v207, 15
      %v446 = vpop.permute.xlu0 %445
      %447 = vrot.lane.b32.xlu0 %v209, 15
      %v448 = vpop.permute.xlu0 %447
      %449 = vrot.lane.b32.xlu0 %v208, 15
      %v450 = vpop.permute.xlu0 %449
      %451 = vrot.lane.b32.xlu0 %v210, 15
      %v452 = vpop.permute.xlu0 %451
      %vm453 = vcmp.lt.s32.totalorder %v220, 15
      %v454 = vsel %vm453, %v446, %v450
      %v455 = vsel %vm453, %v448, %v452
      %v456 = vsel %vm453, %v450, %v446
      %v457 = vsel %vm453, %v452, %v448
      %v458 = vlaneseq
      %v459 = vshrl.u32 %v458, 7
      %v460 = vsub.s32 0, %v459
      %v461 = vrot.slane %v201, %v460
      %v462 = vlaneseq
      %v463 = vshrl.u32 %v462, 7
      %v464 = vsub.s32 0, %v463
      %v465 = vrot.slane %v202, %v464
      %v466 = vmul.f32 %v456, %v461
      %v467 = vmul.f32 %v454, %v465
      %v468 = vmul.f32 %v457, %v461
      %v469 = vmul.f32 %v455, %v465
      %v470 = vpack.c.bf16 %v468, %v466
      %v471 = vpack.c.bf16 %v469, %v467
      %472 = vst [vmem:[#allocation2 + $0x80] sm:$0xff] %v470
      %473 = vst [vmem:[#allocation2 + $0x88] sm:$0xff] %v471
      %474 = vrot.lane.b32.xlu0 %v207, 14
      %v475 = vpop.permute.xlu0 %474
      %476 = vrot.lane.b32.xlu0 %v209, 14
      %v477 = vpop.permute.xlu0 %476
      %478 = vrot.lane.b32.xlu0 %v208, 14
      %v479 = vpop.permute.xlu0 %478
      %480 = vrot.lane.b32.xlu0 %v210, 14
      %v481 = vpop.permute.xlu0 %480
      %vm482 = vcmp.lt.s32.totalorder %v220, 14
      %v483 = vsel %vm482, %v475, %v479
      %v484 = vsel %vm482, %v477, %v481
      %v485 = vsel %vm482, %v479, %v475
      %v486 = vsel %vm482, %v481, %v477
      %v487 = vlaneseq
      %v488 = vshrl.u32 %v487, 7
      %v489 = vsub.s32 1, %v488
      %v490 = vrot.slane %v201, %v489
      %v491 = vlaneseq
      %v492 = vshrl.u32 %v491, 7
      %v493 = vsub.s32 1, %v492
      %v494 = vrot.slane %v202, %v493
      %v495 = vmul.f32 %v485, %v490
      %v496 = vmul.f32 %v483, %v494
      %v497 = vmul.f32 %v486, %v490
      %v498 = vmul.f32 %v484, %v494
      %v499 = vpack.c.bf16 %v497, %v495
      %v500 = vpack.c.bf16 %v498, %v496
      %501 = vst [vmem:[#allocation2 + $0x90] sm:$0xff] %v499
      %502 = vst [vmem:[#allocation2 + $0x98] sm:$0xff] %v500
      %503 = vrot.lane.b32.xlu0 %v207, 2
      %v504 = vpop.permute.xlu0 %503
      %505 = vrot.lane.b32.xlu0 %v209, 2
      %v506 = vpop.permute.xlu0 %505
      %507 = vrot.lane.b32.xlu0 %v208, 2
      %v508 = vpop.permute.xlu0 %507
      %509 = vrot.lane.b32.xlu0 %v210, 2
      %v510 = vpop.permute.xlu0 %509
      %vm511 = vcmp.lt.s32.totalorder %v220, 2
      %v512 = vsel %vm511, %v504, %v508
      %v513 = vsel %vm511, %v506, %v510
      %v514 = vsel %vm511, %v508, %v504
      %v515 = vsel %vm511, %v510, %v506
      %v516 = vlaneseq
      %v517 = vshrl.u32 %v516, 7
      %v518 = vsub.s32 2, %v517
      %v519 = vrot.slane %v201, %v518
      %v520 = vlaneseq
      %v521 = vshrl.u32 %v520, 7
      %v522 = vsub.s32 2, %v521
      %v523 = vrot.slane %v202, %v522
      %v524 = vmul.f32 %v514, %v519
      %v525 = vmul.f32 %v512, %v523
      %v526 = vmul.f32 %v515, %v519
      %v527 = vmul.f32 %v513, %v523
      %v528 = vpack.c.bf16 %v526, %v524
      %v529 = vpack.c.bf16 %v527, %v525
      %530 = vst [vmem:[#allocation2 + $0xa0] sm:$0xff] %v528
      %531 = vst [vmem:[#allocation2 + $0xa8] sm:$0xff] %v529
      %532 = vrot.lane.b32.xlu0 %v207, 1
      %v533 = vpop.permute.xlu0 %532
      %534 = vrot.lane.b32.xlu0 %v209, 1
      %v535 = vpop.permute.xlu0 %534
      %536 = vrot.lane.b32.xlu0 %v208, 1
      %v537 = vpop.permute.xlu0 %536
      %538 = vrot.lane.b32.xlu0 %v210, 1
      %v539 = vpop.permute.xlu0 %538
      %vm540 = vcmp.lt.s32.totalorder %v220, 1
      %v541 = vsel %vm540, %v533, %v537
      %v542 = vsel %vm540, %v535, %v539
      %v543 = vsel %vm540, %v537, %v533
      %v544 = vsel %vm540, %v539, %v535
      %v545 = vlaneseq
      %v546 = vshrl.u32 %v545, 7
      %v547 = vsub.s32 3, %v546
      %v548 = vrot.slane %v201, %v547
      %v549 = vlaneseq
      %v550 = vshrl.u32 %v549, 7
      %v551 = vsub.s32 3, %v550
      %v552 = vrot.slane %v202, %v551
      %v553 = vmul.f32 %v543, %v548
      %v554 = vmul.f32 %v541, %v552
      %v555 = vmul.f32 %v544, %v548
      %v556 = vmul.f32 %v542, %v552
      %v557 = vpack.c.bf16 %v555, %v553
      %v558 = vpack.c.bf16 %v556, %v554
      %559 = vst [vmem:[#allocation2 + $0xb0] sm:$0xff] %v557
      %560 = vst [vmem:[#allocation2 + $0xb8] sm:$0xff] %v558
      %v561 = vpack.c.bf16 %v209, %v207
      %v562 = vpack.c.bf16 %v210, %v208
      %563 = vst [vmem:[#allocation2 + $0xc0] sm:$0xff] %v561
      %564 = vst [vmem:[#allocation2 + $0xc8] sm:$0xff] %v562
      %565 = vrot.lane.b32.xlu0 %v207, 127
      %v566 = vpop.permute.xlu0 %565
      %567 = vrot.lane.b32.xlu0 %v209, 127
      %v568 = vpop.permute.xlu0 %567
      %569 = vrot.lane.b32.xlu0 %v208, 127
      %v570 = vpop.permute.xlu0 %569
      %571 = vrot.lane.b32.xlu0 %v210, 127
      %v572 = vpop.permute.xlu0 %571
      %vm573 = vcmp.lt.s32.totalorder %v220, 127
      %v574 = vsel %vm573, %v566, %v570
      %v575 = vsel %vm573, %v568, %v572
      %v576 = vsel %vm573, %v570, %v566
      %v577 = vsel %vm573, %v572, %v568
      %v578 = vlaneseq
      %v579 = vshrl.u32 %v578, 7
      %v580 = vsub.s32 5, %v579
      %v581 = vrot.slane %v201, %v580
      %v582 = vlaneseq
      %v583 = vshrl.u32 %v582, 7
      %v584 = vsub.s32 5, %v583
      %v585 = vrot.slane %v202, %v584
      %v586 = vmul.f32 %v574, %v581
      %v587 = vmul.f32 %v576, %v585
      %v588 = vmul.f32 %v575, %v581
      %v589 = vmul.f32 %v577, %v585
      %v590 = vpack.c.bf16 %v588, %v586
      %v591 = vpack.c.bf16 %v589, %v587
      %592 = vst [vmem:[#allocation2 + $0xd0] sm:$0xff] %v590
      %593 = vst [vmem:[#allocation2 + $0xd8] sm:$0xff] %v591
      %594 = vrot.lane.b32.xlu0 %v207, 126
      %v595 = vpop.permute.xlu0 %594
      %596 = vrot.lane.b32.xlu0 %v209, 126
      %v597 = vpop.permute.xlu0 %596
      %598 = vrot.lane.b32.xlu0 %v208, 126
      %v599 = vpop.permute.xlu0 %598
      %600 = vrot.lane.b32.xlu0 %v210, 126
      %v601 = vpop.permute.xlu0 %600
      %vm602 = vcmp.lt.s32.totalorder %v220, 126
      %v603 = vsel %vm602, %v595, %v599
      %v604 = vsel %vm602, %v597, %v601
      %v605 = vsel %vm602, %v599, %v595
      %v606 = vsel %vm602, %v601, %v597
      %v607 = vlaneseq
      %v608 = vshrl.u32 %v607, 7
      %v609 = vsub.s32 6, %v608
      %v610 = vrot.slane %v201, %v609
      %v611 = vlaneseq
      %v612 = vshrl.u32 %v611, 7
      %v613 = vsub.s32 6, %v612
      %v614 = vrot.slane %v202, %v613
      %v615 = vmul.f32 %v603, %v610
      %v616 = vmul.f32 %v605, %v614
      %v617 = vmul.f32 %v604, %v610
      %v618 = vmul.f32 %v606, %v614
      %v619 = vpack.c.bf16 %v617, %v615
      %v620 = vpack.c.bf16 %v618, %v616
      %621 = vst [vmem:[#allocation2 + $0xe0] sm:$0xff] %v619
      %622 = vst [vmem:[#allocation2 + $0xe8] sm:$0xff] %v620
      %623 = vrot.lane.b32.xlu0 %v207, 114
      %v624 = vpop.permute.xlu0 %623
      %625 = vrot.lane.b32.xlu0 %v209, 114
      %v626 = vpop.permute.xlu0 %625
      %627 = vrot.lane.b32.xlu0 %v208, 114
      %v628 = vpop.permute.xlu0 %627
      %629 = vrot.lane.b32.xlu0 %v210, 114
      %v630 = vpop.permute.xlu0 %629
      %vm631 = vcmp.lt.s32.totalorder %v220, 114
      %v632 = vsel %vm631, %v624, %v628
      %v633 = vsel %vm631, %v626, %v630
      %v634 = vsel %vm631, %v628, %v624
      %v635 = vsel %vm631, %v630, %v626
      %v636 = vlaneseq
      %v637 = vshrl.u32 %v636, 7
      %v638 = vsub.s32 7, %v637
      %v639 = vrot.slane %v201, %v638
      %v640 = vlaneseq
      %v641 = vshrl.u32 %v640, 7
      %v642 = vsub.s32 7, %v641
      %v643 = vrot.slane %v202, %v642
      %v644 = vmul.f32 %v632, %v639
      %v645 = vmul.f32 %v634, %v643
      %v646 = vmul.f32 %v633, %v639
      %v647 = vmul.f32 %v635, %v643
      %v648 = vpack.c.bf16 %v646, %v644
      %v649 = vpack.c.bf16 %v647, %v645
      %650 = vst [vmem:[#allocation2 + $0xf0] sm:$0xff] %v648
      %651 = vst [vmem:[#allocation2 + $0xf8] sm:$0xff] %v649
      %652 = vrot.lane.b32.xlu0 %v207, 113
      %v653 = vpop.permute.xlu0 %652
      %654 = vrot.lane.b32.xlu0 %v209, 113
      %v655 = vpop.permute.xlu0 %654
      %656 = vrot.lane.b32.xlu0 %v208, 113
      %v657 = vpop.permute.xlu0 %656
      %658 = vrot.lane.b32.xlu0 %v210, 113
      %v659 = vpop.permute.xlu0 %658
      %vm660 = vcmp.lt.s32.totalorder %v220, 113
      %v661 = vsel %vm660, %v653, %v657
      %v662 = vsel %vm660, %v655, %v659
      %v663 = vsel %vm660, %v657, %v653
      %v664 = vsel %vm660, %v659, %v655
      %v665 = vlaneseq
      %v666 = vshrl.u32 %v665, 7
      %v667 = vsub.s32 0, %v666
      %v668 = vrot.slane %v203, %v667
      %v669 = vlaneseq
      %v670 = vshrl.u32 %v669, 7
      %v671 = vsub.s32 0, %v670
      %v672 = vrot.slane %v204, %v671
      %v673 = vmul.f32 %v661, %v668
      %v674 = vmul.f32 %v663, %v672
      %v675 = vmul.f32 %v662, %v668
      %v676 = vmul.f32 %v664, %v672
      %v677 = vpack.c.bf16 %v675, %v673
      %v678 = vpack.c.bf16 %v676, %v674
      %679 = vst [vmem:[#allocation2 + $0x100] sm:$0xff] %v677
      %680 = vst [vmem:[#allocation2 + $0x108] sm:$0xff] %v678
      %681 = vrot.lane.b32.xlu0 %v207, 112
      %v682 = vpop.permute.xlu0 %681
      %683 = vrot.lane.b32.xlu0 %v209, 112
      %v684 = vpop.permute.xlu0 %683
      %685 = vrot.lane.b32.xlu0 %v208, 112
      %v686 = vpop.permute.xlu0 %685
      %687 = vrot.lane.b32.xlu0 %v210, 112
      %v688 = vpop.permute.xlu0 %687
      %vm689 = vcmp.lt.s32.totalorder %v220, 112
      %v690 = vsel %vm689, %v682, %v686
      %v691 = vsel %vm689, %v684, %v688
      %v692 = vsel %vm689, %v686, %v682
      %v693 = vsel %vm689, %v688, %v684
      %v694 = vlaneseq
      %v695 = vshrl.u32 %v694, 7
      %v696 = vsub.s32 1, %v695
      %v697 = vrot.slane %v203, %v696
      %v698 = vlaneseq
      %v699 = vshrl.u32 %v698, 7
      %v700 = vsub.s32 1, %v699
      %v701 = vrot.slane %v204, %v700
      %v702 = vmul.f32 %v690, %v697
      %v703 = vmul.f32 %v692, %v701
      %v704 = vmul.f32 %v691, %v697
      %v705 = vmul.f32 %v693, %v701
      %v706 = vpack.c.bf16 %v704, %v702
      %v707 = vpack.c.bf16 %v705, %v703
      %708 = vst [vmem:[#allocation2 + $0x110] sm:$0xff] %v706
      %709 = vst [vmem:[#allocation2 + $0x118] sm:$0xff] %v707
      %710 = vrot.lane.b32.xlu0 %v207, 111
      %v711 = vpop.permute.xlu0 %710
      %712 = vrot.lane.b32.xlu0 %v209, 111
      %v713 = vpop.permute.xlu0 %712
      %714 = vrot.lane.b32.xlu0 %v208, 111
      %v715 = vpop.permute.xlu0 %714
      %716 = vrot.lane.b32.xlu0 %v210, 111
      %v717 = vpop.permute.xlu0 %716
      %vm718 = vcmp.lt.s32.totalorder %v220, 111
      %v719 = vsel %vm718, %v711, %v715
      %v720 = vsel %vm718, %v713, %v717
      %v721 = vsel %vm718, %v715, %v711
      %v722 = vsel %vm718, %v717, %v713
      %v723 = vlaneseq
      %v724 = vshrl.u32 %v723, 7
      %v725 = vsub.s32 2, %v724
      %v726 = vrot.slane %v203, %v725
      %v727 = vlaneseq
      %v728 = vshrl.u32 %v727, 7
      %v729 = vsub.s32 2, %v728
      %v730 = vrot.slane %v204, %v729
      %v731 = vmul.f32 %v719, %v726
      %v732 = vmul.f32 %v721, %v730
      %v733 = vmul.f32 %v720, %v726
      %v734 = vmul.f32 %v722, %v730
      %v735 = vpack.c.bf16 %v733, %v731
      %v736 = vpack.c.bf16 %v734, %v732
      %737 = vst [vmem:[#allocation2 + $0x120] sm:$0xff] %v735
      %738 = vst [vmem:[#allocation2 + $0x128] sm:$0xff] %v736
      %739 = vrot.lane.b32.xlu0 %v207, 110
      %v740 = vpop.permute.xlu0 %739
      %741 = vrot.lane.b32.xlu0 %v209, 110
      %v742 = vpop.permute.xlu0 %741
      %743 = vrot.lane.b32.xlu0 %v208, 110
      %v744 = vpop.permute.xlu0 %743
      %745 = vrot.lane.b32.xlu0 %v210, 110
      %v746 = vpop.permute.xlu0 %745
      %vm747 = vcmp.lt.s32.totalorder %v220, 110
      %v748 = vsel %vm747, %v740, %v744
      %v749 = vsel %vm747, %v742, %v746
      %v750 = vsel %vm747, %v744, %v740
      %v751 = vsel %vm747, %v746, %v742
      %v752 = vlaneseq
      %v753 = vshrl.u32 %v752, 7
      %v754 = vsub.s32 3, %v753
      %v755 = vrot.slane %v203, %v754
      %v756 = vlaneseq
      %v757 = vshrl.u32 %v756, 7
      %v758 = vsub.s32 3, %v757
      %v759 = vrot.slane %v204, %v758
      %v760 = vmul.f32 %v748, %v755
      %v761 = vmul.f32 %v750, %v759
      %v762 = vmul.f32 %v749, %v755
      %v763 = vmul.f32 %v751, %v759
      %v764 = vpack.c.bf16 %v762, %v760
      %v765 = vpack.c.bf16 %v763, %v761
      %766 = vst [vmem:[#allocation2 + $0x130] sm:$0xff] %v764
      %767 = vst [vmem:[#allocation2 + $0x138] sm:$0xff] %v765
      %768 = vrot.lane.b32.xlu0 %v207, 98
      %v769 = vpop.permute.xlu0 %768
      %770 = vrot.lane.b32.xlu0 %v209, 98
      %v771 = vpop.permute.xlu0 %770
      %772 = vrot.lane.b32.xlu0 %v208, 98
      %v773 = vpop.permute.xlu0 %772
      %774 = vrot.lane.b32.xlu0 %v210, 98
      %v775 = vpop.permute.xlu0 %774
      %vm776 = vcmp.lt.s32.totalorder %v220, 98
      %v777 = vsel %vm776, %v769, %v773
      %v778 = vsel %vm776, %v771, %v775
      %v779 = vsel %vm776, %v773, %v769
      %v780 = vsel %vm776, %v775, %v771
      %v781 = vlaneseq
      %v782 = vshrl.u32 %v781, 7
      %v783 = vsub.s32 4, %v782
      %v784 = vrot.slane %v203, %v783
      %v785 = vlaneseq
      %v786 = vshrl.u32 %v785, 7
      %v787 = vsub.s32 4, %v786
      %v788 = vrot.slane %v204, %v787
      %v789 = vmul.f32 %v777, %v784
      %v790 = vmul.f32 %v779, %v788
      %v791 = vmul.f32 %v778, %v784
      %v792 = vmul.f32 %v780, %v788
      %v793 = vpack.c.bf16 %v791, %v789
      %v794 = vpack.c.bf16 %v792, %v790
      %795 = vst [vmem:[#allocation2 + $0x140] sm:$0xff] %v793
      %796 = vst [vmem:[#allocation2 + $0x148] sm:$0xff] %v794
      %797 = vrot.lane.b32.xlu0 %v207, 97
      %v798 = vpop.permute.xlu0 %797
      %799 = vrot.lane.b32.xlu0 %v209, 97
      %v800 = vpop.permute.xlu0 %799
      %801 = vrot.lane.b32.xlu0 %v208, 97
      %v802 = vpop.permute.xlu0 %801
      %803 = vrot.lane.b32.xlu0 %v210, 97
      %v804 = vpop.permute.xlu0 %803
      %vm805 = vcmp.lt.s32.totalorder %v220, 97
      %v806 = vsel %vm805, %v798, %v802
      %v807 = vsel %vm805, %v800, %v804
      %v808 = vsel %vm805, %v802, %v798
      %v809 = vsel %vm805, %v804, %v800
      %v810 = vlaneseq
      %v811 = vshrl.u32 %v810, 7
      %v812 = vsub.s32 5, %v811
      %v813 = vrot.slane %v203, %v812
      %v814 = vlaneseq
      %v815 = vshrl.u32 %v814, 7
      %v816 = vsub.s32 5, %v815
      %v817 = vrot.slane %v204, %v816
      %v818 = vmul.f32 %v806, %v813
      %v819 = vmul.f32 %v808, %v817
      %v820 = vmul.f32 %v807, %v813
      %v821 = vmul.f32 %v809, %v817
      %v822 = vpack.c.bf16 %v820, %v818
      %v823 = vpack.c.bf16 %v821, %v819
      %824 = vst [vmem:[#allocation2 + $0x150] sm:$0xff] %v822
      %825 = vst [vmem:[#allocation2 + $0x158] sm:$0xff] %v823
      %826 = vrot.lane.b32.xlu0 %v207, 96
      %v827 = vpop.permute.xlu0 %826
      %828 = vrot.lane.b32.xlu0 %v209, 96
      %v829 = vpop.permute.xlu0 %828
      %830 = vrot.lane.b32.xlu0 %v208, 96
      %v831 = vpop.permute.xlu0 %830
      %832 = vrot.lane.b32.xlu0 %v210, 96
      %v833 = vpop.permute.xlu0 %832
      %vm834 = vcmp.lt.s32.totalorder %v220, 96
      %v835 = vsel %vm834, %v827, %v831
      %v836 = vsel %vm834, %v829, %v833
      %v837 = vsel %vm834, %v831, %v827
      %v838 = vsel %vm834, %v833, %v829
      %v839 = vlaneseq
      %v840 = vshrl.u32 %v839, 7
      %v841 = vsub.s32 6, %v840
      %v842 = vrot.slane %v203, %v841
      %v843 = vlaneseq
      %v844 = vshrl.u32 %v843, 7
      %v845 = vsub.s32 6, %v844
      %v846 = vrot.slane %v204, %v845
      %v847 = vmul.f32 %v835, %v842
      %v848 = vmul.f32 %v837, %v846
      %v849 = vmul.f32 %v836, %v842
      %v850 = vmul.f32 %v838, %v846
      %v851 = vpack.c.bf16 %v849, %v847
      %v852 = vpack.c.bf16 %v850, %v848
      %853 = vst [vmem:[#allocation2 + $0x160] sm:$0xff] %v851
      %854 = vst [vmem:[#allocation2 + $0x168] sm:$0xff] %v852
      %855 = vrot.lane.b32.xlu0 %v207, 95
      %v856 = vpop.permute.xlu0 %855
      %857 = vrot.lane.b32.xlu0 %v209, 95
      %v858 = vpop.permute.xlu0 %857
      %859 = vrot.lane.b32.xlu0 %v208, 95
      %v860 = vpop.permute.xlu0 %859
      %861 = vrot.lane.b32.xlu0 %v210, 95
      %v862 = vpop.permute.xlu0 %861
      %vm863 = vcmp.lt.s32.totalorder %v220, 95
      %v864 = vsel %vm863, %v856, %v860
      %v865 = vsel %vm863, %v858, %v862
      %v866 = vsel %vm863, %v860, %v856
      %v867 = vsel %vm863, %v862, %v858
      %v868 = vlaneseq
      %v869 = vshrl.u32 %v868, 7
      %v870 = vsub.s32 7, %v869
      %v871 = vrot.slane %v203, %v870
      %v872 = vlaneseq
      %v873 = vshrl.u32 %v872, 7
      %v874 = vsub.s32 7, %v873
      %v875 = vrot.slane %v204, %v874
      %v876 = vmul.f32 %v864, %v871
      %v877 = vmul.f32 %v866, %v875
      %v878 = vmul.f32 %v865, %v871
      %v879 = vmul.f32 %v867, %v875
      %v880 = vpack.c.bf16 %v878, %v876
      %v881 = vpack.c.bf16 %v879, %v877
      %882 = vst [vmem:[#allocation2 + $0x170] sm:$0xff] %v880
      %883 = vst [vmem:[#allocation2 + $0x178] sm:$0xff] %v881
      %884 = vrot.lane.b32.xlu0 %v207, 94
      %v885 = vpop.permute.xlu0 %884
      %886 = vrot.lane.b32.xlu0 %v209, 94
      %v887 = vpop.permute.xlu0 %886
      %888 = vrot.lane.b32.xlu0 %v208, 94
      %v889 = vpop.permute.xlu0 %888
      %890 = vrot.lane.b32.xlu0 %v210, 94
      %v891 = vpop.permute.xlu0 %890
      %vm892 = vcmp.lt.s32.totalorder %v220, 94
      %v893 = vsel %vm892, %v885, %v889
      %v894 = vsel %vm892, %v887, %v891
      %v895 = vsel %vm892, %v889, %v885
      %v896 = vsel %vm892, %v891, %v887
      %v897 = vlaneseq
      %v898 = vshrl.u32 %v897, 7
      %v899 = vsub.s32 0, %v898
      %v900 = vrot.slane %v205, %v899
      %v901 = vlaneseq
      %v902 = vshrl.u32 %v901, 7
      %v903 = vsub.s32 0, %v902
      %v904 = vrot.slane %v206, %v903
      %v905 = vmul.f32 %v893, %v900
      %v906 = vmul.f32 %v895, %v904
      %v907 = vmul.f32 %v894, %v900
      %v908 = vmul.f32 %v896, %v904
      %v909 = vpack.c.bf16 %v907, %v905
      %v910 = vpack.c.bf16 %v908, %v906
      %911 = vst [vmem:[#allocation2 + $0x180] sm:$0xff] %v909
      %912 = vst [vmem:[#allocation2 + $0x188] sm:$0xff] %v910
      %v913 = vld [vmem:[%s1] sm:$0xff]
      %v914 = vld [vmem:[%s1 + $0x8] sm:$0xff]
      %v915 = vld [vmem:[%s1 + $0x10] sm:$0xff]
      %v916 = vld [vmem:[%s1 + $0x18] sm:$0xff]
      %v917 = vld [vmem:[#allocation2] sm:$0xff]
      %v918 = vld [vmem:[#allocation2 + $0x8] sm:$0xff]
      %v919 = vld [vmem:[#allocation2 + $0x10] sm:$0xff]
      %v920 = vld [vmem:[#allocation2 + $0x18] sm:$0xff]
      %v921 = vld [vmem:[#allocation2 + $0x20] sm:$0xff]
      %v922 = vld [vmem:[#allocation2 + $0x28] sm:$0xff]
      %v923 = vld [vmem:[#allocation2 + $0x30] sm:$0xff]
      %v924 = vld [vmem:[#allocation2 + $0x38] sm:$0xff]
      %v925 = vld [vmem:[#allocation2 + $0x40] sm:$0xff]
      %v926 = vld [vmem:[#allocation2 + $0x48] sm:$0xff]
      %v927 = vld [vmem:[#allocation2 + $0x50] sm:$0xff]
      %v928 = vld [vmem:[#allocation2 + $0x58] sm:$0xff]
      %v929 = vld [vmem:[#allocation2 + $0x60] sm:$0xff]
      %v930 = vld [vmem:[#allocation2 + $0x68] sm:$0xff]
      %v931 = vld [vmem:[#allocation2 + $0x70] sm:$0xff]
      %v932 = vld [vmem:[#allocation2 + $0x78] sm:$0xff]
      %v933 = vld [vmem:[#allocation2 + $0x80] sm:$0xff]
      %v934 = vld [vmem:[#allocation2 + $0x88] sm:$0xff]
      %v935 = vld [vmem:[#allocation2 + $0x90] sm:$0xff]
      %v936 = vld [vmem:[#allocation2 + $0x98] sm:$0xff]
      %v937 = vld [vmem:[#allocation2 + $0xa0] sm:$0xff]
      %v938 = vld [vmem:[#allocation2 + $0xa8] sm:$0xff]
      %v939 = vld [vmem:[#allocation2 + $0xb0] sm:$0xff]
      %v940 = vld [vmem:[#allocation2 + $0xb8] sm:$0xff]
      %v941 = vld [vmem:[#allocation2 + $0xc0] sm:$0xff]
      %v942 = vld [vmem:[#allocation2 + $0xc8] sm:$0xff]
      %v943 = vld [vmem:[#allocation2 + $0xd0] sm:$0xff]
      %v944 = vld [vmem:[#allocation2 + $0xd8] sm:$0xff]
      %v945 = vld [vmem:[#allocation2 + $0xe0] sm:$0xff]
      %v946 = vld [vmem:[#allocation2 + $0xe8] sm:$0xff]
      %v947 = vld [vmem:[#allocation2 + $0xf0] sm:$0xff]
      %v948 = vld [vmem:[#allocation2 + $0xf8] sm:$0xff]
      %v949 = vld [vmem:[#allocation2 + $0x100] sm:$0xff]
      %v950 = vld [vmem:[#allocation2 + $0x108] sm:$0xff]
      %v951 = vld [vmem:[#allocation2 + $0x110] sm:$0xff]
      %v952 = vld [vmem:[#allocation2 + $0x118] sm:$0xff]
      %v953 = vld [vmem:[#allocation2 + $0x120] sm:$0xff]
      %v954 = vld [vmem:[#allocation2 + $0x128] sm:$0xff]
      %v955 = vld [vmem:[#allocation2 + $0x130] sm:$0xff]
      %v956 = vld [vmem:[#allocation2 + $0x138] sm:$0xff]
      %v957 = vld [vmem:[#allocation2 + $0x140] sm:$0xff]
      %v958 = vld [vmem:[#allocation2 + $0x148] sm:$0xff]
      %v959 = vld [vmem:[#allocation2 + $0x150] sm:$0xff]
      %v960 = vld [vmem:[#allocation2 + $0x158] sm:$0xff]
      %v961 = vld [vmem:[#allocation2 + $0x160] sm:$0xff]
      %v962 = vld [vmem:[#allocation2 + $0x168] sm:$0xff]
      %v963 = vld [vmem:[#allocation2 + $0x170] sm:$0xff]
      %v964 = vld [vmem:[#allocation2 + $0x178] sm:$0xff]
      %v965 = vld [vmem:[#allocation2 + $0x180] sm:$0xff]
      %v966 = vld [vmem:[#allocation2 + $0x188] sm:$0xff]
      %v967 = vld [vmem:[%s2] sm:$0xff]
      %v968 = vld [vmem:[%s2 + $0x8] sm:$0xff]
      %970 = vset.pattern.permute.xlu0 0
      %971 = vperm.xlu0 %970, %v967
      %v972 = vpop.permute.xlu0 %971
      %975 = vset.pattern.permute.xlu0 0
      %976 = vperm.xlu0 %975, %v968
      %v977 = vpop.permute.xlu0 %976
      %v983 = vunpack.c.l.b16 %v913
      %v984 = vunpack.c.h.b16 %v913
      %v985 = vunpack.c.l.b16 %v914
      %v986 = vunpack.c.h.b16 %v914
      %v987 = vunpack.c.l.b16 %v915
      %v988 = vunpack.c.h.b16 %v915
      %v989 = vunpack.c.l.b16 %v916
      %v990 = vunpack.c.h.b16 %v916
      %v991 = vpack.c.b16 %v987, %v983
      %v992 = vpack.c.b16 %v988, %v984
      %v993 = vpack.c.b16 %v989, %v985
      %v994 = vpack.c.b16 %v990, %v986
      %vm998 = vcmask 130048
      %v1000 = vsel %vm998, %v994, 0
      %1002 = vmatprep.subr.bf16.mxu0 %v918
      %1003 = vmatpush1.bf16.msra.mxu0 %v917
      %1004 = vmatprep.subr.bf16.mxu0 %v920
      %1005 = vmatpush1.bf16.msra.mxu0 %v919
      %1006 = vmatprep.subr.bf16.mxu0 %v922
      %1007 = vmatpush1.bf16.msra.mxu0 %v921
      %1008 = vmatprep.subr.bf16.mxu0 %v924
      %1009 = vmatpush1.bf16.msra.mxu0 %v923
      %1010 = vmatprep.subr.bf16.mxu0 %v926
      %1011 = vmatpush1.bf16.msra.mxu0 %v925
      %1012 = vmatprep.subr.bf16.mxu0 %v928
      %1013 = vmatpush1.bf16.msra.mxu0 %v927
      %1014 = vmatprep.subr.bf16.mxu0 %v930
      %1015 = vmatpush1.bf16.msra.mxu0 %v929
      %1016 = vmatprep.subr.bf16.mxu0 %v932
      %1017 = vmatpush1.bf16.msra.mxu0 %v931
      %1018 = vmatprep.subr.bf16.mxu0 %v934
      %1019 = vmatpush1.bf16.msra.mxu0 %v933
      %1020 = vmatprep.subr.bf16.mxu0 %v936
      %1021 = vmatpush1.bf16.msra.mxu0 %v935
      %1022 = vmatprep.subr.bf16.mxu0 %v938
      %1023 = vmatpush1.bf16.msra.mxu0 %v937
      %1024 = vmatprep.subr.bf16.mxu0 %v940
      %1025 = vmatpush1.bf16.msra.mxu0 %v939
      %1026 = vmatprep.subr.bf16.mxu0 %v942
      %1027 = vmatpush1.bf16.msra.mxu0 %v941
      %1028 = vmatprep.subr.bf16.mxu0 %v944
      %1029 = vmatpush1.bf16.msra.mxu0 %v943
      %1030 = vmatprep.subr.bf16.mxu0 %v946
      %1031 = vmatpush1.bf16.msra.mxu0 %v945
      %1032 = vmatprep.subr.bf16.mxu0 %v948
      %1033 = vmatpush1.bf16.msra.mxu0 %v947
      %1034 = vmatprep.mubr.bf16.mxu0 %v992
      %1035 = vmatmul.mubr.bf16.gmra.mrb[0].mxu0 %v991
      %v1036 = vpop.f32.mrb[0].mxu0
      %v1037 = vadd.f32 %v972, %v1036
      %v1038 = vpop.f32.mrb[0].mxu0
      %v1039 = vadd.f32 %v972, %v1038
      %v1040 = vpop.f32.mrb[0].mxu0
      %v1041 = vadd.f32 %v977, %v1040
      %v1042 = vpop.f32.mrb[0].mxu0
      %v1043 = vadd.f32 %v977, %v1042
      %1044 = vdwg.mxu0
      %1045 = vmatprep.subr.bf16.mxu0 %v950
      %1046 = vmatpush1.bf16.msra.mxu0 %v949
      %1047 = vmatprep.subr.bf16.mxu0 %v952
      %1048 = vmatpush1.bf16.msra.mxu0 %v951
      %1049 = vmatprep.subr.bf16.mxu0 %v954
      %1050 = vmatpush1.bf16.msra.mxu0 %v953
      %1051 = vmatprep.subr.bf16.mxu0 %v956
      %1052 = vmatpush1.bf16.msra.mxu0 %v955
      %1053 = vmatprep.subr.bf16.mxu0 %v958
      %1054 = vmatpush1.bf16.msra.mxu0 %v957
      %1055 = vmatprep.subr.bf16.mxu0 %v960
      %1056 = vmatpush1.bf16.msra.mxu0 %v959
      %1057 = vmatprep.subr.bf16.mxu0 %v962
      %1058 = vmatpush1.bf16.msra.mxu0 %v961
      %1059 = vmatprep.subr.bf16.mxu0 %v964
      %1060 = vmatpush1.bf16.msra.mxu0 %v963
      %1061 = vmatprep.subr.bf16.mxu0 %v966
      %1062 = vmatpush1.bf16.msra.mxu0 %v965
      %1063 = vmatprep.subr.bf16.mxu0 0
      %1064 = vmatpush1.bf16.msra.mxu0 0
      %1065 = vmatprep.subr.bf16.mxu0 0
      %1066 = vmatpush1.bf16.msra.mxu0 0
      %1067 = vmatprep.subr.bf16.mxu0 0
      %1068 = vmatpush1.bf16.msra.mxu0 0
      %1069 = vmatprep.subr.bf16.mxu0 0
      %1070 = vmatpush1.bf16.msra.mxu0 0
      %1071 = vmatprep.subr.bf16.mxu0 0
      %1072 = vmatpush1.bf16.msra.mxu0 0
      %1073 = vmatprep.subr.bf16.mxu0 0
      %1074 = vmatpush1.bf16.msra.mxu0 0
      %1075 = vmatprep.subr.bf16.mxu0 0
      %1076 = vmatpush1.bf16.msra.mxu0 0
      %1077 = vmatprep.mubr.bf16.mxu0 %v1000
      %1078 = vmatmul.mubr.bf16.gmra.mrb[0].mxu0 %v993
      %v1079 = vpop.f32.mrb[0].mxu0
      %v1080 = vadd.f32 %v1037, %v1079
      %v1081 = vpop.f32.mrb[0].mxu0
      %v1082 = vadd.f32 %v1039, %v1081
      %v1083 = vpop.f32.mrb[0].mxu0
      %v1084 = vadd.f32 %v1041, %v1083
      %v1085 = vpop.f32.mrb[0].mxu0
      %v1086 = vadd.f32 %v1043, %v1085
      %1087 = vdwg.mxu0
      %vm1088 = vcmp.gt.f32.partialorder %v1080, 0.0
      %vm1089 = vcmp.gt.f32.partialorder %v1082, 0.0
      %vm1090 = vcmp.gt.f32.partialorder %v1084, 0.0
      %vm1091 = vcmp.gt.f32.partialorder %v1086, 0.0
      %v1092 = vmul.f32 %v1080, 0.01
      %v1093 = vmul.f32 %v1082, 0.01
      %v1094 = vmul.f32 %v1084, 0.01
      %v1095 = vmul.f32 %v1086, 0.01
      %v1096 = vsel %vm1088, %v1080, %v1092
      %v1097 = vsel %vm1089, %v1082, %v1093
      %v1098 = vsel %vm1090, %v1084, %v1094
      %v1099 = vsel %vm1091, %v1086, %v1095
      %1100 = vrot.lane.b32.xlu0 %v1096, 34
      %v1101 = vpop.permute.xlu0 %1100
      %1102 = vrot.lane.b32.xlu0 %v1098, 34
      %v1103 = vpop.permute.xlu0 %1102
      %1104 = vrot.lane.b32.xlu0 %v1097, 34
      %v1105 = vpop.permute.xlu0 %1104
      %1106 = vrot.lane.b32.xlu0 %v1099, 34
      %v1107 = vpop.permute.xlu0 %1106
      %v1108 = vsel %vm221, %v1101, %v1105
      %v1109 = vsel %vm221, %v1103, %v1107
      %v1110 = vsel %vm221, %v1105, %v1101
      %v1111 = vsel %vm221, %v1107, %v1103
      %v1112 = vmul.f32 %v1110, %v229
      %v1113 = vmul.f32 %v1108, %v233
      %v1114 = vmul.f32 %v1111, %v229
      %v1115 = vmul.f32 %v1109, %v233
      %v1116 = vpack.c.bf16 %v1114, %v1112
      %v1117 = vpack.c.bf16 %v1115, %v1113
      %1118 = vst [vmem:[#allocation2] sm:$0xff] %v1116
      %1119 = vst [vmem:[#allocation2 + $0x8] sm:$0xff] %v1117
      %1120 = vrot.lane.b32.xlu0 %v1096, 33
      %v1121 = vpop.permute.xlu0 %1120
      %1122 = vrot.lane.b32.xlu0 %v1098, 33
      %v1123 = vpop.permute.xlu0 %1122
      %1124 = vrot.lane.b32.xlu0 %v1097, 33
      %v1125 = vpop.permute.xlu0 %1124
      %1126 = vrot.lane.b32.xlu0 %v1099, 33
      %v1127 = vpop.permute.xlu0 %1126
      %v1128 = vsel %vm250, %v1121, %v1125
      %v1129 = vsel %vm250, %v1123, %v1127
      %v1130 = vsel %vm250, %v1125, %v1121
      %v1131 = vsel %vm250, %v1127, %v1123
      %v1132 = vmul.f32 %v1130, %v258
      %v1133 = vmul.f32 %v1128, %v262
      %v1134 = vmul.f32 %v1131, %v258
      %v1135 = vmul.f32 %v1129, %v262
      %v1136 = vpack.c.bf16 %v1134, %v1132
      %v1137 = vpack.c.bf16 %v1135, %v1133
      %1138 = vst [vmem:[#allocation2 + $0x10] sm:$0xff] %v1136
      %1139 = vst [vmem:[#allocation2 + $0x18] sm:$0xff] %v1137
      %1140 = vrot.lane.b32.xlu0 %v1096, 32
      %v1141 = vpop.permute.xlu0 %1140
      %1142 = vrot.lane.b32.xlu0 %v1098, 32
      %v1143 = vpop.permute.xlu0 %1142
      %1144 = vrot.lane.b32.xlu0 %v1097, 32
      %v1145 = vpop.permute.xlu0 %1144
      %1146 = vrot.lane.b32.xlu0 %v1099, 32
      %v1147 = vpop.permute.xlu0 %1146
      %v1148 = vsel %vm279, %v1141, %v1145
      %v1149 = vsel %vm279, %v1143, %v1147
      %v1150 = vsel %vm279, %v1145, %v1141
      %v1151 = vsel %vm279, %v1147, %v1143
      %v1152 = vmul.f32 %v1150, %v287
      %v1153 = vmul.f32 %v1148, %v291
      %v1154 = vmul.f32 %v1151, %v287
      %v1155 = vmul.f32 %v1149, %v291
      %v1156 = vpack.c.bf16 %v1154, %v1152
      %v1157 = vpack.c.bf16 %v1155, %v1153
      %1158 = vst [vmem:[#allocation2 + $0x20] sm:$0xff] %v1156
      %1159 = vst [vmem:[#allocation2 + $0x28] sm:$0xff] %v1157
      %1160 = vrot.lane.b32.xlu0 %v1096, 31
      %v1161 = vpop.permute.xlu0 %1160
      %1162 = vrot.lane.b32.xlu0 %v1098, 31
      %v1163 = vpop.permute.xlu0 %1162
      %1164 = vrot.lane.b32.xlu0 %v1097, 31
      %v1165 = vpop.permute.xlu0 %1164
      %1166 = vrot.lane.b32.xlu0 %v1099, 31
      %v1167 = vpop.permute.xlu0 %1166
      %v1168 = vsel %vm308, %v1161, %v1165
      %v1169 = vsel %vm308, %v1163, %v1167
      %v1170 = vsel %vm308, %v1165, %v1161
      %v1171 = vsel %vm308, %v1167, %v1163
      %v1172 = vmul.f32 %v1170, %v316
      %v1173 = vmul.f32 %v1168, %v320
      %v1174 = vmul.f32 %v1171, %v316
      %v1175 = vmul.f32 %v1169, %v320
      %v1176 = vpack.c.bf16 %v1174, %v1172
      %v1177 = vpack.c.bf16 %v1175, %v1173
      %1178 = vst [vmem:[#allocation2 + $0x30] sm:$0xff] %v1176
      %1179 = vst [vmem:[#allocation2 + $0x38] sm:$0xff] %v1177
      %1180 = vrot.lane.b32.xlu0 %v1096, 30
      %v1181 = vpop.permute.xlu0 %1180
      %1182 = vrot.lane.b32.xlu0 %v1098, 30
      %v1183 = vpop.permute.xlu0 %1182
      %1184 = vrot.lane.b32.xlu0 %v1097, 30
      %v1185 = vpop.permute.xlu0 %1184
      %1186 = vrot.lane.b32.xlu0 %v1099, 30
      %v1187 = vpop.permute.xlu0 %1186
      %v1188 = vsel %vm337, %v1181, %v1185
      %v1189 = vsel %vm337, %v1183, %v1187
      %v1190 = vsel %vm337, %v1185, %v1181
      %v1191 = vsel %vm337, %v1187, %v1183
      %v1192 = vmul.f32 %v1190, %v345
      %v1193 = vmul.f32 %v1188, %v349
      %v1194 = vmul.f32 %v1191, %v345
      %v1195 = vmul.f32 %v1189, %v349
      %v1196 = vpack.c.bf16 %v1194, %v1192
      %v1197 = vpack.c.bf16 %v1195, %v1193
      %1198 = vst [vmem:[#allocation2 + $0x40] sm:$0xff] %v1196
      %1199 = vst [vmem:[#allocation2 + $0x48] sm:$0xff] %v1197
      %1200 = vrot.lane.b32.xlu0 %v1096, 18
      %v1201 = vpop.permute.xlu0 %1200
      %1202 = vrot.lane.b32.xlu0 %v1098, 18
      %v1203 = vpop.permute.xlu0 %1202
      %1204 = vrot.lane.b32.xlu0 %v1097, 18
      %v1205 = vpop.permute.xlu0 %1204
      %1206 = vrot.lane.b32.xlu0 %v1099, 18
      %v1207 = vpop.permute.xlu0 %1206
      %v1208 = vsel %vm366, %v1201, %v1205
      %v1209 = vsel %vm366, %v1203, %v1207
      %v1210 = vsel %vm366, %v1205, %v1201
      %v1211 = vsel %vm366, %v1207, %v1203
      %v1212 = vmul.f32 %v1210, %v374
      %v1213 = vmul.f32 %v1208, %v378
      %v1214 = vmul.f32 %v1211, %v374
      %v1215 = vmul.f32 %v1209, %v378
      %v1216 = vpack.c.bf16 %v1214, %v1212
      %v1217 = vpack.c.bf16 %v1215, %v1213
      %1218 = vst [vmem:[#allocation2 + $0x50] sm:$0xff] %v1216
      %1219 = vst [vmem:[#allocation2 + $0x58] sm:$0xff] %v1217
      %1220 = vrot.lane.b32.xlu0 %v1096, 17
      %v1221 = vpop.permute.xlu0 %1220
      %1222 = vrot.lane.b32.xlu0 %v1098, 17
      %v1223 = vpop.permute.xlu0 %1222
      %1224 = vrot.lane.b32.xlu0 %v1097, 17
      %v1225 = vpop.permute.xlu0 %1224
      %1226 = vrot.lane.b32.xlu0 %v1099, 17
      %v1227 = vpop.permute.xlu0 %1226
      %v1228 = vsel %vm395, %v1221, %v1225
      %v1229 = vsel %vm395, %v1223, %v1227
      %v1230 = vsel %vm395, %v1225, %v1221
      %v1231 = vsel %vm395, %v1227, %v1223
      %v1232 = vmul.f32 %v1230, %v403
      %v1233 = vmul.f32 %v1228, %v407
      %v1234 = vmul.f32 %v1231, %v403
      %v1235 = vmul.f32 %v1229, %v407
      %v1236 = vpack.c.bf16 %v1234, %v1232
      %v1237 = vpack.c.bf16 %v1235, %v1233
      %1238 = vst [vmem:[#allocation2 + $0x60] sm:$0xff] %v1236
      %1239 = vst [vmem:[#allocation2 + $0x68] sm:$0xff] %v1237
      %1240 = vrot.lane.b32.xlu0 %v1096, 16
      %v1241 = vpop.permute.xlu0 %1240
      %1242 = vrot.lane.b32.xlu0 %v1098, 16
      %v1243 = vpop.permute.xlu0 %1242
      %1244 = vrot.lane.b32.xlu0 %v1097, 16
      %v1245 = vpop.permute.xlu0 %1244
      %1246 = vrot.lane.b32.xlu0 %v1099, 16
      %v1247 = vpop.permute.xlu0 %1246
      %v1248 = vsel %vm424, %v1241, %v1245
      %v1249 = vsel %vm424, %v1243, %v1247
      %v1250 = vsel %vm424, %v1245, %v1241
      %v1251 = vsel %vm424, %v1247, %v1243
      %v1252 = vmul.f32 %v1250, %v432
      %v1253 = vmul.f32 %v1248, %v436
      %v1254 = vmul.f32 %v1251, %v432
      %v1255 = vmul.f32 %v1249, %v436
      %v1256 = vpack.c.bf16 %v1254, %v1252
      %v1257 = vpack.c.bf16 %v1255, %v1253
      %1258 = vst [vmem:[#allocation2 + $0x70] sm:$0xff] %v1256
      %1259 = vst [vmem:[#allocation2 + $0x78] sm:$0xff] %v1257
      %1260 = vrot.lane.b32.xlu0 %v1096, 15
      %v1261 = vpop.permute.xlu0 %1260
      %1262 = vrot.lane.b32.xlu0 %v1098, 15
      %v1263 = vpop.permute.xlu0 %1262
      %1264 = vrot.lane.b32.xlu0 %v1097, 15
      %v1265 = vpop.permute.xlu0 %1264
      %1266 = vrot.lane.b32.xlu0 %v1099, 15
      %v1267 = vpop.permute.xlu0 %1266
      %v1268 = vsel %vm453, %v1261, %v1265
      %v1269 = vsel %vm453, %v1263, %v1267
      %v1270 = vsel %vm453, %v1265, %v1261
      %v1271 = vsel %vm453, %v1267, %v1263
      %v1272 = vmul.f32 %v1270, %v461
      %v1273 = vmul.f32 %v1268, %v465
      %v1274 = vmul.f32 %v1271, %v461
      %v1275 = vmul.f32 %v1269, %v465
      %v1276 = vpack.c.bf16 %v1274, %v1272
      %v1277 = vpack.c.bf16 %v1275, %v1273
      %1278 = vst [vmem:[#allocation2 + $0x80] sm:$0xff] %v1276
      %1279 = vst [vmem:[#allocation2 + $0x88] sm:$0xff] %v1277
      %1280 = vrot.lane.b32.xlu0 %v1096, 14
      %v1281 = vpop.permute.xlu0 %1280
      %1282 = vrot.lane.b32.xlu0 %v1098, 14
      %v1283 = vpop.permute.xlu0 %1282
      %1284 = vrot.lane.b32.xlu0 %v1097, 14
      %v1285 = vpop.permute.xlu0 %1284
      %1286 = vrot.lane.b32.xlu0 %v1099, 14
      %v1287 = vpop.permute.xlu0 %1286
      %v1288 = vsel %vm482, %v1281, %v1285
      %v1289 = vsel %vm482, %v1283, %v1287
      %v1290 = vsel %vm482, %v1285, %v1281
      %v1291 = vsel %vm482, %v1287, %v1283
      %v1292 = vmul.f32 %v1290, %v490
      %v1293 = vmul.f32 %v1288, %v494
      %v1294 = vmul.f32 %v1291, %v490
      %v1295 = vmul.f32 %v1289, %v494
      %v1296 = vpack.c.bf16 %v1294, %v1292
      %v1297 = vpack.c.bf16 %v1295, %v1293
      %1298 = vst [vmem:[#allocation2 + $0x90] sm:$0xff] %v1296
      %1299 = vst [vmem:[#allocation2 + $0x98] sm:$0xff] %v1297
      %1300 = vrot.lane.b32.xlu0 %v1096, 2
      %v1301 = vpop.permute.xlu0 %1300
      %1302 = vrot.lane.b32.xlu0 %v1098, 2
      %v1303 = vpop.permute.xlu0 %1302
      %1304 = vrot.lane.b32.xlu0 %v1097, 2
      %v1305 = vpop.permute.xlu0 %1304
      %1306 = vrot.lane.b32.xlu0 %v1099, 2
      %v1307 = vpop.permute.xlu0 %1306
      %v1308 = vsel %vm511, %v1301, %v1305
      %v1309 = vsel %vm511, %v1303, %v1307
      %v1310 = vsel %vm511, %v1305, %v1301
      %v1311 = vsel %vm511, %v1307, %v1303
      %v1312 = vmul.f32 %v1310, %v519
      %v1313 = vmul.f32 %v1308, %v523
      %v1314 = vmul.f32 %v1311, %v519
      %v1315 = vmul.f32 %v1309, %v523
      %v1316 = vpack.c.bf16 %v1314, %v1312
      %v1317 = vpack.c.bf16 %v1315, %v1313
      %1318 = vst [vmem:[#allocation2 + $0xa0] sm:$0xff] %v1316
      %1319 = vst [vmem:[#allocation2 + $0xa8] sm:$0xff] %v1317
      %1320 = vrot.lane.b32.xlu0 %v1096, 1
      %v1321 = vpop.permute.xlu0 %1320
      %1322 = vrot.lane.b32.xlu0 %v1098, 1
      %v1323 = vpop.permute.xlu0 %1322
      %1324 = vrot.lane.b32.xlu0 %v1097, 1
      %v1325 = vpop.permute.xlu0 %1324
      %1326 = vrot.lane.b32.xlu0 %v1099, 1
      %v1327 = vpop.permute.xlu0 %1326
      %v1328 = vsel %vm540, %v1321, %v1325
      %v1329 = vsel %vm540, %v1323, %v1327
      %v1330 = vsel %vm540, %v1325, %v1321
      %v1331 = vsel %vm540, %v1327, %v1323
      %v1332 = vmul.f32 %v1330, %v548
      %v1333 = vmul.f32 %v1328, %v552
      %v1334 = vmul.f32 %v1331, %v548
      %v1335 = vmul.f32 %v1329, %v552
      %v1336 = vpack.c.bf16 %v1334, %v1332
      %v1337 = vpack.c.bf16 %v1335, %v1333
      %1338 = vst [vmem:[#allocation2 + $0xb0] sm:$0xff] %v1336
      %1339 = vst [vmem:[#allocation2 + $0xb8] sm:$0xff] %v1337
      %v1340 = vpack.c.bf16 %v1098, %v1096
      %v1341 = vpack.c.bf16 %v1099, %v1097
      %1342 = vst [vmem:[#allocation2 + $0xc0] sm:$0xff] %v1340
      %1343 = vst [vmem:[#allocation2 + $0xc8] sm:$0xff] %v1341
      %1344 = vrot.lane.b32.xlu0 %v1096, 127
      %v1345 = vpop.permute.xlu0 %1344
      %1346 = vrot.lane.b32.xlu0 %v1098, 127
      %v1347 = vpop.permute.xlu0 %1346
      %1348 = vrot.lane.b32.xlu0 %v1097, 127
      %v1349 = vpop.permute.xlu0 %1348
      %1350 = vrot.lane.b32.xlu0 %v1099, 127
      %v1351 = vpop.permute.xlu0 %1350
      %v1352 = vsel %vm573, %v1345, %v1349
      %v1353 = vsel %vm573, %v1347, %v1351
      %v1354 = vsel %vm573, %v1349, %v1345
      %v1355 = vsel %vm573, %v1351, %v1347
      %v1356 = vmul.f32 %v1352, %v581
      %v1357 = vmul.f32 %v1354, %v585
      %v1358 = vmul.f32 %v1353, %v581
      %v1359 = vmul.f32 %v1355, %v585
      %v1360 = vpack.c.bf16 %v1358, %v1356
      %v1361 = vpack.c.bf16 %v1359, %v1357
      %1362 = vst [vmem:[#allocation2 + $0xd0] sm:$0xff] %v1360
      %1363 = vst [vmem:[#allocation2 + $0xd8] sm:$0xff] %v1361
      %1364 = vrot.lane.b32.xlu0 %v1096, 126
      %v1365 = vpop.permute.xlu0 %1364
      %1366 = vrot.lane.b32.xlu0 %v1098, 126
      %v1367 = vpop.permute.xlu0 %1366
      %1368 = vrot.lane.b32.xlu0 %v1097, 126
      %v1369 = vpop.permute.xlu0 %1368
      %1370 = vrot.lane.b32.xlu0 %v1099, 126
      %v1371 = vpop.permute.xlu0 %1370
      %v1372 = vsel %vm602, %v1365, %v1369
      %v1373 = vsel %vm602, %v1367, %v1371
      %v1374 = vsel %vm602, %v1369, %v1365
      %v1375 = vsel %vm602, %v1371, %v1367
      %v1376 = vmul.f32 %v1372, %v610
      %v1377 = vmul.f32 %v1374, %v614
      %v1378 = vmul.f32 %v1373, %v610
      %v1379 = vmul.f32 %v1375, %v614
      %v1380 = vpack.c.bf16 %v1378, %v1376
      %v1381 = vpack.c.bf16 %v1379, %v1377
      %1382 = vst [vmem:[#allocation2 + $0xe0] sm:$0xff] %v1380
      %1383 = vst [vmem:[#allocation2 + $0xe8] sm:$0xff] %v1381
      %1384 = vrot.lane.b32.xlu0 %v1096, 114
      %v1385 = vpop.permute.xlu0 %1384
      %1386 = vrot.lane.b32.xlu0 %v1098, 114
      %v1387 = vpop.permute.xlu0 %1386
      %1388 = vrot.lane.b32.xlu0 %v1097, 114
      %v1389 = vpop.permute.xlu0 %1388
      %1390 = vrot.lane.b32.xlu0 %v1099, 114
      %v1391 = vpop.permute.xlu0 %1390
      %v1392 = vsel %vm631, %v1385, %v1389
      %v1393 = vsel %vm631, %v1387, %v1391
      %v1394 = vsel %vm631, %v1389, %v1385
      %v1395 = vsel %vm631, %v1391, %v1387
      %v1396 = vmul.f32 %v1392, %v639
      %v1397 = vmul.f32 %v1394, %v643
      %v1398 = vmul.f32 %v1393, %v639
      %v1399 = vmul.f32 %v1395, %v643
      %v1400 = vpack.c.bf16 %v1398, %v1396
      %v1401 = vpack.c.bf16 %v1399, %v1397
      %1402 = vst [vmem:[#allocation2 + $0xf0] sm:$0xff] %v1400
      %1403 = vst [vmem:[#allocation2 + $0xf8] sm:$0xff] %v1401
      %1404 = vrot.lane.b32.xlu0 %v1096, 113
      %v1405 = vpop.permute.xlu0 %1404
      %1406 = vrot.lane.b32.xlu0 %v1098, 113
      %v1407 = vpop.permute.xlu0 %1406
      %1408 = vrot.lane.b32.xlu0 %v1097, 113
      %v1409 = vpop.permute.xlu0 %1408
      %1410 = vrot.lane.b32.xlu0 %v1099, 113
      %v1411 = vpop.permute.xlu0 %1410
      %v1412 = vsel %vm660, %v1405, %v1409
      %v1413 = vsel %vm660, %v1407, %v1411
      %v1414 = vsel %vm660, %v1409, %v1405
      %v1415 = vsel %vm660, %v1411, %v1407
      %v1416 = vmul.f32 %v1412, %v668
      %v1417 = vmul.f32 %v1414, %v672
      %v1418 = vmul.f32 %v1413, %v668
      %v1419 = vmul.f32 %v1415, %v672
      %v1420 = vpack.c.bf16 %v1418, %v1416
      %v1421 = vpack.c.bf16 %v1419, %v1417
      %1422 = vst [vmem:[#allocation2 + $0x100] sm:$0xff] %v1420
      %1423 = vst [vmem:[#allocation2 + $0x108] sm:$0xff] %v1421
      %1424 = vrot.lane.b32.xlu0 %v1096, 112
      %v1425 = vpop.permute.xlu0 %1424
      %1426 = vrot.lane.b32.xlu0 %v1098, 112
      %v1427 = vpop.permute.xlu0 %1426
      %1428 = vrot.lane.b32.xlu0 %v1097, 112
      %v1429 = vpop.permute.xlu0 %1428
      %1430 = vrot.lane.b32.xlu0 %v1099, 112
      %v1431 = vpop.permute.xlu0 %1430
      %v1432 = vsel %vm689, %v1425, %v1429
      %v1433 = vsel %vm689, %v1427, %v1431
      %v1434 = vsel %vm689, %v1429, %v1425
      %v1435 = vsel %vm689, %v1431, %v1427
      %v1436 = vmul.f32 %v1432, %v697
      %v1437 = vmul.f32 %v1434, %v701
      %v1438 = vmul.f32 %v1433, %v697
      %v1439 = vmul.f32 %v1435, %v701
      %v1440 = vpack.c.bf16 %v1438, %v1436
      %v1441 = vpack.c.bf16 %v1439, %v1437
      %1442 = vst [vmem:[#allocation2 + $0x110] sm:$0xff] %v1440
      %1443 = vst [vmem:[#allocation2 + $0x118] sm:$0xff] %v1441
      %1444 = vrot.lane.b32.xlu0 %v1096, 111
      %v1445 = vpop.permute.xlu0 %1444
      %1446 = vrot.lane.b32.xlu0 %v1098, 111
      %v1447 = vpop.permute.xlu0 %1446
      %1448 = vrot.lane.b32.xlu0 %v1097, 111
      %v1449 = vpop.permute.xlu0 %1448
      %1450 = vrot.lane.b32.xlu0 %v1099, 111
      %v1451 = vpop.permute.xlu0 %1450
      %v1452 = vsel %vm718, %v1445, %v1449
      %v1453 = vsel %vm718, %v1447, %v1451
      %v1454 = vsel %vm718, %v1449, %v1445
      %v1455 = vsel %vm718, %v1451, %v1447
      %v1456 = vmul.f32 %v1452, %v726
      %v1457 = vmul.f32 %v1454, %v730
      %v1458 = vmul.f32 %v1453, %v726
      %v1459 = vmul.f32 %v1455, %v730
      %v1460 = vpack.c.bf16 %v1458, %v1456
      %v1461 = vpack.c.bf16 %v1459, %v1457
      %1462 = vst [vmem:[#allocation2 + $0x120] sm:$0xff] %v1460
      %1463 = vst [vmem:[#allocation2 + $0x128] sm:$0xff] %v1461
      %1464 = vrot.lane.b32.xlu0 %v1096, 110
      %v1465 = vpop.permute.xlu0 %1464
      %1466 = vrot.lane.b32.xlu0 %v1098, 110
      %v1467 = vpop.permute.xlu0 %1466
      %1468 = vrot.lane.b32.xlu0 %v1097, 110
      %v1469 = vpop.permute.xlu0 %1468
      %1470 = vrot.lane.b32.xlu0 %v1099, 110
      %v1471 = vpop.permute.xlu0 %1470
      %v1472 = vsel %vm747, %v1465, %v1469
      %v1473 = vsel %vm747, %v1467, %v1471
      %v1474 = vsel %vm747, %v1469, %v1465
      %v1475 = vsel %vm747, %v1471, %v1467
      %v1476 = vmul.f32 %v1472, %v755
      %v1477 = vmul.f32 %v1474, %v759
      %v1478 = vmul.f32 %v1473, %v755
      %v1479 = vmul.f32 %v1475, %v759
      %v1480 = vpack.c.bf16 %v1478, %v1476
      %v1481 = vpack.c.bf16 %v1479, %v1477
      %1482 = vst [vmem:[#allocation2 + $0x130] sm:$0xff] %v1480
      %1483 = vst [vmem:[#allocation2 + $0x138] sm:$0xff] %v1481
      %1484 = vrot.lane.b32.xlu0 %v1096, 98
      %v1485 = vpop.permute.xlu0 %1484
      %1486 = vrot.lane.b32.xlu0 %v1098, 98
      %v1487 = vpop.permute.xlu0 %1486
      %1488 = vrot.lane.b32.xlu0 %v1097, 98
      %v1489 = vpop.permute.xlu0 %1488
      %1490 = vrot.lane.b32.xlu0 %v1099, 98
      %v1491 = vpop.permute.xlu0 %1490
      %v1492 = vsel %vm776, %v1485, %v1489
      %v1493 = vsel %vm776, %v1487, %v1491
      %v1494 = vsel %vm776, %v1489, %v1485
      %v1495 = vsel %vm776, %v1491, %v1487
      %v1496 = vmul.f32 %v1492, %v784
      %v1497 = vmul.f32 %v1494, %v788
      %v1498 = vmul.f32 %v1493, %v784
      %v1499 = vmul.f32 %v1495, %v788
      %v1500 = vpack.c.bf16 %v1498, %v1496
      %v1501 = vpack.c.bf16 %v1499, %v1497
      %1502 = vst [vmem:[#allocation2 + $0x140] sm:$0xff] %v1500
      %1503 = vst [vmem:[#allocation2 + $0x148] sm:$0xff] %v1501
      %1504 = vrot.lane.b32.xlu0 %v1096, 97
      %v1505 = vpop.permute.xlu0 %1504
      %1506 = vrot.lane.b32.xlu0 %v1098, 97
      %v1507 = vpop.permute.xlu0 %1506
      %1508 = vrot.lane.b32.xlu0 %v1097, 97
      %v1509 = vpop.permute.xlu0 %1508
      %1510 = vrot.lane.b32.xlu0 %v1099, 97
      %v1511 = vpop.permute.xlu0 %1510
      %v1512 = vsel %vm805, %v1505, %v1509
      %v1513 = vsel %vm805, %v1507, %v1511
      %v1514 = vsel %vm805, %v1509, %v1505
      %v1515 = vsel %vm805, %v1511, %v1507
      %v1516 = vmul.f32 %v1512, %v813
      %v1517 = vmul.f32 %v1514, %v817
      %v1518 = vmul.f32 %v1513, %v813
      %v1519 = vmul.f32 %v1515, %v817
      %v1520 = vpack.c.bf16 %v1518, %v1516
      %v1521 = vpack.c.bf16 %v1519, %v1517
      %1522 = vst [vmem:[#allocation2 + $0x150] sm:$0xff] %v1520
      %1523 = vst [vmem:[#allocation2 + $0x158] sm:$0xff] %v1521
      %1524 = vrot.lane.b32.xlu0 %v1096, 96
      %v1525 = vpop.permute.xlu0 %1524
      %1526 = vrot.lane.b32.xlu0 %v1098, 96
      %v1527 = vpop.permute.xlu0 %1526
      %1528 = vrot.lane.b32.xlu0 %v1097, 96
      %v1529 = vpop.permute.xlu0 %1528
      %1530 = vrot.lane.b32.xlu0 %v1099, 96
      %v1531 = vpop.permute.xlu0 %1530
      %v1532 = vsel %vm834, %v1525, %v1529
      %v1533 = vsel %vm834, %v1527, %v1531
      %v1534 = vsel %vm834, %v1529, %v1525
      %v1535 = vsel %vm834, %v1531, %v1527
      %v1536 = vmul.f32 %v1532, %v842
      %v1537 = vmul.f32 %v1534, %v846
      %v1538 = vmul.f32 %v1533, %v842
      %v1539 = vmul.f32 %v1535, %v846
      %v1540 = vpack.c.bf16 %v1538, %v1536
      %v1541 = vpack.c.bf16 %v1539, %v1537
      %1542 = vst [vmem:[#allocation2 + $0x160] sm:$0xff] %v1540
      %1543 = vst [vmem:[#allocation2 + $0x168] sm:$0xff] %v1541
      %1544 = vrot.lane.b32.xlu0 %v1096, 95
      %v1545 = vpop.permute.xlu0 %1544
      %1546 = vrot.lane.b32.xlu0 %v1098, 95
      %v1547 = vpop.permute.xlu0 %1546
      %1548 = vrot.lane.b32.xlu0 %v1097, 95
      %v1549 = vpop.permute.xlu0 %1548
      %1550 = vrot.lane.b32.xlu0 %v1099, 95
      %v1551 = vpop.permute.xlu0 %1550
      %v1552 = vsel %vm863, %v1545, %v1549
      %v1553 = vsel %vm863, %v1547, %v1551
      %v1554 = vsel %vm863, %v1549, %v1545
      %v1555 = vsel %vm863, %v1551, %v1547
      %v1556 = vmul.f32 %v1552, %v871
      %v1557 = vmul.f32 %v1554, %v875
      %v1558 = vmul.f32 %v1553, %v871
      %v1559 = vmul.f32 %v1555, %v875
      %v1560 = vpack.c.bf16 %v1558, %v1556
      %v1561 = vpack.c.bf16 %v1559, %v1557
      %1562 = vst [vmem:[#allocation2 + $0x170] sm:$0xff] %v1560
      %1563 = vst [vmem:[#allocation2 + $0x178] sm:$0xff] %v1561
      %1564 = vrot.lane.b32.xlu0 %v1096, 94
      %v1565 = vpop.permute.xlu0 %1564
      %1566 = vrot.lane.b32.xlu0 %v1098, 94
      %v1567 = vpop.permute.xlu0 %1566
      %1568 = vrot.lane.b32.xlu0 %v1097, 94
      %v1569 = vpop.permute.xlu0 %1568
      %1570 = vrot.lane.b32.xlu0 %v1099, 94
      %v1571 = vpop.permute.xlu0 %1570
      %v1572 = vsel %vm892, %v1565, %v1569
      %v1573 = vsel %vm892, %v1567, %v1571
      %v1574 = vsel %vm892, %v1569, %v1565
      %v1575 = vsel %vm892, %v1571, %v1567
      %v1576 = vmul.f32 %v1572, %v900
      %v1577 = vmul.f32 %v1574, %v904
      %v1578 = vmul.f32 %v1573, %v900
      %v1579 = vmul.f32 %v1575, %v904
      %v1580 = vpack.c.bf16 %v1578, %v1576
      %v1581 = vpack.c.bf16 %v1579, %v1577
      %1582 = vst [vmem:[#allocation2 + $0x180] sm:$0xff] %v1580
      %1583 = vst [vmem:[#allocation2 + $0x188] sm:$0xff] %v1581
      %s1584 = scalar_lea.vmem %s1, 32
      %v1585 = vld [vmem:[%s1584] sm:$0xff]
      %v1586 = vld [vmem:[%s1584 + $0x8] sm:$0xff]
      %v1587 = vld [vmem:[%s1584 + $0x10] sm:$0xff]
      %v1588 = vld [vmem:[%s1584 + $0x18] sm:$0xff]
      %v1589 = vld [vmem:[#allocation2] sm:$0xff]
      %v1590 = vld [vmem:[#allocation2 + $0x8] sm:$0xff]
      %v1591 = vld [vmem:[#allocation2 + $0x10] sm:$0xff]
      %v1592 = vld [vmem:[#allocation2 + $0x18] sm:$0xff]
      %v1593 = vld [vmem:[#allocation2 + $0x20] sm:$0xff]
      %v1594 = vld [vmem:[#allocation2 + $0x28] sm:$0xff]
      %v1595 = vld [vmem:[#allocation2 + $0x30] sm:$0xff]
      %v1596 = vld [vmem:[#allocation2 + $0x38] sm:$0xff]
      %v1597 = vld [vmem:[#allocation2 + $0x40] sm:$0xff]
      %v1598 = vld [vmem:[#allocation2 + $0x48] sm:$0xff]
      %v1599 = vld [vmem:[#allocation2 + $0x50] sm:$0xff]
      %v1600 = vld [vmem:[#allocation2 + $0x58] sm:$0xff]
      %v1601 = vld [vmem:[#allocation2 + $0x60] sm:$0xff]
      %v1602 = vld [vmem:[#allocation2 + $0x68] sm:$0xff]
      %v1603 = vld [vmem:[#allocation2 + $0x70] sm:$0xff]
      %v1604 = vld [vmem:[#allocation2 + $0x78] sm:$0xff]
      %v1605 = vld [vmem:[#allocation2 + $0x80] sm:$0xff]
      %v1606 = vld [vmem:[#allocation2 + $0x88] sm:$0xff]
      %v1607 = vld [vmem:[#allocation2 + $0x90] sm:$0xff]
      %v1608 = vld [vmem:[#allocation2 + $0x98] sm:$0xff]
      %v1609 = vld [vmem:[#allocation2 + $0xa0] sm:$0xff]
      %v1610 = vld [vmem:[#allocation2 + $0xa8] sm:$0xff]
      %v1611 = vld [vmem:[#allocation2 + $0xb0] sm:$0xff]
      %v1612 = vld [vmem:[#allocation2 + $0xb8] sm:$0xff]
      %v1613 = vld [vmem:[#allocation2 + $0xc0] sm:$0xff]
      %v1614 = vld [vmem:[#allocation2 + $0xc8] sm:$0xff]
      %v1615 = vld [vmem:[#allocation2 + $0xd0] sm:$0xff]
      %v1616 = vld [vmem:[#allocation2 + $0xd8] sm:$0xff]
      %v1617 = vld [vmem:[#allocation2 + $0xe0] sm:$0xff]
      %v1618 = vld [vmem:[#allocation2 + $0xe8] sm:$0xff]
      %v1619 = vld [vmem:[#allocation2 + $0xf0] sm:$0xff]
      %v1620 = vld [vmem:[#allocation2 + $0xf8] sm:$0xff]
      %v1621 = vld [vmem:[#allocation2 + $0x100] sm:$0xff]
      %v1622 = vld [vmem:[#allocation2 + $0x108] sm:$0xff]
      %v1623 = vld [vmem:[#allocation2 + $0x110] sm:$0xff]
      %v1624 = vld [vmem:[#allocation2 + $0x118] sm:$0xff]
      %v1625 = vld [vmem:[#allocation2 + $0x120] sm:$0xff]
      %v1626 = vld [vmem:[#allocation2 + $0x128] sm:$0xff]
      %v1627 = vld [vmem:[#allocation2 + $0x130] sm:$0xff]
      %v1628 = vld [vmem:[#allocation2 + $0x138] sm:$0xff]
      %v1629 = vld [vmem:[#allocation2 + $0x140] sm:$0xff]
      %v1630 = vld [vmem:[#allocation2 + $0x148] sm:$0xff]
      %v1631 = vld [vmem:[#allocation2 + $0x150] sm:$0xff]
      %v1632 = vld [vmem:[#allocation2 + $0x158] sm:$0xff]
      %v1633 = vld [vmem:[#allocation2 + $0x160] sm:$0xff]
      %v1634 = vld [vmem:[#allocation2 + $0x168] sm:$0xff]
      %v1635 = vld [vmem:[#allocation2 + $0x170] sm:$0xff]
      %v1636 = vld [vmem:[#allocation2 + $0x178] sm:$0xff]
      %v1637 = vld [vmem:[#allocation2 + $0x180] sm:$0xff]
      %v1638 = vld [vmem:[#allocation2 + $0x188] sm:$0xff]
      %s1639 = scalar_lea.vmem %s2, 16
      %v1640 = vld [vmem:[%s1639] sm:$0xff]
      %v1641 = vld [vmem:[%s1639 + $0x8] sm:$0xff]
      %1643 = vset.pattern.permute.xlu0 0
      %1644 = vperm.xlu0 %1643, %v1640
      %v1645 = vpop.permute.xlu0 %1644
      %1648 = vset.pattern.permute.xlu0 0
      %1649 = vperm.xlu0 %1648, %v1641
      %v1650 = vpop.permute.xlu0 %1649
      %v1656 = vunpack.c.l.b16 %v1585
      %v1657 = vunpack.c.h.b16 %v1585
      %v1658 = vunpack.c.l.b16 %v1586
      %v1659 = vunpack.c.h.b16 %v1586
      %v1660 = vunpack.c.l.b16 %v1587
      %v1661 = vunpack.c.h.b16 %v1587
      %v1662 = vunpack.c.l.b16 %v1588
      %v1663 = vunpack.c.h.b16 %v1588
      %v1664 = vpack.c.b16 %v1660, %v1656
      %v1665 = vpack.c.b16 %v1661, %v1657
      %v1666 = vpack.c.b16 %v1662, %v1658
      %v1667 = vpack.c.b16 %v1663, %v1659
      %v1672 = vsel %vm998, %v1667, 0
      %1674 = vmatprep.subr.bf16.mxu0 %v1590
      %1675 = vmatpush1.bf16.msra.mxu0 %v1589
      %1676 = vmatprep.subr.bf16.mxu0 %v1592
      %1677 = vmatpush1.bf16.msra.mxu0 %v1591
      %1678 = vmatprep.subr.bf16.mxu0 %v1594
      %1679 = vmatpush1.bf16.msra.mxu0 %v1593
      %1680 = vmatprep.subr.bf16.mxu0 %v1596
      %1681 = vmatpush1.bf16.msra.mxu0 %v1595
      %1682 = vmatprep.subr.bf16.mxu0 %v1598
      %1683 = vmatpush1.bf16.msra.mxu0 %v1597
      %1684 = vmatprep.subr.bf16.mxu0 %v1600
      %1685 = vmatpush1.bf16.msra.mxu0 %v1599
      %1686 = vmatprep.subr.bf16.mxu0 %v1602
      %1687 = vmatpush1.bf16.msra.mxu0 %v1601
      %1688 = vmatprep.subr.bf16.mxu0 %v1604
      %1689 = vmatpush1.bf16.msra.mxu0 %v1603
      %1690 = vmatprep.subr.bf16.mxu0 %v1606
      %1691 = vmatpush1.bf16.msra.mxu0 %v1605
      %1692 = vmatprep.subr.bf16.mxu0 %v1608
      %1693 = vmatpush1.bf16.msra.mxu0 %v1607
      %1694 = vmatprep.subr.bf16.mxu0 %v1610
      %1695 = vmatpush1.bf16.msra.mxu0 %v1609
      %1696 = vmatprep.subr.bf16.mxu0 %v1612
      %1697 = vmatpush1.bf16.msra.mxu0 %v1611
      %1698 = vmatprep.subr.bf16.mxu0 %v1614
      %1699 = vmatpush1.bf16.msra.mxu0 %v1613
      %1700 = vmatprep.subr.bf16.mxu0 %v1616
      %1701 = vmatpush1.bf16.msra.mxu0 %v1615
      %1702 = vmatprep.subr.bf16.mxu0 %v1618
      %1703 = vmatpush1.bf16.msra.mxu0 %v1617
      %1704 = vmatprep.subr.bf16.mxu0 %v1620
      %1705 = vmatpush1.bf16.msra.mxu0 %v1619
      %1706 = vmatprep.mubr.bf16.mxu0 %v1665
      %1707 = vmatmul.mubr.bf16.gmra.mrb[0].mxu0 %v1664
      %v1708 = vpop.f32.mrb[0].mxu0
      %v1709 = vadd.f32 %v1645, %v1708
      %v1710 = vpop.f32.mrb[0].mxu0
      %v1711 = vadd.f32 %v1645, %v1710
      %v1712 = vpop.f32.mrb[0].mxu0
      %v1713 = vadd.f32 %v1650, %v1712
      %v1714 = vpop.f32.mrb[0].mxu0
      %v1715 = vadd.f32 %v1650, %v1714
      %1716 = vdwg.mxu0
      %1717 = vmatprep.subr.bf16.mxu0 %v1622
      %1718 = vmatpush1.bf16.msra.mxu0 %v1621
      %1719 = vmatprep.subr.bf16.mxu0 %v1624
      %1720 = vmatpush1.bf16.msra.mxu0 %v1623
      %1721 = vmatprep.subr.bf16.mxu0 %v1626
      %1722 = vmatpush1.bf16.msra.mxu0 %v1625
      %1723 = vmatprep.subr.bf16.mxu0 %v1628
      %1724 = vmatpush1.bf16.msra.mxu0 %v1627
      %1725 = vmatprep.subr.bf16.mxu0 %v1630
      %1726 = vmatpush1.bf16.msra.mxu0 %v1629
      %1727 = vmatprep.subr.bf16.mxu0 %v1632
      %1728 = vmatpush1.bf16.msra.mxu0 %v1631
      %1729 = vmatprep.subr.bf16.mxu0 %v1634
      %1730 = vmatpush1.bf16.msra.mxu0 %v1633
      %1731 = vmatprep.subr.bf16.mxu0 %v1636
      %1732 = vmatpush1.bf16.msra.mxu0 %v1635
      %1733 = vmatprep.subr.bf16.mxu0 %v1638
      %1734 = vmatpush1.bf16.msra.mxu0 %v1637
      %1735 = vmatprep.subr.bf16.mxu0 0
      %1736 = vmatpush1.bf16.msra.mxu0 0
      %1737 = vmatprep.subr.bf16.mxu0 0
      %1738 = vmatpush1.bf16.msra.mxu0 0
      %1739 = vmatprep.subr.bf16.mxu0 0
      %1740 = vmatpush1.bf16.msra.mxu0 0
      %1741 = vmatprep.subr.bf16.mxu0 0
      %1742 = vmatpush1.bf16.msra.mxu0 0
      %1743 = vmatprep.subr.bf16.mxu0 0
      %1744 = vmatpush1.bf16.msra.mxu0 0
      %1745 = vmatprep.subr.bf16.mxu0 0
      %1746 = vmatpush1.bf16.msra.mxu0 0
      %1747 = vmatprep.subr.bf16.mxu0 0
      %1748 = vmatpush1.bf16.msra.mxu0 0
      %1749 = vmatprep.mubr.bf16.mxu0 %v1672
      %1750 = vmatmul.mubr.bf16.gmra.mrb[0].mxu0 %v1666
      %v1751 = vpop.f32.mrb[0].mxu0
      %v1752 = vadd.f32 %v1709, %v1751
      %v1753 = vpop.f32.mrb[0].mxu0
      %v1754 = vadd.f32 %v1711, %v1753
      %v1755 = vpop.f32.mrb[0].mxu0
      %v1756 = vadd.f32 %v1713, %v1755
      %v1757 = vpop.f32.mrb[0].mxu0
      %v1758 = vadd.f32 %v1715, %v1757
      %1759 = vdwg.mxu0
      %vm1760 = vcmp.gt.f32.partialorder %v1752, 0.0
      %vm1761 = vcmp.gt.f32.partialorder %v1754, 0.0
      %vm1762 = vcmp.gt.f32.partialorder %v1756, 0.0
      %vm1763 = vcmp.gt.f32.partialorder %v1758, 0.0
      %v1764 = vmul.f32 %v1752, 0.01
      %v1765 = vmul.f32 %v1754, 0.01
      %v1766 = vmul.f32 %v1756, 0.01
      %v1767 = vmul.f32 %v1758, 0.01
      %v1768 = vsel %vm1760, %v1752, %v1764
      %v1769 = vsel %vm1761, %v1754, %v1765
      %v1770 = vsel %vm1762, %v1756, %v1766
      %v1771 = vsel %vm1763, %v1758, %v1767
      %1772 = vrot.lane.b32.xlu0 %v1768, 34
      %v1773 = vpop.permute.xlu0 %1772
      %1774 = vrot.lane.b32.xlu0 %v1770, 34
      %v1775 = vpop.permute.xlu0 %1774
      %1776 = vrot.lane.b32.xlu0 %v1769, 34
      %v1777 = vpop.permute.xlu0 %1776
      %1778 = vrot.lane.b32.xlu0 %v1771, 34
      %v1779 = vpop.permute.xlu0 %1778
      %v1780 = vsel %vm221, %v1773, %v1777
      %v1781 = vsel %vm221, %v1775, %v1779
      %v1782 = vsel %vm221, %v1777, %v1773
      %v1783 = vsel %vm221, %v1779, %v1775
      %v1784 = vmul.f32 %v1782, %v229
      %v1785 = vmul.f32 %v1780, %v233
      %v1786 = vmul.f32 %v1783, %v229
      %v1787 = vmul.f32 %v1781, %v233
      %v1788 = vpack.c.bf16 %v1786, %v1784
      %v1789 = vpack.c.bf16 %v1787, %v1785
      %1790 = vst [vmem:[#allocation2] sm:$0xff] %v1788
      %1791 = vst [vmem:[#allocation2 + $0x8] sm:$0xff] %v1789
      %1792 = vrot.lane.b32.xlu0 %v1768, 33
      %v1793 = vpop.permute.xlu0 %1792
      %1794 = vrot.lane.b32.xlu0 %v1770, 33
      %v1795 = vpop.permute.xlu0 %1794
      %1796 = vrot.lane.b32.xlu0 %v1769, 33
      %v1797 = vpop.permute.xlu0 %1796
      %1798 = vrot.lane.b32.xlu0 %v1771, 33
      %v1799 = vpop.permute.xlu0 %1798
      %v1800 = vsel %vm250, %v1793, %v1797
      %v1801 = vsel %vm250, %v1795, %v1799
      %v1802 = vsel %vm250, %v1797, %v1793
      %v1803 = vsel %vm250, %v1799, %v1795
      %v1804 = vmul.f32 %v1802, %v258
      %v1805 = vmul.f32 %v1800, %v262
      %v1806 = vmul.f32 %v1803, %v258
      %v1807 = vmul.f32 %v1801, %v262
      %v1808 = vpack.c.bf16 %v1806, %v1804
      %v1809 = vpack.c.bf16 %v1807, %v1805
      %1810 = vst [vmem:[#allocation2 + $0x10] sm:$0xff] %v1808
      %1811 = vst [vmem:[#allocation2 + $0x18] sm:$0xff] %v1809
      %1812 = vrot.lane.b32.xlu0 %v1768, 32
      %v1813 = vpop.permute.xlu0 %1812
      %1814 = vrot.lane.b32.xlu0 %v1770, 32
      %v1815 = vpop.permute.xlu0 %1814
      %1816 = vrot.lane.b32.xlu0 %v1769, 32
      %v1817 = vpop.permute.xlu0 %1816
      %1818 = vrot.lane.b32.xlu0 %v1771, 32
      %v1819 = vpop.permute.xlu0 %1818
      %v1820 = vsel %vm279, %v1813, %v1817
      %v1821 = vsel %vm279, %v1815, %v1819
      %v1822 = vsel %vm279, %v1817, %v1813
      %v1823 = vsel %vm279, %v1819, %v1815
      %v1824 = vmul.f32 %v1822, %v287
      %v1825 = vmul.f32 %v1820, %v291
      %v1826 = vmul.f32 %v1823, %v287
      %v1827 = vmul.f32 %v1821, %v291
      %v1828 = vpack.c.bf16 %v1826, %v1824
      %v1829 = vpack.c.bf16 %v1827, %v1825
      %1830 = vst [vmem:[#allocation2 + $0x20] sm:$0xff] %v1828
      %1831 = vst [vmem:[#allocation2 + $0x28] sm:$0xff] %v1829
      %1832 = vrot.lane.b32.xlu0 %v1768, 31
      %v1833 = vpop.permute.xlu0 %1832
      %1834 = vrot.lane.b32.xlu0 %v1770, 31
      %v1835 = vpop.permute.xlu0 %1834
      %1836 = vrot.lane.b32.xlu0 %v1769, 31
      %v1837 = vpop.permute.xlu0 %1836
      %1838 = vrot.lane.b32.xlu0 %v1771, 31
      %v1839 = vpop.permute.xlu0 %1838
      %v1840 = vsel %vm308, %v1833, %v1837
      %v1841 = vsel %vm308, %v1835, %v1839
      %v1842 = vsel %vm308, %v1837, %v1833
      %v1843 = vsel %vm308, %v1839, %v1835
      %v1844 = vmul.f32 %v1842, %v316
      %v1845 = vmul.f32 %v1840, %v320
      %v1846 = vmul.f32 %v1843, %v316
      %v1847 = vmul.f32 %v1841, %v320
      %v1848 = vpack.c.bf16 %v1846, %v1844
      %v1849 = vpack.c.bf16 %v1847, %v1845
      %1850 = vst [vmem:[#allocation2 + $0x30] sm:$0xff] %v1848
      %1851 = vst [vmem:[#allocation2 + $0x38] sm:$0xff] %v1849
      %1852 = vrot.lane.b32.xlu0 %v1768, 30
      %v1853 = vpop.permute.xlu0 %1852
      %1854 = vrot.lane.b32.xlu0 %v1770, 30
      %v1855 = vpop.permute.xlu0 %1854
      %1856 = vrot.lane.b32.xlu0 %v1769, 30
      %v1857 = vpop.permute.xlu0 %1856
      %1858 = vrot.lane.b32.xlu0 %v1771, 30
      %v1859 = vpop.permute.xlu0 %1858
      %v1860 = vsel %vm337, %v1853, %v1857
      %v1861 = vsel %vm337, %v1855, %v1859
      %v1862 = vsel %vm337, %v1857, %v1853
      %v1863 = vsel %vm337, %v1859, %v1855
      %v1864 = vmul.f32 %v1862, %v345
      %v1865 = vmul.f32 %v1860, %v349
      %v1866 = vmul.f32 %v1863, %v345
      %v1867 = vmul.f32 %v1861, %v349
      %v1868 = vpack.c.bf16 %v1866, %v1864
      %v1869 = vpack.c.bf16 %v1867, %v1865
      %1870 = vst [vmem:[#allocation2 + $0x40] sm:$0xff] %v1868
      %1871 = vst [vmem:[#allocation2 + $0x48] sm:$0xff] %v1869
      %1872 = vrot.lane.b32.xlu0 %v1768, 18
      %v1873 = vpop.permute.xlu0 %1872
      %1874 = vrot.lane.b32.xlu0 %v1770, 18
      %v1875 = vpop.permute.xlu0 %1874
      %1876 = vrot.lane.b32.xlu0 %v1769, 18
      %v1877 = vpop.permute.xlu0 %1876
      %1878 = vrot.lane.b32.xlu0 %v1771, 18
      %v1879 = vpop.permute.xlu0 %1878
      %v1880 = vsel %vm366, %v1873, %v1877
      %v1881 = vsel %vm366, %v1875, %v1879
      %v1882 = vsel %vm366, %v1877, %v1873
      %v1883 = vsel %vm366, %v1879, %v1875
      %v1884 = vmul.f32 %v1882, %v374
      %v1885 = vmul.f32 %v1880, %v378
      %v1886 = vmul.f32 %v1883, %v374
      %v1887 = vmul.f32 %v1881, %v378
      %v1888 = vpack.c.bf16 %v1886, %v1884
      %v1889 = vpack.c.bf16 %v1887, %v1885
      %1890 = vst [vmem:[#allocation2 + $0x50] sm:$0xff] %v1888
      %1891 = vst [vmem:[#allocation2 + $0x58] sm:$0xff] %v1889
      %1892 = vrot.lane.b32.xlu0 %v1768, 17
      %v1893 = vpop.permute.xlu0 %1892
      %1894 = vrot.lane.b32.xlu0 %v1770, 17
      %v1895 = vpop.permute.xlu0 %1894
      %1896 = vrot.lane.b32.xlu0 %v1769, 17
      %v1897 = vpop.permute.xlu0 %1896
      %1898 = vrot.lane.b32.xlu0 %v1771, 17
      %v1899 = vpop.permute.xlu0 %1898
      %v1900 = vsel %vm395, %v1893, %v1897
      %v1901 = vsel %vm395, %v1895, %v1899
      %v1902 = vsel %vm395, %v1897, %v1893
      %v1903 = vsel %vm395, %v1899, %v1895
      %v1904 = vmul.f32 %v1902, %v403
      %v1905 = vmul.f32 %v1900, %v407
      %v1906 = vmul.f32 %v1903, %v403
      %v1907 = vmul.f32 %v1901, %v407
      %v1908 = vpack.c.bf16 %v1906, %v1904
      %v1909 = vpack.c.bf16 %v1907, %v1905
      %1910 = vst [vmem:[#allocation2 + $0x60] sm:$0xff] %v1908
      %1911 = vst [vmem:[#allocation2 + $0x68] sm:$0xff] %v1909
      %1912 = vrot.lane.b32.xlu0 %v1768, 16
      %v1913 = vpop.permute.xlu0 %1912
      %1914 = vrot.lane.b32.xlu0 %v1770, 16
      %v1915 = vpop.permute.xlu0 %1914
      %1916 = vrot.lane.b32.xlu0 %v1769, 16
      %v1917 = vpop.permute.xlu0 %1916
      %1918 = vrot.lane.b32.xlu0 %v1771, 16
      %v1919 = vpop.permute.xlu0 %1918
      %v1920 = vsel %vm424, %v1913, %v1917
      %v1921 = vsel %vm424, %v1915, %v1919
      %v1922 = vsel %vm424, %v1917, %v1913
      %v1923 = vsel %vm424, %v1919, %v1915
      %v1924 = vmul.f32 %v1922, %v432
      %v1925 = vmul.f32 %v1920, %v436
      %v1926 = vmul.f32 %v1923, %v432
      %v1927 = vmul.f32 %v1921, %v436
      %v1928 = vpack.c.bf16 %v1926, %v1924
      %v1929 = vpack.c.bf16 %v1927, %v1925
      %1930 = vst [vmem:[#allocation2 + $0x70] sm:$0xff] %v1928
      %1931 = vst [vmem:[#allocation2 + $0x78] sm:$0xff] %v1929
      %1932 = vrot.lane.b32.xlu0 %v1768, 15
      %v1933 = vpop.permute.xlu0 %1932
      %1934 = vrot.lane.b32.xlu0 %v1770, 15
      %v1935 = vpop.permute.xlu0 %1934
      %1936 = vrot.lane.b32.xlu0 %v1769, 15
      %v1937 = vpop.permute.xlu0 %1936
      %1938 = vrot.lane.b32.xlu0 %v1771, 15
      %v1939 = vpop.permute.xlu0 %1938
      %v1940 = vsel %vm453, %v1933, %v1937
      %v1941 = vsel %vm453, %v1935, %v1939
      %v1942 = vsel %vm453, %v1937, %v1933
      %v1943 = vsel %vm453, %v1939, %v1935
      %v1944 = vmul.f32 %v1942, %v461
      %v1945 = vmul.f32 %v1940, %v465
      %v1946 = vmul.f32 %v1943, %v461
      %v1947 = vmul.f32 %v1941, %v465
      %v1948 = vpack.c.bf16 %v1946, %v1944
      %v1949 = vpack.c.bf16 %v1947, %v1945
      %1950 = vst [vmem:[#allocation2 + $0x80] sm:$0xff] %v1948
      %1951 = vst [vmem:[#allocation2 + $0x88] sm:$0xff] %v1949
      %1952 = vrot.lane.b32.xlu0 %v1768, 14
      %v1953 = vpop.permute.xlu0 %1952
      %1954 = vrot.lane.b32.xlu0 %v1770, 14
      %v1955 = vpop.permute.xlu0 %1954
      %1956 = vrot.lane.b32.xlu0 %v1769, 14
      %v1957 = vpop.permute.xlu0 %1956
      %1958 = vrot.lane.b32.xlu0 %v1771, 14
      %v1959 = vpop.permute.xlu0 %1958
      %v1960 = vsel %vm482, %v1953, %v1957
      %v1961 = vsel %vm482, %v1955, %v1959
      %v1962 = vsel %vm482, %v1957, %v1953
      %v1963 = vsel %vm482, %v1959, %v1955
      %v1964 = vmul.f32 %v1962, %v490
      %v1965 = vmul.f32 %v1960, %v494
      %v1966 = vmul.f32 %v1963, %v490
      %v1967 = vmul.f32 %v1961, %v494
      %v1968 = vpack.c.bf16 %v1966, %v1964
      %v1969 = vpack.c.bf16 %v1967, %v1965
      %1970 = vst [vmem:[#allocation2 + $0x90] sm:$0xff] %v1968
      %1971 = vst [vmem:[#allocation2 + $0x98] sm:$0xff] %v1969
      %1972 = vrot.lane.b32.xlu0 %v1768, 2
      %v1973 = vpop.permute.xlu0 %1972
      %1974 = vrot.lane.b32.xlu0 %v1770, 2
      %v1975 = vpop.permute.xlu0 %1974
      %1976 = vrot.lane.b32.xlu0 %v1769, 2
      %v1977 = vpop.permute.xlu0 %1976
      %1978 = vrot.lane.b32.xlu0 %v1771, 2
      %v1979 = vpop.permute.xlu0 %1978
      %v1980 = vsel %vm511, %v1973, %v1977
      %v1981 = vsel %vm511, %v1975, %v1979
      %v1982 = vsel %vm511, %v1977, %v1973
      %v1983 = vsel %vm511, %v1979, %v1975
      %v1984 = vmul.f32 %v1982, %v519
      %v1985 = vmul.f32 %v1980, %v523
      %v1986 = vmul.f32 %v1983, %v519
      %v1987 = vmul.f32 %v1981, %v523
      %v1988 = vpack.c.bf16 %v1986, %v1984
      %v1989 = vpack.c.bf16 %v1987, %v1985
      %1990 = vst [vmem:[#allocation2 + $0xa0] sm:$0xff] %v1988
      %1991 = vst [vmem:[#allocation2 + $0xa8] sm:$0xff] %v1989
      %1992 = vrot.lane.b32.xlu0 %v1768, 1
      %v1993 = vpop.permute.xlu0 %1992
      %1994 = vrot.lane.b32.xlu0 %v1770, 1
      %v1995 = vpop.permute.xlu0 %1994
      %1996 = vrot.lane.b32.xlu0 %v1769, 1
      %v1997 = vpop.permute.xlu0 %1996
      %1998 = vrot.lane.b32.xlu0 %v1771, 1
      %v1999 = vpop.permute.xlu0 %1998
      %v2000 = vsel %vm540, %v1993, %v1997
      %v2001 = vsel %vm540, %v1995, %v1999
      %v2002 = vsel %vm540, %v1997, %v1993
      %v2003 = vsel %vm540, %v1999, %v1995
      %v2004 = vmul.f32 %v2002, %v548
      %v2005 = vmul.f32 %v2000, %v552
      %v2006 = vmul.f32 %v2003, %v548
      %v2007 = vmul.f32 %v2001, %v552
      %v2008 = vpack.c.bf16 %v2006, %v2004
      %v2009 = vpack.c.bf16 %v2007, %v2005
      %2010 = vst [vmem:[#allocation2 + $0xb0] sm:$0xff] %v2008
      %2011 = vst [vmem:[#allocation2 + $0xb8] sm:$0xff] %v2009
      %v2012 = vpack.c.bf16 %v1770, %v1768
      %v2013 = vpack.c.bf16 %v1771, %v1769
      %2014 = vst [vmem:[#allocation2 + $0xc0] sm:$0xff] %v2012
      %2015 = vst [vmem:[#allocation2 + $0xc8] sm:$0xff] %v2013
      %2016 = vrot.lane.b32.xlu0 %v1768, 127
      %v2017 = vpop.permute.xlu0 %2016
      %2018 = vrot.lane.b32.xlu0 %v1770, 127
      %v2019 = vpop.permute.xlu0 %2018
      %2020 = vrot.lane.b32.xlu0 %v1769, 127
      %v2021 = vpop.permute.xlu0 %2020
      %2022 = vrot.lane.b32.xlu0 %v1771, 127
      %v2023 = vpop.permute.xlu0 %2022
      %v2024 = vsel %vm573, %v2017, %v2021
      %v2025 = vsel %vm573, %v2019, %v2023
      %v2026 = vsel %vm573, %v2021, %v2017
      %v2027 = vsel %vm573, %v2023, %v2019
      %v2028 = vmul.f32 %v2024, %v581
      %v2029 = vmul.f32 %v2026, %v585
      %v2030 = vmul.f32 %v2025, %v581
      %v2031 = vmul.f32 %v2027, %v585
      %v2032 = vpack.c.bf16 %v2030, %v2028
      %v2033 = vpack.c.bf16 %v2031, %v2029
      %2034 = vst [vmem:[#allocation2 + $0xd0] sm:$0xff] %v2032
      %2035 = vst [vmem:[#allocation2 + $0xd8] sm:$0xff] %v2033
      %2036 = vrot.lane.b32.xlu0 %v1768, 126
      %v2037 = vpop.permute.xlu0 %2036
      %2038 = vrot.lane.b32.xlu0 %v1770, 126
      %v2039 = vpop.permute.xlu0 %2038
      %2040 = vrot.lane.b32.xlu0 %v1769, 126
      %v2041 = vpop.permute.xlu0 %2040
      %2042 = vrot.lane.b32.xlu0 %v1771, 126
      %v2043 = vpop.permute.xlu0 %2042
      %v2044 = vsel %vm602, %v2037, %v2041
      %v2045 = vsel %vm602, %v2039, %v2043
      %v2046 = vsel %vm602, %v2041, %v2037
      %v2047 = vsel %vm602, %v2043, %v2039
      %v2048 = vmul.f32 %v2044, %v610
      %v2049 = vmul.f32 %v2046, %v614
      %v2050 = vmul.f32 %v2045, %v610
      %v2051 = vmul.f32 %v2047, %v614
      %v2052 = vpack.c.bf16 %v2050, %v2048
      %v2053 = vpack.c.bf16 %v2051, %v2049
      %2054 = vst [vmem:[#allocation2 + $0xe0] sm:$0xff] %v2052
      %2055 = vst [vmem:[#allocation2 + $0xe8] sm:$0xff] %v2053
      %2056 = vrot.lane.b32.xlu0 %v1768, 114
      %v2057 = vpop.permute.xlu0 %2056
      %2058 = vrot.lane.b32.xlu0 %v1770, 114
      %v2059 = vpop.permute.xlu0 %2058
      %2060 = vrot.lane.b32.xlu0 %v1769, 114
      %v2061 = vpop.permute.xlu0 %2060
      %2062 = vrot.lane.b32.xlu0 %v1771, 114
      %v2063 = vpop.permute.xlu0 %2062
      %v2064 = vsel %vm631, %v2057, %v2061
      %v2065 = vsel %vm631, %v2059, %v2063
      %v2066 = vsel %vm631, %v2061, %v2057
      %v2067 = vsel %vm631, %v2063, %v2059
      %v2068 = vmul.f32 %v2064, %v639
      %v2069 = vmul.f32 %v2066, %v643
      %v2070 = vmul.f32 %v2065, %v639
      %v2071 = vmul.f32 %v2067, %v643
      %v2072 = vpack.c.bf16 %v2070, %v2068
      %v2073 = vpack.c.bf16 %v2071, %v2069
      %2074 = vst [vmem:[#allocation2 + $0xf0] sm:$0xff] %v2072
      %2075 = vst [vmem:[#allocation2 + $0xf8] sm:$0xff] %v2073
      %2076 = vrot.lane.b32.xlu0 %v1768, 113
      %v2077 = vpop.permute.xlu0 %2076
      %2078 = vrot.lane.b32.xlu0 %v1770, 113
      %v2079 = vpop.permute.xlu0 %2078
      %2080 = vrot.lane.b32.xlu0 %v1769, 113
      %v2081 = vpop.permute.xlu0 %2080
      %2082 = vrot.lane.b32.xlu0 %v1771, 113
      %v2083 = vpop.permute.xlu0 %2082
      %v2084 = vsel %vm660, %v2077, %v2081
      %v2085 = vsel %vm660, %v2079, %v2083
      %v2086 = vsel %vm660, %v2081, %v2077
      %v2087 = vsel %vm660, %v2083, %v2079
      %v2088 = vmul.f32 %v2084, %v668
      %v2089 = vmul.f32 %v2086, %v672
      %v2090 = vmul.f32 %v2085, %v668
      %v2091 = vmul.f32 %v2087, %v672
      %v2092 = vpack.c.bf16 %v2090, %v2088
      %v2093 = vpack.c.bf16 %v2091, %v2089
      %2094 = vst [vmem:[#allocation2 + $0x100] sm:$0xff] %v2092
      %2095 = vst [vmem:[#allocation2 + $0x108] sm:$0xff] %v2093
      %2096 = vrot.lane.b32.xlu0 %v1768, 112
      %v2097 = vpop.permute.xlu0 %2096
      %2098 = vrot.lane.b32.xlu0 %v1770, 112
      %v2099 = vpop.permute.xlu0 %2098
      %2100 = vrot.lane.b32.xlu0 %v1769, 112
      %v2101 = vpop.permute.xlu0 %2100
      %2102 = vrot.lane.b32.xlu0 %v1771, 112
      %v2103 = vpop.permute.xlu0 %2102
      %v2104 = vsel %vm689, %v2097, %v2101
      %v2105 = vsel %vm689, %v2099, %v2103
      %v2106 = vsel %vm689, %v2101, %v2097
      %v2107 = vsel %vm689, %v2103, %v2099
      %v2108 = vmul.f32 %v2104, %v697
      %v2109 = vmul.f32 %v2106, %v701
      %v2110 = vmul.f32 %v2105, %v697
      %v2111 = vmul.f32 %v2107, %v701
      %v2112 = vpack.c.bf16 %v2110, %v2108
      %v2113 = vpack.c.bf16 %v2111, %v2109
      %2114 = vst [vmem:[#allocation2 + $0x110] sm:$0xff] %v2112
      %2115 = vst [vmem:[#allocation2 + $0x118] sm:$0xff] %v2113
      %2116 = vrot.lane.b32.xlu0 %v1768, 111
      %v2117 = vpop.permute.xlu0 %2116
      %2118 = vrot.lane.b32.xlu0 %v1770, 111
      %v2119 = vpop.permute.xlu0 %2118
      %2120 = vrot.lane.b32.xlu0 %v1769, 111
      %v2121 = vpop.permute.xlu0 %2120
      %2122 = vrot.lane.b32.xlu0 %v1771, 111
      %v2123 = vpop.permute.xlu0 %2122
      %v2124 = vsel %vm718, %v2117, %v2121
      %v2125 = vsel %vm718, %v2119, %v2123
      %v2126 = vsel %vm718, %v2121, %v2117
      %v2127 = vsel %vm718, %v2123, %v2119
      %v2128 = vmul.f32 %v2124, %v726
      %v2129 = vmul.f32 %v2126, %v730
      %v2130 = vmul.f32 %v2125, %v726
      %v2131 = vmul.f32 %v2127, %v730
      %v2132 = vpack.c.bf16 %v2130, %v2128
      %v2133 = vpack.c.bf16 %v2131, %v2129
      %2134 = vst [vmem:[#allocation2 + $0x120] sm:$0xff] %v2132
      %2135 = vst [vmem:[#allocation2 + $0x128] sm:$0xff] %v2133
      %2136 = vrot.lane.b32.xlu0 %v1768, 110
      %v2137 = vpop.permute.xlu0 %2136
      %2138 = vrot.lane.b32.xlu0 %v1770, 110
      %v2139 = vpop.permute.xlu0 %2138
      %2140 = vrot.lane.b32.xlu0 %v1769, 110
      %v2141 = vpop.permute.xlu0 %2140
      %2142 = vrot.lane.b32.xlu0 %v1771, 110
      %v2143 = vpop.permute.xlu0 %2142
      %v2144 = vsel %vm747, %v2137, %v2141
      %v2145 = vsel %vm747, %v2139, %v2143
      %v2146 = vsel %vm747, %v2141, %v2137
      %v2147 = vsel %vm747, %v2143, %v2139
      %v2148 = vmul.f32 %v2144, %v755
      %v2149 = vmul.f32 %v2146, %v759
      %v2150 = vmul.f32 %v2145, %v755
      %v2151 = vmul.f32 %v2147, %v759
      %v2152 = vpack.c.bf16 %v2150, %v2148
      %v2153 = vpack.c.bf16 %v2151, %v2149
      %2154 = vst [vmem:[#allocation2 + $0x130] sm:$0xff] %v2152
      %2155 = vst [vmem:[#allocation2 + $0x138] sm:$0xff] %v2153
      %2156 = vrot.lane.b32.xlu0 %v1768, 98
      %v2157 = vpop.permute.xlu0 %2156
      %2158 = vrot.lane.b32.xlu0 %v1770, 98
      %v2159 = vpop.permute.xlu0 %2158
      %2160 = vrot.lane.b32.xlu0 %v1769, 98
      %v2161 = vpop.permute.xlu0 %2160
      %2162 = vrot.lane.b32.xlu0 %v1771, 98
      %v2163 = vpop.permute.xlu0 %2162
      %v2164 = vsel %vm776, %v2157, %v2161
      %v2165 = vsel %vm776, %v2159, %v2163
      %v2166 = vsel %vm776, %v2161, %v2157
      %v2167 = vsel %vm776, %v2163, %v2159
      %v2168 = vmul.f32 %v2164, %v784
      %v2169 = vmul.f32 %v2166, %v788
      %v2170 = vmul.f32 %v2165, %v784
      %v2171 = vmul.f32 %v2167, %v788
      %v2172 = vpack.c.bf16 %v2170, %v2168
      %v2173 = vpack.c.bf16 %v2171, %v2169
      %2174 = vst [vmem:[#allocation2 + $0x140] sm:$0xff] %v2172
      %2175 = vst [vmem:[#allocation2 + $0x148] sm:$0xff] %v2173
      %2176 = vrot.lane.b32.xlu0 %v1768, 97
      %v2177 = vpop.permute.xlu0 %2176
      %2178 = vrot.lane.b32.xlu0 %v1770, 97
      %v2179 = vpop.permute.xlu0 %2178
      %2180 = vrot.lane.b32.xlu0 %v1769, 97
      %v2181 = vpop.permute.xlu0 %2180
      %2182 = vrot.lane.b32.xlu0 %v1771, 97
      %v2183 = vpop.permute.xlu0 %2182
      %v2184 = vsel %vm805, %v2177, %v2181
      %v2185 = vsel %vm805, %v2179, %v2183
      %v2186 = vsel %vm805, %v2181, %v2177
      %v2187 = vsel %vm805, %v2183, %v2179
      %v2188 = vmul.f32 %v2184, %v813
      %v2189 = vmul.f32 %v2186, %v817
      %v2190 = vmul.f32 %v2185, %v813
      %v2191 = vmul.f32 %v2187, %v817
      %v2192 = vpack.c.bf16 %v2190, %v2188
      %v2193 = vpack.c.bf16 %v2191, %v2189
      %2194 = vst [vmem:[#allocation2 + $0x150] sm:$0xff] %v2192
      %2195 = vst [vmem:[#allocation2 + $0x158] sm:$0xff] %v2193
      %2196 = vrot.lane.b32.xlu0 %v1768, 96
      %v2197 = vpop.permute.xlu0 %2196
      %2198 = vrot.lane.b32.xlu0 %v1770, 96
      %v2199 = vpop.permute.xlu0 %2198
      %2200 = vrot.lane.b32.xlu0 %v1769, 96
      %v2201 = vpop.permute.xlu0 %2200
      %2202 = vrot.lane.b32.xlu0 %v1771, 96
      %v2203 = vpop.permute.xlu0 %2202
      %v2204 = vsel %vm834, %v2197, %v2201
      %v2205 = vsel %vm834, %v2199, %v2203
      %v2206 = vsel %vm834, %v2201, %v2197
      %v2207 = vsel %vm834, %v2203, %v2199
      %v2208 = vmul.f32 %v2204, %v842
      %v2209 = vmul.f32 %v2206, %v846
      %v2210 = vmul.f32 %v2205, %v842
      %v2211 = vmul.f32 %v2207, %v846
      %v2212 = vpack.c.bf16 %v2210, %v2208
      %v2213 = vpack.c.bf16 %v2211, %v2209
      %2214 = vst [vmem:[#allocation2 + $0x160] sm:$0xff] %v2212
      %2215 = vst [vmem:[#allocation2 + $0x168] sm:$0xff] %v2213
      %2216 = vrot.lane.b32.xlu0 %v1768, 95
      %v2217 = vpop.permute.xlu0 %2216
      %2218 = vrot.lane.b32.xlu0 %v1770, 95
      %v2219 = vpop.permute.xlu0 %2218
      %2220 = vrot.lane.b32.xlu0 %v1769, 95
      %v2221 = vpop.permute.xlu0 %2220
      %2222 = vrot.lane.b32.xlu0 %v1771, 95
      %v2223 = vpop.permute.xlu0 %2222
      %v2224 = vsel %vm863, %v2217, %v2221
      %v2225 = vsel %vm863, %v2219, %v2223
      %v2226 = vsel %vm863, %v2221, %v2217
      %v2227 = vsel %vm863, %v2223, %v2219
      %v2228 = vmul.f32 %v2224, %v871
      %v2229 = vmul.f32 %v2226, %v875
      %v2230 = vmul.f32 %v2225, %v871
      %v2231 = vmul.f32 %v2227, %v875
      %v2232 = vpack.c.bf16 %v2230, %v2228
      %v2233 = vpack.c.bf16 %v2231, %v2229
      %2234 = vst [vmem:[#allocation2 + $0x170] sm:$0xff] %v2232
      %2235 = vst [vmem:[#allocation2 + $0x178] sm:$0xff] %v2233
      %2236 = vrot.lane.b32.xlu0 %v1768, 94
      %v2237 = vpop.permute.xlu0 %2236
      %2238 = vrot.lane.b32.xlu0 %v1770, 94
      %v2239 = vpop.permute.xlu0 %2238
      %2240 = vrot.lane.b32.xlu0 %v1769, 94
      %v2241 = vpop.permute.xlu0 %2240
      %2242 = vrot.lane.b32.xlu0 %v1771, 94
      %v2243 = vpop.permute.xlu0 %2242
      %v2244 = vsel %vm892, %v2237, %v2241
      %v2245 = vsel %vm892, %v2239, %v2243
      %v2246 = vsel %vm892, %v2241, %v2237
      %v2247 = vsel %vm892, %v2243, %v2239
      %v2248 = vmul.f32 %v2244, %v900
      %v2249 = vmul.f32 %v2246, %v904
      %v2250 = vmul.f32 %v2245, %v900
      %v2251 = vmul.f32 %v2247, %v904
      %v2252 = vpack.c.bf16 %v2250, %v2248
      %v2253 = vpack.c.bf16 %v2251, %v2249
      %2254 = vst [vmem:[#allocation2 + $0x180] sm:$0xff] %v2252
      %2255 = vst [vmem:[#allocation2 + $0x188] sm:$0xff] %v2253
      %s2256 = scalar_lea.vmem %s1, 64
      %v2257 = vld [vmem:[%s2256] sm:$0xff]
      %v2258 = vld [vmem:[%s2256 + $0x8] sm:$0xff]
      %v2259 = vld [vmem:[%s2256 + $0x10] sm:$0xff]
      %v2260 = vld [vmem:[%s2256 + $0x18] sm:$0xff]
      %v2261 = vld [vmem:[#allocation2] sm:$0xff]
      %v2262 = vld [vmem:[#allocation2 + $0x8] sm:$0xff]
      %v2263 = vld [vmem:[#allocation2 + $0x10] sm:$0xff]
      %v2264 = vld [vmem:[#allocation2 + $0x18] sm:$0xff]
      %v2265 = vld [vmem:[#allocation2 + $0x20] sm:$0xff]
      %v2266 = vld [vmem:[#allocation2 + $0x28] sm:$0xff]
      %v2267 = vld [vmem:[#allocation2 + $0x30] sm:$0xff]
      %v2268 = vld [vmem:[#allocation2 + $0x38] sm:$0xff]
      %v2269 = vld [vmem:[#allocation2 + $0x40] sm:$0xff]
      %v2270 = vld [vmem:[#allocation2 + $0x48] sm:$0xff]
      %v2271 = vld [vmem:[#allocation2 + $0x50] sm:$0xff]
      %v2272 = vld [vmem:[#allocation2 + $0x58] sm:$0xff]
      %v2273 = vld [vmem:[#allocation2 + $0x60] sm:$0xff]
      %v2274 = vld [vmem:[#allocation2 + $0x68] sm:$0xff]
      %v2275 = vld [vmem:[#allocation2 + $0x70] sm:$0xff]
      %v2276 = vld [vmem:[#allocation2 + $0x78] sm:$0xff]
      %v2277 = vld [vmem:[#allocation2 + $0x80] sm:$0xff]
      %v2278 = vld [vmem:[#allocation2 + $0x88] sm:$0xff]
      %v2279 = vld [vmem:[#allocation2 + $0x90] sm:$0xff]
      %v2280 = vld [vmem:[#allocation2 + $0x98] sm:$0xff]
      %v2281 = vld [vmem:[#allocation2 + $0xa0] sm:$0xff]
      %v2282 = vld [vmem:[#allocation2 + $0xa8] sm:$0xff]
      %v2283 = vld [vmem:[#allocation2 + $0xb0] sm:$0xff]
      %v2284 = vld [vmem:[#allocation2 + $0xb8] sm:$0xff]
      %v2285 = vld [vmem:[#allocation2 + $0xc0] sm:$0xff]
      %v2286 = vld [vmem:[#allocation2 + $0xc8] sm:$0xff]
      %v2287 = vld [vmem:[#allocation2 + $0xd0] sm:$0xff]
      %v2288 = vld [vmem:[#allocation2 + $0xd8] sm:$0xff]
      %v2289 = vld [vmem:[#allocation2 + $0xe0] sm:$0xff]
      %v2290 = vld [vmem:[#allocation2 + $0xe8] sm:$0xff]
      %v2291 = vld [vmem:[#allocation2 + $0xf0] sm:$0xff]
      %v2292 = vld [vmem:[#allocation2 + $0xf8] sm:$0xff]
      %v2293 = vld [vmem:[#allocation2 + $0x100] sm:$0xff]
      %v2294 = vld [vmem:[#allocation2 + $0x108] sm:$0xff]
      %v2295 = vld [vmem:[#allocation2 + $0x110] sm:$0xff]
      %v2296 = vld [vmem:[#allocation2 + $0x118] sm:$0xff]
      %v2297 = vld [vmem:[#allocation2 + $0x120] sm:$0xff]
      %v2298 = vld [vmem:[#allocation2 + $0x128] sm:$0xff]
      %v2299 = vld [vmem:[#allocation2 + $0x130] sm:$0xff]
      %v2300 = vld [vmem:[#allocation2 + $0x138] sm:$0xff]
      %v2301 = vld [vmem:[#allocation2 + $0x140] sm:$0xff]
      %v2302 = vld [vmem:[#allocation2 + $0x148] sm:$0xff]
      %v2303 = vld [vmem:[#allocation2 + $0x150] sm:$0xff]
      %v2304 = vld [vmem:[#allocation2 + $0x158] sm:$0xff]
      %v2305 = vld [vmem:[#allocation2 + $0x160] sm:$0xff]
      %v2306 = vld [vmem:[#allocation2 + $0x168] sm:$0xff]
      %v2307 = vld [vmem:[#allocation2 + $0x170] sm:$0xff]
      %v2308 = vld [vmem:[#allocation2 + $0x178] sm:$0xff]
      %v2309 = vld [vmem:[#allocation2 + $0x180] sm:$0xff]
      %v2310 = vld [vmem:[#allocation2 + $0x188] sm:$0xff]
      %s2311 = scalar_lea.vmem %s2, 32
      %v2312 = vld [vmem:[%s2311] sm:$0xff]
      %v2313 = vld [vmem:[%s2311 + $0x8] sm:$0xff]
      %2315 = vset.pattern.permute.xlu0 0
      %2316 = vperm.xlu0 %2315, %v2312
      %v2317 = vpop.permute.xlu0 %2316
      %2320 = vset.pattern.permute.xlu0 0
      %2321 = vperm.xlu0 %2320, %v2313
      %v2322 = vpop.permute.xlu0 %2321
      %v2328 = vunpack.c.l.b16 %v2257
      %v2329 = vunpack.c.h.b16 %v2257
      %v2330 = vunpack.c.l.b16 %v2258
      %v2331 = vunpack.c.h.b16 %v2258
      %v2332 = vunpack.c.l.b16 %v2259
      %v2333 = vunpack.c.h.b16 %v2259
      %v2334 = vunpack.c.l.b16 %v2260
      %v2335 = vunpack.c.h.b16 %v2260
      %v2336 = vpack.c.b16 %v2332, %v2328
      %v2337 = vpack.c.b16 %v2333, %v2329
      %v2338 = vpack.c.b16 %v2334, %v2330
      %v2339 = vpack.c.b16 %v2335, %v2331
      %v2344 = vsel %vm998, %v2339, 0
      %2346 = vmatprep.subr.bf16.mxu0 %v2262
      %2347 = vmatpush1.bf16.msra.mxu0 %v2261
      %2348 = vmatprep.subr.bf16.mxu0 %v2264
      %2349 = vmatpush1.bf16.msra.mxu0 %v2263
      %2350 = vmatprep.subr.bf16.mxu0 %v2266
      %2351 = vmatpush1.bf16.msra.mxu0 %v2265
      %2352 = vmatprep.subr.bf16.mxu0 %v2268
      %2353 = vmatpush1.bf16.msra.mxu0 %v2267
      %2354 = vmatprep.subr.bf16.mxu0 %v2270
      %2355 = vmatpush1.bf16.msra.mxu0 %v2269
      %2356 = vmatprep.subr.bf16.mxu0 %v2272
      %2357 = vmatpush1.bf16.msra.mxu0 %v2271
      %2358 = vmatprep.subr.bf16.mxu0 %v2274
      %2359 = vmatpush1.bf16.msra.mxu0 %v2273
      %2360 = vmatprep.subr.bf16.mxu0 %v2276
      %2361 = vmatpush1.bf16.msra.mxu0 %v2275
      %2362 = vmatprep.subr.bf16.mxu0 %v2278
      %2363 = vmatpush1.bf16.msra.mxu0 %v2277
      %2364 = vmatprep.subr.bf16.mxu0 %v2280
      %2365 = vmatpush1.bf16.msra.mxu0 %v2279
      %2366 = vmatprep.subr.bf16.mxu0 %v2282
      %2367 = vmatpush1.bf16.msra.mxu0 %v2281
      %2368 = vmatprep.subr.bf16.mxu0 %v2284
      %2369 = vmatpush1.bf16.msra.mxu0 %v2283
      %2370 = vmatprep.subr.bf16.mxu0 %v2286
      %2371 = vmatpush1.bf16.msra.mxu0 %v2285
      %2372 = vmatprep.subr.bf16.mxu0 %v2288
      %2373 = vmatpush1.bf16.msra.mxu0 %v2287
      %2374 = vmatprep.subr.bf16.mxu0 %v2290
      %2375 = vmatpush1.bf16.msra.mxu0 %v2289
      %2376 = vmatprep.subr.bf16.mxu0 %v2292
      %2377 = vmatpush1.bf16.msra.mxu0 %v2291
      %2378 = vmatprep.mubr.bf16.mxu0 %v2337
      %2379 = vmatmul.mubr.bf16.gmra.mrb[0].mxu0 %v2336
      %v2380 = vpop.f32.mrb[0].mxu0
      %v2381 = vadd.f32 %v2317, %v2380
      %v2382 = vpop.f32.mrb[0].mxu0
      %v2383 = vadd.f32 %v2317, %v2382
      %v2384 = vpop.f32.mrb[0].mxu0
      %v2385 = vadd.f32 %v2322, %v2384
      %v2386 = vpop.f32.mrb[0].mxu0
      %v2387 = vadd.f32 %v2322, %v2386
      %2388 = vdwg.mxu0
      %2389 = vmatprep.subr.bf16.mxu0 %v2294
      %2390 = vmatpush1.bf16.msra.mxu0 %v2293
      %2391 = vmatprep.subr.bf16.mxu0 %v2296
      %2392 = vmatpush1.bf16.msra.mxu0 %v2295
      %2393 = vmatprep.subr.bf16.mxu0 %v2298
      %2394 = vmatpush1.bf16.msra.mxu0 %v2297
      %2395 = vmatprep.subr.bf16.mxu0 %v2300
      %2396 = vmatpush1.bf16.msra.mxu0 %v2299
      %2397 = vmatprep.subr.bf16.mxu0 %v2302
      %2398 = vmatpush1.bf16.msra.mxu0 %v2301
      %2399 = vmatprep.subr.bf16.mxu0 %v2304
      %2400 = vmatpush1.bf16.msra.mxu0 %v2303
      %2401 = vmatprep.subr.bf16.mxu0 %v2306
      %2402 = vmatpush1.bf16.msra.mxu0 %v2305
      %2403 = vmatprep.subr.bf16.mxu0 %v2308
      %2404 = vmatpush1.bf16.msra.mxu0 %v2307
      %2405 = vmatprep.subr.bf16.mxu0 %v2310
      %2406 = vmatpush1.bf16.msra.mxu0 %v2309
      %2407 = vmatprep.subr.bf16.mxu0 0
      %2408 = vmatpush1.bf16.msra.mxu0 0
      %2409 = vmatprep.subr.bf16.mxu0 0
      %2410 = vmatpush1.bf16.msra.mxu0 0
      %2411 = vmatprep.subr.bf16.mxu0 0
      %2412 = vmatpush1.bf16.msra.mxu0 0
      %2413 = vmatprep.subr.bf16.mxu0 0
      %2414 = vmatpush1.bf16.msra.mxu0 0
      %2415 = vmatprep.subr.bf16.mxu0 0
      %2416 = vmatpush1.bf16.msra.mxu0 0
      %2417 = vmatprep.subr.bf16.mxu0 0
      %2418 = vmatpush1.bf16.msra.mxu0 0
      %2419 = vmatprep.subr.bf16.mxu0 0
      %2420 = vmatpush1.bf16.msra.mxu0 0
      %2421 = vmatprep.mubr.bf16.mxu0 %v2344
      %2422 = vmatmul.mubr.bf16.gmra.mrb[0].mxu0 %v2338
      %v2423 = vpop.f32.mrb[0].mxu0
      %v2424 = vadd.f32 %v2381, %v2423
      %v2425 = vpop.f32.mrb[0].mxu0
      %v2426 = vadd.f32 %v2383, %v2425
      %v2427 = vpop.f32.mrb[0].mxu0
      %v2428 = vadd.f32 %v2385, %v2427
      %v2429 = vpop.f32.mrb[0].mxu0
      %v2430 = vadd.f32 %v2387, %v2429
      %2431 = vdwg.mxu0
      %vm2432 = vcmp.gt.f32.partialorder %v2424, 0.0
      %vm2433 = vcmp.gt.f32.partialorder %v2426, 0.0
      %vm2434 = vcmp.gt.f32.partialorder %v2428, 0.0
      %vm2435 = vcmp.gt.f32.partialorder %v2430, 0.0
      %v2436 = vmul.f32 %v2424, 0.01
      %v2437 = vmul.f32 %v2426, 0.01
      %v2438 = vmul.f32 %v2428, 0.01
      %v2439 = vmul.f32 %v2430, 0.01
      %v2440 = vsel %vm2432, %v2424, %v2436
      %v2441 = vsel %vm2433, %v2426, %v2437
      %v2442 = vsel %vm2434, %v2428, %v2438
      %v2443 = vsel %vm2435, %v2430, %v2439
      %2444 = vrot.lane.b32.xlu0 %v2440, 34
      %v2445 = vpop.permute.xlu0 %2444
      %2446 = vrot.lane.b32.xlu0 %v2442, 34
      %v2447 = vpop.permute.xlu0 %2446
      %2448 = vrot.lane.b32.xlu0 %v2441, 34
      %v2449 = vpop.permute.xlu0 %2448
      %2450 = vrot.lane.b32.xlu0 %v2443, 34
      %v2451 = vpop.permute.xlu0 %2450
      %v2452 = vsel %vm221, %v2445, %v2449
      %v2453 = vsel %vm221, %v2447, %v2451
      %v2454 = vsel %vm221, %v2449, %v2445
      %v2455 = vsel %vm221, %v2451, %v2447
      %v2456 = vmul.f32 %v2454, %v229
      %v2457 = vmul.f32 %v2452, %v233
      %v2458 = vmul.f32 %v2455, %v229
      %v2459 = vmul.f32 %v2453, %v233
      %v2460 = vpack.c.bf16 %v2458, %v2456
      %v2461 = vpack.c.bf16 %v2459, %v2457
      %2462 = vst [vmem:[#allocation2] sm:$0xff] %v2460
      %2463 = vst [vmem:[#allocation2 + $0x8] sm:$0xff] %v2461
      %2464 = vrot.lane.b32.xlu0 %v2440, 33
      %v2465 = vpop.permute.xlu0 %2464
      %2466 = vrot.lane.b32.xlu0 %v2442, 33
      %v2467 = vpop.permute.xlu0 %2466
      %2468 = vrot.lane.b32.xlu0 %v2441, 33
      %v2469 = vpop.permute.xlu0 %2468
      %2470 = vrot.lane.b32.xlu0 %v2443, 33
      %v2471 = vpop.permute.xlu0 %2470
      %v2472 = vsel %vm250, %v2465, %v2469
      %v2473 = vsel %vm250, %v2467, %v2471
      %v2474 = vsel %vm250, %v2469, %v2465
      %v2475 = vsel %vm250, %v2471, %v2467
      %v2476 = vmul.f32 %v2474, %v258
      %v2477 = vmul.f32 %v2472, %v262
      %v2478 = vmul.f32 %v2475, %v258
      %v2479 = vmul.f32 %v2473, %v262
      %v2480 = vpack.c.bf16 %v2478, %v2476
      %v2481 = vpack.c.bf16 %v2479, %v2477
      %2482 = vst [vmem:[#allocation2 + $0x10] sm:$0xff] %v2480
      %2483 = vst [vmem:[#allocation2 + $0x18] sm:$0xff] %v2481
      %2484 = vrot.lane.b32.xlu0 %v2440, 32
      %v2485 = vpop.permute.xlu0 %2484
      %2486 = vrot.lane.b32.xlu0 %v2442, 32
      %v2487 = vpop.permute.xlu0 %2486
      %2488 = vrot.lane.b32.xlu0 %v2441, 32
      %v2489 = vpop.permute.xlu0 %2488
      %2490 = vrot.lane.b32.xlu0 %v2443, 32
      %v2491 = vpop.permute.xlu0 %2490
      %v2492 = vsel %vm279, %v2485, %v2489
      %v2493 = vsel %vm279, %v2487, %v2491
      %v2494 = vsel %vm279, %v2489, %v2485
      %v2495 = vsel %vm279, %v2491, %v2487
      %v2496 = vmul.f32 %v2494, %v287
      %v2497 = vmul.f32 %v2492, %v291
      %v2498 = vmul.f32 %v2495, %v287
      %v2499 = vmul.f32 %v2493, %v291
      %v2500 = vpack.c.bf16 %v2498, %v2496
      %v2501 = vpack.c.bf16 %v2499, %v2497
      %2502 = vst [vmem:[#allocation2 + $0x20] sm:$0xff] %v2500
      %2503 = vst [vmem:[#allocation2 + $0x28] sm:$0xff] %v2501
      %2504 = vrot.lane.b32.xlu0 %v2440, 31
      %v2505 = vpop.permute.xlu0 %2504
      %2506 = vrot.lane.b32.xlu0 %v2442, 31
      %v2507 = vpop.permute.xlu0 %2506
      %2508 = vrot.lane.b32.xlu0 %v2441, 31
      %v2509 = vpop.permute.xlu0 %2508
      %2510 = vrot.lane.b32.xlu0 %v2443, 31
      %v2511 = vpop.permute.xlu0 %2510
      %v2512 = vsel %vm308, %v2505, %v2509
      %v2513 = vsel %vm308, %v2507, %v2511
      %v2514 = vsel %vm308, %v2509, %v2505
      %v2515 = vsel %vm308, %v2511, %v2507
      %v2516 = vmul.f32 %v2514, %v316
      %v2517 = vmul.f32 %v2512, %v320
      %v2518 = vmul.f32 %v2515, %v316
      %v2519 = vmul.f32 %v2513, %v320
      %v2520 = vpack.c.bf16 %v2518, %v2516
      %v2521 = vpack.c.bf16 %v2519, %v2517
      %2522 = vst [vmem:[#allocation2 + $0x30] sm:$0xff] %v2520
      %2523 = vst [vmem:[#allocation2 + $0x38] sm:$0xff] %v2521
      %2524 = vrot.lane.b32.xlu0 %v2440, 30
      %v2525 = vpop.permute.xlu0 %2524
      %2526 = vrot.lane.b32.xlu0 %v2442, 30
      %v2527 = vpop.permute.xlu0 %2526
      %2528 = vrot.lane.b32.xlu0 %v2441, 30
      %v2529 = vpop.permute.xlu0 %2528
      %2530 = vrot.lane.b32.xlu0 %v2443, 30
      %v2531 = vpop.permute.xlu0 %2530
      %v2532 = vsel %vm337, %v2525, %v2529
      %v2533 = vsel %vm337, %v2527, %v2531
      %v2534 = vsel %vm337, %v2529, %v2525
      %v2535 = vsel %vm337, %v2531, %v2527
      %v2536 = vmul.f32 %v2534, %v345
      %v2537 = vmul.f32 %v2532, %v349
      %v2538 = vmul.f32 %v2535, %v345
      %v2539 = vmul.f32 %v2533, %v349
      %v2540 = vpack.c.bf16 %v2538, %v2536
      %v2541 = vpack.c.bf16 %v2539, %v2537
      %2542 = vst [vmem:[#allocation2 + $0x40] sm:$0xff] %v2540
      %2543 = vst [vmem:[#allocation2 + $0x48] sm:$0xff] %v2541
      %2544 = vrot.lane.b32.xlu0 %v2440, 18
      %v2545 = vpop.permute.xlu0 %2544
      %2546 = vrot.lane.b32.xlu0 %v2442, 18
      %v2547 = vpop.permute.xlu0 %2546
      %2548 = vrot.lane.b32.xlu0 %v2441, 18
      %v2549 = vpop.permute.xlu0 %2548
      %2550 = vrot.lane.b32.xlu0 %v2443, 18
      %v2551 = vpop.permute.xlu0 %2550
      %v2552 = vsel %vm366, %v2545, %v2549
      %v2553 = vsel %vm366, %v2547, %v2551
      %v2554 = vsel %vm366, %v2549, %v2545
      %v2555 = vsel %vm366, %v2551, %v2547
      %v2556 = vmul.f32 %v2554, %v374
      %v2557 = vmul.f32 %v2552, %v378
      %v2558 = vmul.f32 %v2555, %v374
      %v2559 = vmul.f32 %v2553, %v378
      %v2560 = vpack.c.bf16 %v2558, %v2556
      %v2561 = vpack.c.bf16 %v2559, %v2557
      %2562 = vst [vmem:[#allocation2 + $0x50] sm:$0xff] %v2560
      %2563 = vst [vmem:[#allocation2 + $0x58] sm:$0xff] %v2561
      %2564 = vrot.lane.b32.xlu0 %v2440, 17
      %v2565 = vpop.permute.xlu0 %2564
      %2566 = vrot.lane.b32.xlu0 %v2442, 17
      %v2567 = vpop.permute.xlu0 %2566
      %2568 = vrot.lane.b32.xlu0 %v2441, 17
      %v2569 = vpop.permute.xlu0 %2568
      %2570 = vrot.lane.b32.xlu0 %v2443, 17
      %v2571 = vpop.permute.xlu0 %2570
      %v2572 = vsel %vm395, %v2565, %v2569
      %v2573 = vsel %vm395, %v2567, %v2571
      %v2574 = vsel %vm395, %v2569, %v2565
      %v2575 = vsel %vm395, %v2571, %v2567
      %v2576 = vmul.f32 %v2574, %v403
      %v2577 = vmul.f32 %v2572, %v407
      %v2578 = vmul.f32 %v2575, %v403
      %v2579 = vmul.f32 %v2573, %v407
      %v2580 = vpack.c.bf16 %v2578, %v2576
      %v2581 = vpack.c.bf16 %v2579, %v2577
      %2582 = vst [vmem:[#allocation2 + $0x60] sm:$0xff] %v2580
      %2583 = vst [vmem:[#allocation2 + $0x68] sm:$0xff] %v2581
      %2584 = vrot.lane.b32.xlu0 %v2440, 16
      %v2585 = vpop.permute.xlu0 %2584
      %2586 = vrot.lane.b32.xlu0 %v2442, 16
      %v2587 = vpop.permute.xlu0 %2586
      %2588 = vrot.lane.b32.xlu0 %v2441, 16
      %v2589 = vpop.permute.xlu0 %2588
      %2590 = vrot.lane.b32.xlu0 %v2443, 16
      %v2591 = vpop.permute.xlu0 %2590
      %v2592 = vsel %vm424, %v2585, %v2589
      %v2593 = vsel %vm424, %v2587, %v2591
      %v2594 = vsel %vm424, %v2589, %v2585
      %v2595 = vsel %vm424, %v2591, %v2587
      %v2596 = vmul.f32 %v2594, %v432
      %v2597 = vmul.f32 %v2592, %v436
      %v2598 = vmul.f32 %v2595, %v432
      %v2599 = vmul.f32 %v2593, %v436
      %v2600 = vpack.c.bf16 %v2598, %v2596
      %v2601 = vpack.c.bf16 %v2599, %v2597
      %2602 = vst [vmem:[#allocation2 + $0x70] sm:$0xff] %v2600
      %2603 = vst [vmem:[#allocation2 + $0x78] sm:$0xff] %v2601
      %2604 = vrot.lane.b32.xlu0 %v2440, 15
      %v2605 = vpop.permute.xlu0 %2604
      %2606 = vrot.lane.b32.xlu0 %v2442, 15
      %v2607 = vpop.permute.xlu0 %2606
      %2608 = vrot.lane.b32.xlu0 %v2441, 15
      %v2609 = vpop.permute.xlu0 %2608
      %2610 = vrot.lane.b32.xlu0 %v2443, 15
      %v2611 = vpop.permute.xlu0 %2610
      %v2612 = vsel %vm453, %v2605, %v2609
      %v2613 = vsel %vm453, %v2607, %v2611
      %v2614 = vsel %vm453, %v2609, %v2605
      %v2615 = vsel %vm453, %v2611, %v2607
      %v2616 = vmul.f32 %v2614, %v461
      %v2617 = vmul.f32 %v2612, %v465
      %v2618 = vmul.f32 %v2615, %v461
      %v2619 = vmul.f32 %v2613, %v465
      %v2620 = vpack.c.bf16 %v2618, %v2616
      %v2621 = vpack.c.bf16 %v2619, %v2617
      %2622 = vst [vmem:[#allocation2 + $0x80] sm:$0xff] %v2620
      %2623 = vst [vmem:[#allocation2 + $0x88] sm:$0xff] %v2621
      %2624 = vrot.lane.b32.xlu0 %v2440, 14
      %v2625 = vpop.permute.xlu0 %2624
      %2626 = vrot.lane.b32.xlu0 %v2442, 14
      %v2627 = vpop.permute.xlu0 %2626
      %2628 = vrot.lane.b32.xlu0 %v2441, 14
      %v2629 = vpop.permute.xlu0 %2628
      %2630 = vrot.lane.b32.xlu0 %v2443, 14
      %v2631 = vpop.permute.xlu0 %2630
      %v2632 = vsel %vm482, %v2625, %v2629
      %v2633 = vsel %vm482, %v2627, %v2631
      %v2634 = vsel %vm482, %v2629, %v2625
      %v2635 = vsel %vm482, %v2631, %v2627
      %v2636 = vmul.f32 %v2634, %v490
      %v2637 = vmul.f32 %v2632, %v494
      %v2638 = vmul.f32 %v2635, %v490
      %v2639 = vmul.f32 %v2633, %v494
      %v2640 = vpack.c.bf16 %v2638, %v2636
      %v2641 = vpack.c.bf16 %v2639, %v2637
      %2642 = vst [vmem:[#allocation2 + $0x90] sm:$0xff] %v2640
      %2643 = vst [vmem:[#allocation2 + $0x98] sm:$0xff] %v2641
      %2644 = vrot.lane.b32.xlu0 %v2440, 2
      %v2645 = vpop.permute.xlu0 %2644
      %2646 = vrot.lane.b32.xlu0 %v2442, 2
      %v2647 = vpop.permute.xlu0 %2646
      %2648 = vrot.lane.b32.xlu0 %v2441, 2
      %v2649 = vpop.permute.xlu0 %2648
      %2650 = vrot.lane.b32.xlu0 %v2443, 2
      %v2651 = vpop.permute.xlu0 %2650
      %v2652 = vsel %vm511, %v2645, %v2649
      %v2653 = vsel %vm511, %v2647, %v2651
      %v2654 = vsel %vm511, %v2649, %v2645
      %v2655 = vsel %vm511, %v2651, %v2647
      %v2656 = vmul.f32 %v2654, %v519
      %v2657 = vmul.f32 %v2652, %v523
      %v2658 = vmul.f32 %v2655, %v519
      %v2659 = vmul.f32 %v2653, %v523
      %v2660 = vpack.c.bf16 %v2658, %v2656
      %v2661 = vpack.c.bf16 %v2659, %v2657
      %2662 = vst [vmem:[#allocation2 + $0xa0] sm:$0xff] %v2660
      %2663 = vst [vmem:[#allocation2 + $0xa8] sm:$0xff] %v2661
      %2664 = vrot.lane.b32.xlu0 %v2440, 1
      %v2665 = vpop.permute.xlu0 %2664
      %2666 = vrot.lane.b32.xlu0 %v2442, 1
      %v2667 = vpop.permute.xlu0 %2666
      %2668 = vrot.lane.b32.xlu0 %v2441, 1
      %v2669 = vpop.permute.xlu0 %2668
      %2670 = vrot.lane.b32.xlu0 %v2443, 1
      %v2671 = vpop.permute.xlu0 %2670
      %v2672 = vsel %vm540, %v2665, %v2669
      %v2673 = vsel %vm540, %v2667, %v2671
      %v2674 = vsel %vm540, %v2669, %v2665
      %v2675 = vsel %vm540, %v2671, %v2667
      %v2676 = vmul.f32 %v2674, %v548
      %v2677 = vmul.f32 %v2672, %v552
      %v2678 = vmul.f32 %v2675, %v548
      %v2679 = vmul.f32 %v2673, %v552
      %v2680 = vpack.c.bf16 %v2678, %v2676
      %v2681 = vpack.c.bf16 %v2679, %v2677
      %2682 = vst [vmem:[#allocation2 + $0xb0] sm:$0xff] %v2680
      %2683 = vst [vmem:[#allocation2 + $0xb8] sm:$0xff] %v2681
      %v2684 = vpack.c.bf16 %v2442, %v2440
      %v2685 = vpack.c.bf16 %v2443, %v2441
      %2686 = vst [vmem:[#allocation2 + $0xc0] sm:$0xff] %v2684
      %2687 = vst [vmem:[#allocation2 + $0xc8] sm:$0xff] %v2685
      %2688 = vrot.lane.b32.xlu0 %v2440, 127
      %v2689 = vpop.permute.xlu0 %2688
      %2690 = vrot.lane.b32.xlu0 %v2442, 127
      %v2691 = vpop.permute.xlu0 %2690
      %2692 = vrot.lane.b32.xlu0 %v2441, 127
      %v2693 = vpop.permute.xlu0 %2692
      %2694 = vrot.lane.b32.xlu0 %v2443, 127
      %v2695 = vpop.permute.xlu0 %2694
      %v2696 = vsel %vm573, %v2689, %v2693
      %v2697 = vsel %vm573, %v2691, %v2695
      %v2698 = vsel %vm573, %v2693, %v2689
      %v2699 = vsel %vm573, %v2695, %v2691
      %v2700 = vmul.f32 %v2696, %v581
      %v2701 = vmul.f32 %v2698, %v585
      %v2702 = vmul.f32 %v2697, %v581
      %v2703 = vmul.f32 %v2699, %v585
      %v2704 = vpack.c.bf16 %v2702, %v2700
      %v2705 = vpack.c.bf16 %v2703, %v2701
      %2706 = vst [vmem:[#allocation2 + $0xd0] sm:$0xff] %v2704
      %2707 = vst [vmem:[#allocation2 + $0xd8] sm:$0xff] %v2705
      %2708 = vrot.lane.b32.xlu0 %v2440, 126
      %v2709 = vpop.permute.xlu0 %2708
      %2710 = vrot.lane.b32.xlu0 %v2442, 126
      %v2711 = vpop.permute.xlu0 %2710
      %2712 = vrot.lane.b32.xlu0 %v2441, 126
      %v2713 = vpop.permute.xlu0 %2712
      %2714 = vrot.lane.b32.xlu0 %v2443, 126
      %v2715 = vpop.permute.xlu0 %2714
      %v2716 = vsel %vm602, %v2709, %v2713
      %v2717 = vsel %vm602, %v2711, %v2715
      %v2718 = vsel %vm602, %v2713, %v2709
      %v2719 = vsel %vm602, %v2715, %v2711
      %v2720 = vmul.f32 %v2716, %v610
      %v2721 = vmul.f32 %v2718, %v614
      %v2722 = vmul.f32 %v2717, %v610
      %v2723 = vmul.f32 %v2719, %v614
      %v2724 = vpack.c.bf16 %v2722, %v2720
      %v2725 = vpack.c.bf16 %v2723, %v2721
      %2726 = vst [vmem:[#allocation2 + $0xe0] sm:$0xff] %v2724
      %2727 = vst [vmem:[#allocation2 + $0xe8] sm:$0xff] %v2725
      %2728 = vrot.lane.b32.xlu0 %v2440, 114
      %v2729 = vpop.permute.xlu0 %2728
      %2730 = vrot.lane.b32.xlu0 %v2442, 114
      %v2731 = vpop.permute.xlu0 %2730
      %2732 = vrot.lane.b32.xlu0 %v2441, 114
      %v2733 = vpop.permute.xlu0 %2732
      %2734 = vrot.lane.b32.xlu0 %v2443, 114
      %v2735 = vpop.permute.xlu0 %2734
      %v2736 = vsel %vm631, %v2729, %v2733
      %v2737 = vsel %vm631, %v2731, %v2735
      %v2738 = vsel %vm631, %v2733, %v2729
      %v2739 = vsel %vm631, %v2735, %v2731
      %v2740 = vmul.f32 %v2736, %v639
      %v2741 = vmul.f32 %v2738, %v643
      %v2742 = vmul.f32 %v2737, %v639
      %v2743 = vmul.f32 %v2739, %v643
      %v2744 = vpack.c.bf16 %v2742, %v2740
      %v2745 = vpack.c.bf16 %v2743, %v2741
      %2746 = vst [vmem:[#allocation2 + $0xf0] sm:$0xff] %v2744
      %2747 = vst [vmem:[#allocation2 + $0xf8] sm:$0xff] %v2745
      %2748 = vrot.lane.b32.xlu0 %v2440, 113
      %v2749 = vpop.permute.xlu0 %2748
      %2750 = vrot.lane.b32.xlu0 %v2442, 113
      %v2751 = vpop.permute.xlu0 %2750
      %2752 = vrot.lane.b32.xlu0 %v2441, 113
      %v2753 = vpop.permute.xlu0 %2752
      %2754 = vrot.lane.b32.xlu0 %v2443, 113
      %v2755 = vpop.permute.xlu0 %2754
      %v2756 = vsel %vm660, %v2749, %v2753
      %v2757 = vsel %vm660, %v2751, %v2755
      %v2758 = vsel %vm660, %v2753, %v2749
      %v2759 = vsel %vm660, %v2755, %v2751
      %v2760 = vmul.f32 %v2756, %v668
      %v2761 = vmul.f32 %v2758, %v672
      %v2762 = vmul.f32 %v2757, %v668
      %v2763 = vmul.f32 %v2759, %v672
      %v2764 = vpack.c.bf16 %v2762, %v2760
      %v2765 = vpack.c.bf16 %v2763, %v2761
      %2766 = vst [vmem:[#allocation2 + $0x100] sm:$0xff] %v2764
      %2767 = vst [vmem:[#allocation2 + $0x108] sm:$0xff] %v2765
      %2768 = vrot.lane.b32.xlu0 %v2440, 112
      %v2769 = vpop.permute.xlu0 %2768
      %2770 = vrot.lane.b32.xlu0 %v2442, 112
      %v2771 = vpop.permute.xlu0 %2770
      %2772 = vrot.lane.b32.xlu0 %v2441, 112
      %v2773 = vpop.permute.xlu0 %2772
      %2774 = vrot.lane.b32.xlu0 %v2443, 112
      %v2775 = vpop.permute.xlu0 %2774
      %v2776 = vsel %vm689, %v2769, %v2773
      %v2777 = vsel %vm689, %v2771, %v2775
      %v2778 = vsel %vm689, %v2773, %v2769
      %v2779 = vsel %vm689, %v2775, %v2771
      %v2780 = vmul.f32 %v2776, %v697
      %v2781 = vmul.f32 %v2778, %v701
      %v2782 = vmul.f32 %v2777, %v697
      %v2783 = vmul.f32 %v2779, %v701
      %v2784 = vpack.c.bf16 %v2782, %v2780
      %v2785 = vpack.c.bf16 %v2783, %v2781
      %2786 = vst [vmem:[#allocation2 + $0x110] sm:$0xff] %v2784
      %2787 = vst [vmem:[#allocation2 + $0x118] sm:$0xff] %v2785
      %2788 = vrot.lane.b32.xlu0 %v2440, 111
      %v2789 = vpop.permute.xlu0 %2788
      %2790 = vrot.lane.b32.xlu0 %v2442, 111
      %v2791 = vpop.permute.xlu0 %2790
      %2792 = vrot.lane.b32.xlu0 %v2441, 111
      %v2793 = vpop.permute.xlu0 %2792
      %2794 = vrot.lane.b32.xlu0 %v2443, 111
      %v2795 = vpop.permute.xlu0 %2794
      %v2796 = vsel %vm718, %v2789, %v2793
      %v2797 = vsel %vm718, %v2791, %v2795
      %v2798 = vsel %vm718, %v2793, %v2789
      %v2799 = vsel %vm718, %v2795, %v2791
      %v2800 = vmul.f32 %v2796, %v726
      %v2801 = vmul.f32 %v2798, %v730
      %v2802 = vmul.f32 %v2797, %v726
      %v2803 = vmul.f32 %v2799, %v730
      %v2804 = vpack.c.bf16 %v2802, %v2800
      %v2805 = vpack.c.bf16 %v2803, %v2801
      %2806 = vst [vmem:[#allocation2 + $0x120] sm:$0xff] %v2804
      %2807 = vst [vmem:[#allocation2 + $0x128] sm:$0xff] %v2805
      %2808 = vrot.lane.b32.xlu0 %v2440, 110
      %v2809 = vpop.permute.xlu0 %2808
      %2810 = vrot.lane.b32.xlu0 %v2442, 110
      %v2811 = vpop.permute.xlu0 %2810
      %2812 = vrot.lane.b32.xlu0 %v2441, 110
      %v2813 = vpop.permute.xlu0 %2812
      %2814 = vrot.lane.b32.xlu0 %v2443, 110
      %v2815 = vpop.permute.xlu0 %2814
      %v2816 = vsel %vm747, %v2809, %v2813
      %v2817 = vsel %vm747, %v2811, %v2815
      %v2818 = vsel %vm747, %v2813, %v2809
      %v2819 = vsel %vm747, %v2815, %v2811
      %v2820 = vmul.f32 %v2816, %v755
      %v2821 = vmul.f32 %v2818, %v759
      %v2822 = vmul.f32 %v2817, %v755
      %v2823 = vmul.f32 %v2819, %v759
      %v2824 = vpack.c.bf16 %v2822, %v2820
      %v2825 = vpack.c.bf16 %v2823, %v2821
      %2826 = vst [vmem:[#allocation2 + $0x130] sm:$0xff] %v2824
      %2827 = vst [vmem:[#allocation2 + $0x138] sm:$0xff] %v2825
      %2828 = vrot.lane.b32.xlu0 %v2440, 98
      %v2829 = vpop.permute.xlu0 %2828
      %2830 = vrot.lane.b32.xlu0 %v2442, 98
      %v2831 = vpop.permute.xlu0 %2830
      %2832 = vrot.lane.b32.xlu0 %v2441, 98
      %v2833 = vpop.permute.xlu0 %2832
      %2834 = vrot.lane.b32.xlu0 %v2443, 98
      %v2835 = vpop.permute.xlu0 %2834
      %v2836 = vsel %vm776, %v2829, %v2833
      %v2837 = vsel %vm776, %v2831, %v2835
      %v2838 = vsel %vm776, %v2833, %v2829
      %v2839 = vsel %vm776, %v2835, %v2831
      %v2840 = vmul.f32 %v2836, %v784
      %v2841 = vmul.f32 %v2838, %v788
      %v2842 = vmul.f32 %v2837, %v784
      %v2843 = vmul.f32 %v2839, %v788
      %v2844 = vpack.c.bf16 %v2842, %v2840
      %v2845 = vpack.c.bf16 %v2843, %v2841
      %2846 = vst [vmem:[#allocation2 + $0x140] sm:$0xff] %v2844
      %2847 = vst [vmem:[#allocation2 + $0x148] sm:$0xff] %v2845
      %2848 = vrot.lane.b32.xlu0 %v2440, 97
      %v2849 = vpop.permute.xlu0 %2848
      %2850 = vrot.lane.b32.xlu0 %v2442, 97
      %v2851 = vpop.permute.xlu0 %2850
      %2852 = vrot.lane.b32.xlu0 %v2441, 97
      %v2853 = vpop.permute.xlu0 %2852
      %2854 = vrot.lane.b32.xlu0 %v2443, 97
      %v2855 = vpop.permute.xlu0 %2854
      %v2856 = vsel %vm805, %v2849, %v2853
      %v2857 = vsel %vm805, %v2851, %v2855
      %v2858 = vsel %vm805, %v2853, %v2849
      %v2859 = vsel %vm805, %v2855, %v2851
      %v2860 = vmul.f32 %v2856, %v813
      %v2861 = vmul.f32 %v2858, %v817
      %v2862 = vmul.f32 %v2857, %v813
      %v2863 = vmul.f32 %v2859, %v817
      %v2864 = vpack.c.bf16 %v2862, %v2860
      %v2865 = vpack.c.bf16 %v2863, %v2861
      %2866 = vst [vmem:[#allocation2 + $0x150] sm:$0xff] %v2864
      %2867 = vst [vmem:[#allocation2 + $0x158] sm:$0xff] %v2865
      %2868 = vrot.lane.b32.xlu0 %v2440, 96
      %v2869 = vpop.permute.xlu0 %2868
      %2870 = vrot.lane.b32.xlu0 %v2442, 96
      %v2871 = vpop.permute.xlu0 %2870
      %2872 = vrot.lane.b32.xlu0 %v2441, 96
      %v2873 = vpop.permute.xlu0 %2872
      %2874 = vrot.lane.b32.xlu0 %v2443, 96
      %v2875 = vpop.permute.xlu0 %2874
      %v2876 = vsel %vm834, %v2869, %v2873
      %v2877 = vsel %vm834, %v2871, %v2875
      %v2878 = vsel %vm834, %v2873, %v2869
      %v2879 = vsel %vm834, %v2875, %v2871
      %v2880 = vmul.f32 %v2876, %v842
      %v2881 = vmul.f32 %v2878, %v846
      %v2882 = vmul.f32 %v2877, %v842
      %v2883 = vmul.f32 %v2879, %v846
      %v2884 = vpack.c.bf16 %v2882, %v2880
      %v2885 = vpack.c.bf16 %v2883, %v2881
      %2886 = vst [vmem:[#allocation2 + $0x160] sm:$0xff] %v2884
      %2887 = vst [vmem:[#allocation2 + $0x168] sm:$0xff] %v2885
      %2888 = vrot.lane.b32.xlu0 %v2440, 95
      %v2889 = vpop.permute.xlu0 %2888
      %2890 = vrot.lane.b32.xlu0 %v2442, 95
      %v2891 = vpop.permute.xlu0 %2890
      %2892 = vrot.lane.b32.xlu0 %v2441, 95
      %v2893 = vpop.permute.xlu0 %2892
      %2894 = vrot.lane.b32.xlu0 %v2443, 95
      %v2895 = vpop.permute.xlu0 %2894
      %v2896 = vsel %vm863, %v2889, %v2893
      %v2897 = vsel %vm863, %v2891, %v2895
      %v2898 = vsel %vm863, %v2893, %v2889
      %v2899 = vsel %vm863, %v2895, %v2891
      %v2900 = vmul.f32 %v2896, %v871
      %v2901 = vmul.f32 %v2898, %v875
      %v2902 = vmul.f32 %v2897, %v871
      %v2903 = vmul.f32 %v2899, %v875
      %v2904 = vpack.c.bf16 %v2902, %v2900
      %v2905 = vpack.c.bf16 %v2903, %v2901
      %2906 = vst [vmem:[#allocation2 + $0x170] sm:$0xff] %v2904
      %2907 = vst [vmem:[#allocation2 + $0x178] sm:$0xff] %v2905
      %2908 = vrot.lane.b32.xlu0 %v2440, 94
      %v2909 = vpop.permute.xlu0 %2908
      %2910 = vrot.lane.b32.xlu0 %v2442, 94
      %v2911 = vpop.permute.xlu0 %2910
      %2912 = vrot.lane.b32.xlu0 %v2441, 94
      %v2913 = vpop.permute.xlu0 %2912
      %2914 = vrot.lane.b32.xlu0 %v2443, 94
      %v2915 = vpop.permute.xlu0 %2914
      %v2916 = vsel %vm892, %v2909, %v2913
      %v2917 = vsel %vm892, %v2911, %v2915
      %v2918 = vsel %vm892, %v2913, %v2909
      %v2919 = vsel %vm892, %v2915, %v2911
      %v2920 = vmul.f32 %v2916, %v900
      %v2921 = vmul.f32 %v2918, %v904
      %v2922 = vmul.f32 %v2917, %v900
      %v2923 = vmul.f32 %v2919, %v904
      %v2924 = vpack.c.bf16 %v2922, %v2920
      %v2925 = vpack.c.bf16 %v2923, %v2921
      %2926 = vst [vmem:[#allocation2 + $0x180] sm:$0xff] %v2924
      %2927 = vst [vmem:[#allocation2 + $0x188] sm:$0xff] %v2925
      %s2928 = scalar_lea.vmem %s1, 96
      %v2929 = vld [vmem:[%s2928] sm:$0xff]
      %v2930 = vld [vmem:[%s2928 + $0x8] sm:$0xff]
      %v2931 = vld [vmem:[%s2928 + $0x10] sm:$0xff]
      %v2932 = vld [vmem:[%s2928 + $0x18] sm:$0xff]
      %v2933 = vld [vmem:[#allocation2] sm:$0xff]
      %v2934 = vld [vmem:[#allocation2 + $0x8] sm:$0xff]
      %v2935 = vld [vmem:[#allocation2 + $0x10] sm:$0xff]
      %v2936 = vld [vmem:[#allocation2 + $0x18] sm:$0xff]
      %v2937 = vld [vmem:[#allocation2 + $0x20] sm:$0xff]
      %v2938 = vld [vmem:[#allocation2 + $0x28] sm:$0xff]
      %v2939 = vld [vmem:[#allocation2 + $0x30] sm:$0xff]
      %v2940 = vld [vmem:[#allocation2 + $0x38] sm:$0xff]
      %v2941 = vld [vmem:[#allocation2 + $0x40] sm:$0xff]
      %v2942 = vld [vmem:[#allocation2 + $0x48] sm:$0xff]
      %v2943 = vld [vmem:[#allocation2 + $0x50] sm:$0xff]
      %v2944 = vld [vmem:[#allocation2 + $0x58] sm:$0xff]
      %v2945 = vld [vmem:[#allocation2 + $0x60] sm:$0xff]
      %v2946 = vld [vmem:[#allocation2 + $0x68] sm:$0xff]
      %v2947 = vld [vmem:[#allocation2 + $0x70] sm:$0xff]
      %v2948 = vld [vmem:[#allocation2 + $0x78] sm:$0xff]
      %v2949 = vld [vmem:[#allocation2 + $0x80] sm:$0xff]
      %v2950 = vld [vmem:[#allocation2 + $0x88] sm:$0xff]
      %v2951 = vld [vmem:[#allocation2 + $0x90] sm:$0xff]
      %v2952 = vld [vmem:[#allocation2 + $0x98] sm:$0xff]
      %v2953 = vld [vmem:[#allocation2 + $0xa0] sm:$0xff]
      %v2954 = vld [vmem:[#allocation2 + $0xa8] sm:$0xff]
      %v2955 = vld [vmem:[#allocation2 + $0xb0] sm:$0xff]
      %v2956 = vld [vmem:[#allocation2 + $0xb8] sm:$0xff]
      %v2957 = vld [vmem:[#allocation2 + $0xc0] sm:$0xff]
      %v2958 = vld [vmem:[#allocation2 + $0xc8] sm:$0xff]
      %v2959 = vld [vmem:[#allocation2 + $0xd0] sm:$0xff]
      %v2960 = vld [vmem:[#allocation2 + $0xd8] sm:$0xff]
      %v2961 = vld [vmem:[#allocation2 + $0xe0] sm:$0xff]
      %v2962 = vld [vmem:[#allocation2 + $0xe8] sm:$0xff]
      %v2963 = vld [vmem:[#allocation2 + $0xf0] sm:$0xff]
      %v2964 = vld [vmem:[#allocation2 + $0xf8] sm:$0xff]
      %v2965 = vld [vmem:[#allocation2 + $0x100] sm:$0xff]
      %v2966 = vld [vmem:[#allocation2 + $0x108] sm:$0xff]
      %v2967 = vld [vmem:[#allocation2 + $0x110] sm:$0xff]
      %v2968 = vld [vmem:[#allocation2 + $0x118] sm:$0xff]
      %v2969 = vld [vmem:[#allocation2 + $0x120] sm:$0xff]
      %v2970 = vld [vmem:[#allocation2 + $0x128] sm:$0xff]
      %v2971 = vld [vmem:[#allocation2 + $0x130] sm:$0xff]
      %v2972 = vld [vmem:[#allocation2 + $0x138] sm:$0xff]
      %v2973 = vld [vmem:[#allocation2 + $0x140] sm:$0xff]
      %v2974 = vld [vmem:[#allocation2 + $0x148] sm:$0xff]
      %v2975 = vld [vmem:[#allocation2 + $0x150] sm:$0xff]
      %v2976 = vld [vmem:[#allocation2 + $0x158] sm:$0xff]
      %v2977 = vld [vmem:[#allocation2 + $0x160] sm:$0xff]
      %v2978 = vld [vmem:[#allocation2 + $0x168] sm:$0xff]
      %v2979 = vld [vmem:[#allocation2 + $0x170] sm:$0xff]
      %v2980 = vld [vmem:[#allocation2 + $0x178] sm:$0xff]
      %v2981 = vld [vmem:[#allocation2 + $0x180] sm:$0xff]
      %v2982 = vld [vmem:[#allocation2 + $0x188] sm:$0xff]
      %s2983 = scalar_lea.vmem %s2, 48
      %v2984 = vld [vmem:[%s2983] sm:$0xff]
      %v2985 = vld [vmem:[%s2983 + $0x8] sm:$0xff]
      %2987 = vset.pattern.permute.xlu0 0
      %2988 = vperm.xlu0 %2987, %v2984
      %v2989 = vpop.permute.xlu0 %2988
      %2992 = vset.pattern.permute.xlu0 0
      %2993 = vperm.xlu0 %2992, %v2985
      %v2994 = vpop.permute.xlu0 %2993
      %v3000 = vunpack.c.l.b16 %v2929
      %v3001 = vunpack.c.h.b16 %v2929
      %v3002 = vunpack.c.l.b16 %v2930
      %v3003 = vunpack.c.h.b16 %v2930
      %v3004 = vunpack.c.l.b16 %v2931
      %v3005 = vunpack.c.h.b16 %v2931
      %v3006 = vunpack.c.l.b16 %v2932
      %v3007 = vunpack.c.h.b16 %v2932
      %v3008 = vpack.c.b16 %v3004, %v3000
      %v3009 = vpack.c.b16 %v3005, %v3001
      %v3010 = vpack.c.b16 %v3006, %v3002
      %v3011 = vpack.c.b16 %v3007, %v3003
      %v3016 = vsel %vm998, %v3011, 0
      %3018 = vmatprep.subr.bf16.mxu0 %v2934
      %3019 = vmatpush1.bf16.msra.mxu0 %v2933
      %3020 = vmatprep.subr.bf16.mxu0 %v2936
      %3021 = vmatpush1.bf16.msra.mxu0 %v2935
      %3022 = vmatprep.subr.bf16.mxu0 %v2938
      %3023 = vmatpush1.bf16.msra.mxu0 %v2937
      %3024 = vmatprep.subr.bf16.mxu0 %v2940
      %3025 = vmatpush1.bf16.msra.mxu0 %v2939
      %3026 = vmatprep.subr.bf16.mxu0 %v2942
      %3027 = vmatpush1.bf16.msra.mxu0 %v2941
      %3028 = vmatprep.subr.bf16.mxu0 %v2944
      %3029 = vmatpush1.bf16.msra.mxu0 %v2943
      %3030 = vmatprep.subr.bf16.mxu0 %v2946
      %3031 = vmatpush1.bf16.msra.mxu0 %v2945
      %3032 = vmatprep.subr.bf16.mxu0 %v2948
      %3033 = vmatpush1.bf16.msra.mxu0 %v2947
      %3034 = vmatprep.subr.bf16.mxu0 %v2950
      %3035 = vmatpush1.bf16.msra.mxu0 %v2949
      %3036 = vmatprep.subr.bf16.mxu0 %v2952
      %3037 = vmatpush1.bf16.msra.mxu0 %v2951
      %3038 = vmatprep.subr.bf16.mxu0 %v2954
      %3039 = vmatpush1.bf16.msra.mxu0 %v2953
      %3040 = vmatprep.subr.bf16.mxu0 %v2956
      %3041 = vmatpush1.bf16.msra.mxu0 %v2955
      %3042 = vmatprep.subr.bf16.mxu0 %v2958
      %3043 = vmatpush1.bf16.msra.mxu0 %v2957
      %3044 = vmatprep.subr.bf16.mxu0 %v2960
      %3045 = vmatpush1.bf16.msra.mxu0 %v2959
      %3046 = vmatprep.subr.bf16.mxu0 %v2962
      %3047 = vmatpush1.bf16.msra.mxu0 %v2961
      %3048 = vmatprep.subr.bf16.mxu0 %v2964
      %3049 = vmatpush1.bf16.msra.mxu0 %v2963
      %3050 = vmatprep.mubr.bf16.mxu0 %v3009
      %3051 = vmatmul.mubr.bf16.gmra.mrb[0].mxu0 %v3008
      %v3052 = vpop.f32.mrb[0].mxu0
      %v3053 = vadd.f32 %v2989, %v3052
      %v3054 = vpop.f32.mrb[0].mxu0
      %v3055 = vadd.f32 %v2989, %v3054
      %v3056 = vpop.f32.mrb[0].mxu0
      %v3057 = vadd.f32 %v2994, %v3056
      %v3058 = vpop.f32.mrb[0].mxu0
      %v3059 = vadd.f32 %v2994, %v3058
      %3060 = vdwg.mxu0
      %3061 = vmatprep.subr.bf16.mxu0 %v2966
      %3062 = vmatpush1.bf16.msra.mxu0 %v2965
      %3063 = vmatprep.subr.bf16.mxu0 %v2968
      %3064 = vmatpush1.bf16.msra.mxu0 %v2967
      %3065 = vmatprep.subr.bf16.mxu0 %v2970
      %3066 = vmatpush1.bf16.msra.mxu0 %v2969
      %3067 = vmatprep.subr.bf16.mxu0 %v2972
      %3068 = vmatpush1.bf16.msra.mxu0 %v2971
      %3069 = vmatprep.subr.bf16.mxu0 %v2974
      %3070 = vmatpush1.bf16.msra.mxu0 %v2973
      %3071 = vmatprep.subr.bf16.mxu0 %v2976
      %3072 = vmatpush1.bf16.msra.mxu0 %v2975
      %3073 = vmatprep.subr.bf16.mxu0 %v2978
      %3074 = vmatpush1.bf16.msra.mxu0 %v2977
      %3075 = vmatprep.subr.bf16.mxu0 %v2980
      %3076 = vmatpush1.bf16.msra.mxu0 %v2979
      %3077 = vmatprep.subr.bf16.mxu0 %v2982
      %3078 = vmatpush1.bf16.msra.mxu0 %v2981
      %3079 = vmatprep.subr.bf16.mxu0 0
      %3080 = vmatpush1.bf16.msra.mxu0 0
      %3081 = vmatprep.subr.bf16.mxu0 0
      %3082 = vmatpush1.bf16.msra.mxu0 0
      %3083 = vmatprep.subr.bf16.mxu0 0
      %3084 = vmatpush1.bf16.msra.mxu0 0
      %3085 = vmatprep.subr.bf16.mxu0 0
      %3086 = vmatpush1.bf16.msra.mxu0 0
      %3087 = vmatprep.subr.bf16.mxu0 0
      %3088 = vmatpush1.bf16.msra.mxu0 0
      %3089 = vmatprep.subr.bf16.mxu0 0
      %3090 = vmatpush1.bf16.msra.mxu0 0
      %3091 = vmatprep.subr.bf16.mxu0 0
      %3092 = vmatpush1.bf16.msra.mxu0 0
      %3093 = vmatprep.mubr.bf16.mxu0 %v3016
      %3094 = vmatmul.mubr.bf16.gmra.mrb[0].mxu0 %v3010
      %v3095 = vpop.f32.mrb[0].mxu0
      %v3096 = vadd.f32 %v3053, %v3095
      %v3097 = vpop.f32.mrb[0].mxu0
      %v3098 = vadd.f32 %v3055, %v3097
      %v3099 = vpop.f32.mrb[0].mxu0
      %v3100 = vadd.f32 %v3057, %v3099
      %v3101 = vpop.f32.mrb[0].mxu0
      %v3102 = vadd.f32 %v3059, %v3101
      %3103 = vdwg.mxu0
      %vm3104 = vcmp.gt.f32.partialorder %v3096, 0.0
      %vm3105 = vcmp.gt.f32.partialorder %v3098, 0.0
      %vm3106 = vcmp.gt.f32.partialorder %v3100, 0.0
      %vm3107 = vcmp.gt.f32.partialorder %v3102, 0.0
      %v3108 = vmul.f32 %v3096, 0.01
      %v3109 = vmul.f32 %v3098, 0.01
      %v3110 = vmul.f32 %v3100, 0.01
      %v3111 = vmul.f32 %v3102, 0.01
      %v3112 = vsel %vm3104, %v3096, %v3108
      %v3113 = vsel %vm3105, %v3098, %v3109
      %v3114 = vsel %vm3106, %v3100, %v3110
      %v3115 = vsel %vm3107, %v3102, %v3111
      %3116 = vrot.lane.b32.xlu0 %v3112, 34
      %v3117 = vpop.permute.xlu0 %3116
      %3118 = vrot.lane.b32.xlu0 %v3114, 34
      %v3119 = vpop.permute.xlu0 %3118
      %3120 = vrot.lane.b32.xlu0 %v3113, 34
      %v3121 = vpop.permute.xlu0 %3120
      %3122 = vrot.lane.b32.xlu0 %v3115, 34
      %v3123 = vpop.permute.xlu0 %3122
      %v3124 = vsel %vm221, %v3117, %v3121
      %v3125 = vsel %vm221, %v3119, %v3123
      %v3126 = vsel %vm221, %v3121, %v3117
      %v3127 = vsel %vm221, %v3123, %v3119
      %v3128 = vmul.f32 %v3126, %v229
      %v3129 = vmul.f32 %v3124, %v233
      %v3130 = vmul.f32 %v3127, %v229
      %v3131 = vmul.f32 %v3125, %v233
      %v3132 = vpack.c.bf16 %v3130, %v3128
      %v3133 = vpack.c.bf16 %v3131, %v3129
      %3134 = vst [vmem:[#allocation2] sm:$0xff] %v3132
      %3135 = vst [vmem:[#allocation2 + $0x8] sm:$0xff] %v3133
      %3136 = vrot.lane.b32.xlu0 %v3112, 33
      %v3137 = vpop.permute.xlu0 %3136
      %3138 = vrot.lane.b32.xlu0 %v3114, 33
      %v3139 = vpop.permute.xlu0 %3138
      %3140 = vrot.lane.b32.xlu0 %v3113, 33
      %v3141 = vpop.permute.xlu0 %3140
      %3142 = vrot.lane.b32.xlu0 %v3115, 33
      %v3143 = vpop.permute.xlu0 %3142
      %v3144 = vsel %vm250, %v3137, %v3141
      %v3145 = vsel %vm250, %v3139, %v3143
      %v3146 = vsel %vm250, %v3141, %v3137
      %v3147 = vsel %vm250, %v3143, %v3139
      %v3148 = vmul.f32 %v3146, %v258
      %v3149 = vmul.f32 %v3144, %v262
      %v3150 = vmul.f32 %v3147, %v258
      %v3151 = vmul.f32 %v3145, %v262
      %v3152 = vpack.c.bf16 %v3150, %v3148
      %v3153 = vpack.c.bf16 %v3151, %v3149
      %3154 = vst [vmem:[#allocation2 + $0x10] sm:$0xff] %v3152
      %3155 = vst [vmem:[#allocation2 + $0x18] sm:$0xff] %v3153
      %3156 = vrot.lane.b32.xlu0 %v3112, 32
      %v3157 = vpop.permute.xlu0 %3156
      %3158 = vrot.lane.b32.xlu0 %v3114, 32
      %v3159 = vpop.permute.xlu0 %3158
      %3160 = vrot.lane.b32.xlu0 %v3113, 32
      %v3161 = vpop.permute.xlu0 %3160
      %3162 = vrot.lane.b32.xlu0 %v3115, 32
      %v3163 = vpop.permute.xlu0 %3162
      %v3164 = vsel %vm279, %v3157, %v3161
      %v3165 = vsel %vm279, %v3159, %v3163
      %v3166 = vsel %vm279, %v3161, %v3157
      %v3167 = vsel %vm279, %v3163, %v3159
      %v3168 = vmul.f32 %v3166, %v287
      %v3169 = vmul.f32 %v3164, %v291
      %v3170 = vmul.f32 %v3167, %v287
      %v3171 = vmul.f32 %v3165, %v291
      %v3172 = vpack.c.bf16 %v3170, %v3168
      %v3173 = vpack.c.bf16 %v3171, %v3169
      %3174 = vst [vmem:[#allocation2 + $0x20] sm:$0xff] %v3172
      %3175 = vst [vmem:[#allocation2 + $0x28] sm:$0xff] %v3173
      %3176 = vrot.lane.b32.xlu0 %v3112, 31
      %v3177 = vpop.permute.xlu0 %3176
      %3178 = vrot.lane.b32.xlu0 %v3114, 31
      %v3179 = vpop.permute.xlu0 %3178
      %3180 = vrot.lane.b32.xlu0 %v3113, 31
      %v3181 = vpop.permute.xlu0 %3180
      %3182 = vrot.lane.b32.xlu0 %v3115, 31
      %v3183 = vpop.permute.xlu0 %3182
      %v3184 = vsel %vm308, %v3177, %v3181
      %v3185 = vsel %vm308, %v3179, %v3183
      %v3186 = vsel %vm308, %v3181, %v3177
      %v3187 = vsel %vm308, %v3183, %v3179
      %v3188 = vmul.f32 %v3186, %v316
      %v3189 = vmul.f32 %v3184, %v320
      %v3190 = vmul.f32 %v3187, %v316
      %v3191 = vmul.f32 %v3185, %v320
      %v3192 = vpack.c.bf16 %v3190, %v3188
      %v3193 = vpack.c.bf16 %v3191, %v3189
      %3194 = vst [vmem:[#allocation2 + $0x30] sm:$0xff] %v3192
      %3195 = vst [vmem:[#allocation2 + $0x38] sm:$0xff] %v3193
      %3196 = vrot.lane.b32.xlu0 %v3112, 30
      %v3197 = vpop.permute.xlu0 %3196
      %3198 = vrot.lane.b32.xlu0 %v3114, 30
      %v3199 = vpop.permute.xlu0 %3198
      %3200 = vrot.lane.b32.xlu0 %v3113, 30
      %v3201 = vpop.permute.xlu0 %3200
      %3202 = vrot.lane.b32.xlu0 %v3115, 30
      %v3203 = vpop.permute.xlu0 %3202
      %v3204 = vsel %vm337, %v3197, %v3201
      %v3205 = vsel %vm337, %v3199, %v3203
      %v3206 = vsel %vm337, %v3201, %v3197
      %v3207 = vsel %vm337, %v3203, %v3199
      %v3208 = vmul.f32 %v3206, %v345
      %v3209 = vmul.f32 %v3204, %v349
      %v3210 = vmul.f32 %v3207, %v345
      %v3211 = vmul.f32 %v3205, %v349
      %v3212 = vpack.c.bf16 %v3210, %v3208
      %v3213 = vpack.c.bf16 %v3211, %v3209
      %3214 = vst [vmem:[#allocation2 + $0x40] sm:$0xff] %v3212
      %3215 = vst [vmem:[#allocation2 + $0x48] sm:$0xff] %v3213
      %3216 = vrot.lane.b32.xlu0 %v3112, 18
      %v3217 = vpop.permute.xlu0 %3216
      %3218 = vrot.lane.b32.xlu0 %v3114, 18
      %v3219 = vpop.permute.xlu0 %3218
      %3220 = vrot.lane.b32.xlu0 %v3113, 18
      %v3221 = vpop.permute.xlu0 %3220
      %3222 = vrot.lane.b32.xlu0 %v3115, 18
      %v3223 = vpop.permute.xlu0 %3222
      %v3224 = vsel %vm366, %v3217, %v3221
      %v3225 = vsel %vm366, %v3219, %v3223
      %v3226 = vsel %vm366, %v3221, %v3217
      %v3227 = vsel %vm366, %v3223, %v3219
      %v3228 = vmul.f32 %v3226, %v374
      %v3229 = vmul.f32 %v3224, %v378
      %v3230 = vmul.f32 %v3227, %v374
      %v3231 = vmul.f32 %v3225, %v378
      %v3232 = vpack.c.bf16 %v3230, %v3228
      %v3233 = vpack.c.bf16 %v3231, %v3229
      %3234 = vst [vmem:[#allocation2 + $0x50] sm:$0xff] %v3232
      %3235 = vst [vmem:[#allocation2 + $0x58] sm:$0xff] %v3233
      %3236 = vrot.lane.b32.xlu0 %v3112, 17
      %v3237 = vpop.permute.xlu0 %3236
      %3238 = vrot.lane.b32.xlu0 %v3114, 17
      %v3239 = vpop.permute.xlu0 %3238
      %3240 = vrot.lane.b32.xlu0 %v3113, 17
      %v3241 = vpop.permute.xlu0 %3240
      %3242 = vrot.lane.b32.xlu0 %v3115, 17
      %v3243 = vpop.permute.xlu0 %3242
      %v3244 = vsel %vm395, %v3237, %v3241
      %v3245 = vsel %vm395, %v3239, %v3243
      %v3246 = vsel %vm395, %v3241, %v3237
      %v3247 = vsel %vm395, %v3243, %v3239
      %v3248 = vmul.f32 %v3246, %v403
      %v3249 = vmul.f32 %v3244, %v407
      %v3250 = vmul.f32 %v3247, %v403
      %v3251 = vmul.f32 %v3245, %v407
      %v3252 = vpack.c.bf16 %v3250, %v3248
      %v3253 = vpack.c.bf16 %v3251, %v3249
      %3254 = vst [vmem:[#allocation2 + $0x60] sm:$0xff] %v3252
      %3255 = vst [vmem:[#allocation2 + $0x68] sm:$0xff] %v3253
      %3256 = vrot.lane.b32.xlu0 %v3112, 16
      %v3257 = vpop.permute.xlu0 %3256
      %3258 = vrot.lane.b32.xlu0 %v3114, 16
      %v3259 = vpop.permute.xlu0 %3258
      %3260 = vrot.lane.b32.xlu0 %v3113, 16
      %v3261 = vpop.permute.xlu0 %3260
      %3262 = vrot.lane.b32.xlu0 %v3115, 16
      %v3263 = vpop.permute.xlu0 %3262
      %v3264 = vsel %vm424, %v3257, %v3261
      %v3265 = vsel %vm424, %v3259, %v3263
      %v3266 = vsel %vm424, %v3261, %v3257
      %v3267 = vsel %vm424, %v3263, %v3259
      %v3268 = vmul.f32 %v3266, %v432
      %v3269 = vmul.f32 %v3264, %v436
      %v3270 = vmul.f32 %v3267, %v432
      %v3271 = vmul.f32 %v3265, %v436
      %v3272 = vpack.c.bf16 %v3270, %v3268
      %v3273 = vpack.c.bf16 %v3271, %v3269
      %3274 = vst [vmem:[#allocation2 + $0x70] sm:$0xff] %v3272
      %3275 = vst [vmem:[#allocation2 + $0x78] sm:$0xff] %v3273
      %3276 = vrot.lane.b32.xlu0 %v3112, 15
      %v3277 = vpop.permute.xlu0 %3276
      %3278 = vrot.lane.b32.xlu0 %v3114, 15
      %v3279 = vpop.permute.xlu0 %3278
      %3280 = vrot.lane.b32.xlu0 %v3113, 15
      %v3281 = vpop.permute.xlu0 %3280
      %3282 = vrot.lane.b32.xlu0 %v3115, 15
      %v3283 = vpop.permute.xlu0 %3282
      %v3284 = vsel %vm453, %v3277, %v3281
      %v3285 = vsel %vm453, %v3279, %v3283
      %v3286 = vsel %vm453, %v3281, %v3277
      %v3287 = vsel %vm453, %v3283, %v3279
      %v3288 = vmul.f32 %v3286, %v461
      %v3289 = vmul.f32 %v3284, %v465
      %v3290 = vmul.f32 %v3287, %v461
      %v3291 = vmul.f32 %v3285, %v465
      %v3292 = vpack.c.bf16 %v3290, %v3288
      %v3293 = vpack.c.bf16 %v3291, %v3289
      %3294 = vst [vmem:[#allocation2 + $0x80] sm:$0xff] %v3292
      %3295 = vst [vmem:[#allocation2 + $0x88] sm:$0xff] %v3293
      %3296 = vrot.lane.b32.xlu0 %v3112, 14
      %v3297 = vpop.permute.xlu0 %3296
      %3298 = vrot.lane.b32.xlu0 %v3114, 14
      %v3299 = vpop.permute.xlu0 %3298
      %3300 = vrot.lane.b32.xlu0 %v3113, 14
      %v3301 = vpop.permute.xlu0 %3300
      %3302 = vrot.lane.b32.xlu0 %v3115, 14
      %v3303 = vpop.permute.xlu0 %3302
      %v3304 = vsel %vm482, %v3297, %v3301
      %v3305 = vsel %vm482, %v3299, %v3303
      %v3306 = vsel %vm482, %v3301, %v3297
      %v3307 = vsel %vm482, %v3303, %v3299
      %v3308 = vmul.f32 %v3306, %v490
      %v3309 = vmul.f32 %v3304, %v494
      %v3310 = vmul.f32 %v3307, %v490
      %v3311 = vmul.f32 %v3305, %v494
      %v3312 = vpack.c.bf16 %v3310, %v3308
      %v3313 = vpack.c.bf16 %v3311, %v3309
      %3314 = vst [vmem:[#allocation2 + $0x90] sm:$0xff] %v3312
      %3315 = vst [vmem:[#allocation2 + $0x98] sm:$0xff] %v3313
      %3316 = vrot.lane.b32.xlu0 %v3112, 2
      %v3317 = vpop.permute.xlu0 %3316
      %3318 = vrot.lane.b32.xlu0 %v3114, 2
      %v3319 = vpop.permute.xlu0 %3318
      %3320 = vrot.lane.b32.xlu0 %v3113, 2
      %v3321 = vpop.permute.xlu0 %3320
      %3322 = vrot.lane.b32.xlu0 %v3115, 2
      %v3323 = vpop.permute.xlu0 %3322
      %v3324 = vsel %vm511, %v3317, %v3321
      %v3325 = vsel %vm511, %v3319, %v3323
      %v3326 = vsel %vm511, %v3321, %v3317
      %v3327 = vsel %vm511, %v3323, %v3319
      %v3328 = vmul.f32 %v3326, %v519
      %v3329 = vmul.f32 %v3324, %v523
      %v3330 = vmul.f32 %v3327, %v519
      %v3331 = vmul.f32 %v3325, %v523
      %v3332 = vpack.c.bf16 %v3330, %v3328
      %v3333 = vpack.c.bf16 %v3331, %v3329
      %3334 = vst [vmem:[#allocation2 + $0xa0] sm:$0xff] %v3332
      %3335 = vst [vmem:[#allocation2 + $0xa8] sm:$0xff] %v3333
      %3336 = vrot.lane.b32.xlu0 %v3112, 1
      %v3337 = vpop.permute.xlu0 %3336
      %3338 = vrot.lane.b32.xlu0 %v3114, 1
      %v3339 = vpop.permute.xlu0 %3338
      %3340 = vrot.lane.b32.xlu0 %v3113, 1
      %v3341 = vpop.permute.xlu0 %3340
      %3342 = vrot.lane.b32.xlu0 %v3115, 1
      %v3343 = vpop.permute.xlu0 %3342
      %v3344 = vsel %vm540, %v3337, %v3341
      %v3345 = vsel %vm540, %v3339, %v3343
      %v3346 = vsel %vm540, %v3341, %v3337
      %v3347 = vsel %vm540, %v3343, %v3339
      %v3348 = vmul.f32 %v3346, %v548
      %v3349 = vmul.f32 %v3344, %v552
      %v3350 = vmul.f32 %v3347, %v548
      %v3351 = vmul.f32 %v3345, %v552
      %v3352 = vpack.c.bf16 %v3350, %v3348
      %v3353 = vpack.c.bf16 %v3351, %v3349
      %3354 = vst [vmem:[#allocation2 + $0xb0] sm:$0xff] %v3352
      %3355 = vst [vmem:[#allocation2 + $0xb8] sm:$0xff] %v3353
      %v3356 = vpack.c.bf16 %v3114, %v3112
      %v3357 = vpack.c.bf16 %v3115, %v3113
      %3358 = vst [vmem:[#allocation2 + $0xc0] sm:$0xff] %v3356
      %3359 = vst [vmem:[#allocation2 + $0xc8] sm:$0xff] %v3357
      %3360 = vrot.lane.b32.xlu0 %v3112, 127
      %v3361 = vpop.permute.xlu0 %3360
      %3362 = vrot.lane.b32.xlu0 %v3114, 127
      %v3363 = vpop.permute.xlu0 %3362
      %3364 = vrot.lane.b32.xlu0 %v3113, 127
      %v3365 = vpop.permute.xlu0 %3364
      %3366 = vrot.lane.b32.xlu0 %v3115, 127
      %v3367 = vpop.permute.xlu0 %3366
      %v3368 = vsel %vm573, %v3361, %v3365
      %v3369 = vsel %vm573, %v3363, %v3367
      %v3370 = vsel %vm573, %v3365, %v3361
      %v3371 = vsel %vm573, %v3367, %v3363
      %v3372 = vmul.f32 %v3368, %v581
      %v3373 = vmul.f32 %v3370, %v585
      %v3374 = vmul.f32 %v3369, %v581
      %v3375 = vmul.f32 %v3371, %v585
      %v3376 = vpack.c.bf16 %v3374, %v3372
      %v3377 = vpack.c.bf16 %v3375, %v3373
      %3378 = vst [vmem:[#allocation2 + $0xd0] sm:$0xff] %v3376
      %3379 = vst [vmem:[#allocation2 + $0xd8] sm:$0xff] %v3377
      %3380 = vrot.lane.b32.xlu0 %v3112, 126
      %v3381 = vpop.permute.xlu0 %3380
      %3382 = vrot.lane.b32.xlu0 %v3114, 126
      %v3383 = vpop.permute.xlu0 %3382
      %3384 = vrot.lane.b32.xlu0 %v3113, 126
      %v3385 = vpop.permute.xlu0 %3384
      %3386 = vrot.lane.b32.xlu0 %v3115, 126
      %v3387 = vpop.permute.xlu0 %3386
      %v3388 = vsel %vm602, %v3381, %v3385
      %v3389 = vsel %vm602, %v3383, %v3387
      %v3390 = vsel %vm602, %v3385, %v3381
      %v3391 = vsel %vm602, %v3387, %v3383
      %v3392 = vmul.f32 %v3388, %v610
      %v3393 = vmul.f32 %v3390, %v614
      %v3394 = vmul.f32 %v3389, %v610
      %v3395 = vmul.f32 %v3391, %v614
      %v3396 = vpack.c.bf16 %v3394, %v3392
      %v3397 = vpack.c.bf16 %v3395, %v3393
      %3398 = vst [vmem:[#allocation2 + $0xe0] sm:$0xff] %v3396
      %3399 = vst [vmem:[#allocation2 + $0xe8] sm:$0xff] %v3397
      %3400 = vrot.lane.b32.xlu0 %v3112, 114
      %v3401 = vpop.permute.xlu0 %3400
      %3402 = vrot.lane.b32.xlu0 %v3114, 114
      %v3403 = vpop.permute.xlu0 %3402
      %3404 = vrot.lane.b32.xlu0 %v3113, 114
      %v3405 = vpop.permute.xlu0 %3404
      %3406 = vrot.lane.b32.xlu0 %v3115, 114
      %v3407 = vpop.permute.xlu0 %3406
      %v3408 = vsel %vm631, %v3401, %v3405
      %v3409 = vsel %vm631, %v3403, %v3407
      %v3410 = vsel %vm631, %v3405, %v3401
      %v3411 = vsel %vm631, %v3407, %v3403
      %v3412 = vmul.f32 %v3408, %v639
      %v3413 = vmul.f32 %v3410, %v643
      %v3414 = vmul.f32 %v3409, %v639
      %v3415 = vmul.f32 %v3411, %v643
      %v3416 = vpack.c.bf16 %v3414, %v3412
      %v3417 = vpack.c.bf16 %v3415, %v3413
      %3418 = vst [vmem:[#allocation2 + $0xf0] sm:$0xff] %v3416
      %3419 = vst [vmem:[#allocation2 + $0xf8] sm:$0xff] %v3417
      %3420 = vrot.lane.b32.xlu0 %v3112, 113
      %v3421 = vpop.permute.xlu0 %3420
      %3422 = vrot.lane.b32.xlu0 %v3114, 113
      %v3423 = vpop.permute.xlu0 %3422
      %3424 = vrot.lane.b32.xlu0 %v3113, 113
      %v3425 = vpop.permute.xlu0 %3424
      %3426 = vrot.lane.b32.xlu0 %v3115, 113
      %v3427 = vpop.permute.xlu0 %3426
      %v3428 = vsel %vm660, %v3421, %v3425
      %v3429 = vsel %vm660, %v3423, %v3427
      %v3430 = vsel %vm660, %v3425, %v3421
      %v3431 = vsel %vm660, %v3427, %v3423
      %v3432 = vmul.f32 %v3428, %v668
      %v3433 = vmul.f32 %v3430, %v672
      %v3434 = vmul.f32 %v3429, %v668
      %v3435 = vmul.f32 %v3431, %v672
      %v3436 = vpack.c.bf16 %v3434, %v3432
      %v3437 = vpack.c.bf16 %v3435, %v3433
      %3438 = vst [vmem:[#allocation2 + $0x100] sm:$0xff] %v3436
      %3439 = vst [vmem:[#allocation2 + $0x108] sm:$0xff] %v3437
      %3440 = vrot.lane.b32.xlu0 %v3112, 112
      %v3441 = vpop.permute.xlu0 %3440
      %3442 = vrot.lane.b32.xlu0 %v3114, 112
      %v3443 = vpop.permute.xlu0 %3442
      %3444 = vrot.lane.b32.xlu0 %v3113, 112
      %v3445 = vpop.permute.xlu0 %3444
      %3446 = vrot.lane.b32.xlu0 %v3115, 112
      %v3447 = vpop.permute.xlu0 %3446
      %v3448 = vsel %vm689, %v3441, %v3445
      %v3449 = vsel %vm689, %v3443, %v3447
      %v3450 = vsel %vm689, %v3445, %v3441
      %v3451 = vsel %vm689, %v3447, %v3443
      %v3452 = vmul.f32 %v3448, %v697
      %v3453 = vmul.f32 %v3450, %v701
      %v3454 = vmul.f32 %v3449, %v697
      %v3455 = vmul.f32 %v3451, %v701
      %v3456 = vpack.c.bf16 %v3454, %v3452
      %v3457 = vpack.c.bf16 %v3455, %v3453
      %3458 = vst [vmem:[#allocation2 + $0x110] sm:$0xff] %v3456
      %3459 = vst [vmem:[#allocation2 + $0x118] sm:$0xff] %v3457
      %3460 = vrot.lane.b32.xlu0 %v3112, 111
      %v3461 = vpop.permute.xlu0 %3460
      %3462 = vrot.lane.b32.xlu0 %v3114, 111
      %v3463 = vpop.permute.xlu0 %3462
      %3464 = vrot.lane.b32.xlu0 %v3113, 111
      %v3465 = vpop.permute.xlu0 %3464
      %3466 = vrot.lane.b32.xlu0 %v3115, 111
      %v3467 = vpop.permute.xlu0 %3466
      %v3468 = vsel %vm718, %v3461, %v3465
      %v3469 = vsel %vm718, %v3463, %v3467
      %v3470 = vsel %vm718, %v3465, %v3461
      %v3471 = vsel %vm718, %v3467, %v3463
      %v3472 = vmul.f32 %v3468, %v726
      %v3473 = vmul.f32 %v3470, %v730
      %v3474 = vmul.f32 %v3469, %v726
      %v3475 = vmul.f32 %v3471, %v730
      %v3476 = vpack.c.bf16 %v3474, %v3472
      %v3477 = vpack.c.bf16 %v3475, %v3473
      %3478 = vst [vmem:[#allocation2 + $0x120] sm:$0xff] %v3476
      %3479 = vst [vmem:[#allocation2 + $0x128] sm:$0xff] %v3477
      %3480 = vrot.lane.b32.xlu0 %v3112, 110
      %v3481 = vpop.permute.xlu0 %3480
      %3482 = vrot.lane.b32.xlu0 %v3114, 110
      %v3483 = vpop.permute.xlu0 %3482
      %3484 = vrot.lane.b32.xlu0 %v3113, 110
      %v3485 = vpop.permute.xlu0 %3484
      %3486 = vrot.lane.b32.xlu0 %v3115, 110
      %v3487 = vpop.permute.xlu0 %3486
      %v3488 = vsel %vm747, %v3481, %v3485
      %v3489 = vsel %vm747, %v3483, %v3487
      %v3490 = vsel %vm747, %v3485, %v3481
      %v3491 = vsel %vm747, %v3487, %v3483
      %v3492 = vmul.f32 %v3488, %v755
      %v3493 = vmul.f32 %v3490, %v759
      %v3494 = vmul.f32 %v3489, %v755
      %v3495 = vmul.f32 %v3491, %v759
      %v3496 = vpack.c.bf16 %v3494, %v3492
      %v3497 = vpack.c.bf16 %v3495, %v3493
      %3498 = vst [vmem:[#allocation2 + $0x130] sm:$0xff] %v3496
      %3499 = vst [vmem:[#allocation2 + $0x138] sm:$0xff] %v3497
      %3500 = vrot.lane.b32.xlu0 %v3112, 98
      %v3501 = vpop.permute.xlu0 %3500
      %3502 = vrot.lane.b32.xlu0 %v3114, 98
      %v3503 = vpop.permute.xlu0 %3502
      %3504 = vrot.lane.b32.xlu0 %v3113, 98
      %v3505 = vpop.permute.xlu0 %3504
      %3506 = vrot.lane.b32.xlu0 %v3115, 98
      %v3507 = vpop.permute.xlu0 %3506
      %v3508 = vsel %vm776, %v3501, %v3505
      %v3509 = vsel %vm776, %v3503, %v3507
      %v3510 = vsel %vm776, %v3505, %v3501
      %v3511 = vsel %vm776, %v3507, %v3503
      %v3512 = vmul.f32 %v3508, %v784
      %v3513 = vmul.f32 %v3510, %v788
      %v3514 = vmul.f32 %v3509, %v784
      %v3515 = vmul.f32 %v3511, %v788
      %v3516 = vpack.c.bf16 %v3514, %v3512
      %v3517 = vpack.c.bf16 %v3515, %v3513
      %3518 = vst [vmem:[#allocation2 + $0x140] sm:$0xff] %v3516
      %3519 = vst [vmem:[#allocation2 + $0x148] sm:$0xff] %v3517
      %3520 = vrot.lane.b32.xlu0 %v3112, 97
      %v3521 = vpop.permute.xlu0 %3520
      %3522 = vrot.lane.b32.xlu0 %v3114, 97
      %v3523 = vpop.permute.xlu0 %3522
      %3524 = vrot.lane.b32.xlu0 %v3113, 97
      %v3525 = vpop.permute.xlu0 %3524
      %3526 = vrot.lane.b32.xlu0 %v3115, 97
      %v3527 = vpop.permute.xlu0 %3526
      %v3528 = vsel %vm805, %v3521, %v3525
      %v3529 = vsel %vm805, %v3523, %v3527
      %v3530 = vsel %vm805, %v3525, %v3521
      %v3531 = vsel %vm805, %v3527, %v3523
      %v3532 = vmul.f32 %v3528, %v813
      %v3533 = vmul.f32 %v3530, %v817
      %v3534 = vmul.f32 %v3529, %v813
      %v3535 = vmul.f32 %v3531, %v817
      %v3536 = vpack.c.bf16 %v3534, %v3532
      %v3537 = vpack.c.bf16 %v3535, %v3533
      %3538 = vst [vmem:[#allocation2 + $0x150] sm:$0xff] %v3536
      %3539 = vst [vmem:[#allocation2 + $0x158] sm:$0xff] %v3537
      %3540 = vrot.lane.b32.xlu0 %v3112, 96
      %v3541 = vpop.permute.xlu0 %3540
      %3542 = vrot.lane.b32.xlu0 %v3114, 96
      %v3543 = vpop.permute.xlu0 %3542
      %3544 = vrot.lane.b32.xlu0 %v3113, 96
      %v3545 = vpop.permute.xlu0 %3544
      %3546 = vrot.lane.b32.xlu0 %v3115, 96
      %v3547 = vpop.permute.xlu0 %3546
      %v3548 = vsel %vm834, %v3541, %v3545
      %v3549 = vsel %vm834, %v3543, %v3547
      %v3550 = vsel %vm834, %v3545, %v3541
      %v3551 = vsel %vm834, %v3547, %v3543
      %v3552 = vmul.f32 %v3548, %v842
      %v3553 = vmul.f32 %v3550, %v846
      %v3554 = vmul.f32 %v3549, %v842
      %v3555 = vmul.f32 %v3551, %v846
      %v3556 = vpack.c.bf16 %v3554, %v3552
      %v3557 = vpack.c.bf16 %v3555, %v3553
      %3558 = vst [vmem:[#allocation2 + $0x160] sm:$0xff] %v3556
      %3559 = vst [vmem:[#allocation2 + $0x168] sm:$0xff] %v3557
      %3560 = vrot.lane.b32.xlu0 %v3112, 95
      %v3561 = vpop.permute.xlu0 %3560
      %3562 = vrot.lane.b32.xlu0 %v3114, 95
      %v3563 = vpop.permute.xlu0 %3562
      %3564 = vrot.lane.b32.xlu0 %v3113, 95
      %v3565 = vpop.permute.xlu0 %3564
      %3566 = vrot.lane.b32.xlu0 %v3115, 95
      %v3567 = vpop.permute.xlu0 %3566
      %v3568 = vsel %vm863, %v3561, %v3565
      %v3569 = vsel %vm863, %v3563, %v3567
      %v3570 = vsel %vm863, %v3565, %v3561
      %v3571 = vsel %vm863, %v3567, %v3563
      %v3572 = vmul.f32 %v3568, %v871
      %v3573 = vmul.f32 %v3570, %v875
      %v3574 = vmul.f32 %v3569, %v871
      %v3575 = vmul.f32 %v3571, %v875
      %v3576 = vpack.c.bf16 %v3574, %v3572
      %v3577 = vpack.c.bf16 %v3575, %v3573
      %3578 = vst [vmem:[#allocation2 + $0x170] sm:$0xff] %v3576
      %3579 = vst [vmem:[#allocation2 + $0x178] sm:$0xff] %v3577
      %3580 = vrot.lane.b32.xlu0 %v3112, 94
      %v3581 = vpop.permute.xlu0 %3580
      %3582 = vrot.lane.b32.xlu0 %v3114, 94
      %v3583 = vpop.permute.xlu0 %3582
      %3584 = vrot.lane.b32.xlu0 %v3113, 94
      %v3585 = vpop.permute.xlu0 %3584
      %3586 = vrot.lane.b32.xlu0 %v3115, 94
      %v3587 = vpop.permute.xlu0 %3586
      %v3588 = vsel %vm892, %v3581, %v3585
      %v3589 = vsel %vm892, %v3583, %v3587
      %v3590 = vsel %vm892, %v3585, %v3581
      %v3591 = vsel %vm892, %v3587, %v3583
      %v3592 = vmul.f32 %v3588, %v900
      %v3593 = vmul.f32 %v3590, %v904
      %v3594 = vmul.f32 %v3589, %v900
      %v3595 = vmul.f32 %v3591, %v904
      %v3596 = vpack.c.bf16 %v3594, %v3592
      %v3597 = vpack.c.bf16 %v3595, %v3593
      %3598 = vst [vmem:[#allocation2 + $0x180] sm:$0xff] %v3596
      %3599 = vst [vmem:[#allocation2 + $0x188] sm:$0xff] %v3597
      %s3600 = scalar_lea.vmem %s1, 128
      %v3601 = vld [vmem:[%s3600] sm:$0xff]
      %v3602 = vld [vmem:[%s3600 + $0x8] sm:$0xff]
      %v3603 = vld [vmem:[%s3600 + $0x10] sm:$0xff]
      %v3604 = vld [vmem:[%s3600 + $0x18] sm:$0xff]
      %v3605 = vld [vmem:[#allocation2] sm:$0xff]
      %v3606 = vld [vmem:[#allocation2 + $0x8] sm:$0xff]
      %v3607 = vld [vmem:[#allocation2 + $0x10] sm:$0xff]
      %v3608 = vld [vmem:[#allocation2 + $0x18] sm:$0xff]
      %v3609 = vld [vmem:[#allocation2 + $0x20] sm:$0xff]
      %v3610 = vld [vmem:[#allocation2 + $0x28] sm:$0xff]
      %v3611 = vld [vmem:[#allocation2 + $0x30] sm:$0xff]
      %v3612 = vld [vmem:[#allocation2 + $0x38] sm:$0xff]
      %v3613 = vld [vmem:[#allocation2 + $0x40] sm:$0xff]
      %v3614 = vld [vmem:[#allocation2 + $0x48] sm:$0xff]
      %v3615 = vld [vmem:[#allocation2 + $0x50] sm:$0xff]
      %v3616 = vld [vmem:[#allocation2 + $0x58] sm:$0xff]
      %v3617 = vld [vmem:[#allocation2 + $0x60] sm:$0xff]
      %v3618 = vld [vmem:[#allocation2 + $0x68] sm:$0xff]
      %v3619 = vld [vmem:[#allocation2 + $0x70] sm:$0xff]
      %v3620 = vld [vmem:[#allocation2 + $0x78] sm:$0xff]
      %v3621 = vld [vmem:[#allocation2 + $0x80] sm:$0xff]
      %v3622 = vld [vmem:[#allocation2 + $0x88] sm:$0xff]
      %v3623 = vld [vmem:[#allocation2 + $0x90] sm:$0xff]
      %v3624 = vld [vmem:[#allocation2 + $0x98] sm:$0xff]
      %v3625 = vld [vmem:[#allocation2 + $0xa0] sm:$0xff]
      %v3626 = vld [vmem:[#allocation2 + $0xa8] sm:$0xff]
      %v3627 = vld [vmem:[#allocation2 + $0xb0] sm:$0xff]
      %v3628 = vld [vmem:[#allocation2 + $0xb8] sm:$0xff]
      %v3629 = vld [vmem:[#allocation2 + $0xc0] sm:$0xff]
      %v3630 = vld [vmem:[#allocation2 + $0xc8] sm:$0xff]
      %v3631 = vld [vmem:[#allocation2 + $0xd0] sm:$0xff]
      %v3632 = vld [vmem:[#allocation2 + $0xd8] sm:$0xff]
      %v3633 = vld [vmem:[#allocation2 + $0xe0] sm:$0xff]
      %v3634 = vld [vmem:[#allocation2 + $0xe8] sm:$0xff]
      %v3635 = vld [vmem:[#allocation2 + $0xf0] sm:$0xff]
      %v3636 = vld [vmem:[#allocation2 + $0xf8] sm:$0xff]
      %v3637 = vld [vmem:[#allocation2 + $0x100] sm:$0xff]
      %v3638 = vld [vmem:[#allocation2 + $0x108] sm:$0xff]
      %v3639 = vld [vmem:[#allocation2 + $0x110] sm:$0xff]
      %v3640 = vld [vmem:[#allocation2 + $0x118] sm:$0xff]
      %v3641 = vld [vmem:[#allocation2 + $0x120] sm:$0xff]
      %v3642 = vld [vmem:[#allocation2 + $0x128] sm:$0xff]
      %v3643 = vld [vmem:[#allocation2 + $0x130] sm:$0xff]
      %v3644 = vld [vmem:[#allocation2 + $0x138] sm:$0xff]
      %v3645 = vld [vmem:[#allocation2 + $0x140] sm:$0xff]
      %v3646 = vld [vmem:[#allocation2 + $0x148] sm:$0xff]
      %v3647 = vld [vmem:[#allocation2 + $0x150] sm:$0xff]
      %v3648 = vld [vmem:[#allocation2 + $0x158] sm:$0xff]
      %v3649 = vld [vmem:[#allocation2 + $0x160] sm:$0xff]
      %v3650 = vld [vmem:[#allocation2 + $0x168] sm:$0xff]
      %v3651 = vld [vmem:[#allocation2 + $0x170] sm:$0xff]
      %v3652 = vld [vmem:[#allocation2 + $0x178] sm:$0xff]
      %v3653 = vld [vmem:[#allocation2 + $0x180] sm:$0xff]
      %v3654 = vld [vmem:[#allocation2 + $0x188] sm:$0xff]
      %s3655 = scalar_lea.vmem %s2, 64
      %v3656 = vld [vmem:[%s3655] sm:$0xff]
      %v3657 = vld [vmem:[%s3655 + $0x8] sm:$0xff]
      %3659 = vset.pattern.permute.xlu0 0
      %3660 = vperm.xlu0 %3659, %v3656
      %v3661 = vpop.permute.xlu0 %3660
      %3664 = vset.pattern.permute.xlu0 0
      %3665 = vperm.xlu0 %3664, %v3657
      %v3666 = vpop.permute.xlu0 %3665
      %v3672 = vunpack.c.l.b16 %v3601
      %v3673 = vunpack.c.h.b16 %v3601
      %v3674 = vunpack.c.l.b16 %v3602
      %v3675 = vunpack.c.h.b16 %v3602
      %v3676 = vunpack.c.l.b16 %v3603
      %v3677 = vunpack.c.h.b16 %v3603
      %v3678 = vunpack.c.l.b16 %v3604
      %v3679 = vunpack.c.h.b16 %v3604
      %v3680 = vpack.c.b16 %v3676, %v3672
      %v3681 = vpack.c.b16 %v3677, %v3673
      %v3682 = vpack.c.b16 %v3678, %v3674
      %v3683 = vpack.c.b16 %v3679, %v3675
      %v3688 = vsel %vm998, %v3683, 0
      %3690 = vmatprep.subr.bf16.mxu0 %v3606
      %3691 = vmatpush1.bf16.msra.mxu0 %v3605
      %3692 = vmatprep.subr.bf16.mxu0 %v3608
      %3693 = vmatpush1.bf16.msra.mxu0 %v3607
      %3694 = vmatprep.subr.bf16.mxu0 %v3610
      %3695 = vmatpush1.bf16.msra.mxu0 %v3609
      %3696 = vmatprep.subr.bf16.mxu0 %v3612
      %3697 = vmatpush1.bf16.msra.mxu0 %v3611
      %3698 = vmatprep.subr.bf16.mxu0 %v3614
      %3699 = vmatpush1.bf16.msra.mxu0 %v3613
      %3700 = vmatprep.subr.bf16.mxu0 %v3616
      %3701 = vmatpush1.bf16.msra.mxu0 %v3615
      %3702 = vmatprep.subr.bf16.mxu0 %v3618
      %3703 = vmatpush1.bf16.msra.mxu0 %v3617
      %3704 = vmatprep.subr.bf16.mxu0 %v3620
      %3705 = vmatpush1.bf16.msra.mxu0 %v3619
      %3706 = vmatprep.subr.bf16.mxu0 %v3622
      %3707 = vmatpush1.bf16.msra.mxu0 %v3621
      %3708 = vmatprep.subr.bf16.mxu0 %v3624
      %3709 = vmatpush1.bf16.msra.mxu0 %v3623
      %3710 = vmatprep.subr.bf16.mxu0 %v3626
      %3711 = vmatpush1.bf16.msra.mxu0 %v3625
      %3712 = vmatprep.subr.bf16.mxu0 %v3628
      %3713 = vmatpush1.bf16.msra.mxu0 %v3627
      %3714 = vmatprep.subr.bf16.mxu0 %v3630
      %3715 = vmatpush1.bf16.msra.mxu0 %v3629
      %3716 = vmatprep.subr.bf16.mxu0 %v3632
      %3717 = vmatpush1.bf16.msra.mxu0 %v3631
      %3718 = vmatprep.subr.bf16.mxu0 %v3634
      %3719 = vmatpush1.bf16.msra.mxu0 %v3633
      %3720 = vmatprep.subr.bf16.mxu0 %v3636
      %3721 = vmatpush1.bf16.msra.mxu0 %v3635
      %3722 = vmatprep.mubr.bf16.mxu0 %v3681
      %3723 = vmatmul.mubr.bf16.gmra.mrb[0].mxu0 %v3680
      %v3724 = vpop.f32.mrb[0].mxu0
      %v3725 = vadd.f32 %v3661, %v3724
      %v3726 = vpop.f32.mrb[0].mxu0
      %v3727 = vadd.f32 %v3661, %v3726
      %v3728 = vpop.f32.mrb[0].mxu0
      %v3729 = vadd.f32 %v3666, %v3728
      %v3730 = vpop.f32.mrb[0].mxu0
      %v3731 = vadd.f32 %v3666, %v3730
      %3732 = vdwg.mxu0
      %3733 = vmatprep.subr.bf16.mxu0 %v3638
      %3734 = vmatpush1.bf16.msra.mxu0 %v3637
      %3735 = vmatprep.subr.bf16.mxu0 %v3640
      %3736 = vmatpush1.bf16.msra.mxu0 %v3639
      %3737 = vmatprep.subr.bf16.mxu0 %v3642
      %3738 = vmatpush1.bf16.msra.mxu0 %v3641
      %3739 = vmatprep.subr.bf16.mxu0 %v3644
      %3740 = vmatpush1.bf16.msra.mxu0 %v3643
      %3741 = vmatprep.subr.bf16.mxu0 %v3646
      %3742 = vmatpush1.bf16.msra.mxu0 %v3645
      %3743 = vmatprep.subr.bf16.mxu0 %v3648
      %3744 = vmatpush1.bf16.msra.mxu0 %v3647
      %3745 = vmatprep.subr.bf16.mxu0 %v3650
      %3746 = vmatpush1.bf16.msra.mxu0 %v3649
      %3747 = vmatprep.subr.bf16.mxu0 %v3652
      %3748 = vmatpush1.bf16.msra.mxu0 %v3651
      %3749 = vmatprep.subr.bf16.mxu0 %v3654
      %3750 = vmatpush1.bf16.msra.mxu0 %v3653
      %3751 = vmatprep.subr.bf16.mxu0 0
      %3752 = vmatpush1.bf16.msra.mxu0 0
      %3753 = vmatprep.subr.bf16.mxu0 0
      %3754 = vmatpush1.bf16.msra.mxu0 0
      %3755 = vmatprep.subr.bf16.mxu0 0
      %3756 = vmatpush1.bf16.msra.mxu0 0
      %3757 = vmatprep.subr.bf16.mxu0 0
      %3758 = vmatpush1.bf16.msra.mxu0 0
      %3759 = vmatprep.subr.bf16.mxu0 0
      %3760 = vmatpush1.bf16.msra.mxu0 0
      %3761 = vmatprep.subr.bf16.mxu0 0
      %3762 = vmatpush1.bf16.msra.mxu0 0
      %3763 = vmatprep.subr.bf16.mxu0 0
      %3764 = vmatpush1.bf16.msra.mxu0 0
      %3765 = vmatprep.mubr.bf16.mxu0 %v3688
      %3766 = vmatmul.mubr.bf16.gmra.mrb[0].mxu0 %v3682
      %v3767 = vpop.f32.mrb[0].mxu0
      %v3768 = vadd.f32 %v3725, %v3767
      %v3769 = vpop.f32.mrb[0].mxu0
      %v3770 = vadd.f32 %v3727, %v3769
      %v3771 = vpop.f32.mrb[0].mxu0
      %v3772 = vadd.f32 %v3729, %v3771
      %v3773 = vpop.f32.mrb[0].mxu0
      %v3774 = vadd.f32 %v3731, %v3773
      %3775 = vdwg.mxu0
      %v3776 = vsub.f32 0.0, %v3768
      %v3777 = vsub.f32 0.0, %v3770
      %v3778 = vsub.f32 0.0, %v3772
      %v3779 = vsub.f32 0.0, %v3774
      %v3780 = vmul.f32 %v3776, 1.442695
      %v3781 = vpow.pop %v3780
      %v3782 = vmul.f32 %v3777, 1.442695
      %v3783 = vpow.pop %v3782
      %v3784 = vmul.f32 %v3778, 1.442695
      %v3785 = vpow.pop %v3784
      %v3786 = vmul.f32 %v3779, 1.442695
      %v3787 = vpow.pop %v3786
      %v3788 = vadd.f32 %v3781, 1.0
      %v3789 = vadd.f32 %v3783, 1.0
      %v3790 = vadd.f32 %v3785, 1.0
      %v3791 = vadd.f32 %v3787, 1.0
      %v3792 = vrcp.pop %v3788
      %v3793 = vmul.f32 1.0, %v3792
      %v3794 = vrcp.pop %v3789
      %v3795 = vmul.f32 1.0, %v3794
      %v3796 = vrcp.pop %v3790
      %v3797 = vmul.f32 1.0, %v3796
      %v3798 = vrcp.pop %v3791
      %v3799 = vmul.f32 1.0, %v3798
      %3800 = vst [vmem:[%s197] sm:$0xff] %v3793
      %3801 = vst [vmem:[%s197 + $0x8] sm:$0xff] %v3795
      %3802 = vst [vmem:[%s197 + $0x10] sm:$0xff] %v3797
      %3803 = vst [vmem:[%s197 + $0x18] sm:$0xff] %v3799
      %p3804 = scmp.lt.s32.totalorder %s15, 1
      %s3805 = scalar_select %p3804, %s15, 1
      %s3806 = smul.addr %s3805, 4
      %s3807 = smul.addr %s3806, 8
      %s3808 = scalar_lea.vmem %s4, %s3807
      // Predicated region
      $region37: #{_forward_impl.1} parent=35 // pred_check
        %p3809 = pneg %p122
      $region38: #{_forward_impl.1} parent=35 // pred_check_branch
        %3811 = sbr.rel (%p3809) target = $region40
      $region39: #{_forward_impl.1} parent=35 // pred_region
        _
      $region40: #{_forward_impl.1} parent=35 // pred_fallthru
        _
    $region36: #{_forward_impl.1} parent=5 // pred_fallthru
      _
    %p3812 = scmp.le.s32.totalorder 2, %s10
    // Predicated region
    $region41: #{_forward_impl.1} parent=5 // pred_check
      %p3813 = pneg %p3812
    $region42: #{_forward_impl.1} parent=5 // pred_check_branch
      %3815 = sbr.rel (%p3813) target = $region44
    $region43: #{_forward_impl.1} parent=5 // pred_region
      %s3816 = ssub.s32 %s10, 2
      // Predicated region
      $region45: #{_forward_impl.1} parent=43 // pred_check
        %p3817 = pneg %p128
      $region46: #{_forward_impl.1} parent=43 // pred_check_branch
        %3819 = sbr.rel (%p3817) target = $region48
      $region47: #{_forward_impl.1} parent=43 // pred_region
        %p3820 = scmp.lt.s32.totalorder %s16, 1
        %s3821 = scalar_select %p3820, %s16, 1
        %s3822 = smul.addr %s3821, 4
        %s3823 = smul.addr %s3822, 8
        %s3824 = scalar_lea.vmem %s4, %s3823
      $region48: #{_forward_impl.1} parent=43 // pred_fallthru
        _
    $region44: #{_forward_impl.1} parent=5 // pred_fallthru
      _
  $region6: #{_forward_impl.1} parent=0 // loop_footer
    %s14 = sadd.s32 1, %s10
  $region7: #{_forward_impl.1} parent=0 // loop_footer_branch
    %9 = sbr.rel target = $region3
  $region8: #{_forward_impl.1} parent=0 // loop_exit
    _

</llo_original>
